<compile_context>
chip_gen: v6e
topology: v6e:2x2x1
jax: 0.10.0
libtpu: 0.0.40
codegen_flags: <defaults>
</compile_context>

<pallas_src>
import functools

import numpy as np
import jax
import jax.numpy as jnp
from jax.experimental import pallas as pl
from jax.experimental.pallas import tpu as pltpu


# --------------------------------------------------------------------------
# Small capability / budget helpers
# --------------------------------------------------------------------------
def _vmem_limit(requested_bytes):
    """Raise the scoped-VMEM limit but never above ~87% of physical VMEM."""
    try:
        cap = pltpu.get_tpu_info().vmem_capacity_bytes
    except Exception:
        cap = 64 * 1024 * 1024        # conservative (v7x per-TC size)
    return int(min(requested_bytes, int(cap * 0.875)))


def _probe_copy_kernel(x_ref, o_ref):
    o_ref[...] = x_ref[...]


@functools.lru_cache(maxsize=1)
def _buffered_supported():
    """One-off probe: does this JAX build accept BlockSpec(pipeline_mode=...)?"""
    try:
        spec = pl.BlockSpec((8, 128), lambda i: (0, 0),
                            pipeline_mode=pl.Buffered(1))
        out = pl.pallas_call(
            _probe_copy_kernel,
            out_shape=jax.ShapeDtypeStruct((8, 128), jnp.float32),
            grid=(1,),
            in_specs=[spec],
            out_specs=pl.BlockSpec((8, 128), lambda i: (0, 0)),
        )(jnp.zeros((8, 128), jnp.float32))
        jax.block_until_ready(out)
        return True
    except Exception:
        return False


def _spec(shape, index_map, buffers=None):
    """BlockSpec with optional pipeline_mode=pl.Buffered(buffers)."""
    if buffers is not None and _buffered_supported():
        return pl.BlockSpec(shape, index_map, pipeline_mode=pl.Buffered(buffers))
    return pl.BlockSpec(shape, index_map)


# --------------------------------------------------------------------------
# Kernel 1: fused SANet -> NLB_1 -> NLB_2 over a (Bsub*49, C) slab
# --------------------------------------------------------------------------
def _fused_feature_kernel(
    # constant index/mask helpers (built once in the wrapper with numpy)
    expand_ref, segsum_ref, smask_ref, nmask_ref,
    # token-major 2-D features
    aes_ref, sty_ref, gen_ref,
    # SANet (1x1 convs as channel matmuls; weights bf16)
    wf_ref, bf_ref, wg_ref, bg_ref, wh_ref, bh_ref, wo_ref, bo_ref,
    # NLB_1 (g|theta|phi fused along output dim)
    wcat1_ref, bcat1_ref, ww1_ref, bw1_ref, sc1_ref, sh1_ref,
    # NLB_2 (fused projections row-split across the two input halves)
    wcat2a_ref, wcat2b_ref, bcat2_ref, ww2_ref, bw2_ref, sc2_ref, sh2_ref,
    out_ref,
):
    f32, bf16 = jnp.float32, jnp.bfloat16
    M = aes_ref.shape[0]          # Bsub * 49 rows in this block
    C = aes_ref.shape[1]
    HW = 49

    expand = expand_ref[...]      # (M, nseg) 0/1
    segsum = segsum_ref[...]      # (nseg, M) 0/1
    smask = smask_ref[...]        # (M, M) additive block-diagonal mask
    nmask = nmask_ref[...]        # (M, M) additive mask (same-sample & pool-valid col)

    def c(x):                     # single bf16 cast point per tensor
        return x.astype(bf16)

    def mm(a_bf, w):              # (M,K)bf16 @ (K,N)bf16 -> f32
        return jnp.dot(a_bf, w, preferred_element_type=f32)

    def mm_nt(a_bf, b_bf):        # a @ b.T (contract last dims of both)
        return jax.lax.dot_general(a_bf, b_bf, (((1,), (1,)), ((), ())),
                                   preferred_element_type=f32)

    def softmax_last(s):          # exact division (review correctness note)
        s = s - jnp.max(s, axis=-1, keepdims=True)
        e = jnp.exp(s)
        return e / jnp.sum(e, axis=-1, keepdims=True)

    def mvn(x):                   # per-sample mean_variance_norm (unbiased var, eps on var)
        mean_s = jnp.dot(segsum, x, preferred_element_type=f32) * (1.0 / HW)
        d = x - jnp.dot(expand, mean_s, preferred_element_type=f32)
        var_s = jnp.dot(segsum, d * d, preferred_element_type=f32) * (1.0 / (HW - 1))
        inv_s = jax.lax.rsqrt(var_s + 1e-5)
        return d * jnp.dot(expand, inv_s, preferred_element_type=f32)

    def pool(v):
        # Vectorized MaxPool2d(2,2) on each sample's 7x7 token grid:
        # pool[t] = max(v[t], v[t+1], v[t+7], v[t+8]).  Rolls wrap across
        # samples only at positions that the attention mask discards.
        h = jnp.maximum(v, pltpu.roll(v, M - 1, axis=0))
        return jnp.maximum(h, pltpu.roll(h, M - 7, axis=0))

    def nonlocal_block(parts_bf, wcat_refs, bcat_ref, ww_ref, bw_ref, sc_ref, sh_ref):
        proj = bcat_ref[...]
        for xp, wc in zip(parts_bf, wcat_refs):
            proj = proj + mm(xp, wc[...])            # (M, 3*inter) f32
        inter = proj.shape[-1] // 3
        g_p = c(pool(proj[:, :inter]))               # pooled g
        th = c(proj[:, inter:2 * inter])             # theta (not pooled)
        ph_p = c(pool(proj[:, 2 * inter:]))          # pooled phi
        f = mm_nt(th, ph_p) + nmask                  # (M, M), only 9 valid cols/sample
        p = c(softmax_last(f))
        y = c(mm(p, g_p))                            # (M, inter)
        wy = mm(y, ww_ref[...]) + bw_ref[...]
        return wy * sc_ref[...] + sh_ref[...]        # folded eval-mode BatchNorm

    content = aes_ref[...]                           # (M, C) f32
    style = sty_ref[...]
    gen = gen_ref[...]

    # ---- SANet(content=aes, style=sty), followed by my_SANet's relu ----
    Fm = c(mm(c(mvn(content)), wf_ref[...]) + bf_ref[...])
    Gm = c(mm(c(mvn(style)), wg_ref[...]) + bg_ref[...])
    Hm = c(mm(c(style), wh_ref[...]) + bh_ref[...])
    S = c(softmax_last(mm_nt(Fm, Gm) + smask))       # per-sample 49x49 attention
    O = c(mm(S, Hm))
    sanet = jnp.maximum(mm(O, wo_ref[...]) + bo_ref[...] + content, 0.0)

    # ---- NLB_1 ----
    nlb1 = nonlocal_block([c(sanet)], [wcat1_ref], bcat1_ref,
                          ww1_ref, bw1_ref, sc1_ref, sh1_ref) + sanet

    # ---- NLB_2 on channel-concat(nlb1, gen) via row-split projection weights;
    #      residual added half-by-half (no concat materialization) ----
    wy2 = nonlocal_block([c(nlb1), c(gen)], [wcat2a_ref, wcat2b_ref], bcat2_ref,
                         ww2_ref, bw2_ref, sc2_ref, sh2_ref)
    out_ref[:, :C] = (wy2[:, :C] + nlb1).astype(out_ref.dtype)
    out_ref[:, C:] = (wy2[:, C:] + gen).astype(out_ref.dtype)


def _segment_helpers(bsub, hw=49):
    """Constant 0/1 segment matrices and additive attention masks (numpy)."""
    m = bsub * hw
    rows = np.arange(m)
    seg = rows // hw
    tok = rows % hw
    expand = (seg[:, None] == np.arange(bsub)[None, :]).astype(np.float32)  # (M, nseg)
    segsum = np.ascontiguousarray(expand.T)                                 # (nseg, M)
    same = seg[:, None] == seg[None, :]
    ti, tj = tok // 7, tok % 7
    pool_ok = (ti % 2 == 0) & (ti < 6) & (tj % 2 == 0) & (tj < 6)           # 9 valid/sample
    neg = np.float32(-1e30)
    smask = np.where(same, np.float32(0.0), neg).astype(np.float32)
    nmask = np.where(same & pool_ok[None, :], np.float32(0.0), neg).astype(np.float32)
    return (jnp.asarray(expand), jnp.asarray(segsum),
            jnp.asarray(smask), jnp.asarray(nmask))


def fused_features_forward(aes2d, sty2d, gen2d, pk, bsub):
    m_full, C = aes2d.shape
    M = bsub * 49
    nblk = m_full // M

    helpers = _segment_helpers(bsub)
    weights = [pk['wf'], pk['bf'], pk['wg'], pk['bg'], pk['wh'], pk['bh'],
               pk['wo'], pk['bo'],
               pk['wcat1'], pk['bcat1'], pk['ww1'], pk['bw1'], pk['sc1'], pk['sh1'],
               pk['wcat2a'], pk['wcat2b'], pk['bcat2'], pk['ww2'], pk['bw2'],
               pk['sc2'], pk['sh2']]

    feat_spec = pl.BlockSpec((M, C), lambda b: (b, 0))
    out_spec = pl.BlockSpec((M, 2 * C), lambda b: (b, 0))

    def const_spec(a):
        # Constant block index -> fetched once; single-buffered so the weight
        # footprint is not doubled (review item).
        return _spec(a.shape, lambda b, _n=a.ndim: (0,) * _n, buffers=1)

    return pl.pallas_call(
        _fused_feature_kernel,
        out_shape=jax.ShapeDtypeStruct((m_full, 2 * C), jnp.bfloat16),
        grid=(nblk,),
        in_specs=[const_spec(a) for a in helpers]
                 + [feat_spec, feat_spec, feat_spec]
                 + [const_spec(a) for a in weights],
        out_specs=out_spec,
        compiler_params=pltpu.CompilerParams(
            # "arbitrary": batch-parallel megacore would double the weight DMA
            # on v7x at small batch (review item).  Flip to "parallel" for
            # large B on v7x.
            dimension_semantics=("arbitrary",),
            vmem_limit_bytes=_vmem_limit(100 * 1024 * 1024)),
    )(*helpers, aes2d, sty2d, gen2d, *weights)


# --------------------------------------------------------------------------
# Kernel 2: SWIN_predictor (Linear -> ReLU -> Dropout(id) -> Linear), K-tiled
# over the 49*2C input dim, hidden dim split across a leading "parallel" axis.
# Sigmoid + final predictor Linear are finished in XLA (tiny).
# --------------------------------------------------------------------------
def _swin_kernel(x_ref, w1_ref, b1_ref, w2_ref, out_ref, acc_ref):
    k = pl.program_id(1)

    @pl.when(k == 0)
    def _():
        acc_ref[...] = jnp.zeros_like(acc_ref)

    acc_ref[...] += jnp.dot(x_ref[...], w1_ref[...],
                            preferred_element_type=jnp.float32)

    @pl.when(k == pl.num_programs(1) - 1)
    def _():
        h = jnp.maximum(acc_ref[...] + b1_ref[...], 0.0)
        # nn.Dropout(p=0.1) is the identity at inference.
        out_ref[...] = jnp.dot(h.astype(jnp.bfloat16), w2_ref[...],
                               preferred_element_type=jnp.float32)


def swin_predictor_forward(fc_input, pk):
    B, K = fc_input.shape
    H = pk['w1'].shape[1]
    s_out = pk['w2'].shape[1]

    nj = 2 if H % 256 == 0 else 1       # split hidden dim across v7x TCs
    nk = 49 if (K % 49 == 0 and (K // 49) % 128 == 0) else 1
    tk, th = K // nk, H // nj

    x_spec = pl.BlockSpec((B, tk), lambda j, k: (0, k))
    # w1 is the HBM-bound stream: triple-buffer it (review item for v7x).
    w1_spec = _spec((tk, th), lambda j, k: (k, j), buffers=3)
    b1_spec = pl.BlockSpec((1, th), lambda j, k: (0, j))
    w2_spec = pl.BlockSpec((th, s_out), lambda j, k: (j, 0))
    out_spec = pl.BlockSpec((None, B, s_out), lambda j, k: (j, 0, 0))

    partial = pl.pallas_call(
        _swin_kernel,
        out_shape=jax.ShapeDtypeStruct((nj, B, s_out), jnp.float32),
        grid=(nj, nk),
        in_specs=[x_spec, w1_spec, b1_spec, w2_spec],
        out_specs=out_spec,
        scratch_shapes=[pltpu.VMEM((B, th), jnp.float32)],
        compiler_params=pltpu.CompilerParams(
            dimension_semantics=("parallel", "arbitrary"),
            vmem_limit_bytes=_vmem_limit(56 * 1024 * 1024)),
    )(fc_input, pk['w1'], pk['b1'], pk['w2'])
    return partial                       # (nj, B, s_out) partial pre-sigmoid logits


# --------------------------------------------------------------------------
# Parameter init (deterministic, synthetic) and packing for the kernels
# --------------------------------------------------------------------------
def init_params(key, C, hidden, swin_out, num_classes):
    kit = iter(jax.random.split(key, 48))

    def w(cin, cout, scale=0.05):
        return scale * jax.random.normal(next(kit), (cin, cout), jnp.float32)

    def b(cout, scale=0.05):
        return scale * jax.random.normal(next(kit), (1, cout), jnp.float32)

    sanet = {'wf': w(C, C), 'bf': b(C), 'wg': w(C, C), 'bg': b(C),
             'wh': w(C, C), 'bh': b(C), 'wo': w(C, C), 'bo': b(C)}

    def nlb(in_c):
        inter = max(in_c // 2, 1)
        # NOTE: PyTorch zero-inits the W-branch BatchNorm gamma/beta (block
        # starts as identity).  Random eval-mode BN params are used so the
        # full kernel path is numerically exercised.
        return {'wg': w(in_c, inter), 'bg': b(inter),
                'wt': w(in_c, inter), 'bt': b(inter),
                'wp': w(in_c, inter), 'bp': b(inter),
                'ww': w(inter, in_c), 'bw': b(in_c),
                'gamma': 0.1 * jax.random.normal(next(kit), (1, in_c), jnp.float32),
                'beta': 0.1 * jax.random.normal(next(kit), (1, in_c), jnp.float32),
                'rm': 0.1 * jax.random.normal(next(kit), (1, in_c), jnp.float32),
                'rv': jax.random.uniform(next(kit), (1, in_c), jnp.float32, 0.5, 1.5)}

    swin_pred = {'w1': w(2 * C * 49, hidden, 0.01), 'b1': b(hidden),
                 'w2': w(hidden, swin_out, 0.05), 'b2': b(swin_out)}
    pred = {'w': w(1 + 16 + swin_out, num_classes), 'b': b(num_classes)}
    return {'feat_channels': C, 'sanet': sanet,
            'nlb1': nlb(C), 'nlb2': nlb(2 * C),
            'swin_pred': swin_pred, 'pred': pred}


def pack_params(params):
    """Cast weights to bf16, fuse NLB projections, fold BN, permute SWIN w1."""
    bf16 = jnp.bfloat16
    C = params['feat_channels']
    sa, n1, n2 = params['sanet'], params['nlb1'], params['nlb2']

    def bn_fold(n):
        scale = n['gamma'] * jax.lax.rsqrt(n['rv'] + 1e-5)
        return scale, n['beta'] - n['rm'] * scale

    sc1, sh1 = bn_fold(n1)
    sc2, sh2 = bn_fold(n2)
    wcat2 = jnp.concatenate([n2['wg'], n2['wt'], n2['wp']], axis=1)   # (2C, 3*inter2)

    packed = {
        'wf': sa['wf'].astype(bf16), 'bf': sa['bf'],
        'wg': sa['wg'].astype(bf16), 'bg': sa['bg'],
        'wh': sa['wh'].astype(bf16), 'bh': sa['bh'],
        'wo': sa['wo'].astype(bf16), 'bo': sa['bo'],
        'wcat1': jnp.concatenate([n1['wg'], n1['wt'], n1['wp']], axis=1).astype(bf16),
        'bcat1': jnp.concatenate([n1['bg'], n1['bt'], n1['bp']], axis=1),
        'ww1': n1['ww'].astype(bf16), 'bw1': n1['bw'], 'sc1': sc1, 'sh1': sh1,
        'wcat2a': wcat2[:C].astype(bf16), 'wcat2b': wcat2[C:].astype(bf16),
        'bcat2': jnp.concatenate([n2['bg'], n2['bt'], n2['bp']], axis=1),
        'ww2': n2['ww'].astype(bf16), 'bw2': n2['bw'], 'sc2': sc2, 'sh2': sh2,
    }

    # torch.flatten(NCHW) indexes rows as c*49+s; kernel-1 output is token-
    # major (s*2C+c).  Permute w1's rows once so no transpose is needed later.
    sp = params['swin_pred']
    HW, C2 = 49, 2 * C
    r = jnp.arange(HW * C2)
    perm = (r % C2) * HW + (r // C2)
    packed['w1'] = sp['w1'][perm].astype(bf16)
    packed['b1'] = sp['b1']
    packed['w2'] = sp['w2'].astype(bf16)
    packed['b2'] = sp['b2']

    packed['wp'] = params['pred']['w']     # final predictor (runs in XLA, tiny)
    packed['bp'] = params['pred']['b']
    return packed


# --------------------------------------------------------------------------
# BSFN forward
# --------------------------------------------------------------------------
def bsfn_forward(x_img, q_score, packed, stub_key):
    B = x_img.shape[0]
    C = packed['wf'].shape[0]
    HW = 49

    k1, k2, k3, k4 = jax.random.split(stub_key, 4)
    # TODO(synk): CLIPImageQualityAssessment (16 pretrained CLIP prompt scores)
    # has no Pallas equivalent; replaced by deterministic synthetic scores.
    clip_scores = jax.random.uniform(k1, (B, 16), jnp.float32)
    # TODO(synk): SwinModel backbones (GenAes + the two Swin encoders inside
    # my_SANet) are pretrained transformers; replaced by synthetic (B,C,7,7) maps.
    gen_feat = jax.random.normal(k2, (B, C, 7, 7), jnp.float32)
    sty_feat = jax.random.normal(k3, (B, C, 7, 7), jnp.float32)
    aes_feat = jax.random.normal(k4, (B, C, 7, 7), jnp.float32)

    # NCHW -> token-major (B_pad*49, C) 2-D slabs (pad B to a multiple of Bsub).
    bsub = B if B <= 8 else 8
    b_pad = ((B + bsub - 1) // bsub) * bsub

    def to_tok2d(x):
        t = jnp.transpose(x.reshape(B, C, HW), (0, 2, 1))        # (B, 49, C)
        if b_pad != B:
            t = jnp.concatenate(
                [t, jnp.zeros((b_pad - B, HW, C), t.dtype)], axis=0)
        return t.reshape(b_pad * HW, C)

    aes2d, sty2d, gen2d = (to_tok2d(a) for a in (aes_feat, sty_feat, gen_feat))

    # SANet(+relu) -> NLB_1 -> NLB_2, all in one kernel.   (B_pad*49, 2C) bf16
    all_tok = fused_features_forward(aes2d, sty2d, gen2d, packed, bsub)
    fc_input = all_tok[: B * HW].reshape(B, HW * 2 * C)   # token-major flatten

    # SWIN_predictor (K-tiled, hidden split across TCs) -> partial logits.
    partial = swin_predictor_forward(fc_input, packed)             # (nj, B, 111)
    swin = jax.nn.sigmoid(jnp.sum(partial, axis=0) + packed['b2'])  # (B, 111)

    q = q_score.reshape(B, 1).astype(jnp.float32)
    final_in = jnp.concatenate([q, clip_scores, swin], axis=1)      # (B, 128)
    return final_in @ packed['wp'] + packed['bp']                   # (B, num_classes)


if __name__ == "__main__":
    key = jax.random.PRNGKey(0)
    B = 2
    C = 256         # stands in for 1536 (kept a multiple of 128 so all lane
                    # slices inside the kernels stay 128-aligned)
    HIDDEN = 256    # stands in for 2048
    SWIN_OUT = 111  # kept: 1 + 16 + 111 = 128 feeds the final predictor
    NUM_CLASSES = 10

    k_params, k_x, k_q, k_stub = jax.random.split(key, 4)
    params = init_params(k_params, C, HIDDEN, SWIN_OUT, NUM_CLASSES)
    packed = pack_params(params)
    x = jax.random.normal(k_x, (B, 3, 32, 32), jnp.float32)   # consumed by stubbed backbones
    q_score = jax.random.uniform(k_q, (B,), jnp.float32)

    out = bsfn_forward(x, q_score, packed, k_stub)
    out = jax.block_until_ready(out)
    assert out.shape == (B, NUM_CLASSES)
    assert bool(jnp.all(jnp.isfinite(out)))
    print("KERNEL_OK")
</pallas_src>

<mosaic_0001>
module attributes {stable_mosaic.version = 11 : i64} {
  func.func @_probe_copy_kernel(%arg0: i32, %arg1: memref<8x128xf32, #tpu.memory_space<vmem>>, %arg2: memref<8x128xf32, #tpu.memory_space<vmem>>) attributes {dimension_semantics = [#tpu.dimension_semantics<arbitrary>], iteration_bounds = array<i64: 1>, scalar_prefetch = 0 : i64, scratch_operands = 0 : i64, tpu.core_type = #tpu.core_type<tc>, window_params = [{pipeline_mode = #tpu.pipeline_mode<synchronous>, transform_indices = @transform_0, window_bounds = array<i64: 8, 128>}, {pipeline_mode = #tpu.pipeline_mode<synchronous>, transform_indices = @transform_1, window_bounds = array<i64: 8, 128>}]} {
    %c0 = arith.constant 0 : index
    %c0_0 = arith.constant 0 : index
    %0 = vector.load %arg1[%c0, %c0_0] : memref<8x128xf32, #tpu.memory_space<vmem>>, vector<8x128xf32>
    %c0_1 = arith.constant 0 : index
    %c0_2 = arith.constant 0 : index
    %1 = vector.load %arg2[%c0_1, %c0_2] : memref<8x128xf32, #tpu.memory_space<vmem>>, vector<8x128xf32>
    tpu.vector_store %arg2[%c0_1, %c0_2], %0 {strides = array<i32>} : memref<8x128xf32, #tpu.memory_space<vmem>>, vector<8x128xf32>,
    return
  }
  func.func @transform_0(%arg0: i32) -> (i32, i32) {
    %c0_i32 = arith.constant 0 : i32
    %c0_i32_0 = arith.constant 0 : i32
    %c0_i32_1 = arith.constant 0 : i32
    return %c0_i32, %c0_i32_0 : i32, i32
  }
  func.func @transform_1(%arg0: i32) -> (i32, i32) {
    %c0_i32 = arith.constant 0 : i32
    %c0_i32_0 = arith.constant 0 : i32
    %c0_i32_1 = arith.constant 0 : i32
    return %c0_i32, %c0_i32_0 : i32, i32
  }
}

module attributes {stable_mosaic.version = 11 : i64} {
  func.func @_fused_feature_kernel(%arg0: i32, %arg1: memref<98x2xf32, #tpu.memory_space<vmem>>, %arg2: memref<2x98xf32, #tpu.memory_space<vmem>>, %arg3: memref<98x98xf32, #tpu.memory_space<vmem>>, %arg4: memref<98x98xf32, #tpu.memory_space<vmem>>, %arg5: memref<98x256xf32, #tpu.memory_space<vmem>>, %arg6: memref<98x256xf32, #tpu.memory_space<vmem>>, %arg7: memref<98x256xf32, #tpu.memory_space<vmem>>, %arg8: memref<256x256xbf16, #tpu.memory_space<vmem>>, %arg9: memref<1x256xf32, #tpu.memory_space<vmem>>, %arg10: memref<256x256xbf16, #tpu.memory_space<vmem>>, %arg11: memref<1x256xf32, #tpu.memory_space<vmem>>, %arg12: memref<256x256xbf16, #tpu.memory_space<vmem>>, %arg13: memref<1x256xf32, #tpu.memory_space<vmem>>, %arg14: memref<256x256xbf16, #tpu.memory_space<vmem>>, %arg15: memref<1x256xf32, #tpu.memory_space<vmem>>, %arg16: memref<256x384xbf16, #tpu.memory_space<vmem>>, %arg17: memref<1x384xf32, #tpu.memory_space<vmem>>, %arg18: memref<128x256xbf16, #tpu.memory_space<vmem>>, %arg19: memref<1x256xf32, #tpu.memory_space<vmem>>, %arg20: memref<1x256xf32, #tpu.memory_space<vmem>>, %arg21: memref<1x256xf32, #tpu.memory_space<vmem>>, %arg22: memref<256x768xbf16, #tpu.memory_space<vmem>>, %arg23: memref<256x768xbf16, #tpu.memory_space<vmem>>, %arg24: memref<1x768xf32, #tpu.memory_space<vmem>>, %arg25: memref<256x512xbf16, #tpu.memory_space<vmem>>, %arg26: memref<1x512xf32, #tpu.memory_space<vmem>>, %arg27: memref<1x512xf32, #tpu.memory_space<vmem>>, %arg28: memref<1x512xf32, #tpu.memory_space<vmem>>, %arg29: memref<98x512xbf16, #tpu.memory_space<vmem>>) attributes {dimension_semantics = [#tpu.dimension_semantics<arbitrary>], iteration_bounds = array<i64: 1>, scalar_prefetch = 0 : i64, scratch_operands = 0 : i64, tpu.core_type = #tpu.core_type<tc>, window_params = [{pipeline_mode = #tpu.pipeline_mode<synchronous>, transform_indices = @transform_0, window_bounds = array<i64: 98, 2>}, {pipeline_mode = #tpu.pipeline_mode<synchronous>, transform_indices = @transform_1, window_bounds = array<i64: 2, 98>}, {pipeline_mode = #tpu.pipeline_mode<synchronous>, transform_indices = @transform_2, window_bounds = array<i64: 98, 98>}, {pipeline_mode = #tpu.pipeline_mode<synchronous>, transform_indices = @transform_3, window_bounds = array<i64: 98, 98>}, {transform_indices = @transform_4, window_bounds = array<i64: 98, 256>}, {transform_indices = @transform_5, window_bounds = array<i64: 98, 256>}, {transform_indices = @transform_6, window_bounds = array<i64: 98, 256>}, {pipeline_mode = #tpu.pipeline_mode<synchronous>, transform_indices = @transform_7, window_bounds = array<i64: 256, 256>}, {pipeline_mode = #tpu.pipeline_mode<synchronous>, transform_indices = @transform_8, window_bounds = array<i64: 1, 256>}, {pipeline_mode = #tpu.pipeline_mode<synchronous>, transform_indices = @transform_9, window_bounds = array<i64: 256, 256>}, {pipeline_mode = #tpu.pipeline_mode<synchronous>, transform_indices = @transform_10, window_bounds = array<i64: 1, 256>}, {pipeline_mode = #tpu.pipeline_mode<synchronous>, transform_indices = @transform_11, window_bounds = array<i64: 256, 256>}, {pipeline_mode = #tpu.pipeline_mode<synchronous>, transform_indices = @transform_12, window_bounds = array<i64: 1, 256>}, {pipeline_mode = #tpu.pipeline_mode<synchronous>, transform_indices = @transform_13, window_bounds = array<i64: 256, 256>}, {pipeline_mode = #tpu.pipeline_mode<synchronous>, transform_indices = @transform_14, window_bounds = array<i64: 1, 256>}, {pipeline_mode = #tpu.pipeline_mode<synchronous>, transform_indices = @transform_15, window_bounds = array<i64: 256, 384>}, {pipeline_mode = #tpu.pipeline_mode<synchronous>, transform_indices = @transform_16, window_bounds = array<i64: 1, 384>}, {pipeline_mode = #tpu.pipeline_mode<synchronous>, transform_indices = @transform_17, window_bounds = array<i64: 128, 256>}, {pipeline_mode = #tpu.pipeline_mode<synchronous>, transform_indices = @transform_18, window_bounds = array<i64: 1, 256>}, {pipeline_mode = #tpu.pipeline_mode<synchronous>, transform_indices = @transform_19, window_bounds = array<i64: 1, 256>}, {pipeline_mode = #tpu.pipeline_mode<synchronous>, transform_indices = @transform_20, window_bounds = array<i64: 1, 256>}, {pipeline_mode = #tpu.pipeline_mode<synchronous>, transform_indices = @transform_21, window_bounds = array<i64: 256, 768>}, {pipeline_mode = #tpu.pipeline_mode<synchronous>, transform_indices = @transform_22, window_bounds = array<i64: 256, 768>}, {pipeline_mode = #tpu.pipeline_mode<synchronous>, transform_indices = @transform_23, window_bounds = array<i64: 1, 768>}, {pipeline_mode = #tpu.pipeline_mode<synchronous>, transform_indices = @transform_24, window_bounds = array<i64: 256, 512>}, {pipeline_mode = #tpu.pipeline_mode<synchronous>, transform_indices = @transform_25, window_bounds = array<i64: 1, 512>}, {pipeline_mode = #tpu.pipeline_mode<synchronous>, transform_indices = @transform_26, window_bounds = array<i64: 1, 512>}, {pipeline_mode = #tpu.pipeline_mode<synchronous>, transform_indices = @transform_27, window_bounds = array<i64: 1, 512>}, {transform_indices = @transform_28, window_bounds = array<i64: 98, 512>}]} {
    %c0 = arith.constant 0 : index
    %c0_0 = arith.constant 0 : index
    %0 = vector.load %arg1[%c0, %c0_0] : memref<98x2xf32, #tpu.memory_space<vmem>>, vector<98x2xf32>
    %c0_1 = arith.constant 0 : index
    %c0_2 = arith.constant 0 : index
    %1 = vector.load %arg2[%c0_1, %c0_2] : memref<2x98xf32, #tpu.memory_space<vmem>>, vector<2x98xf32>
    %c0_3 = arith.constant 0 : index
    %c0_4 = arith.constant 0 : index
    %2 = vector.load %arg3[%c0_3, %c0_4] : memref<98x98xf32, #tpu.memory_space<vmem>>, vector<98x98xf32>
    %c0_5 = arith.constant 0 : index
    %c0_6 = arith.constant 0 : index
    %3 = vector.load %arg4[%c0_5, %c0_6] : memref<98x98xf32, #tpu.memory_space<vmem>>, vector<98x98xf32>
    %c0_7 = arith.constant 0 : index
    %c0_8 = arith.constant 0 : index
    %4 = vector.load %arg5[%c0_7, %c0_8] : memref<98x256xf32, #tpu.memory_space<vmem>>, vector<98x256xf32>
    %c0_9 = arith.constant 0 : index
    %c0_10 = arith.constant 0 : index
    %5 = vector.load %arg6[%c0_9, %c0_10] : memref<98x256xf32, #tpu.memory_space<vmem>>, vector<98x256xf32>
    %c0_11 = arith.constant 0 : index
    %c0_12 = arith.constant 0 : index
    %6 = vector.load %arg7[%c0_11, %c0_12] : memref<98x256xf32, #tpu.memory_space<vmem>>, vector<98x256xf32>
    %cst = arith.constant dense<0.000000e+00> : vector<2x256xf32>
    %7 = tpu.matmul %1, %4, %cst {dimension_numbers = #tpu.dot_dimension_numbers<[1], [0], [0], [1], [0, 0, 1, 1], [], []>} : vector<2x98xf32>, vector<98x256xf32>, vector<2x256xf32> -> vector<2x256xf32>
    %cst_13 = arith.constant 0.0204081628 : f32
    %8 = vector.broadcast %cst_13 : f32 to vector<2x256xf32>
    %9 = arith.mulf %7, %8 : vector<2x256xf32>
    %cst_14 = arith.constant dense<0.000000e+00> : vector<98x256xf32>
    %10 = tpu.matmul %0, %9, %cst_14 {dimension_numbers = #tpu.dot_dimension_numbers<[1], [0], [0], [1], [0, 0, 1, 1], [], []>} : vector<98x2xf32>, vector<2x256xf32>, vector<98x256xf32> -> vector<98x256xf32>
    %11 = arith.subf %4, %10 : vector<98x256xf32>
    %12 = arith.mulf %11, %11 : vector<98x256xf32>
    %cst_15 = arith.constant dense<0.000000e+00> : vector<2x256xf32>
    %13 = tpu.matmul %1, %12, %cst_15 {dimension_numbers = #tpu.dot_dimension_numbers<[1], [0], [0], [1], [0, 0, 1, 1], [], []>} : vector<2x98xf32>, vector<98x256xf32>, vector<2x256xf32> -> vector<2x256xf32>
    %cst_16 = arith.constant 0.020833334 : f32
    %14 = vector.broadcast %cst_16 : f32 to vector<2x256xf32>
    %15 = arith.mulf %13, %14 : vector<2x256xf32>
    %cst_17 = arith.constant 9.99999974E-6 : f32
    %16 = vector.broadcast %cst_17 : f32 to vector<2x256xf32>
    %17 = arith.addf %15, %16 : vector<2x256xf32>
    %18 = math.rsqrt %17 : vector<2x256xf32>
    %cst_18 = arith.constant dense<0.000000e+00> : vector<98x256xf32>
    %19 = tpu.matmul %0, %18, %cst_18 {dimension_numbers = #tpu.dot_dimension_numbers<[1], [0], [0], [1], [0, 0, 1, 1], [], []>} : vector<98x2xf32>, vector<2x256xf32>, vector<98x256xf32> -> vector<98x256xf32>
    %20 = arith.mulf %11, %19 : vector<98x256xf32>
    %21 = arith.truncf %20 : vector<98x256xf32> to vector<98x256xbf16>
    %c0_19 = arith.constant 0 : index
    %c0_20 = arith.constant 0 : index
    %22 = vector.load %arg8[%c0_19, %c0_20] : memref<256x256xbf16, #tpu.memory_space<vmem>>, vector<256x256xbf16>
    %cst_21 = arith.constant dense<0.000000e+00> : vector<98x256xf32>
    %23 = tpu.matmul %21, %22, %cst_21 {dimension_numbers = #tpu.dot_dimension_numbers<[1], [0], [0], [1], [0, 0, 1, 1], [], []>} : vector<98x256xbf16>, vector<256x256xbf16>, vector<98x256xf32> -> vector<98x256xf32>
    %c0_22 = arith.constant 0 : index
    %c0_23 = arith.constant 0 : index
    %24 = vector.load %arg9[%c0_22, %c0_23] : memref<1x256xf32, #tpu.memory_space<vmem>>, vector<1x256xf32>
    %25 = vector.broadcast %24 : vector<1x256xf32> to vector<98x256xf32>
    %26 = arith.addf %23, %25 : vector<98x256xf32>
    %27 = arith.truncf %26 : vector<98x256xf32> to vector<98x256xbf16>
    %cst_24 = arith.constant dense<0.000000e+00> : vector<2x256xf32>
    %28 = tpu.matmul %1, %5, %cst_24 {dimension_numbers = #tpu.dot_dimension_numbers<[1], [0], [0], [1], [0, 0, 1, 1], [], []>} : vector<2x98xf32>, vector<98x256xf32>, vector<2x256xf32> -> vector<2x256xf32>
    %cst_25 = arith.constant 0.0204081628 : f32
    %29 = vector.broadcast %cst_25 : f32 to vector<2x256xf32>
    %30 = arith.mulf %28, %29 : vector<2x256xf32>
    %cst_26 = arith.constant dense<0.000000e+00> : vector<98x256xf32>
    %31 = tpu.matmul %0, %30, %cst_26 {dimension_numbers = #tpu.dot_dimension_numbers<[1], [0], [0], [1], [0, 0, 1, 1], [], []>} : vector<98x2xf32>, vector<2x256xf32>, vector<98x256xf32> -> vector<98x256xf32>
    %32 = arith.subf %5, %31 : vector<98x256xf32>
    %33 = arith.mulf %32, %32 : vector<98x256xf32>
    %cst_27 = arith.constant dense<0.000000e+00> : vector<2x256xf32>
    %34 = tpu.matmul %1, %33, %cst_27 {dimension_numbers = #tpu.dot_dimension_numbers<[1], [0], [0], [1], [0, 0, 1, 1], [], []>} : vector<2x98xf32>, vector<98x256xf32>, vector<2x256xf32> -> vector<2x256xf32>
    %cst_28 = arith.constant 0.020833334 : f32
    %35 = vector.broadcast %cst_28 : f32 to vector<2x256xf32>
    %36 = arith.mulf %34, %35 : vector<2x256xf32>
    %cst_29 = arith.constant 9.99999974E-6 : f32
    %37 = vector.broadcast %cst_29 : f32 to vector<2x256xf32>
    %38 = arith.addf %36, %37 : vector<2x256xf32>
    %39 = math.rsqrt %38 : vector<2x256xf32>
    %cst_30 = arith.constant dense<0.000000e+00> : vector<98x256xf32>
    %40 = tpu.matmul %0, %39, %cst_30 {dimension_numbers = #tpu.dot_dimension_numbers<[1], [0], [0], [1], [0, 0, 1, 1], [], []>} : vector<98x2xf32>, vector<2x256xf32>, vector<98x256xf32> -> vector<98x256xf32>
    %41 = arith.mulf %32, %40 : vector<98x256xf32>
    %42 = arith.truncf %41 : vector<98x256xf32> to vector<98x256xbf16>
    %c0_31 = arith.constant 0 : index
    %c0_32 = arith.constant 0 : index
    %43 = vector.load %arg10[%c0_31, %c0_32] : memref<256x256xbf16, #tpu.memory_space<vmem>>, vector<256x256xbf16>
    %cst_33 = arith.constant dense<0.000000e+00> : vector<98x256xf32>
    %44 = tpu.matmul %42, %43, %cst_33 {dimension_numbers = #tpu.dot_dimension_numbers<[1], [0], [0], [1], [0, 0, 1, 1], [], []>} : vector<98x256xbf16>, vector<256x256xbf16>, vector<98x256xf32> -> vector<98x256xf32>
    %c0_34 = arith.constant 0 : index
    %c0_35 = arith.constant 0 : index
    %45 = vector.load %arg11[%c0_34, %c0_35] : memref<1x256xf32, #tpu.memory_space<vmem>>, vector<1x256xf32>
    %46 = vector.broadcast %45 : vector<1x256xf32> to vector<98x256xf32>
    %47 = arith.addf %44, %46 : vector<98x256xf32>
    %48 = arith.truncf %47 : vector<98x256xf32> to vector<98x256xbf16>
    %49 = arith.truncf %5 : vector<98x256xf32> to vector<98x256xbf16>
    %c0_36 = arith.constant 0 : index
    %c0_37 = arith.constant 0 : index
    %50 = vector.load %arg12[%c0_36, %c0_37] : memref<256x256xbf16, #tpu.memory_space<vmem>>, vector<256x256xbf16>
    %cst_38 = arith.constant dense<0.000000e+00> : vector<98x256xf32>
    %51 = tpu.matmul %49, %50, %cst_38 {dimension_numbers = #tpu.dot_dimension_numbers<[1], [0], [0], [1], [0, 0, 1, 1], [], []>} : vector<98x256xbf16>, vector<256x256xbf16>, vector<98x256xf32> -> vector<98x256xf32>
    %c0_39 = arith.constant 0 : index
    %c0_40 = arith.constant 0 : index
    %52 = vector.load %arg13[%c0_39, %c0_40] : memref<1x256xf32, #tpu.memory_space<vmem>>, vector<1x256xf32>
    %53 = vector.broadcast %52 : vector<1x256xf32> to vector<98x256xf32>
    %54 = arith.addf %51, %53 : vector<98x256xf32>
    %55 = arith.truncf %54 : vector<98x256xf32> to vector<98x256xbf16>
    %cst_41 = arith.constant dense<0.000000e+00> : vector<98x98xf32>
    %56 = tpu.matmul %27, %48, %cst_41 {dimension_numbers = #tpu.dot_dimension_numbers<[1], [1], [0], [0], [0, 0, 1, 0], [], []>} : vector<98x256xbf16>, vector<98x256xbf16>, vector<98x98xf32> -> vector<98x98xf32>
    %57 = arith.addf %56, %2 : vector<98x98xf32>
    %cst_42 = arith.constant dense<0xFF800000> : vector<98xf32>
    %58 = vector.multi_reduction <maximumf>, %57, %cst_42 [1] : vector<98x98xf32> to vector<98xf32>
    %59 = vector.shape_cast %58 : vector<98xf32> to vector<98x1xf32>
    %60 = vector.broadcast %59 : vector<98x1xf32> to vector<98x98xf32>
    %61 = arith.subf %57, %60 : vector<98x98xf32>
    %62 = math.exp %61 : vector<98x98xf32>
    %cst_43 = arith.constant dense<0.000000e+00> : vector<98xf32>
    %63 = vector.multi_reduction <add>, %62, %cst_43 [1] : vector<98x98xf32> to vector<98xf32>
    %64 = vector.shape_cast %63 : vector<98xf32> to vector<98x1xf32>
    %65 = vector.broadcast %64 : vector<98x1xf32> to vector<98x98xf32>
    %66 = arith.divf %62, %65 : vector<98x98xf32>
    %67 = arith.truncf %66 : vector<98x98xf32> to vector<98x98xbf16>
    %cst_44 = arith.constant dense<0.000000e+00> : vector<98x256xf32>
    %68 = tpu.matmul %67, %55, %cst_44 {dimension_numbers = #tpu.dot_dimension_numbers<[1], [0], [0], [1], [0, 0, 1, 1], [], []>} : vector<98x98xbf16>, vector<98x256xbf16>, vector<98x256xf32> -> vector<98x256xf32>
    %69 = arith.truncf %68 : vector<98x256xf32> to vector<98x256xbf16>
    %c0_45 = arith.constant 0 : index
    %c0_46 = arith.constant 0 : index
    %70 = vector.load %arg14[%c0_45, %c0_46] : memref<256x256xbf16, #tpu.memory_space<vmem>>, vector<256x256xbf16>
    %cst_47 = arith.constant dense<0.000000e+00> : vector<98x256xf32>
    %71 = tpu.matmul %69, %70, %cst_47 {dimension_numbers = #tpu.dot_dimension_numbers<[1], [0], [0], [1], [0, 0, 1, 1], [], []>} : vector<98x256xbf16>, vector<256x256xbf16>, vector<98x256xf32> -> vector<98x256xf32>
    %c0_48 = arith.constant 0 : index
    %c0_49 = arith.constant 0 : index
    %72 = vector.load %arg15[%c0_48, %c0_49] : memref<1x256xf32, #tpu.memory_space<vmem>>, vector<1x256xf32>
    %73 = vector.broadcast %72 : vector<1x256xf32> to vector<98x256xf32>
    %74 = arith.addf %71, %73 : vector<98x256xf32>
    %75 = arith.addf %74, %4 : vector<98x256xf32>
    %cst_50 = arith.constant 0.000000e+00 : f32
    %76 = vector.broadcast %cst_50 : f32 to vector<98x256xf32>
    %77 = arith.maximumf %75, %76 : vector<98x256xf32>
    %78 = arith.truncf %77 : vector<98x256xf32> to vector<98x256xbf16>
    %c0_51 = arith.constant 0 : index
    %c0_52 = arith.constant 0 : index
    %79 = vector.load %arg17[%c0_51, %c0_52] : memref<1x384xf32, #tpu.memory_space<vmem>>, vector<1x384xf32>
    %c0_53 = arith.constant 0 : index
    %c0_54 = arith.constant 0 : index
    %80 = vector.load %arg16[%c0_53, %c0_54] : memref<256x384xbf16, #tpu.memory_space<vmem>>, vector<256x384xbf16>
    %cst_55 = arith.constant dense<0.000000e+00> : vector<98x384xf32>
    %81 = tpu.matmul %78, %80, %cst_55 {dimension_numbers = #tpu.dot_dimension_numbers<[1], [0], [0], [1], [0, 0, 1, 1], [], []>} : vector<98x256xbf16>, vector<256x384xbf16>, vector<98x384xf32> -> vector<98x384xf32>
    %82 = vector.broadcast %79 : vector<1x384xf32> to vector<98x384xf32>
    %83 = arith.addf %82, %81 : vector<98x384xf32>
    %84 = vector.extract_strided_slice %83 {offsets = [0, 0], sizes = [98, 128], strides = [1, 1]} : vector<98x384xf32> to vector<98x128xf32>
    %c97_i32 = arith.constant 97 : i32
    %85 = tpu.dynamic_rotate %84 by %c97_i32 dim 0 : vector<98x128xf32>, i32 -> vector<98x128xf32>
    %86 = arith.maximumf %84, %85 : vector<98x128xf32>
    %c91_i32 = arith.constant 91 : i32
    %87 = tpu.dynamic_rotate %86 by %c91_i32 dim 0 : vector<98x128xf32>, i32 -> vector<98x128xf32>
    %88 = arith.maximumf %86, %87 : vector<98x128xf32>
    %89 = arith.truncf %88 : vector<98x128xf32> to vector<98x128xbf16>
    %90 = vector.extract_strided_slice %83 {offsets = [0, 128], sizes = [98, 128], strides = [1, 1]} : vector<98x384xf32> to vector<98x128xf32>
    %91 = arith.truncf %90 : vector<98x128xf32> to vector<98x128xbf16>
    %92 = vector.extract_strided_slice %83 {offsets = [0, 256], sizes = [98, 128], strides = [1, 1]} : vector<98x384xf32> to vector<98x128xf32>
    %c97_i32_56 = arith.constant 97 : i32
    %93 = tpu.dynamic_rotate %92 by %c97_i32_56 dim 0 : vector<98x128xf32>, i32 -> vector<98x128xf32>
    %94 = arith.maximumf %92, %93 : vector<98x128xf32>
    %c91_i32_57 = arith.constant 91 : i32
    %95 = tpu.dynamic_rotate %94 by %c91_i32_57 dim 0 : vector<98x128xf32>, i32 -> vector<98x128xf32>
    %96 = arith.maximumf %94, %95 : vector<98x128xf32>
    %97 = arith.truncf %96 : vector<98x128xf32> to vector<98x128xbf16>
    %cst_58 = arith.constant dense<0.000000e+00> : vector<98x98xf32>
    %98 = tpu.matmul %91, %97, %cst_58 {dimension_numbers = #tpu.dot_dimension_numbers<[1], [1], [0], [0], [0, 0, 1, 0], [], []>} : vector<98x128xbf16>, vector<98x128xbf16>, vector<98x98xf32> -> vector<98x98xf32>
    %99 = arith.addf %98, %3 : vector<98x98xf32>
    %cst_59 = arith.constant dense<0xFF800000> : vector<98xf32>
    %100 = vector.multi_reduction <maximumf>, %99, %cst_59 [1] : vector<98x98xf32> to vector<98xf32>
    %101 = vector.shape_cast %100 : vector<98xf32> to vector<98x1xf32>
    %102 = vector.broadcast %101 : vector<98x1xf32> to vector<98x98xf32>
    %103 = arith.subf %99, %102 : vector<98x98xf32>
    %104 = math.exp %103 : vector<98x98xf32>
    %cst_60 = arith.constant dense<0.000000e+00> : vector<98xf32>
    %105 = vector.multi_reduction <add>, %104, %cst_60 [1] : vector<98x98xf32> to vector<98xf32>
    %106 = vector.shape_cast %105 : vector<98xf32> to vector<98x1xf32>
    %107 = vector.broadcast %106 : vector<98x1xf32> to vector<98x98xf32>
    %108 = arith.divf %104, %107 : vector<98x98xf32>
    %109 = arith.truncf %108 : vector<98x98xf32> to vector<98x98xbf16>
    %cst_61 = arith.constant dense<0.000000e+00> : vector<98x128xf32>
    %110 = tpu.matmul %109, %89, %cst_61 {dimension_numbers = #tpu.dot_dimension_numbers<[1], [0], [0], [1], [0, 0, 1, 1], [], []>} : vector<98x98xbf16>, vector<98x128xbf16>, vector<98x128xf32> -> vector<98x128xf32>
    %111 = arith.truncf %110 : vector<98x128xf32> to vector<98x128xbf16>
    %c0_62 = arith.constant 0 : index
    %c0_63 = arith.constant 0 : index
    %112 = vector.load %arg18[%c0_62, %c0_63] : memref<128x256xbf16, #tpu.memory_space<vmem>>, vector<128x256xbf16>
    %cst_64 = arith.constant dense<0.000000e+00> : vector<98x256xf32>
    %113 = tpu.matmul %111, %112, %cst_64 {dimension_numbers = #tpu.dot_dimension_numbers<[1], [0], [0], [1], [0, 0, 1, 1], [], []>} : vector<98x128xbf16>, vector<128x256xbf16>, vector<98x256xf32> -> vector<98x256xf32>
    %c0_65 = arith.constant 0 : index
    %c0_66 = arith.constant 0 : index
    %114 = vector.load %arg19[%c0_65, %c0_66] : memref<1x256xf32, #tpu.memory_space<vmem>>, vector<1x256xf32>
    %115 = vector.broadcast %114 : vector<1x256xf32> to vector<98x256xf32>
    %116 = arith.addf %113, %115 : vector<98x256xf32>
    %c0_67 = arith.constant 0 : index
    %c0_68 = arith.constant 0 : index
    %117 = vector.load %arg20[%c0_67, %c0_68] : memref<1x256xf32, #tpu.memory_space<vmem>>, vector<1x256xf32>
    %118 = vector.broadcast %117 : vector<1x256xf32> to vector<98x256xf32>
    %119 = arith.mulf %116, %118 : vector<98x256xf32>
    %c0_69 = arith.constant 0 : index
    %c0_70 = arith.constant 0 : index
    %120 = vector.load %arg21[%c0_69, %c0_70] : memref<1x256xf32, #tpu.memory_space<vmem>>, vector<1x256xf32>
    %121 = vector.broadcast %120 : vector<1x256xf32> to vector<98x256xf32>
    %122 = arith.addf %119, %121 : vector<98x256xf32>
    %123 = arith.addf %122, %77 : vector<98x256xf32>
    %124 = arith.truncf %123 : vector<98x256xf32> to vector<98x256xbf16>
    %125 = arith.truncf %6 : vector<98x256xf32> to vector<98x256xbf16>
    %c0_71 = arith.constant 0 : index
    %c0_72 = arith.constant 0 : index
    %126 = vector.load %arg24[%c0_71, %c0_72] : memref<1x768xf32, #tpu.memory_space<vmem>>, vector<1x768xf32>
    %c0_73 = arith.constant 0 : index
    %c0_74 = arith.constant 0 : index
    %127 = vector.load %arg22[%c0_73, %c0_74] : memref<256x768xbf16, #tpu.memory_space<vmem>>, vector<256x768xbf16>
    %cst_75 = arith.constant dense<0.000000e+00> : vector<98x768xf32>
    %128 = tpu.matmul %124, %127, %cst_75 {dimension_numbers = #tpu.dot_dimension_numbers<[1], [0], [0], [1], [0, 0, 1, 1], [], []>} : vector<98x256xbf16>, vector<256x768xbf16>, vector<98x768xf32> -> vector<98x768xf32>
    %129 = vector.broadcast %126 : vector<1x768xf32> to vector<98x768xf32>
    %130 = arith.addf %129, %128 : vector<98x768xf32>
    %c0_76 = arith.constant 0 : index
    %c0_77 = arith.constant 0 : index
    %131 = vector.load %arg23[%c0_76, %c0_77] : memref<256x768xbf16, #tpu.memory_space<vmem>>, vector<256x768xbf16>
    %cst_78 = arith.constant dense<0.000000e+00> : vector<98x768xf32>
    %132 = tpu.matmul %125, %131, %cst_78 {dimension_numbers = #tpu.dot_dimension_numbers<[1], [0], [0], [1], [0, 0, 1, 1], [], []>} : vector<98x256xbf16>, vector<256x768xbf16>, vector<98x768xf32> -> vector<98x768xf32>
    %133 = arith.addf %130, %132 : vector<98x768xf32>
    %134 = vector.extract_strided_slice %133 {offsets = [0, 0], sizes = [98, 256], strides = [1, 1]} : vector<98x768xf32> to vector<98x256xf32>
    %c97_i32_79 = arith.constant 97 : i32
    %135 = tpu.dynamic_rotate %134 by %c97_i32_79 dim 0 : vector<98x256xf32>, i32 -> vector<98x256xf32>
    %136 = arith.maximumf %134, %135 : vector<98x256xf32>
    %c91_i32_80 = arith.constant 91 : i32
    %137 = tpu.dynamic_rotate %136 by %c91_i32_80 dim 0 : vector<98x256xf32>, i32 -> vector<98x256xf32>
    %138 = arith.maximumf %136, %137 : vector<98x256xf32>
    %139 = arith.truncf %138 : vector<98x256xf32> to vector<98x256xbf16>
    %140 = vector.extract_strided_slice %133 {offsets = [0, 256], sizes = [98, 256], strides = [1, 1]} : vector<98x768xf32> to vector<98x256xf32>
    %141 = arith.truncf %140 : vector<98x256xf32> to vector<98x256xbf16>
    %142 = vector.extract_strided_slice %133 {offsets = [0, 512], sizes = [98, 256], strides = [1, 1]} : vector<98x768xf32> to vector<98x256xf32>
    %c97_i32_81 = arith.constant 97 : i32
    %143 = tpu.dynamic_rotate %142 by %c97_i32_81 dim 0 : vector<98x256xf32>, i32 -> vector<98x256xf32>
    %144 = arith.maximumf %142, %143 : vector<98x256xf32>
    %c91_i32_82 = arith.constant 91 : i32
    %145 = tpu.dynamic_rotate %144 by %c91_i32_82 dim 0 : vector<98x256xf32>, i32 -> vector<98x256xf32>
    %146 = arith.maximumf %144, %145 : vector<98x256xf32>
    %147 = arith.truncf %146 : vector<98x256xf32> to vector<98x256xbf16>
    %cst_83 = arith.constant dense<0.000000e+00> : vector<98x98xf32>
    %148 = tpu.matmul %141, %147, %cst_83 {dimension_numbers = #tpu.dot_dimension_numbers<[1], [1], [0], [0], [0, 0, 1, 0], [], []>} : vector<98x256xbf16>, vector<98x256xbf16>, vector<98x98xf32> -> vector<98x98xf32>
    %149 = arith.addf %148, %3 : vector<98x98xf32>
    %cst_84 = arith.constant dense<0xFF800000> : vector<98xf32>
    %150 = vector.multi_reduction <maximumf>, %149, %cst_84 [1] : vector<98x98xf32> to vector<98xf32>
    %151 = vector.shape_cast %150 : vector<98xf32> to vector<98x1xf32>
    %152 = vector.broadcast %151 : vector<98x1xf32> to vector<98x98xf32>
    %153 = arith.subf %149, %152 : vector<98x98xf32>
    %154 = math.exp %153 : vector<98x98xf32>
    %cst_85 = arith.constant dense<0.000000e+00> : vector<98xf32>
    %155 = vector.multi_reduction <add>, %154, %cst_85 [1] : vector<98x98xf32> to vector<98xf32>
    %156 = vector.shape_cast %155 : vector<98xf32> to vector<98x1xf32>
    %157 = vector.broadcast %156 : vector<98x1xf32> to vector<98x98xf32>
    %158 = arith.divf %154, %157 : vector<98x98xf32>
    %159 = arith.truncf %158 : vector<98x98xf32> to vector<98x98xbf16>
    %cst_86 = arith.constant dense<0.000000e+00> : vector<98x256xf32>
    %160 = tpu.matmul %159, %139, %cst_86 {dimension_numbers = #tpu.dot_dimension_numbers<[1], [0], [0], [1], [0, 0, 1, 1], [], []>} : vector<98x98xbf16>, vector<98x256xbf16>, vector<98x256xf32> -> vector<98x256xf32>
    %161 = arith.truncf %160 : vector<98x256xf32> to vector<98x256xbf16>
    %c0_87 = arith.constant 0 : index
    %c0_88 = arith.constant 0 : index
    %162 = vector.load %arg25[%c0_87, %c0_88] : memref<256x512xbf16, #tpu.memory_space<vmem>>, vector<256x512xbf16>
    %cst_89 = arith.constant dense<0.000000e+00> : vector<98x512xf32>
    %163 = tpu.matmul %161, %162, %cst_89 {dimension_numbers = #tpu.dot_dimension_numbers<[1], [0], [0], [1], [0, 0, 1, 1], [], []>} : vector<98x256xbf16>, vector<256x512xbf16>, vector<98x512xf32> -> vector<98x512xf32>
    %c0_90 = arith.constant 0 : index
    %c0_91 = arith.constant 0 : index
    %164 = vector.load %arg26[%c0_90, %c0_91] : memref<1x512xf32, #tpu.memory_space<vmem>>, vector<1x512xf32>
    %165 = vector.broadcast %164 : vector<1x512xf32> to vector<98x512xf32>
    %166 = arith.addf %163, %165 : vector<98x512xf32>
    %c0_92 = arith.constant 0 : index
    %c0_93 = arith.constant 0 : index
    %167 = vector.load %arg27[%c0_92, %c0_93] : memref<1x512xf32, #tpu.memory_space<vmem>>, vector<1x512xf32>
    %168 = vector.broadcast %167 : vector<1x512xf32> to vector<98x512xf32>
    %169 = arith.mulf %166, %168 : vector<98x512xf32>
    %c0_94 = arith.constant 0 : index
    %c0_95 = arith.constant 0 : index
    %170 = vector.load %arg28[%c0_94, %c0_95] : memref<1x512xf32, #tpu.memory_space<vmem>>, vector<1x512xf32>
    %171 = vector.broadcast %170 : vector<1x512xf32> to vector<98x512xf32>
    %172 = arith.addf %169, %171 : vector<98x512xf32>
    %173 = vector.extract_strided_slice %172 {offsets = [0, 0], sizes = [98, 256], strides = [1, 1]} : vector<98x512xf32> to vector<98x256xf32>
    %174 = arith.addf %173, %123 : vector<98x256xf32>
    %175 = arith.truncf %174 : vector<98x256xf32> to vector<98x256xbf16>
    %c0_96 = arith.constant 0 : index
    %c0_97 = arith.constant 0 : index
    %176 = vector.load %arg29[%c0_96, %c0_97] : memref<98x512xbf16, #tpu.memory_space<vmem>>, vector<98x256xbf16>
    tpu.vector_store %arg29[%c0_96, %c0_97], %175 {strides = array<i32>} : memref<98x512xbf16, #tpu.memory_space<vmem>>, vector<98x256xbf16>,
    %177 = vector.extract_strided_slice %172 {offsets = [0, 256], sizes = [98, 256], strides = [1, 1]} : vector<98x512xf32> to vector<98x256xf32>
    %178 = arith.addf %177, %6 : vector<98x256xf32>
    %179 = arith.truncf %178 : vector<98x256xf32> to vector<98x256xbf16>
    %c0_98 = arith.constant 0 : index
    %c256 = arith.constant 256 : index
    %180 = vector.load %arg29[%c0_98, %c256] : memref<98x512xbf16, #tpu.memory_space<vmem>>, vector<98x256xbf16>
    tpu.vector_store %arg29[%c0_98, %c256], %179 {strides = array<i32>} : memref<98x512xbf16, #tpu.memory_space<vmem>>, vector<98x256xbf16>,
    return
  }
  func.func @transform_0(%arg0: i32) -> (i32, i32) {
    %c0_i32 = arith.constant 0 : i32
    %c0_i32_0 = arith.constant 0 : i32
    %c0_i32_1 = arith.constant 0 : i32
    return %c0_i32, %c0_i32_0 : i32, i32
  }
  func.func @transform_1(%arg0: i32) -> (i32, i32) {
    %c0_i32 = arith.constant 0 : i32
    %c0_i32_0 = arith.constant 0 : i32
    %c0_i32_1 = arith.constant 0 : i32
    return %c0_i32, %c0_i32_0 : i32, i32
  }
  func.func @transform_2(%arg0: i32) -> (i32, i32) {
    %c0_i32 = arith.constant 0 : i32
    %c0_i32_0 = arith.constant 0 : i32
    %c0_i32_1 = arith.constant 0 : i32
    return %c0_i32, %c0_i32_0 : i32, i32
  }
  func.func @transform_3(%arg0: i32) -> (i32, i32) {
    %c0_i32 = arith.constant 0 : i32
    %c0_i32_0 = arith.constant 0 : i32
    %c0_i32_1 = arith.constant 0 : i32
    return %c0_i32, %c0_i32_0 : i32, i32
  }
  func.func @transform_4(%arg0: i32) -> (i32, i32) {
    %c0_i32 = arith.constant 0 : i32
    %c0_i32_0 = arith.constant 0 : i32
    return %arg0, %c0_i32 : i32, i32
  }
  func.func @transform_5(%arg0: i32) -> (i32, i32) {
    %c0_i32 = arith.constant 0 : i32
    %c0_i32_0 = arith.constant 0 : i32
    return %arg0, %c0_i32 : i32, i32
  }
  func.func @transform_6(%arg0: i32) -> (i32, i32) {
    %c0_i32 = arith.constant 0 : i32
    %c0_i32_0 = arith.constant 0 : i32
    return %arg0, %c0_i32 : i32, i32
  }
  func.func @transform_7(%arg0: i32) -> (i32, i32) {
    %c0_i32 = arith.constant 0 : i32
    %c0_i32_0 = arith.constant 0 : i32
    %c0_i32_1 = arith.constant 0 : i32
    return %c0_i32, %c0_i32_0 : i32, i32
  }
  func.func @transform_8(%arg0: i32) -> (i32, i32) {
    %c0_i32 = arith.constant 0 : i32
    %c0_i32_0 = arith.constant 0 : i32
    %c0_i32_1 = arith.constant 0 : i32
    return %c0_i32, %c0_i32_0 : i32, i32
  }
  func.func @transform_9(%arg0: i32) -> (i32, i32) {
    %c0_i32 = arith.constant 0 : i32
    %c0_i32_0 = arith.constant 0 : i32
    %c0_i32_1 = arith.constant 0 : i32
    return %c0_i32, %c0_i32_0 : i32, i32
  }
  func.func @transform_10(%arg0: i32) -> (i32, i32) {
    %c0_i32 = arith.constant 0 : i32
    %c0_i32_0 = arith.constant 0 : i32
    %c0_i32_1 = arith.constant 0 : i32
    return %c0_i32, %c0_i32_0 : i32, i32
  }
  func.func @transform_11(%arg0: i32) -> (i32, i32) {
    %c0_i32 = arith.constant 0 : i32
    %c0_i32_0 = arith.constant 0 : i32
    %c0_i32_1 = arith.constant 0 : i32
    return %c0_i32, %c0_i32_0 : i32, i32
  }
  func.func @transform_12(%arg0: i32) -> (i32, i32) {
    %c0_i32 = arith.constant 0 : i32
    %c0_i32_0 = arith.constant 0 : i32
    %c0_i32_1 = arith.constant 0 : i32
    return %c0_i32, %c0_i32_0 : i32, i32
  }
  func.func @transform_13(%arg0: i32) -> (i32, i32) {
    %c0_i32 = arith.constant 0 : i32
    %c0_i32_0 = arith.constant 0 : i32
    %c0_i32_1 = arith.constant 0 : i32
    return %c0_i32, %c0_i32_0 : i32, i32
  }
  func.func @transform_14(%arg0: i32) -> (i32, i32) {
    %c0_i32 = arith.constant 0 : i32
    %c0_i32_0 = arith.constant 0 : i32
    %c0_i32_1 = arith.constant 0 : i32
    return %c0_i32, %c0_i32_0 : i32, i32
  }
  func.func @transform_15(%arg0: i32) -> (i32, i32) {
    %c0_i32 = arith.constant 0 : i32
    %c0_i32_0 = arith.constant 0 : i32
    %c0_i32_1 = arith.constant 0 : i32
    return %c0_i32, %c0_i32_0 : i32, i32
  }
  func.func @transform_16(%arg0: i32) -> (i32, i32) {
    %c0_i32 = arith.constant 0 : i32
    %c0_i32_0 = arith.constant 0 : i32
    %c0_i32_1 = arith.constant 0 : i32
    return %c0_i32, %c0_i32_0 : i32, i32
  }
  func.func @transform_17(%arg0: i32) -> (i32, i32) {
    %c0_i32 = arith.constant 0 : i32
    %c0_i32_0 = arith.constant 0 : i32
    %c0_i32_1 = arith.constant 0 : i32
    return %c0_i32, %c0_i32_0 : i32, i32
  }
  func.func @transform_18(%arg0: i32) -> (i32, i32) {
    %c0_i32 = arith.constant 0 : i32
    %c0_i32_0 = arith.constant 0 : i32
    %c0_i32_1 = arith.constant 0 : i32
    return %c0_i32, %c0_i32_0 : i32, i32
  }
  func.func @transform_19(%arg0: i32) -> (i32, i32) {
    %c0_i32 = arith.constant 0 : i32
    %c0_i32_0 = arith.constant 0 : i32
    %c0_i32_1 = arith.constant 0 : i32
    return %c0_i32, %c0_i32_0 : i32, i32
  }
  func.func @transform_20(%arg0: i32) -> (i32, i32) {
    %c0_i32 = arith.constant 0 : i32
    %c0_i32_0 = arith.constant 0 : i32
    %c0_i32_1 = arith.constant 0 : i32
    return %c0_i32, %c0_i32_0 : i32, i32
  }
  func.func @transform_21(%arg0: i32) -> (i32, i32) {
    %c0_i32 = arith.constant 0 : i32
    %c0_i32_0 = arith.constant 0 : i32
    %c0_i32_1 = arith.constant 0 : i32
    return %c0_i32, %c0_i32_0 : i32, i32
  }
  func.func @transform_22(%arg0: i32) -> (i32, i32) {
    %c0_i32 = arith.constant 0 : i32
    %c0_i32_0 = arith.constant 0 : i32
    %c0_i32_1 = arith.constant 0 : i32
    return %c0_i32, %c0_i32_0 : i32, i32
  }
  func.func @transform_23(%arg0: i32) -> (i32, i32) {
    %c0_i32 = arith.constant 0 : i32
    %c0_i32_0 = arith.constant 0 : i32
    %c0_i32_1 = arith.constant 0 : i32
    return %c0_i32, %c0_i32_0 : i32, i32
  }
  func.func @transform_24(%arg0: i32) -> (i32, i32) {
    %c0_i32 = arith.constant 0 : i32
    %c0_i32_0 = arith.constant 0 : i32
    %c0_i32_1 = arith.constant 0 : i32
    return %c0_i32, %c0_i32_0 : i32, i32
  }
  func.func @transform_25(%arg0: i32) -> (i32, i32) {
    %c0_i32 = arith.constant 0 : i32
    %c0_i32_0 = arith.constant 0 : i32
    %c0_i32_1 = arith.constant 0 : i32
    return %c0_i32, %c0_i32_0 : i32, i32
  }
  func.func @transform_26(%arg0: i32) -> (i32, i32) {
    %c0_i32 = arith.constant 0 : i32
    %c0_i32_0 = arith.constant 0 : i32
    %c0_i32_1 = arith.constant 0 : i32
    return %c0_i32, %c0_i32_0 : i32, i32
  }
  func.func @transform_27(%arg0: i32) -> (i32, i32) {
    %c0_i32 = arith.constant 0 : i32
    %c0_i32_0 = arith.constant 0 : i32
    %c0_i32_1 = arith.constant 0 : i32
    return %c0_i32, %c0_i32_0 : i32, i32
  }
  func.func @transform_28(%arg0: i32) -> (i32, i32) {
    %c0_i32 = arith.constant 0 : i32
    %c0_i32_0 = arith.constant 0 : i32
    return %arg0, %c0_i32 : i32, i32
  }
}

</mosaic_0001>

<llo_original>
// kernel: tpu_custom_call.1
$region0: #{tpu_custom_call.1}
  #allocation0 [shape = 'u32[]', space=smem, size = 0x4, offset = 0x4, fixed_abs, tag = 'smem constant byte address 0x4 - core index']
  #allocation1 [shape = 'u32[144,128]{1,0:T(1,128)}', space=vmem, size = 0x12000, scoped, tag = 'internal scratch']
  %s0 = inlined_call_operand.hbm [shape: f32[8,128], index: 0, kind: input, shape index: {}]
  %s1 = inlined_call_operand.hbm [shape: f32[8,128], index: 1, kind: output, shape index: {}]
  %s2 = sld [smem:[#allocation0]]
  $region18: #{tpu_custom_call.1} parent=0
    _
  %s4 = ssub.s32 1, %s2
  %s5 = scalar_select 0, %s4, %s2
  $region1: #{tpu_custom_call.1} parent=0
    #allocation2 [shape = 'u8[4096]{0}', space=vmem, size = 0x1000, scoped, tag = 'input window, operand 0, single buffered']
    #allocation3 [shape = 's32[1]{0}', space=sflag, size = 0x4, scoped, tag = 'scoped memory for tpu_custom_call.1']
    #allocation4 [shape = 's32[1]{0}', space=sflag, size = 0x4, scoped, tag = 'scoped memory for tpu_custom_call.1']
    #allocation5 [shape = 'u8[4096]{0}', space=vmem, size = 0x1000, scoped, tag = 'output window, operand 0, single buffered']
    %6 = vsyncpa [#allocation3], 0
    %7 = vsyncpa [#allocation4], 0
    // Predicated region
    $region2: #{tpu_custom_call.1} parent=1 // pred_check
      _
    $region3: #{tpu_custom_call.1} parent=1 // pred_check_branch
      %9 = sbr.rel (0) target = $region5
    $region4: #{tpu_custom_call.1} parent=1 // pred_region
      %s11 = ssub.s32 128, 128
      %12 = vsyncadd [#allocation3], %s11
      %s14 = sshll.u32 [#allocation2], 4
      %s15 = int_to_ptr.vmem [resolvable:$true] %s14
      %17 = dma.hbm_to_vmem [thread:$0]  %s0, 128, %s15, [#allocation3]
    $region5: #{tpu_custom_call.1} parent=1 // pred_fallthru
      _
    // Predicated region
    $region6: #{tpu_custom_call.1} parent=1 // pred_check
      _
    $region7: #{tpu_custom_call.1} parent=1 // pred_check_branch
      %19 = sbr.rel (0) target = $region9
    $region8: #{tpu_custom_call.1} parent=1 // pred_region
      %20 = dma.done [#allocation3], 128
    $region9: #{tpu_custom_call.1} parent=1 // pred_fallthru
      _
    %v21 = vld [vmem:[#allocation2] sm:$0xff]
    %22 = vst [vmem:[#allocation5] sm:$0xff] %v21
    // Predicated region
    $region10: #{tpu_custom_call.1} parent=1 // pred_check
      _
    $region11: #{tpu_custom_call.1} parent=1 // pred_check_branch
      %24 = sbr.rel (0) target = $region13
    $region12: #{tpu_custom_call.1} parent=1 // pred_region
      %s26 = ssub.s32 128, 128
      %27 = vsyncadd [#allocation4], %s26
      %s29 = sshll.u32 [#allocation5], 4
      %s30 = int_to_ptr.vmem [resolvable:$true] %s29
      %32 = dma.vmem_to_hbm [thread:$0]  %s30, 128, %s1, [#allocation4]
    $region13: #{tpu_custom_call.1} parent=1 // pred_fallthru
      _
    // Predicated region
    $region14: #{tpu_custom_call.1} parent=1 // pred_check
      _
    $region15: #{tpu_custom_call.1} parent=1 // pred_check_branch
      %34 = sbr.rel (0) target = $region17
    $region16: #{tpu_custom_call.1} parent=1 // pred_region
      %35 = dma.done [#allocation4], 128
    $region17: #{tpu_custom_call.1} parent=1 // pred_fallthru
      _
    %36 = vsyncpa [#allocation3], 1
    %37 = vsyncpa [#allocation4], 1

// kernel: tpu_custom_call.1
$region0: #{tpu_custom_call.1}
  #allocation0 [shape = 'u32[]', space=smem, size = 0x4, offset = 0x4, fixed_abs, tag = 'smem constant byte address 0x4 - core index']
  #allocation1 [shape = 'u32[144,128]{1,0:T(1,128)}', space=vmem, size = 0x12000, scoped, tag = 'internal scratch']
  %s0 = inlined_call_operand.vmem [shape: f32[98,2], index: 0, kind: input, shape index: {}]
  %s1 = inlined_call_operand.hbm [shape: f32[2,98], index: 1, kind: input, shape index: {}]
  %s2 = inlined_call_operand.hbm [shape: f32[98,98], index: 2, kind: input, shape index: {}]
  %s3 = inlined_call_operand.hbm [shape: f32[98,98], index: 3, kind: input, shape index: {}]
  %s4 = inlined_call_operand.hbm [shape: f32[98,256], index: 4, kind: input, shape index: {}]
  %s5 = inlined_call_operand.hbm [shape: f32[98,256], index: 5, kind: input, shape index: {}]
  %s6 = inlined_call_operand.hbm [shape: f32[98,256], index: 6, kind: input, shape index: {}]
  %s7 = inlined_call_operand.hbm [shape: bf16[256,256], index: 7, kind: input, shape index: {}]
  %s8 = inlined_call_operand.hbm [shape: f32[1,256], index: 8, kind: input, shape index: {}]
  %s9 = inlined_call_operand.hbm [shape: bf16[256,256], index: 9, kind: input, shape index: {}]
  %s10 = inlined_call_operand.hbm [shape: f32[1,256], index: 10, kind: input, shape index: {}]
  %s11 = inlined_call_operand.hbm [shape: bf16[256,256], index: 11, kind: input, shape index: {}]
  %s12 = inlined_call_operand.hbm [shape: f32[1,256], index: 12, kind: input, shape index: {}]
  %s13 = inlined_call_operand.hbm [shape: bf16[256,256], index: 13, kind: input, shape index: {}]
  %s14 = inlined_call_operand.hbm [shape: f32[1,256], index: 14, kind: input, shape index: {}]
  %s15 = inlined_call_operand.hbm [shape: bf16[256,384], index: 15, kind: input, shape index: {}]
  %s16 = inlined_call_operand.hbm [shape: f32[1,384], index: 16, kind: input, shape index: {}]
  %s17 = inlined_call_operand.vmem [shape: bf16[128,256], index: 17, kind: input, shape index: {}]
  %s18 = inlined_call_operand.hbm [shape: f32[1,256], index: 18, kind: input, shape index: {}]
  %s19 = inlined_call_operand.hbm [shape: f32[1,256], index: 19, kind: input, shape index: {}]
  %s20 = inlined_call_operand.hbm [shape: f32[1,256], index: 20, kind: input, shape index: {}]
  %s21 = inlined_call_operand.hbm [shape: bf16[256,768], index: 21, kind: input, shape index: {}]
  %s22 = inlined_call_operand.hbm [shape: bf16[256,768], index: 22, kind: input, shape index: {}]
  %s23 = inlined_call_operand.vmem [shape: f32[1,768], index: 23, kind: input, shape index: {}]
  %s24 = inlined_call_operand.hbm [shape: bf16[256,512], index: 24, kind: input, shape index: {}]
  %s25 = inlined_call_operand.vmem [shape: f32[1,512], index: 25, kind: input, shape index: {}]
  %s26 = inlined_call_operand.vmem [shape: f32[1,512], index: 26, kind: input, shape index: {}]
  %s27 = inlined_call_operand.vmem [shape: f32[1,512], index: 27, kind: input, shape index: {}]
  %s28 = inlined_call_operand.hbm [shape: bf16[98,512], index: 28, kind: output, shape index: {}]
  %s29 = sld [smem:[#allocation0]]
  $region210: #{tpu_custom_call.1} parent=0
    _
  %s31 = ssub.s32 1, %s29
  %s32 = scalar_select 0, %s31, %s29
  $region1: #{tpu_custom_call.1} parent=0
    #allocation2 [shape = 'u8[1024]{0}', space=vmem, size = 0x400, scoped, tag = 'input window, operand 1, single buffered']
    #allocation3 [shape = 's32[1]{0}', space=sflag, size = 0x4, scoped, tag = 'scoped memory for tpu_custom_call.1']
    #allocation4 [shape = 's32[1]{0}', space=sflag, size = 0x4, scoped, tag = 'scoped memory for tpu_custom_call.1']
    #allocation5 [shape = 'u8[53248]{0}', space=vmem, size = 0xd000, scoped, tag = 'input window, operand 2, single buffered']
    #allocation6 [shape = 's32[1]{0}', space=sflag, size = 0x4, scoped, tag = 'scoped memory for tpu_custom_call.1']
    #allocation7 [shape = 'u8[53248]{0}', space=vmem, size = 0xd000, scoped, tag = 'input window, operand 3, single buffered']
    #allocation8 [shape = 'u8[106496]{0}', space=vmem, size = 0x1a000, scoped, tag = 'input window, operand 4, single buffered']
    #allocation9 [shape = 's32[1]{0}', space=sflag, size = 0x4, scoped, tag = 'scoped memory for tpu_custom_call.1']
    #allocation10 [shape = 'u8[106496]{0}', space=vmem, size = 0x1a000, scoped, tag = 'input window, operand 5, single buffered']
    #allocation11 [shape = 'u8[106496]{0}', space=vmem, size = 0x1a000, scoped, tag = 'input window, operand 6, single buffered']
    #allocation12 [shape = 's32[1]{0}', space=sflag, size = 0x4, scoped, tag = 'scoped memory for tpu_custom_call.1']
    #allocation13 [shape = 'u8[131072]{0}', space=vmem, size = 0x20000, scoped, tag = 'input window, operand 7, single buffered']
    #allocation14 [shape = 'u8[1024]{0}', space=vmem, size = 0x400, scoped, tag = 'input window, operand 8, single buffered']
    #allocation15 [shape = 's32[1]{0}', space=sflag, size = 0x4, scoped, tag = 'scoped memory for tpu_custom_call.1']
    #allocation16 [shape = 'u8[131072]{0}', space=vmem, size = 0x20000, scoped, tag = 'input window, operand 9, single buffered']
    #allocation17 [shape = 'u8[1024]{0}', space=vmem, size = 0x400, scoped, tag = 'input window, operand 10, single buffered']
    #allocation18 [shape = 's32[1]{0}', space=sflag, size = 0x4, scoped, tag = 'scoped memory for tpu_custom_call.1']
    #allocation19 [shape = 'u8[131072]{0}', space=vmem, size = 0x20000, scoped, tag = 'input window, operand 11, single buffered']
    #allocation20 [shape = 'u8[1024]{0}', space=vmem, size = 0x400, scoped, tag = 'input window, operand 12, single buffered']
    #allocation21 [shape = 's32[1]{0}', space=sflag, size = 0x4, scoped, tag = 'scoped memory for tpu_custom_call.1']
    #allocation22 [shape = 'u8[131072]{0}', space=vmem, size = 0x20000, scoped, tag = 'input window, operand 13, single buffered']
    #allocation23 [shape = 'u8[1024]{0}', space=vmem, size = 0x400, scoped, tag = 'input window, operand 14, single buffered']
    #allocation24 [shape = 's32[1]{0}', space=sflag, size = 0x4, scoped, tag = 'scoped memory for tpu_custom_call.1']
    #allocation25 [shape = 'u8[196608]{0}', space=vmem, size = 0x30000, scoped, tag = 'input window, operand 15, single buffered']
    #allocation26 [shape = 'u8[1536]{0}', space=vmem, size = 0x800, scoped, tag = 'input window, operand 16, single buffered']
    #allocation27 [shape = 's32[1]{0}', space=sflag, size = 0x4, scoped, tag = 'scoped memory for tpu_custom_call.1']
    #allocation28 [shape = 'u8[1024]{0}', space=vmem, size = 0x400, scoped, tag = 'input window, operand 18, single buffered']
    #allocation29 [shape = 'u8[1024]{0}', space=vmem, size = 0x400, scoped, tag = 'input window, operand 19, single buffered']
    #allocation30 [shape = 's32[1]{0}', space=sflag, size = 0x4, scoped, tag = 'scoped memory for tpu_custom_call.1']
    #allocation31 [shape = 'u8[1024]{0}', space=vmem, size = 0x400, scoped, tag = 'input window, operand 20, single buffered']
    #allocation32 [shape = 'u8[393216]{0}', space=vmem, size = 0x60000, scoped, tag = 'input window, operand 21, single buffered']
    #allocation33 [shape = 's32[1]{0}', space=sflag, size = 0x4, scoped, tag = 'scoped memory for tpu_custom_call.1']
    #allocation34 [shape = 'u8[393216]{0}', space=vmem, size = 0x60000, scoped, tag = 'input window, operand 22, single buffered']
    #allocation35 [shape = 'u8[262144]{0}', space=vmem, size = 0x40000, scoped, tag = 'input window, operand 24, single buffered']
    #allocation36 [shape = 's32[1]{0}', space=sflag, size = 0x4, scoped, tag = 'scoped memory for tpu_custom_call.1']
    #allocation37 [shape = 'u8[106496]{0}', space=vmem, size = 0x1a000, scoped, tag = 'output window, operand 0, single buffered']
    %33 = vsyncpa [#allocation3], 0
    %34 = vsyncpa [#allocation6], 0
    %35 = vsyncpa [#allocation9], 0
    %36 = vsyncpa [#allocation12], 0
    %37 = vsyncpa [#allocation15], 0
    %38 = vsyncpa [#allocation18], 0
    %39 = vsyncpa [#allocation21], 0
    %40 = vsyncpa [#allocation24], 0
    %41 = vsyncpa [#allocation27], 0
    %42 = vsyncpa [#allocation30], 0
    %43 = vsyncpa [#allocation33], 0
    %44 = vsyncpa [#allocation36], 0
    %45 = vsyncpa [#allocation4], 0
    // Predicated region
    $region2: #{tpu_custom_call.1} parent=1 // pred_check
      _
    $region3: #{tpu_custom_call.1} parent=1 // pred_check_branch
      %47 = sbr.rel (0) target = $region5
    $region4: #{tpu_custom_call.1} parent=1 // pred_region
      _
    $region5: #{tpu_custom_call.1} parent=1 // pred_fallthru
      _
    // Predicated region
    $region6: #{tpu_custom_call.1} parent=1 // pred_check
      _
    $region7: #{tpu_custom_call.1} parent=1 // pred_check_branch
      %49 = sbr.rel (0) target = $region9
    $region8: #{tpu_custom_call.1} parent=1 // pred_region
      %s51 = ssub.s32 32, 32
      %52 = vsyncadd [#allocation3], %s51
      %s54 = sshll.u32 [#allocation2], 4
      %s55 = int_to_ptr.vmem [resolvable:$true] %s54
      %57 = dma.hbm_to_vmem [thread:$0]  %s1, 32, %s55, [#allocation3]
    $region9: #{tpu_custom_call.1} parent=1 // pred_fallthru
      _
    // Predicated region
    $region10: #{tpu_custom_call.1} parent=1 // pred_check
      _
    $region11: #{tpu_custom_call.1} parent=1 // pred_check_branch
      %59 = sbr.rel (0) target = $region13
    $region12: #{tpu_custom_call.1} parent=1 // pred_region
      %s61 = ssub.s32 1664, 1664
      %62 = vsyncadd [#allocation6], %s61
      %s63 = sshll.u32 [#allocation5], 4
      %s64 = int_to_ptr.vmem [resolvable:$true] %s63
      %69 = dma.hbm_to_vmem [thread:$0]  %s2, 1664, %s64, [#allocation6], 128, 128, 8
    $region13: #{tpu_custom_call.1} parent=1 // pred_fallthru
      _
    // Predicated region
    $region14: #{tpu_custom_call.1} parent=1 // pred_check
      _
    $region15: #{tpu_custom_call.1} parent=1 // pred_check_branch
      %71 = sbr.rel (0) target = $region17
    $region16: #{tpu_custom_call.1} parent=1 // pred_region
      %s73 = ssub.s32 1664, 1664
      %74 = vsyncadd [#allocation6], %s73
      %s75 = sshll.u32 [#allocation7], 4
      %s76 = int_to_ptr.vmem [resolvable:$true] %s75
      %81 = dma.hbm_to_vmem [thread:$0]  %s3, 1664, %s76, [#allocation6], 128, 128, 8
    $region17: #{tpu_custom_call.1} parent=1 // pred_fallthru
      _
    // Predicated region
    $region18: #{tpu_custom_call.1} parent=1 // pred_check
      _
    $region19: #{tpu_custom_call.1} parent=1 // pred_check_branch
      %83 = sbr.rel (0) target = $region21
    $region20: #{tpu_custom_call.1} parent=1 // pred_region
      %s85 = ssub.s32 3328, 3328
      %86 = vsyncadd [#allocation9], %s85
      %s87 = sshll.u32 [#allocation8], 4
      %s88 = int_to_ptr.vmem [resolvable:$true] %s87
      %93 = dma.hbm_to_vmem [thread:$0]  %s4, 3328, %s88, [#allocation9], 256, 256, 16
    $region21: #{tpu_custom_call.1} parent=1 // pred_fallthru
      _
    // Predicated region
    $region22: #{tpu_custom_call.1} parent=1 // pred_check
      _
    $region23: #{tpu_custom_call.1} parent=1 // pred_check_branch
      %95 = sbr.rel (0) target = $region25
    $region24: #{tpu_custom_call.1} parent=1 // pred_region
      %s97 = ssub.s32 3328, 3328
      %98 = vsyncadd [#allocation9], %s97
      %s99 = sshll.u32 [#allocation10], 4
      %s100 = int_to_ptr.vmem [resolvable:$true] %s99
      %105 = dma.hbm_to_vmem [thread:$0]  %s5, 3328, %s100, [#allocation9], 256, 256, 16
    $region25: #{tpu_custom_call.1} parent=1 // pred_fallthru
      _
    // Predicated region
    $region26: #{tpu_custom_call.1} parent=1 // pred_check
      _
    $region27: #{tpu_custom_call.1} parent=1 // pred_check_branch
      %107 = sbr.rel (0) target = $region29
    $region28: #{tpu_custom_call.1} parent=1 // pred_region
      %s109 = ssub.s32 3328, 3328
      %110 = vsyncadd [#allocation12], %s109
      %s111 = sshll.u32 [#allocation11], 4
      %s112 = int_to_ptr.vmem [resolvable:$true] %s111
      %117 = dma.hbm_to_vmem [thread:$0]  %s6, 3328, %s112, [#allocation12], 256, 256, 16
    $region29: #{tpu_custom_call.1} parent=1 // pred_fallthru
      _
    // Predicated region
    $region30: #{tpu_custom_call.1} parent=1 // pred_check
      _
    $region31: #{tpu_custom_call.1} parent=1 // pred_check_branch
      %119 = sbr.rel (0) target = $region33
    $region32: #{tpu_custom_call.1} parent=1 // pred_region
      %s121 = ssub.s32 4096, 4096
      %122 = vsyncadd [#allocation12], %s121
      %s123 = sshll.u32 [#allocation13], 4
      %s124 = int_to_ptr.vmem [resolvable:$true] %s123
      %129 = dma.hbm_to_vmem [thread:$0]  %s7, 4096, %s124, [#allocation12], 128, 128, 8
    $region33: #{tpu_custom_call.1} parent=1 // pred_fallthru
      _
    // Predicated region
    $region34: #{tpu_custom_call.1} parent=1 // pred_check
      _
    $region35: #{tpu_custom_call.1} parent=1 // pred_check_branch
      %131 = sbr.rel (0) target = $region37
    $region36: #{tpu_custom_call.1} parent=1 // pred_region
      %s133 = ssub.s32 32, 32
      %134 = vsyncadd [#allocation15], %s133
      %s136 = sshll.u32 [#allocation14], 4
      %s137 = int_to_ptr.vmem [resolvable:$true] %s136
      %139 = dma.hbm_to_vmem [thread:$0]  %s8, 32, %s137, [#allocation15]
    $region37: #{tpu_custom_call.1} parent=1 // pred_fallthru
      _
    // Predicated region
    $region38: #{tpu_custom_call.1} parent=1 // pred_check
      _
    $region39: #{tpu_custom_call.1} parent=1 // pred_check_branch
      %141 = sbr.rel (0) target = $region41
    $region40: #{tpu_custom_call.1} parent=1 // pred_region
      %s143 = ssub.s32 4096, 4096
      %144 = vsyncadd [#allocation15], %s143
      %s145 = sshll.u32 [#allocation16], 4
      %s146 = int_to_ptr.vmem [resolvable:$true] %s145
      %151 = dma.hbm_to_vmem [thread:$0]  %s9, 4096, %s146, [#allocation15], 128, 128, 8
    $region41: #{tpu_custom_call.1} parent=1 // pred_fallthru
      _
    // Predicated region
    $region42: #{tpu_custom_call.1} parent=1 // pred_check
      _
    $region43: #{tpu_custom_call.1} parent=1 // pred_check_branch
      %153 = sbr.rel (0) target = $region45
    $region44: #{tpu_custom_call.1} parent=1 // pred_region
      %s155 = ssub.s32 32, 32
      %156 = vsyncadd [#allocation18], %s155
      %s158 = sshll.u32 [#allocation17], 4
      %s159 = int_to_ptr.vmem [resolvable:$true] %s158
      %161 = dma.hbm_to_vmem [thread:$0]  %s10, 32, %s159, [#allocation18]
    $region45: #{tpu_custom_call.1} parent=1 // pred_fallthru
      _
    // Predicated region
    $region46: #{tpu_custom_call.1} parent=1 // pred_check
      _
    $region47: #{tpu_custom_call.1} parent=1 // pred_check_branch
      %163 = sbr.rel (0) target = $region49
    $region48: #{tpu_custom_call.1} parent=1 // pred_region
      %s165 = ssub.s32 4096, 4096
      %166 = vsyncadd [#allocation18], %s165
      %s167 = sshll.u32 [#allocation19], 4
      %s168 = int_to_ptr.vmem [resolvable:$true] %s167
      %173 = dma.hbm_to_vmem [thread:$0]  %s11, 4096, %s168, [#allocation18], 128, 128, 8
    $region49: #{tpu_custom_call.1} parent=1 // pred_fallthru
      _
    // Predicated region
    $region50: #{tpu_custom_call.1} parent=1 // pred_check
      _
    $region51: #{tpu_custom_call.1} parent=1 // pred_check_branch
      %175 = sbr.rel (0) target = $region53
    $region52: #{tpu_custom_call.1} parent=1 // pred_region
      %s177 = ssub.s32 32, 32
      %178 = vsyncadd [#allocation21], %s177
      %s180 = sshll.u32 [#allocation20], 4
      %s181 = int_to_ptr.vmem [resolvable:$true] %s180
      %183 = dma.hbm_to_vmem [thread:$0]  %s12, 32, %s181, [#allocation21]
    $region53: #{tpu_custom_call.1} parent=1 // pred_fallthru
      _
    // Predicated region
    $region54: #{tpu_custom_call.1} parent=1 // pred_check
      _
    $region55: #{tpu_custom_call.1} parent=1 // pred_check_branch
      %185 = sbr.rel (0) target = $region57
    $region56: #{tpu_custom_call.1} parent=1 // pred_region
      %s187 = ssub.s32 4096, 4096
      %188 = vsyncadd [#allocation21], %s187
      %s189 = sshll.u32 [#allocation22], 4
      %s190 = int_to_ptr.vmem [resolvable:$true] %s189
      %195 = dma.hbm_to_vmem [thread:$0]  %s13, 4096, %s190, [#allocation21], 128, 128, 8
    $region57: #{tpu_custom_call.1} parent=1 // pred_fallthru
      _
    // Predicated region
    $region58: #{tpu_custom_call.1} parent=1 // pred_check
      _
    $region59: #{tpu_custom_call.1} parent=1 // pred_check_branch
      %197 = sbr.rel (0) target = $region61
    $region60: #{tpu_custom_call.1} parent=1 // pred_region
      %s199 = ssub.s32 32, 32
      %200 = vsyncadd [#allocation24], %s199
      %s202 = sshll.u32 [#allocation23], 4
      %s203 = int_to_ptr.vmem [resolvable:$true] %s202
      %205 = dma.hbm_to_vmem [thread:$0]  %s14, 32, %s203, [#allocation24]
    $region61: #{tpu_custom_call.1} parent=1 // pred_fallthru
      _
    // Predicated region
    $region62: #{tpu_custom_call.1} parent=1 // pred_check
      _
    $region63: #{tpu_custom_call.1} parent=1 // pred_check_branch
      %207 = sbr.rel (0) target = $region65
    $region64: #{tpu_custom_call.1} parent=1 // pred_region
      %s209 = ssub.s32 6144, 6144
      %210 = vsyncadd [#allocation24], %s209
      %s211 = sshll.u32 [#allocation25], 4
      %s212 = int_to_ptr.vmem [resolvable:$true] %s211
      %217 = dma.hbm_to_vmem [thread:$0]  %s15, 6144, %s212, [#allocation24], 192, 192, 12
    $region65: #{tpu_custom_call.1} parent=1 // pred_fallthru
      _
    // Predicated region
    $region66: #{tpu_custom_call.1} parent=1 // pred_check
      _
    $region67: #{tpu_custom_call.1} parent=1 // pred_check_branch
      %219 = sbr.rel (0) target = $region69
    $region68: #{tpu_custom_call.1} parent=1 // pred_region
      %s221 = ssub.s32 48, 48
      %222 = vsyncadd [#allocation27], %s221
      %s224 = sshll.u32 [#allocation26], 4
      %s225 = int_to_ptr.vmem [resolvable:$true] %s224
      %227 = dma.hbm_to_vmem [thread:$0]  %s16, 48, %s225, [#allocation27]
    $region69: #{tpu_custom_call.1} parent=1 // pred_fallthru
      _
    // Predicated region
    $region70: #{tpu_custom_call.1} parent=1 // pred_check
      _
    $region71: #{tpu_custom_call.1} parent=1 // pred_check_branch
      %229 = sbr.rel (0) target = $region73
    $region72: #{tpu_custom_call.1} parent=1 // pred_region
      _
    $region73: #{tpu_custom_call.1} parent=1 // pred_fallthru
      _
    // Predicated region
    $region74: #{tpu_custom_call.1} parent=1 // pred_check
      _
    $region75: #{tpu_custom_call.1} parent=1 // pred_check_branch
      %231 = sbr.rel (0) target = $region77
    $region76: #{tpu_custom_call.1} parent=1 // pred_region
      %s233 = ssub.s32 32, 32
      %234 = vsyncadd [#allocation27], %s233
      %s236 = sshll.u32 [#allocation28], 4
      %s237 = int_to_ptr.vmem [resolvable:$true] %s236
      %239 = dma.hbm_to_vmem [thread:$0]  %s18, 32, %s237, [#allocation27]
    $region77: #{tpu_custom_call.1} parent=1 // pred_fallthru
      _
    // Predicated region
    $region78: #{tpu_custom_call.1} parent=1 // pred_check
      _
    $region79: #{tpu_custom_call.1} parent=1 // pred_check_branch
      %241 = sbr.rel (0) target = $region81
    $region80: #{tpu_custom_call.1} parent=1 // pred_region
      %s243 = ssub.s32 32, 32
      %244 = vsyncadd [#allocation30], %s243
      %s246 = sshll.u32 [#allocation29], 4
      %s247 = int_to_ptr.vmem [resolvable:$true] %s246
      %249 = dma.hbm_to_vmem [thread:$0]  %s19, 32, %s247, [#allocation30]
    $region81: #{tpu_custom_call.1} parent=1 // pred_fallthru
      _
    // Predicated region
    $region82: #{tpu_custom_call.1} parent=1 // pred_check
      _
    $region83: #{tpu_custom_call.1} parent=1 // pred_check_branch
      %251 = sbr.rel (0) target = $region85
    $region84: #{tpu_custom_call.1} parent=1 // pred_region
      %s253 = ssub.s32 32, 32
      %254 = vsyncadd [#allocation30], %s253
      %s256 = sshll.u32 [#allocation31], 4
      %s257 = int_to_ptr.vmem [resolvable:$true] %s256
      %259 = dma.hbm_to_vmem [thread:$0]  %s20, 32, %s257, [#allocation30]
    $region85: #{tpu_custom_call.1} parent=1 // pred_fallthru
      _
    // Predicated region
    $region86: #{tpu_custom_call.1} parent=1 // pred_check
      _
    $region87: #{tpu_custom_call.1} parent=1 // pred_check_branch
      %261 = sbr.rel (0) target = $region89
    $region88: #{tpu_custom_call.1} parent=1 // pred_region
      %s263 = ssub.s32 12288, 12288
      %264 = vsyncadd [#allocation33], %s263
      %s265 = sshll.u32 [#allocation32], 4
      %s266 = int_to_ptr.vmem [resolvable:$true] %s265
      %271 = dma.hbm_to_vmem [thread:$0]  %s21, 12288, %s266, [#allocation33], 384, 384, 24
    $region89: #{tpu_custom_call.1} parent=1 // pred_fallthru
      _
    // Predicated region
    $region90: #{tpu_custom_call.1} parent=1 // pred_check
      _
    $region91: #{tpu_custom_call.1} parent=1 // pred_check_branch
      %273 = sbr.rel (0) target = $region93
    $region92: #{tpu_custom_call.1} parent=1 // pred_region
      %s275 = ssub.s32 12288, 12288
      %276 = vsyncadd [#allocation33], %s275
      %s277 = sshll.u32 [#allocation34], 4
      %s278 = int_to_ptr.vmem [resolvable:$true] %s277
      %283 = dma.hbm_to_vmem [thread:$0]  %s22, 12288, %s278, [#allocation33], 384, 384, 24
    $region93: #{tpu_custom_call.1} parent=1 // pred_fallthru
      _
    // Predicated region
    $region94: #{tpu_custom_call.1} parent=1 // pred_check
      _
    $region95: #{tpu_custom_call.1} parent=1 // pred_check_branch
      %285 = sbr.rel (0) target = $region97
    $region96: #{tpu_custom_call.1} parent=1 // pred_region
      _
    $region97: #{tpu_custom_call.1} parent=1 // pred_fallthru
      _
    // Predicated region
    $region98: #{tpu_custom_call.1} parent=1 // pred_check
      _
    $region99: #{tpu_custom_call.1} parent=1 // pred_check_branch
      %287 = sbr.rel (0) target = $region101
    $region100: #{tpu_custom_call.1} parent=1 // pred_region
      %s289 = ssub.s32 8192, 8192
      %290 = vsyncadd [#allocation36], %s289
      %s291 = sshll.u32 [#allocation35], 4
      %s292 = int_to_ptr.vmem [resolvable:$true] %s291
      %297 = dma.hbm_to_vmem [thread:$0]  %s24, 8192, %s292, [#allocation36], 256, 256, 16
    $region101: #{tpu_custom_call.1} parent=1 // pred_fallthru
      _
    // Predicated region
    $region102: #{tpu_custom_call.1} parent=1 // pred_check
      _
    $region103: #{tpu_custom_call.1} parent=1 // pred_check_branch
      %299 = sbr.rel (0) target = $region105
    $region104: #{tpu_custom_call.1} parent=1 // pred_region
      _
    $region105: #{tpu_custom_call.1} parent=1 // pred_fallthru
      _
    // Predicated region
    $region106: #{tpu_custom_call.1} parent=1 // pred_check
      _
    $region107: #{tpu_custom_call.1} parent=1 // pred_check_branch
      %301 = sbr.rel (0) target = $region109
    $region108: #{tpu_custom_call.1} parent=1 // pred_region
      _
    $region109: #{tpu_custom_call.1} parent=1 // pred_fallthru
      _
    // Predicated region
    $region110: #{tpu_custom_call.1} parent=1 // pred_check
      _
    $region111: #{tpu_custom_call.1} parent=1 // pred_check_branch
      %303 = sbr.rel (0) target = $region113
    $region112: #{tpu_custom_call.1} parent=1 // pred_region
      _
    $region113: #{tpu_custom_call.1} parent=1 // pred_fallthru
      _
    // Predicated region
    $region114: #{tpu_custom_call.1} parent=1 // pred_check
      _
    $region115: #{tpu_custom_call.1} parent=1 // pred_check_branch
      %305 = sbr.rel (0) target = $region117
    $region116: #{tpu_custom_call.1} parent=1 // pred_region
      %306 = dma.done [#allocation3], 32
    $region117: #{tpu_custom_call.1} parent=1 // pred_fallthru
      _
    // Predicated region
    $region118: #{tpu_custom_call.1} parent=1 // pred_check
      _
    $region119: #{tpu_custom_call.1} parent=1 // pred_check_branch
      %308 = sbr.rel (0) target = $region121
    $region120: #{tpu_custom_call.1} parent=1 // pred_region
      %309 = dma.done [#allocation6], 1664
    $region121: #{tpu_custom_call.1} parent=1 // pred_fallthru
      _
    // Predicated region
    $region122: #{tpu_custom_call.1} parent=1 // pred_check
      _
    $region123: #{tpu_custom_call.1} parent=1 // pred_check_branch
      %311 = sbr.rel (0) target = $region125
    $region124: #{tpu_custom_call.1} parent=1 // pred_region
      %312 = dma.done [#allocation6], 1664
    $region125: #{tpu_custom_call.1} parent=1 // pred_fallthru
      _
    // Predicated region
    $region126: #{tpu_custom_call.1} parent=1 // pred_check
      _
    $region127: #{tpu_custom_call.1} parent=1 // pred_check_branch
      %314 = sbr.rel (0) target = $region129
    $region128: #{tpu_custom_call.1} parent=1 // pred_region
      %315 = dma.done [#allocation9], 3328
    $region129: #{tpu_custom_call.1} parent=1 // pred_fallthru
      _
    // Predicated region
    $region130: #{tpu_custom_call.1} parent=1 // pred_check
      _
    $region131: #{tpu_custom_call.1} parent=1 // pred_check_branch
      %317 = sbr.rel (0) target = $region133
    $region132: #{tpu_custom_call.1} parent=1 // pred_region
      %318 = dma.done [#allocation9], 3328
    $region133: #{tpu_custom_call.1} parent=1 // pred_fallthru
      _
    // Predicated region
    $region134: #{tpu_custom_call.1} parent=1 // pred_check
      _
    $region135: #{tpu_custom_call.1} parent=1 // pred_check_branch
      %320 = sbr.rel (0) target = $region137
    $region136: #{tpu_custom_call.1} parent=1 // pred_region
      %321 = dma.done [#allocation12], 3328
    $region137: #{tpu_custom_call.1} parent=1 // pred_fallthru
      _
    // Predicated region
    $region138: #{tpu_custom_call.1} parent=1 // pred_check
      _
    $region139: #{tpu_custom_call.1} parent=1 // pred_check_branch
      %323 = sbr.rel (0) target = $region141
    $region140: #{tpu_custom_call.1} parent=1 // pred_region
      %324 = dma.done [#allocation12], 4096
    $region141: #{tpu_custom_call.1} parent=1 // pred_fallthru
      _
    // Predicated region
    $region142: #{tpu_custom_call.1} parent=1 // pred_check
      _
    $region143: #{tpu_custom_call.1} parent=1 // pred_check_branch
      %326 = sbr.rel (0) target = $region145
    $region144: #{tpu_custom_call.1} parent=1 // pred_region
      %327 = dma.done [#allocation15], 32
    $region145: #{tpu_custom_call.1} parent=1 // pred_fallthru
      _
    // Predicated region
    $region146: #{tpu_custom_call.1} parent=1 // pred_check
      _
    $region147: #{tpu_custom_call.1} parent=1 // pred_check_branch
      %329 = sbr.rel (0) target = $region149
    $region148: #{tpu_custom_call.1} parent=1 // pred_region
      %330 = dma.done [#allocation15], 4096
    $region149: #{tpu_custom_call.1} parent=1 // pred_fallthru
      _
    // Predicated region
    $region150: #{tpu_custom_call.1} parent=1 // pred_check
      _
    $region151: #{tpu_custom_call.1} parent=1 // pred_check_branch
      %332 = sbr.rel (0) target = $region153
    $region152: #{tpu_custom_call.1} parent=1 // pred_region
      %333 = dma.done [#allocation18], 32
    $region153: #{tpu_custom_call.1} parent=1 // pred_fallthru
      _
    // Predicated region
    $region154: #{tpu_custom_call.1} parent=1 // pred_check
      _
    $region155: #{tpu_custom_call.1} parent=1 // pred_check_branch
      %335 = sbr.rel (0) target = $region157
    $region156: #{tpu_custom_call.1} parent=1 // pred_region
      %336 = dma.done [#allocation18], 4096
    $region157: #{tpu_custom_call.1} parent=1 // pred_fallthru
      _
    // Predicated region
    $region158: #{tpu_custom_call.1} parent=1 // pred_check
      _
    $region159: #{tpu_custom_call.1} parent=1 // pred_check_branch
      %338 = sbr.rel (0) target = $region161
    $region160: #{tpu_custom_call.1} parent=1 // pred_region
      %339 = dma.done [#allocation21], 32
    $region161: #{tpu_custom_call.1} parent=1 // pred_fallthru
      _
    // Predicated region
    $region162: #{tpu_custom_call.1} parent=1 // pred_check
      _
    $region163: #{tpu_custom_call.1} parent=1 // pred_check_branch
      %341 = sbr.rel (0) target = $region165
    $region164: #{tpu_custom_call.1} parent=1 // pred_region
      %342 = dma.done [#allocation21], 4096
    $region165: #{tpu_custom_call.1} parent=1 // pred_fallthru
      _
    // Predicated region
    $region166: #{tpu_custom_call.1} parent=1 // pred_check
      _
    $region167: #{tpu_custom_call.1} parent=1 // pred_check_branch
      %344 = sbr.rel (0) target = $region169
    $region168: #{tpu_custom_call.1} parent=1 // pred_region
      %345 = dma.done [#allocation24], 32
    $region169: #{tpu_custom_call.1} parent=1 // pred_fallthru
      _
    // Predicated region
    $region170: #{tpu_custom_call.1} parent=1 // pred_check
      _
    $region171: #{tpu_custom_call.1} parent=1 // pred_check_branch
      %347 = sbr.rel (0) target = $region173
    $region172: #{tpu_custom_call.1} parent=1 // pred_region
      %348 = dma.done [#allocation24], 6144
    $region173: #{tpu_custom_call.1} parent=1 // pred_fallthru
      _
    // Predicated region
    $region174: #{tpu_custom_call.1} parent=1 // pred_check
      _
    $region175: #{tpu_custom_call.1} parent=1 // pred_check_branch
      %350 = sbr.rel (0) target = $region177
    $region176: #{tpu_custom_call.1} parent=1 // pred_region
      %351 = dma.done [#allocation27], 48
    $region177: #{tpu_custom_call.1} parent=1 // pred_fallthru
      _
    // Predicated region
    $region178: #{tpu_custom_call.1} parent=1 // pred_check
      _
    $region179: #{tpu_custom_call.1} parent=1 // pred_check_branch
      %353 = sbr.rel (0) target = $region181
    $region180: #{tpu_custom_call.1} parent=1 // pred_region
      %354 = dma.done [#allocation27], 32
    $region181: #{tpu_custom_call.1} parent=1 // pred_fallthru
      _
    // Predicated region
    $region182: #{tpu_custom_call.1} parent=1 // pred_check
      _
    $region183: #{tpu_custom_call.1} parent=1 // pred_check_branch
      %356 = sbr.rel (0) target = $region185
    $region184: #{tpu_custom_call.1} parent=1 // pred_region
      %357 = dma.done [#allocation30], 32
    $region185: #{tpu_custom_call.1} parent=1 // pred_fallthru
      _
    // Predicated region
    $region186: #{tpu_custom_call.1} parent=1 // pred_check
      _
    $region187: #{tpu_custom_call.1} parent=1 // pred_check_branch
      %359 = sbr.rel (0) target = $region189
    $region188: #{tpu_custom_call.1} parent=1 // pred_region
      %360 = dma.done [#allocation30], 32
    $region189: #{tpu_custom_call.1} parent=1 // pred_fallthru
      _
    // Predicated region
    $region190: #{tpu_custom_call.1} parent=1 // pred_check
      _
    $region191: #{tpu_custom_call.1} parent=1 // pred_check_branch
      %362 = sbr.rel (0) target = $region193
    $region192: #{tpu_custom_call.1} parent=1 // pred_region
      %363 = dma.done [#allocation33], 12288
    $region193: #{tpu_custom_call.1} parent=1 // pred_fallthru
      _
    // Predicated region
    $region194: #{tpu_custom_call.1} parent=1 // pred_check
      _
    $region195: #{tpu_custom_call.1} parent=1 // pred_check_branch
      %365 = sbr.rel (0) target = $region197
    $region196: #{tpu_custom_call.1} parent=1 // pred_region
      %366 = dma.done [#allocation33], 12288
    $region197: #{tpu_custom_call.1} parent=1 // pred_fallthru
      _
    // Predicated region
    $region198: #{tpu_custom_call.1} parent=1 // pred_check
      _
    $region199: #{tpu_custom_call.1} parent=1 // pred_check_branch
      %368 = sbr.rel (0) target = $region201
    $region200: #{tpu_custom_call.1} parent=1 // pred_region
      %369 = dma.done [#allocation36], 8192
    $region201: #{tpu_custom_call.1} parent=1 // pred_fallthru
      _
    %v371 = vld [vmem:[%s0] sm:$0xff]
    %v372 = vld [vmem:[%s0 + $0x8] sm:$0xff]
    %v373 = vld [vmem:[%s0 + $0x10] sm:$0xff]
    %v374 = vld [vmem:[%s0 + $0x18] sm:$0xff]
    %v375 = vld [vmem:[%s0 + $0x20] sm:$0xff]
    %v376 = vld [vmem:[%s0 + $0x28] sm:$0xff]
    %v377 = vld [vmem:[%s0 + $0x30] sm:$0xff]
    %v378 = vld [vmem:[%s0 + $0x38] sm:$0xff]
    %v379 = vld [vmem:[%s0 + $0x40] sm:$0xff]
    %v380 = vld [vmem:[%s0 + $0x48] sm:$0xff]
    %v381 = vld [vmem:[%s0 + $0x50] sm:$0xff]
    %v382 = vld [vmem:[%s0 + $0x58] sm:$0xff]
    %v383 = vld [vmem:[%s0 + $0x60] sm:$0x3]
    %v384 = vld [vmem:[#allocation2] sm:$0x3]
    %v385 = vld [vmem:[#allocation5] sm:$0xff]
    %v386 = vld [vmem:[#allocation5 + $0x8] sm:$0xff]
    %v387 = vld [vmem:[#allocation5 + $0x10] sm:$0xff]
    %v388 = vld [vmem:[#allocation5 + $0x18] sm:$0xff]
    %v389 = vld [vmem:[#allocation5 + $0x20] sm:$0xff]
    %v390 = vld [vmem:[#allocation5 + $0x28] sm:$0xff]
    %v391 = vld [vmem:[#allocation5 + $0x30] sm:$0xff]
    %v392 = vld [vmem:[#allocation5 + $0x38] sm:$0xff]
    %v393 = vld [vmem:[#allocation5 + $0x40] sm:$0xff]
    %v394 = vld [vmem:[#allocation5 + $0x48] sm:$0xff]
    %v395 = vld [vmem:[#allocation5 + $0x50] sm:$0xff]
    %v396 = vld [vmem:[#allocation5 + $0x58] sm:$0xff]
    %v397 = vld [vmem:[#allocation5 + $0x60] sm:$0x3]
    %v398 = vld [vmem:[#allocation7] sm:$0xff]
    %v399 = vld [vmem:[#allocation7 + $0x8] sm:$0xff]
    %v400 = vld [vmem:[#allocation7 + $0x10] sm:$0xff]
    %v401 = vld [vmem:[#allocation7 + $0x18] sm:$0xff]
    %v402 = vld [vmem:[#allocation7 + $0x20] sm:$0xff]
    %v403 = vld [vmem:[#allocation7 + $0x28] sm:$0xff]
    %v404 = vld [vmem:[#allocation7 + $0x30] sm:$0xff]
    %v405 = vld [vmem:[#allocation7 + $0x38] sm:$0xff]
    %v406 = vld [vmem:[#allocation7 + $0x40] sm:$0xff]
    %v407 = vld [vmem:[#allocation7 + $0x48] sm:$0xff]
    %v408 = vld [vmem:[#allocation7 + $0x50] sm:$0xff]
    %v409 = vld [vmem:[#allocation7 + $0x58] sm:$0xff]
    %v410 = vld [vmem:[#allocation7 + $0x60] sm:$0x3]
    %v411 = vld [vmem:[#allocation8] sm:$0xff]
    %v412 = vld [vmem:[#allocation8 + $0x8] sm:$0xff]
    %v413 = vld [vmem:[#allocation8 + $0x10] sm:$0xff]
    %v414 = vld [vmem:[#allocation8 + $0x18] sm:$0xff]
    %v415 = vld [vmem:[#allocation8 + $0x20] sm:$0xff]
    %v416 = vld [vmem:[#allocation8 + $0x28] sm:$0xff]
    %v417 = vld [vmem:[#allocation8 + $0x30] sm:$0xff]
    %v418 = vld [vmem:[#allocation8 + $0x38] sm:$0xff]
    %v419 = vld [vmem:[#allocation8 + $0x40] sm:$0xff]
    %v420 = vld [vmem:[#allocation8 + $0x48] sm:$0xff]
    %v421 = vld [vmem:[#allocation8 + $0x50] sm:$0xff]
    %v422 = vld [vmem:[#allocation8 + $0x58] sm:$0xff]
    %v423 = vld [vmem:[#allocation8 + $0x60] sm:$0xff]
    %v424 = vld [vmem:[#allocation8 + $0x68] sm:$0xff]
    %v425 = vld [vmem:[#allocation8 + $0x70] sm:$0xff]
    %v426 = vld [vmem:[#allocation8 + $0x78] sm:$0xff]
    %v427 = vld [vmem:[#allocation8 + $0x80] sm:$0xff]
    %v428 = vld [vmem:[#allocation8 + $0x88] sm:$0xff]
    %v429 = vld [vmem:[#allocation8 + $0x90] sm:$0xff]
    %v430 = vld [vmem:[#allocation8 + $0x98] sm:$0xff]
    %v431 = vld [vmem:[#allocation8 + $0xa0] sm:$0xff]
    %v432 = vld [vmem:[#allocation8 + $0xa8] sm:$0xff]
    %v433 = vld [vmem:[#allocation8 + $0xb0] sm:$0xff]
    %v434 = vld [vmem:[#allocation8 + $0xb8] sm:$0xff]
    %v435 = vld [vmem:[#allocation8 + $0xc0] sm:$0x3]
    %v436 = vld [vmem:[#allocation8 + $0xc8] sm:$0x3]
    %v437 = vld [vmem:[#allocation10] sm:$0xff]
    %v438 = vld [vmem:[#allocation10 + $0x8] sm:$0xff]
    %v439 = vld [vmem:[#allocation10 + $0x10] sm:$0xff]
    %v440 = vld [vmem:[#allocation10 + $0x18] sm:$0xff]
    %v441 = vld [vmem:[#allocation10 + $0x20] sm:$0xff]
    %v442 = vld [vmem:[#allocation10 + $0x28] sm:$0xff]
    %v443 = vld [vmem:[#allocation10 + $0x30] sm:$0xff]
    %v444 = vld [vmem:[#allocation10 + $0x38] sm:$0xff]
    %v445 = vld [vmem:[#allocation10 + $0x40] sm:$0xff]
    %v446 = vld [vmem:[#allocation10 + $0x48] sm:$0xff]
    %v447 = vld [vmem:[#allocation10 + $0x50] sm:$0xff]
    %v448 = vld [vmem:[#allocation10 + $0x58] sm:$0xff]
    %v449 = vld [vmem:[#allocation10 + $0x60] sm:$0xff]
    %v450 = vld [vmem:[#allocation10 + $0x68] sm:$0xff]
    %v451 = vld [vmem:[#allocation10 + $0x70] sm:$0xff]
    %v452 = vld [vmem:[#allocation10 + $0x78] sm:$0xff]
    %v453 = vld [vmem:[#allocation10 + $0x80] sm:$0xff]
    %v454 = vld [vmem:[#allocation10 + $0x88] sm:$0xff]
    %v455 = vld [vmem:[#allocation10 + $0x90] sm:$0xff]
    %v456 = vld [vmem:[#allocation10 + $0x98] sm:$0xff]
    %v457 = vld [vmem:[#allocation10 + $0xa0] sm:$0xff]
    %v458 = vld [vmem:[#allocation10 + $0xa8] sm:$0xff]
    %v459 = vld [vmem:[#allocation10 + $0xb0] sm:$0xff]
    %v460 = vld [vmem:[#allocation10 + $0xb8] sm:$0xff]
    %v461 = vld [vmem:[#allocation10 + $0xc0] sm:$0x3]
    %v462 = vld [vmem:[#allocation10 + $0xc8] sm:$0x3]
    %v463 = vld [vmem:[#allocation11] sm:$0xff]
    %v464 = vld [vmem:[#allocation11 + $0x8] sm:$0xff]
    %v465 = vld [vmem:[#allocation11 + $0x10] sm:$0xff]
    %v466 = vld [vmem:[#allocation11 + $0x18] sm:$0xff]
    %v467 = vld [vmem:[#allocation11 + $0x20] sm:$0xff]
    %v468 = vld [vmem:[#allocation11 + $0x28] sm:$0xff]
    %v469 = vld [vmem:[#allocation11 + $0x30] sm:$0xff]
    %v470 = vld [vmem:[#allocation11 + $0x38] sm:$0xff]
    %v471 = vld [vmem:[#allocation11 + $0x40] sm:$0xff]
    %v472 = vld [vmem:[#allocation11 + $0x48] sm:$0xff]
    %v473 = vld [vmem:[#allocation11 + $0x50] sm:$0xff]
    %v474 = vld [vmem:[#allocation11 + $0x58] sm:$0xff]
    %v475 = vld [vmem:[#allocation11 + $0x60] sm:$0xff]
    %v476 = vld [vmem:[#allocation11 + $0x68] sm:$0xff]
    %v477 = vld [vmem:[#allocation11 + $0x70] sm:$0xff]
    %v478 = vld [vmem:[#allocation11 + $0x78] sm:$0xff]
    %v479 = vld [vmem:[#allocation11 + $0x80] sm:$0xff]
    %v480 = vld [vmem:[#allocation11 + $0x88] sm:$0xff]
    %v481 = vld [vmem:[#allocation11 + $0x90] sm:$0xff]
    %v482 = vld [vmem:[#allocation11 + $0x98] sm:$0xff]
    %v483 = vld [vmem:[#allocation11 + $0xa0] sm:$0xff]
    %v484 = vld [vmem:[#allocation11 + $0xa8] sm:$0xff]
    %v485 = vld [vmem:[#allocation11 + $0xb0] sm:$0xff]
    %v486 = vld [vmem:[#allocation11 + $0xb8] sm:$0xff]
    %v487 = vld [vmem:[#allocation11 + $0xc0] sm:$0x3]
    %v488 = vld [vmem:[#allocation11 + $0xc8] sm:$0x3]
    %vm489 = vcmask 801792
    %v491 = vsel %vm489, %v384, 0
    %vm493 = vcmask 1041408
    %v495 = vsel %vm493, %v435, 0
    %v498 = vsel %vm493, %v436, 0
    %500 = vmatprep.subr.mxu0 0.0
    %501 = vmatpush1.msra.mxu0 0.0
    %502 = vmatprep.subr.mxu0 0.0
    %503 = vmatpush1.msra.mxu0 0.0
    %504 = vmatprep.subr.mxu0 0.0
    %505 = vmatpush1.msra.mxu0 0.0
    %506 = vmatprep.subr.mxu0 %v498
    %507 = vmatpush1.msra.mxu0 %v495
    %508 = vmatprep.subr.mxu0 %v434
    %509 = vmatpush1.msra.mxu0 %v433
    %510 = vmatprep.subr.mxu0 %v432
    %511 = vmatpush1.msra.mxu0 %v431
    %512 = vmatprep.subr.mxu0 %v430
    %513 = vmatpush1.msra.mxu0 %v429
    %514 = vmatprep.subr.mxu0 %v428
    %515 = vmatpush1.msra.mxu0 %v427
    %516 = vmatprep.subr.mxu0 %v426
    %517 = vmatpush1.msra.mxu0 %v425
    %518 = vmatprep.subr.mxu0 %v424
    %519 = vmatpush1.msra.mxu0 %v423
    %520 = vmatprep.subr.mxu0 %v422
    %521 = vmatpush1.msra.mxu0 %v421
    %522 = vmatprep.subr.mxu0 %v420
    %523 = vmatpush1.msra.mxu0 %v419
    %524 = vmatprep.subr.mxu0 %v418
    %525 = vmatpush1.msra.mxu0 %v417
    %526 = vmatprep.subr.mxu0 %v416
    %527 = vmatpush1.msra.mxu0 %v415
    %528 = vmatprep.subr.mxu0 %v414
    %529 = vmatpush1.msra.mxu0 %v413
    %530 = vmatprep.subr.mxu0 %v412
    %531 = vmatpush1.msra.mxu0 %v411
    %532 = vmatprep.subr.mxu0 0.0
    %533 = vmatpush2.msra.mxu0 0.0
    %534 = vmatprep.subr.mxu0 0.0
    %535 = vmatpush2.msra.mxu0 0.0
    %536 = vmatprep.subr.mxu0 0.0
    %537 = vmatpush2.msra.mxu0 0.0
    %538 = vmatprep.subr.mxu0 0.0
    %539 = vmatpush2.msra.mxu0 0.0
    %540 = vmatprep.subr.mxu0 0.0
    %541 = vmatpush2.msra.mxu0 0.0
    %542 = vmatprep.subr.mxu0 0.0
    %543 = vmatpush2.msra.mxu0 0.0
    %544 = vmatprep.subr.mxu0 0.0
    %545 = vmatpush2.msra.mxu0 0.0
    %546 = vmatprep.subr.mxu0 0.0
    %547 = vmatpush2.msra.mxu0 0.0
    %548 = vmatprep.subr.mxu0 0.0
    %549 = vmatpush2.msra.mxu0 0.0
    %550 = vmatprep.subr.mxu0 0.0
    %551 = vmatpush2.msra.mxu0 0.0
    %552 = vmatprep.subr.mxu0 0.0
    %553 = vmatpush2.msra.mxu0 0.0
    %554 = vmatprep.subr.mxu0 0.0
    %555 = vmatpush2.msra.mxu0 0.0
    %556 = vmatprep.subr.mxu0 0.0
    %557 = vmatpush2.msra.mxu0 0.0
    %558 = vmatprep.subr.mxu0 0.0
    %559 = vmatpush2.msra.mxu0 0.0
    %560 = vmatprep.subr.mxu0 0.0
    %561 = vmatpush2.msra.mxu0 0.0
    %562 = vmatprep.subr.mxu0 0.0
    %563 = vmatpush2.msra.mxu0 0.0
    %564 = vmatprep.mubr.f32.mxu0 0.0
    %565 = vmatmul.mubr.f32.gmra.mxu0 %v491
    %v566 = vpop.f32.mrf.mxu0
    %v567 = vadd.f32 0.0, %v566
    %v568 = vpop.f32.mrf.mxu0
    %v569 = vadd.f32 0.0, %v568
    %570 = vdwg.mxu0
    %v571 = vmul.f32 %v567, 0.020408163
    %v572 = vmul.f32 %v569, 0.020408163
    %vm573 = vcmask 15360
    %v575 = vsel %vm573, %v371, 0
    %v578 = vsel %vm573, %v372, 0
    %v581 = vsel %vm573, %v373, 0
    %v584 = vsel %vm573, %v374, 0
    %v587 = vsel %vm573, %v375, 0
    %v590 = vsel %vm573, %v376, 0
    %v593 = vsel %vm573, %v377, 0
    %v596 = vsel %vm573, %v378, 0
    %v599 = vsel %vm573, %v379, 0
    %v602 = vsel %vm573, %v380, 0
    %v605 = vsel %vm573, %v381, 0
    %v608 = vsel %vm573, %v382, 0
    %v611 = vsel %vm573, %v383, 0
    %v614 = vsel %vm493, %v571, 0
    %v617 = vsel %vm493, %v572, 0
    %619 = vmatprep.subr.mxu0 0.0
    %620 = vmatpush1.msra.mxu0 0.0
    %621 = vmatprep.subr.mxu0 0.0
    %622 = vmatpush1.msra.mxu0 0.0
    %623 = vmatprep.subr.mxu0 0.0
    %624 = vmatpush1.msra.mxu0 0.0
    %625 = vmatprep.subr.mxu0 0.0
    %626 = vmatpush1.msra.mxu0 0.0
    %627 = vmatprep.subr.mxu0 0.0
    %628 = vmatpush1.msra.mxu0 0.0
    %629 = vmatprep.subr.mxu0 0.0
    %630 = vmatpush1.msra.mxu0 0.0
    %631 = vmatprep.subr.mxu0 0.0
    %632 = vmatpush1.msra.mxu0 0.0
    %633 = vmatprep.subr.mxu0 0.0
    %634 = vmatpush1.msra.mxu0 0.0
    %635 = vmatprep.subr.mxu0 0.0
    %636 = vmatpush1.msra.mxu0 0.0
    %637 = vmatprep.subr.mxu0 0.0
    %638 = vmatpush1.msra.mxu0 0.0
    %639 = vmatprep.subr.mxu0 0.0
    %640 = vmatpush1.msra.mxu0 0.0
    %641 = vmatprep.subr.mxu0 0.0
    %642 = vmatpush1.msra.mxu0 0.0
    %643 = vmatprep.subr.mxu0 0.0
    %644 = vmatpush1.msra.mxu0 0.0
    %645 = vmatprep.subr.mxu0 0.0
    %646 = vmatpush1.msra.mxu0 0.0
    %647 = vmatprep.subr.mxu0 0.0
    %648 = vmatpush1.msra.mxu0 0.0
    %649 = vmatprep.subr.mxu0 %v617
    %650 = vmatpush1.msra.mxu0 %v614
    %651 = vmatprep.subr.mxu0 0.0
    %652 = vmatpush2.msra.mxu0 0.0
    %653 = vmatprep.subr.mxu0 0.0
    %654 = vmatpush2.msra.mxu0 0.0
    %655 = vmatprep.subr.mxu0 0.0
    %656 = vmatpush2.msra.mxu0 0.0
    %657 = vmatprep.subr.mxu0 0.0
    %658 = vmatpush2.msra.mxu0 0.0
    %659 = vmatprep.subr.mxu0 0.0
    %660 = vmatpush2.msra.mxu0 0.0
    %661 = vmatprep.subr.mxu0 0.0
    %662 = vmatpush2.msra.mxu0 0.0
    %663 = vmatprep.subr.mxu0 0.0
    %664 = vmatpush2.msra.mxu0 0.0
    %665 = vmatprep.subr.mxu0 0.0
    %666 = vmatpush2.msra.mxu0 0.0
    %667 = vmatprep.subr.mxu0 0.0
    %668 = vmatpush2.msra.mxu0 0.0
    %669 = vmatprep.subr.mxu0 0.0
    %670 = vmatpush2.msra.mxu0 0.0
    %671 = vmatprep.subr.mxu0 0.0
    %672 = vmatpush2.msra.mxu0 0.0
    %673 = vmatprep.subr.mxu0 0.0
    %674 = vmatpush2.msra.mxu0 0.0
    %675 = vmatprep.subr.mxu0 0.0
    %676 = vmatpush2.msra.mxu0 0.0
    %677 = vmatprep.subr.mxu0 0.0
    %678 = vmatpush2.msra.mxu0 0.0
    %679 = vmatprep.subr.mxu0 0.0
    %680 = vmatpush2.msra.mxu0 0.0
    %681 = vmatprep.subr.mxu0 0.0
    %682 = vmatpush2.msra.mxu0 0.0
    %683 = vmatprep.mubr.f32.mxu0 0.0
    %684 = vmatmul.mubr.f32.gmra.mxu0 %v575
    %v685 = vpop.f32.mrf.mxu0
    %v686 = vadd.f32 0.0, %v685
    %v687 = vpop.f32.mrf.mxu0
    %v688 = vadd.f32 0.0, %v687
    %689 = vmatprep.mubr.f32.mxu0 0.0
    %690 = vmatmul.mubr.f32.gmra.mxu0 %v578
    %v691 = vpop.f32.mrf.mxu0
    %v692 = vadd.f32 0.0, %v691
    %v693 = vpop.f32.mrf.mxu0
    %v694 = vadd.f32 0.0, %v693
    %695 = vmatprep.mubr.f32.mxu0 0.0
    %696 = vmatmul.mubr.f32.gmra.mxu0 %v581
    %v697 = vpop.f32.mrf.mxu0
    %v698 = vadd.f32 0.0, %v697
    %v699 = vpop.f32.mrf.mxu0
    %v700 = vadd.f32 0.0, %v699
    %701 = vmatprep.mubr.f32.mxu0 0.0
    %702 = vmatmul.mubr.f32.gmra.mxu0 %v584
    %v703 = vpop.f32.mrf.mxu0
    %v704 = vadd.f32 0.0, %v703
    %v705 = vpop.f32.mrf.mxu0
    %v706 = vadd.f32 0.0, %v705
    %707 = vmatprep.mubr.f32.mxu0 0.0
    %708 = vmatmul.mubr.f32.gmra.mxu0 %v587
    %v709 = vpop.f32.mrf.mxu0
    %v710 = vadd.f32 0.0, %v709
    %v711 = vpop.f32.mrf.mxu0
    %v712 = vadd.f32 0.0, %v711
    %713 = vmatprep.mubr.f32.mxu0 0.0
    %714 = vmatmul.mubr.f32.gmra.mxu0 %v590
    %v715 = vpop.f32.mrf.mxu0
    %v716 = vadd.f32 0.0, %v715
    %v717 = vpop.f32.mrf.mxu0
    %v718 = vadd.f32 0.0, %v717
    %719 = vmatprep.mubr.f32.mxu0 0.0
    %720 = vmatmul.mubr.f32.gmra.mxu0 %v593
    %v721 = vpop.f32.mrf.mxu0
    %v722 = vadd.f32 0.0, %v721
    %v723 = vpop.f32.mrf.mxu0
    %v724 = vadd.f32 0.0, %v723
    %725 = vmatprep.mubr.f32.mxu0 0.0
    %726 = vmatmul.mubr.f32.gmra.mxu0 %v596
    %v727 = vpop.f32.mrf.mxu0
    %v728 = vadd.f32 0.0, %v727
    %v729 = vpop.f32.mrf.mxu0
    %v730 = vadd.f32 0.0, %v729
    %731 = vmatprep.mubr.f32.mxu0 0.0
    %732 = vmatmul.mubr.f32.gmra.mxu0 %v599
    %v733 = vpop.f32.mrf.mxu0
    %v734 = vadd.f32 0.0, %v733
    %v735 = vpop.f32.mrf.mxu0
    %v736 = vadd.f32 0.0, %v735
    %737 = vmatprep.mubr.f32.mxu0 0.0
    %738 = vmatmul.mubr.f32.gmra.mxu0 %v602
    %v739 = vpop.f32.mrf.mxu0
    %v740 = vadd.f32 0.0, %v739
    %v741 = vpop.f32.mrf.mxu0
    %v742 = vadd.f32 0.0, %v741
    %743 = vmatprep.mubr.f32.mxu0 0.0
    %744 = vmatmul.mubr.f32.gmra.mxu0 %v605
    %v745 = vpop.f32.mrf.mxu0
    %v746 = vadd.f32 0.0, %v745
    %v747 = vpop.f32.mrf.mxu0
    %v748 = vadd.f32 0.0, %v747
    %749 = vmatprep.mubr.f32.mxu0 0.0
    %750 = vmatmul.mubr.f32.gmra.mxu0 %v608
    %v751 = vpop.f32.mrf.mxu0
    %v752 = vadd.f32 0.0, %v751
    %v753 = vpop.f32.mrf.mxu0
    %v754 = vadd.f32 0.0, %v753
    %755 = vmatprep.mubr.f32.mxu0 0.0
    %756 = vmatmul.mubr.f32.gmra.mxu0 %v611
    %v757 = vpop.f32.mrf.mxu0
    %v758 = vadd.f32 0.0, %v757
    %v759 = vpop.f32.mrf.mxu0
    %v760 = vadd.f32 0.0, %v759
    %761 = vdwg.mxu0
    %v762 = vsub.f32 %v411, %v686
    %v763 = vsub.f32 %v412, %v688
    %v764 = vsub.f32 %v413, %v692
    %v765 = vsub.f32 %v414, %v694
    %v766 = vsub.f32 %v415, %v698
    %v767 = vsub.f32 %v416, %v700
    %v768 = vsub.f32 %v417, %v704
    %v769 = vsub.f32 %v418, %v706
    %v770 = vsub.f32 %v419, %v710
    %v771 = vsub.f32 %v420, %v712
    %v772 = vsub.f32 %v421, %v716
    %v773 = vsub.f32 %v422, %v718
    %v774 = vsub.f32 %v423, %v722
    %v775 = vsub.f32 %v424, %v724
    %v776 = vsub.f32 %v425, %v728
    %v777 = vsub.f32 %v426, %v730
    %v778 = vsub.f32 %v427, %v734
    %v779 = vsub.f32 %v428, %v736
    %v780 = vsub.f32 %v429, %v740
    %v781 = vsub.f32 %v430, %v742
    %v782 = vsub.f32 %v431, %v746
    %v783 = vsub.f32 %v432, %v748
    %v784 = vsub.f32 %v433, %v752
    %v785 = vsub.f32 %v434, %v754
    %v786 = vsub.f32 %v435, %v758
    %v787 = vsub.f32 %v436, %v760
    %v788 = vmul.f32 %v762, %v762
    %v789 = vmul.f32 %v763, %v763
    %v790 = vmul.f32 %v764, %v764
    %v791 = vmul.f32 %v765, %v765
    %v792 = vmul.f32 %v766, %v766
    %v793 = vmul.f32 %v767, %v767
    %v794 = vmul.f32 %v768, %v768
    %v795 = vmul.f32 %v769, %v769
    %v796 = vmul.f32 %v770, %v770
    %v797 = vmul.f32 %v771, %v771
    %v798 = vmul.f32 %v772, %v772
    %v799 = vmul.f32 %v773, %v773
    %v800 = vmul.f32 %v774, %v774
    %v801 = vmul.f32 %v775, %v775
    %v802 = vmul.f32 %v776, %v776
    %v803 = vmul.f32 %v777, %v777
    %v804 = vmul.f32 %v778, %v778
    %v805 = vmul.f32 %v779, %v779
    %v806 = vmul.f32 %v780, %v780
    %v807 = vmul.f32 %v781, %v781
    %v808 = vmul.f32 %v782, %v782
    %v809 = vmul.f32 %v783, %v783
    %v810 = vmul.f32 %v784, %v784
    %v811 = vmul.f32 %v785, %v785
    %v812 = vmul.f32 %v786, %v786
    %v813 = vmul.f32 %v787, %v787
    %v815 = vsel %vm493, %v812, 0
    %v818 = vsel %vm493, %v813, 0
    %820 = vmatprep.subr.mxu0 0.0
    %821 = vmatpush1.msra.mxu0 0.0
    %822 = vmatprep.subr.mxu0 0.0
    %823 = vmatpush1.msra.mxu0 0.0
    %824 = vmatprep.subr.mxu0 0.0
    %825 = vmatpush1.msra.mxu0 0.0
    %826 = vmatprep.subr.mxu0 %v818
    %827 = vmatpush1.msra.mxu0 %v815
    %828 = vmatprep.subr.mxu0 %v811
    %829 = vmatpush1.msra.mxu0 %v810
    %830 = vmatprep.subr.mxu0 %v809
    %831 = vmatpush1.msra.mxu0 %v808
    %832 = vmatprep.subr.mxu0 %v807
    %833 = vmatpush1.msra.mxu0 %v806
    %834 = vmatprep.subr.mxu0 %v805
    %835 = vmatpush1.msra.mxu0 %v804
    %836 = vmatprep.subr.mxu0 %v803
    %837 = vmatpush1.msra.mxu0 %v802
    %838 = vmatprep.subr.mxu0 %v801
    %839 = vmatpush1.msra.mxu0 %v800
    %840 = vmatprep.subr.mxu0 %v799
    %841 = vmatpush1.msra.mxu0 %v798
    %842 = vmatprep.subr.mxu0 %v797
    %843 = vmatpush1.msra.mxu0 %v796
    %844 = vmatprep.subr.mxu0 %v795
    %845 = vmatpush1.msra.mxu0 %v794
    %846 = vmatprep.subr.mxu0 %v793
    %847 = vmatpush1.msra.mxu0 %v792
    %848 = vmatprep.subr.mxu0 %v791
    %849 = vmatpush1.msra.mxu0 %v790
    %850 = vmatprep.subr.mxu0 %v789
    %851 = vmatpush1.msra.mxu0 %v788
    %852 = vmatprep.subr.mxu0 0.0
    %853 = vmatpush2.msra.mxu0 0.0
    %854 = vmatprep.subr.mxu0 0.0
    %855 = vmatpush2.msra.mxu0 0.0
    %856 = vmatprep.subr.mxu0 0.0
    %857 = vmatpush2.msra.mxu0 0.0
    %858 = vmatprep.subr.mxu0 0.0
    %859 = vmatpush2.msra.mxu0 0.0
    %860 = vmatprep.subr.mxu0 0.0
    %861 = vmatpush2.msra.mxu0 0.0
    %862 = vmatprep.subr.mxu0 0.0
    %863 = vmatpush2.msra.mxu0 0.0
    %864 = vmatprep.subr.mxu0 0.0
    %865 = vmatpush2.msra.mxu0 0.0
    %866 = vmatprep.subr.mxu0 0.0
    %867 = vmatpush2.msra.mxu0 0.0
    %868 = vmatprep.subr.mxu0 0.0
    %869 = vmatpush2.msra.mxu0 0.0
    %870 = vmatprep.subr.mxu0 0.0
    %871 = vmatpush2.msra.mxu0 0.0
    %872 = vmatprep.subr.mxu0 0.0
    %873 = vmatpush2.msra.mxu0 0.0
    %874 = vmatprep.subr.mxu0 0.0
    %875 = vmatpush2.msra.mxu0 0.0
    %876 = vmatprep.subr.mxu0 0.0
    %877 = vmatpush2.msra.mxu0 0.0
    %878 = vmatprep.subr.mxu0 0.0
    %879 = vmatpush2.msra.mxu0 0.0
    %880 = vmatprep.subr.mxu0 0.0
    %881 = vmatpush2.msra.mxu0 0.0
    %882 = vmatprep.subr.mxu0 0.0
    %883 = vmatpush2.msra.mxu0 0.0
    %884 = vmatprep.mubr.f32.mxu0 0.0
    %885 = vmatmul.mubr.f32.gmra.mxu0 %v491
    %v886 = vpop.f32.mrf.mxu0
    %v887 = vadd.f32 0.0, %v886
    %v888 = vpop.f32.mrf.mxu0
    %v889 = vadd.f32 0.0, %v888
    %890 = vdwg.mxu0
    %v891 = vmul.f32 %v887, 0.020833334
    %v892 = vmul.f32 %v889, 0.020833334
    %v893 = vadd.f32 %v891, 1e-05
    %v894 = vadd.f32 %v892, 1e-05
    %v895 = vrsqrt.pop %v893
    %v896 = vrsqrt.pop %v894
    %v898 = vsel %vm493, %v895, 0
    %v901 = vsel %vm493, %v896, 0
    %903 = vmatprep.subr.mxu0 0.0
    %904 = vmatpush1.msra.mxu0 0.0
    %905 = vmatprep.subr.mxu0 0.0
    %906 = vmatpush1.msra.mxu0 0.0
    %907 = vmatprep.subr.mxu0 0.0
    %908 = vmatpush1.msra.mxu0 0.0
    %909 = vmatprep.subr.mxu0 0.0
    %910 = vmatpush1.msra.mxu0 0.0
    %911 = vmatprep.subr.mxu0 0.0
    %912 = vmatpush1.msra.mxu0 0.0
    %913 = vmatprep.subr.mxu0 0.0
    %914 = vmatpush1.msra.mxu0 0.0
    %915 = vmatprep.subr.mxu0 0.0
    %916 = vmatpush1.msra.mxu0 0.0
    %917 = vmatprep.subr.mxu0 0.0
    %918 = vmatpush1.msra.mxu0 0.0
    %919 = vmatprep.subr.mxu0 0.0
    %920 = vmatpush1.msra.mxu0 0.0
    %921 = vmatprep.subr.mxu0 0.0
    %922 = vmatpush1.msra.mxu0 0.0
    %923 = vmatprep.subr.mxu0 0.0
    %924 = vmatpush1.msra.mxu0 0.0
    %925 = vmatprep.subr.mxu0 0.0
    %926 = vmatpush1.msra.mxu0 0.0
    %927 = vmatprep.subr.mxu0 0.0
    %928 = vmatpush1.msra.mxu0 0.0
    %929 = vmatprep.subr.mxu0 0.0
    %930 = vmatpush1.msra.mxu0 0.0
    %931 = vmatprep.subr.mxu0 0.0
    %932 = vmatpush1.msra.mxu0 0.0
    %933 = vmatprep.subr.mxu0 %v901
    %934 = vmatpush1.msra.mxu0 %v898
    %935 = vmatprep.subr.mxu0 0.0
    %936 = vmatpush2.msra.mxu0 0.0
    %937 = vmatprep.subr.mxu0 0.0
    %938 = vmatpush2.msra.mxu0 0.0
    %939 = vmatprep.subr.mxu0 0.0
    %940 = vmatpush2.msra.mxu0 0.0
    %941 = vmatprep.subr.mxu0 0.0
    %942 = vmatpush2.msra.mxu0 0.0
    %943 = vmatprep.subr.mxu0 0.0
    %944 = vmatpush2.msra.mxu0 0.0
    %945 = vmatprep.subr.mxu0 0.0
    %946 = vmatpush2.msra.mxu0 0.0
    %947 = vmatprep.subr.mxu0 0.0
    %948 = vmatpush2.msra.mxu0 0.0
    %949 = vmatprep.subr.mxu0 0.0
    %950 = vmatpush2.msra.mxu0 0.0
    %951 = vmatprep.subr.mxu0 0.0
    %952 = vmatpush2.msra.mxu0 0.0
    %953 = vmatprep.subr.mxu0 0.0
    %954 = vmatpush2.msra.mxu0 0.0
    %955 = vmatprep.subr.mxu0 0.0
    %956 = vmatpush2.msra.mxu0 0.0
    %957 = vmatprep.subr.mxu0 0.0
    %958 = vmatpush2.msra.mxu0 0.0
    %959 = vmatprep.subr.mxu0 0.0
    %960 = vmatpush2.msra.mxu0 0.0
    %961 = vmatprep.subr.mxu0 0.0
    %962 = vmatpush2.msra.mxu0 0.0
    %963 = vmatprep.subr.mxu0 0.0
    %964 = vmatpush2.msra.mxu0 0.0
    %965 = vmatprep.subr.mxu0 0.0
    %966 = vmatpush2.msra.mxu0 0.0
    %967 = vmatprep.mubr.f32.mxu0 0.0
    %968 = vmatmul.mubr.f32.gmra.mxu0 %v575
    %v969 = vpop.f32.mrf.mxu0
    %v970 = vadd.f32 0.0, %v969
    %v971 = vpop.f32.mrf.mxu0
    %v972 = vadd.f32 0.0, %v971
    %973 = vmatprep.mubr.f32.mxu0 0.0
    %974 = vmatmul.mubr.f32.gmra.mxu0 %v578
    %v975 = vpop.f32.mrf.mxu0
    %v976 = vadd.f32 0.0, %v975
    %v977 = vpop.f32.mrf.mxu0
    %v978 = vadd.f32 0.0, %v977
    %979 = vmatprep.mubr.f32.mxu0 0.0
    %980 = vmatmul.mubr.f32.gmra.mxu0 %v581
    %v981 = vpop.f32.mrf.mxu0
    %v982 = vadd.f32 0.0, %v981
    %v983 = vpop.f32.mrf.mxu0
    %v984 = vadd.f32 0.0, %v983
    %985 = vmatprep.mubr.f32.mxu0 0.0
    %986 = vmatmul.mubr.f32.gmra.mxu0 %v584
    %v987 = vpop.f32.mrf.mxu0
    %v988 = vadd.f32 0.0, %v987
    %v989 = vpop.f32.mrf.mxu0
    %v990 = vadd.f32 0.0, %v989
    %991 = vmatprep.mubr.f32.mxu0 0.0
    %992 = vmatmul.mubr.f32.gmra.mxu0 %v587
    %v993 = vpop.f32.mrf.mxu0
    %v994 = vadd.f32 0.0, %v993
    %v995 = vpop.f32.mrf.mxu0
    %v996 = vadd.f32 0.0, %v995
    %997 = vmatprep.mubr.f32.mxu0 0.0
    %998 = vmatmul.mubr.f32.gmra.mxu0 %v590
    %v999 = vpop.f32.mrf.mxu0
    %v1000 = vadd.f32 0.0, %v999
    %v1001 = vpop.f32.mrf.mxu0
    %v1002 = vadd.f32 0.0, %v1001
    %1003 = vmatprep.mubr.f32.mxu0 0.0
    %1004 = vmatmul.mubr.f32.gmra.mxu0 %v593
    %v1005 = vpop.f32.mrf.mxu0
    %v1006 = vadd.f32 0.0, %v1005
    %v1007 = vpop.f32.mrf.mxu0
    %v1008 = vadd.f32 0.0, %v1007
    %1009 = vmatprep.mubr.f32.mxu0 0.0
    %1010 = vmatmul.mubr.f32.gmra.mxu0 %v596
    %v1011 = vpop.f32.mrf.mxu0
    %v1012 = vadd.f32 0.0, %v1011
    %v1013 = vpop.f32.mrf.mxu0
    %v1014 = vadd.f32 0.0, %v1013
    %1015 = vmatprep.mubr.f32.mxu0 0.0
    %1016 = vmatmul.mubr.f32.gmra.mxu0 %v599
    %v1017 = vpop.f32.mrf.mxu0
    %v1018 = vadd.f32 0.0, %v1017
    %v1019 = vpop.f32.mrf.mxu0
    %v1020 = vadd.f32 0.0, %v1019
    %1021 = vmatprep.mubr.f32.mxu0 0.0
    %1022 = vmatmul.mubr.f32.gmra.mxu0 %v602
    %v1023 = vpop.f32.mrf.mxu0
    %v1024 = vadd.f32 0.0, %v1023
    %v1025 = vpop.f32.mrf.mxu0
    %v1026 = vadd.f32 0.0, %v1025
    %1027 = vmatprep.mubr.f32.mxu0 0.0
    %1028 = vmatmul.mubr.f32.gmra.mxu0 %v605
    %v1029 = vpop.f32.mrf.mxu0
    %v1030 = vadd.f32 0.0, %v1029
    %v1031 = vpop.f32.mrf.mxu0
    %v1032 = vadd.f32 0.0, %v1031
    %1033 = vmatprep.mubr.f32.mxu0 0.0
    %1034 = vmatmul.mubr.f32.gmra.mxu0 %v608
    %v1035 = vpop.f32.mrf.mxu0
    %v1036 = vadd.f32 0.0, %v1035
    %v1037 = vpop.f32.mrf.mxu0
    %v1038 = vadd.f32 0.0, %v1037
    %1039 = vmatprep.mubr.f32.mxu0 0.0
    %1040 = vmatmul.mubr.f32.gmra.mxu0 %v611
    %v1041 = vpop.f32.mrf.mxu0
    %v1042 = vadd.f32 0.0, %v1041
    %v1043 = vpop.f32.mrf.mxu0
    %v1044 = vadd.f32 0.0, %v1043
    %1045 = vdwg.mxu0
    %v1046 = vmul.f32 %v762, %v970
    %v1047 = vmul.f32 %v763, %v972
    %v1048 = vmul.f32 %v764, %v976
    %v1049 = vmul.f32 %v765, %v978
    %v1050 = vmul.f32 %v766, %v982
    %v1051 = vmul.f32 %v767, %v984
    %v1052 = vmul.f32 %v768, %v988
    %v1053 = vmul.f32 %v769, %v990
    %v1054 = vmul.f32 %v770, %v994
    %v1055 = vmul.f32 %v771, %v996
    %v1056 = vmul.f32 %v772, %v1000
    %v1057 = vmul.f32 %v773, %v1002
    %v1058 = vmul.f32 %v774, %v1006
    %v1059 = vmul.f32 %v775, %v1008
    %v1060 = vmul.f32 %v776, %v1012
    %v1061 = vmul.f32 %v777, %v1014
    %v1062 = vmul.f32 %v778, %v1018
    %v1063 = vmul.f32 %v779, %v1020
    %v1064 = vmul.f32 %v780, %v1024
    %v1065 = vmul.f32 %v781, %v1026
    %v1066 = vmul.f32 %v782, %v1030
    %v1067 = vmul.f32 %v783, %v1032
    %v1068 = vmul.f32 %v784, %v1036
    %v1069 = vmul.f32 %v785, %v1038
    %v1070 = vmul.f32 %v786, %v1042
    %v1071 = vmul.f32 %v787, %v1044
    %v1072 = vpack.c.bf16 %v1048, %v1046
    %v1073 = vpack.c.bf16 %v1049, %v1047
    %v1074 = vpack.c.bf16 %v1052, %v1050
    %v1075 = vpack.c.bf16 %v1053, %v1051
    %v1076 = vpack.c.bf16 %v1056, %v1054
    %v1077 = vpack.c.bf16 %v1057, %v1055
    %v1078 = vpack.c.bf16 %v1060, %v1058
    %v1079 = vpack.c.bf16 %v1061, %v1059
    %v1080 = vpack.c.bf16 %v1064, %v1062
    %v1081 = vpack.c.bf16 %v1065, %v1063
    %v1082 = vpack.c.bf16 %v1068, %v1066
    %v1083 = vpack.c.bf16 %v1069, %v1067
    %v1084 = vpack.c.bf16 %v1070, %v1070
    %v1085 = vpack.c.bf16 %v1071, %v1071
    %v1086 = vld [vmem:[#allocation13] sm:$0xff]
    %v1087 = vld [vmem:[#allocation13 + $0x8] sm:$0xff]
    %v1088 = vld [vmem:[#allocation13 + $0x10] sm:$0xff]
    %v1089 = vld [vmem:[#allocation13 + $0x18] sm:$0xff]
    %v1090 = vld [vmem:[#allocation13 + $0x20] sm:$0xff]
    %v1091 = vld [vmem:[#allocation13 + $0x28] sm:$0xff]
    %v1092 = vld [vmem:[#allocation13 + $0x30] sm:$0xff]
    %v1093 = vld [vmem:[#allocation13 + $0x38] sm:$0xff]
    %v1094 = vld [vmem:[#allocation13 + $0x40] sm:$0xff]
    %v1095 = vld [vmem:[#allocation13 + $0x48] sm:$0xff]
    %v1096 = vld [vmem:[#allocation13 + $0x50] sm:$0xff]
    %v1097 = vld [vmem:[#allocation13 + $0x58] sm:$0xff]
    %v1098 = vld [vmem:[#allocation13 + $0x60] sm:$0xff]
    %v1099 = vld [vmem:[#allocation13 + $0x68] sm:$0xff]
    %v1100 = vld [vmem:[#allocation13 + $0x70] sm:$0xff]
    %v1101 = vld [vmem:[#allocation13 + $0x78] sm:$0xff]
    %v1102 = vld [vmem:[#allocation13 + $0x80] sm:$0xff]
    %v1103 = vld [vmem:[#allocation13 + $0x88] sm:$0xff]
    %v1104 = vld [vmem:[#allocation13 + $0x90] sm:$0xff]
    %v1105 = vld [vmem:[#allocation13 + $0x98] sm:$0xff]
    %v1106 = vld [vmem:[#allocation13 + $0xa0] sm:$0xff]
    %v1107 = vld [vmem:[#allocation13 + $0xa8] sm:$0xff]
    %v1108 = vld [vmem:[#allocation13 + $0xb0] sm:$0xff]
    %v1109 = vld [vmem:[#allocation13 + $0xb8] sm:$0xff]
    %v1110 = vld [vmem:[#allocation13 + $0xc0] sm:$0xff]
    %v1111 = vld [vmem:[#allocation13 + $0xc8] sm:$0xff]
    %v1112 = vld [vmem:[#allocation13 + $0xd0] sm:$0xff]
    %v1113 = vld [vmem:[#allocation13 + $0xd8] sm:$0xff]
    %v1114 = vld [vmem:[#allocation13 + $0xe0] sm:$0xff]
    %v1115 = vld [vmem:[#allocation13 + $0xe8] sm:$0xff]
    %v1116 = vld [vmem:[#allocation13 + $0xf0] sm:$0xff]
    %v1117 = vld [vmem:[#allocation13 + $0xf8] sm:$0xff]
    %v1118 = vld [vmem:[#allocation14] sm:$0x3]
    %v1120 = vlaneseq
    %v1121 = vshrl.u32 %v1120, 7
    %v1122 = vsub.s32 0, %v1121
    %v1123 = vrot.slane %v1118, %v1122
    %v1124 = vlaneseq
    %v1125 = vshrl.u32 %v1124, 7
    %v1126 = vsub.s32 1, %v1125
    %v1127 = vrot.slane %v1118, %v1126
    %v1162 = vunpack.c.l.b16 %v1086
    %v1163 = vunpack.c.h.b16 %v1086
    %v1164 = vunpack.c.l.b16 %v1087
    %v1165 = vunpack.c.h.b16 %v1087
    %v1166 = vunpack.c.l.b16 %v1088
    %v1167 = vunpack.c.h.b16 %v1088
    %v1168 = vunpack.c.l.b16 %v1089
    %v1169 = vunpack.c.h.b16 %v1089
    %v1170 = vunpack.c.l.b16 %v1090
    %v1171 = vunpack.c.h.b16 %v1090
    %v1172 = vunpack.c.l.b16 %v1091
    %v1173 = vunpack.c.h.b16 %v1091
    %v1174 = vunpack.c.l.b16 %v1092
    %v1175 = vunpack.c.h.b16 %v1092
    %v1176 = vunpack.c.l.b16 %v1093
    %v1177 = vunpack.c.h.b16 %v1093
    %v1178 = vunpack.c.l.b16 %v1094
    %v1179 = vunpack.c.h.b16 %v1094
    %v1180 = vunpack.c.l.b16 %v1095
    %v1181 = vunpack.c.h.b16 %v1095
    %v1182 = vunpack.c.l.b16 %v1096
    %v1183 = vunpack.c.h.b16 %v1096
    %v1184 = vunpack.c.l.b16 %v1097
    %v1185 = vunpack.c.h.b16 %v1097
    %v1186 = vunpack.c.l.b16 %v1098
    %v1187 = vunpack.c.h.b16 %v1098
    %v1188 = vunpack.c.l.b16 %v1099
    %v1189 = vunpack.c.h.b16 %v1099
    %v1190 = vunpack.c.l.b16 %v1100
    %v1191 = vunpack.c.h.b16 %v1100
    %v1192 = vunpack.c.l.b16 %v1101
    %v1193 = vunpack.c.h.b16 %v1101
    %v1194 = vunpack.c.l.b16 %v1102
    %v1195 = vunpack.c.h.b16 %v1102
    %v1196 = vunpack.c.l.b16 %v1103
    %v1197 = vunpack.c.h.b16 %v1103
    %v1198 = vunpack.c.l.b16 %v1104
    %v1199 = vunpack.c.h.b16 %v1104
    %v1200 = vunpack.c.l.b16 %v1105
    %v1201 = vunpack.c.h.b16 %v1105
    %v1202 = vunpack.c.l.b16 %v1106
    %v1203 = vunpack.c.h.b16 %v1106
    %v1204 = vunpack.c.l.b16 %v1107
    %v1205 = vunpack.c.h.b16 %v1107
    %v1206 = vunpack.c.l.b16 %v1108
    %v1207 = vunpack.c.h.b16 %v1108
    %v1208 = vunpack.c.l.b16 %v1109
    %v1209 = vunpack.c.h.b16 %v1109
    %v1210 = vunpack.c.l.b16 %v1110
    %v1211 = vunpack.c.h.b16 %v1110
    %v1212 = vunpack.c.l.b16 %v1111
    %v1213 = vunpack.c.h.b16 %v1111
    %v1214 = vunpack.c.l.b16 %v1112
    %v1215 = vunpack.c.h.b16 %v1112
    %v1216 = vunpack.c.l.b16 %v1113
    %v1217 = vunpack.c.h.b16 %v1113
    %v1218 = vunpack.c.l.b16 %v1114
    %v1219 = vunpack.c.h.b16 %v1114
    %v1220 = vunpack.c.l.b16 %v1115
    %v1221 = vunpack.c.h.b16 %v1115
    %v1222 = vunpack.c.l.b16 %v1116
    %v1223 = vunpack.c.h.b16 %v1116
    %v1224 = vunpack.c.l.b16 %v1117
    %v1225 = vunpack.c.h.b16 %v1117
    %v1226 = vpack.c.b16 %v1164, %v1162
    %v1227 = vpack.c.b16 %v1165, %v1163
    %v1228 = vpack.c.b16 %v1168, %v1166
    %v1229 = vpack.c.b16 %v1169, %v1167
    %v1230 = vpack.c.b16 %v1172, %v1170
    %v1231 = vpack.c.b16 %v1173, %v1171
    %v1232 = vpack.c.b16 %v1176, %v1174
    %v1233 = vpack.c.b16 %v1177, %v1175
    %v1234 = vpack.c.b16 %v1180, %v1178
    %v1235 = vpack.c.b16 %v1181, %v1179
    %v1236 = vpack.c.b16 %v1184, %v1182
    %v1237 = vpack.c.b16 %v1185, %v1183
    %v1238 = vpack.c.b16 %v1188, %v1186
    %v1239 = vpack.c.b16 %v1189, %v1187
    %v1240 = vpack.c.b16 %v1192, %v1190
    %v1241 = vpack.c.b16 %v1193, %v1191
    %v1242 = vpack.c.b16 %v1196, %v1194
    %v1243 = vpack.c.b16 %v1197, %v1195
    %v1244 = vpack.c.b16 %v1200, %v1198
    %v1245 = vpack.c.b16 %v1201, %v1199
    %v1246 = vpack.c.b16 %v1204, %v1202
    %v1247 = vpack.c.b16 %v1205, %v1203
    %v1248 = vpack.c.b16 %v1208, %v1206
    %v1249 = vpack.c.b16 %v1209, %v1207
    %v1250 = vpack.c.b16 %v1212, %v1210
    %v1251 = vpack.c.b16 %v1213, %v1211
    %v1252 = vpack.c.b16 %v1216, %v1214
    %v1253 = vpack.c.b16 %v1217, %v1215
    %v1254 = vpack.c.b16 %v1220, %v1218
    %v1255 = vpack.c.b16 %v1221, %v1219
    %v1256 = vpack.c.b16 %v1224, %v1222
    %v1257 = vpack.c.b16 %v1225, %v1223
    %1290 = vmatprep.subr.bf16.mxu0 %v1241
    %1291 = vmatpush1.bf16.msra.mxu0 %v1240
    %1292 = vmatprep.subr.bf16.mxu0 %v1239
    %1293 = vmatpush1.bf16.msra.mxu0 %v1238
    %1294 = vmatprep.subr.bf16.mxu0 %v1237
    %1295 = vmatpush1.bf16.msra.mxu0 %v1236
    %1296 = vmatprep.subr.bf16.mxu0 %v1235
    %1297 = vmatpush1.bf16.msra.mxu0 %v1234
    %1298 = vmatprep.subr.bf16.mxu0 %v1233
    %1299 = vmatpush1.bf16.msra.mxu0 %v1232
    %1300 = vmatprep.subr.bf16.mxu0 %v1231
    %1301 = vmatpush1.bf16.msra.mxu0 %v1230
    %1302 = vmatprep.subr.bf16.mxu0 %v1229
    %1303 = vmatpush1.bf16.msra.mxu0 %v1228
    %1304 = vmatprep.subr.bf16.mxu0 %v1227
    %1305 = vmatpush1.bf16.msra.mxu0 %v1226
    %1306 = vmatprep.subr.bf16.mxu0 %v1257
    %1307 = vmatpush2.bf16.msra.mxu0 %v1256
    %1308 = vmatprep.subr.bf16.mxu0 %v1255
    %1309 = vmatpush2.bf16.msra.mxu0 %v1254
    %1310 = vmatprep.subr.bf16.mxu0 %v1253
    %1311 = vmatpush2.bf16.msra.mxu0 %v1252
    %1312 = vmatprep.subr.bf16.mxu0 %v1251
    %1313 = vmatpush2.bf16.msra.mxu0 %v1250
    %1314 = vmatprep.subr.bf16.mxu0 %v1249
    %1315 = vmatpush2.bf16.msra.mxu0 %v1248
    %1316 = vmatprep.subr.bf16.mxu0 %v1247
    %1317 = vmatpush2.bf16.msra.mxu0 %v1246
    %1318 = vmatprep.subr.bf16.mxu0 %v1245
    %1319 = vmatpush2.bf16.msra.mxu0 %v1244
    %1320 = vmatprep.subr.bf16.mxu0 %v1243
    %1321 = vmatpush2.bf16.msra.mxu0 %v1242
    %1322 = vmatprep.mubr.bf16.mxu0 %v1073
    %1323 = vmatmul.mubr.bf16.gmra.mxu0 %v1072
    %v1324 = vpop.f32.mrf.mxu0
    %v1325 = vadd.f32 %v1123, %v1324
    %v1326 = vpop.f32.mrf.mxu0
    %v1327 = vadd.f32 %v1127, %v1326
    %v1328 = vpop.f32.mrf.mxu0
    %v1329 = vadd.f32 %v1123, %v1328
    %v1330 = vpop.f32.mrf.mxu0
    %v1331 = vadd.f32 %v1127, %v1330
    %1332 = vmatprep.mubr.bf16.mxu0 %v1075
    %1333 = vmatmul.mubr.bf16.gmra.mxu0 %v1074
    %v1334 = vpop.f32.mrf.mxu0
    %v1335 = vadd.f32 %v1123, %v1334
    %v1336 = vpop.f32.mrf.mxu0
    %v1337 = vadd.f32 %v1127, %v1336
    %v1338 = vpop.f32.mrf.mxu0
    %v1339 = vadd.f32 %v1123, %v1338
    %v1340 = vpop.f32.mrf.mxu0
    %v1341 = vadd.f32 %v1127, %v1340
    %1342 = vmatprep.mubr.bf16.mxu0 %v1077
    %1343 = vmatmul.mubr.bf16.gmra.mxu0 %v1076
    %v1344 = vpop.f32.mrf.mxu0
    %v1345 = vadd.f32 %v1123, %v1344
    %v1346 = vpop.f32.mrf.mxu0
    %v1347 = vadd.f32 %v1127, %v1346
    %v1348 = vpop.f32.mrf.mxu0
    %v1349 = vadd.f32 %v1123, %v1348
    %v1350 = vpop.f32.mrf.mxu0
    %v1351 = vadd.f32 %v1127, %v1350
    %1352 = vmatprep.mubr.bf16.mxu0 %v1079
    %1353 = vmatmul.mubr.bf16.gmra.mxu0 %v1078
    %v1354 = vpop.f32.mrf.mxu0
    %v1355 = vadd.f32 %v1123, %v1354
    %v1356 = vpop.f32.mrf.mxu0
    %v1357 = vadd.f32 %v1127, %v1356
    %v1358 = vpop.f32.mrf.mxu0
    %v1359 = vadd.f32 %v1123, %v1358
    %v1360 = vpop.f32.mrf.mxu0
    %v1361 = vadd.f32 %v1127, %v1360
    %1362 = vmatprep.mubr.bf16.mxu0 %v1081
    %1363 = vmatmul.mubr.bf16.gmra.mxu0 %v1080
    %v1364 = vpop.f32.mrf.mxu0
    %v1365 = vadd.f32 %v1123, %v1364
    %v1366 = vpop.f32.mrf.mxu0
    %v1367 = vadd.f32 %v1127, %v1366
    %v1368 = vpop.f32.mrf.mxu0
    %v1369 = vadd.f32 %v1123, %v1368
    %v1370 = vpop.f32.mrf.mxu0
    %v1371 = vadd.f32 %v1127, %v1370
    %1372 = vmatprep.mubr.bf16.mxu0 %v1083
    %1373 = vmatmul.mubr.bf16.gmra.mxu0 %v1082
    %v1374 = vpop.f32.mrf.mxu0
    %v1375 = vadd.f32 %v1123, %v1374
    %v1376 = vpop.f32.mrf.mxu0
    %v1377 = vadd.f32 %v1127, %v1376
    %v1378 = vpop.f32.mrf.mxu0
    %v1379 = vadd.f32 %v1123, %v1378
    %v1380 = vpop.f32.mrf.mxu0
    %v1381 = vadd.f32 %v1127, %v1380
    %1382 = vmatprep.mubr.bf16.mxu0 %v1085
    %1383 = vmatmul.mubr.bf16.gmra.mxu0 %v1084
    %v1384 = vpop.f32.mrf.mxu0
    %v1385 = vadd.f32 %v1123, %v1384
    %v1386 = vpop.f32.mrf.mxu0
    %v1387 = vadd.f32 %v1127, %v1386
    %v1388 = vpop.f32.mrf.mxu0
    %v1389 = vpop.f32.mrf.mxu0
    %1390 = vdwg.mxu0
    %v1391 = vpack.c.bf16 %v1329, %v1325
    %v1392 = vpack.c.bf16 %v1331, %v1327
    %v1393 = vpack.c.bf16 %v1339, %v1335
    %v1394 = vpack.c.bf16 %v1341, %v1337
    %v1395 = vpack.c.bf16 %v1349, %v1345
    %v1396 = vpack.c.bf16 %v1351, %v1347
    %v1397 = vpack.c.bf16 %v1359, %v1355
    %v1398 = vpack.c.bf16 %v1361, %v1357
    %v1399 = vpack.c.bf16 %v1369, %v1365
    %v1400 = vpack.c.bf16 %v1371, %v1367
    %v1401 = vpack.c.bf16 %v1379, %v1375
    %v1402 = vpack.c.bf16 %v1381, %v1377
    %v1403 = vpack.c.bf16 %v1385, %v1385
    %v1404 = vpack.c.bf16 %v1387, %v1387
    %v1406 = vsel %vm493, %v461, 0
    %v1409 = vsel %vm493, %v462, 0
    %1411 = vmatprep.subr.mxu0 0.0
    %1412 = vmatpush1.msra.mxu0 0.0
    %1413 = vmatprep.subr.mxu0 0.0
    %1414 = vmatpush1.msra.mxu0 0.0
    %1415 = vmatprep.subr.mxu0 0.0
    %1416 = vmatpush1.msra.mxu0 0.0
    %1417 = vmatprep.subr.mxu0 %v1409
    %1418 = vmatpush1.msra.mxu0 %v1406
    %1419 = vmatprep.subr.mxu0 %v460
    %1420 = vmatpush1.msra.mxu0 %v459
    %1421 = vmatprep.subr.mxu0 %v458
    %1422 = vmatpush1.msra.mxu0 %v457
    %1423 = vmatprep.subr.mxu0 %v456
    %1424 = vmatpush1.msra.mxu0 %v455
    %1425 = vmatprep.subr.mxu0 %v454
    %1426 = vmatpush1.msra.mxu0 %v453
    %1427 = vmatprep.subr.mxu0 %v452
    %1428 = vmatpush1.msra.mxu0 %v451
    %1429 = vmatprep.subr.mxu0 %v450
    %1430 = vmatpush1.msra.mxu0 %v449
    %1431 = vmatprep.subr.mxu0 %v448
    %1432 = vmatpush1.msra.mxu0 %v447
    %1433 = vmatprep.subr.mxu0 %v446
    %1434 = vmatpush1.msra.mxu0 %v445
    %1435 = vmatprep.subr.mxu0 %v444
    %1436 = vmatpush1.msra.mxu0 %v443
    %1437 = vmatprep.subr.mxu0 %v442
    %1438 = vmatpush1.msra.mxu0 %v441
    %1439 = vmatprep.subr.mxu0 %v440
    %1440 = vmatpush1.msra.mxu0 %v439
    %1441 = vmatprep.subr.mxu0 %v438
    %1442 = vmatpush1.msra.mxu0 %v437
    %1443 = vmatprep.subr.mxu0 0.0
    %1444 = vmatpush2.msra.mxu0 0.0
    %1445 = vmatprep.subr.mxu0 0.0
    %1446 = vmatpush2.msra.mxu0 0.0
    %1447 = vmatprep.subr.mxu0 0.0
    %1448 = vmatpush2.msra.mxu0 0.0
    %1449 = vmatprep.subr.mxu0 0.0
    %1450 = vmatpush2.msra.mxu0 0.0
    %1451 = vmatprep.subr.mxu0 0.0
    %1452 = vmatpush2.msra.mxu0 0.0
    %1453 = vmatprep.subr.mxu0 0.0
    %1454 = vmatpush2.msra.mxu0 0.0
    %1455 = vmatprep.subr.mxu0 0.0
    %1456 = vmatpush2.msra.mxu0 0.0
    %1457 = vmatprep.subr.mxu0 0.0
    %1458 = vmatpush2.msra.mxu0 0.0
    %1459 = vmatprep.subr.mxu0 0.0
    %1460 = vmatpush2.msra.mxu0 0.0
    %1461 = vmatprep.subr.mxu0 0.0
    %1462 = vmatpush2.msra.mxu0 0.0
    %1463 = vmatprep.subr.mxu0 0.0
    %1464 = vmatpush2.msra.mxu0 0.0
    %1465 = vmatprep.subr.mxu0 0.0
    %1466 = vmatpush2.msra.mxu0 0.0
    %1467 = vmatprep.subr.mxu0 0.0
    %1468 = vmatpush2.msra.mxu0 0.0
    %1469 = vmatprep.subr.mxu0 0.0
    %1470 = vmatpush2.msra.mxu0 0.0
    %1471 = vmatprep.subr.mxu0 0.0
    %1472 = vmatpush2.msra.mxu0 0.0
    %1473 = vmatprep.subr.mxu0 0.0
    %1474 = vmatpush2.msra.mxu0 0.0
    %1475 = vmatprep.mubr.f32.mxu0 0.0
    %1476 = vmatmul.mubr.f32.gmra.mxu0 %v491
    %v1477 = vpop.f32.mrf.mxu0
    %v1478 = vadd.f32 0.0, %v1477
    %v1479 = vpop.f32.mrf.mxu0
    %v1480 = vadd.f32 0.0, %v1479
    %1481 = vdwg.mxu0
    %v1482 = vmul.f32 %v1478, 0.020408163
    %v1483 = vmul.f32 %v1480, 0.020408163
    %v1485 = vsel %vm493, %v1482, 0
    %v1488 = vsel %vm493, %v1483, 0
    %1490 = vmatprep.subr.mxu0 0.0
    %1491 = vmatpush1.msra.mxu0 0.0
    %1492 = vmatprep.subr.mxu0 0.0
    %1493 = vmatpush1.msra.mxu0 0.0
    %1494 = vmatprep.subr.mxu0 0.0
    %1495 = vmatpush1.msra.mxu0 0.0
    %1496 = vmatprep.subr.mxu0 0.0
    %1497 = vmatpush1.msra.mxu0 0.0
    %1498 = vmatprep.subr.mxu0 0.0
    %1499 = vmatpush1.msra.mxu0 0.0
    %1500 = vmatprep.subr.mxu0 0.0
    %1501 = vmatpush1.msra.mxu0 0.0
    %1502 = vmatprep.subr.mxu0 0.0
    %1503 = vmatpush1.msra.mxu0 0.0
    %1504 = vmatprep.subr.mxu0 0.0
    %1505 = vmatpush1.msra.mxu0 0.0
    %1506 = vmatprep.subr.mxu0 0.0
    %1507 = vmatpush1.msra.mxu0 0.0
    %1508 = vmatprep.subr.mxu0 0.0
    %1509 = vmatpush1.msra.mxu0 0.0
    %1510 = vmatprep.subr.mxu0 0.0
    %1511 = vmatpush1.msra.mxu0 0.0
    %1512 = vmatprep.subr.mxu0 0.0
    %1513 = vmatpush1.msra.mxu0 0.0
    %1514 = vmatprep.subr.mxu0 0.0
    %1515 = vmatpush1.msra.mxu0 0.0
    %1516 = vmatprep.subr.mxu0 0.0
    %1517 = vmatpush1.msra.mxu0 0.0
    %1518 = vmatprep.subr.mxu0 0.0
    %1519 = vmatpush1.msra.mxu0 0.0
    %1520 = vmatprep.subr.mxu0 %v1488
    %1521 = vmatpush1.msra.mxu0 %v1485
    %1522 = vmatprep.subr.mxu0 0.0
    %1523 = vmatpush2.msra.mxu0 0.0
    %1524 = vmatprep.subr.mxu0 0.0
    %1525 = vmatpush2.msra.mxu0 0.0
    %1526 = vmatprep.subr.mxu0 0.0
    %1527 = vmatpush2.msra.mxu0 0.0
    %1528 = vmatprep.subr.mxu0 0.0
    %1529 = vmatpush2.msra.mxu0 0.0
    %1530 = vmatprep.subr.mxu0 0.0
    %1531 = vmatpush2.msra.mxu0 0.0
    %1532 = vmatprep.subr.mxu0 0.0
    %1533 = vmatpush2.msra.mxu0 0.0
    %1534 = vmatprep.subr.mxu0 0.0
    %1535 = vmatpush2.msra.mxu0 0.0
    %1536 = vmatprep.subr.mxu0 0.0
    %1537 = vmatpush2.msra.mxu0 0.0
    %1538 = vmatprep.subr.mxu0 0.0
    %1539 = vmatpush2.msra.mxu0 0.0
    %1540 = vmatprep.subr.mxu0 0.0
    %1541 = vmatpush2.msra.mxu0 0.0
    %1542 = vmatprep.subr.mxu0 0.0
    %1543 = vmatpush2.msra.mxu0 0.0
    %1544 = vmatprep.subr.mxu0 0.0
    %1545 = vmatpush2.msra.mxu0 0.0
    %1546 = vmatprep.subr.mxu0 0.0
    %1547 = vmatpush2.msra.mxu0 0.0
    %1548 = vmatprep.subr.mxu0 0.0
    %1549 = vmatpush2.msra.mxu0 0.0
    %1550 = vmatprep.subr.mxu0 0.0
    %1551 = vmatpush2.msra.mxu0 0.0
    %1552 = vmatprep.subr.mxu0 0.0
    %1553 = vmatpush2.msra.mxu0 0.0
    %1554 = vmatprep.mubr.f32.mxu0 0.0
    %1555 = vmatmul.mubr.f32.gmra.mxu0 %v575
    %v1556 = vpop.f32.mrf.mxu0
    %v1557 = vadd.f32 0.0, %v1556
    %v1558 = vpop.f32.mrf.mxu0
    %v1559 = vadd.f32 0.0, %v1558
    %1560 = vmatprep.mubr.f32.mxu0 0.0
    %1561 = vmatmul.mubr.f32.gmra.mxu0 %v578
    %v1562 = vpop.f32.mrf.mxu0
    %v1563 = vadd.f32 0.0, %v1562
    %v1564 = vpop.f32.mrf.mxu0
    %v1565 = vadd.f32 0.0, %v1564
    %1566 = vmatprep.mubr.f32.mxu0 0.0
    %1567 = vmatmul.mubr.f32.gmra.mxu0 %v581
    %v1568 = vpop.f32.mrf.mxu0
    %v1569 = vadd.f32 0.0, %v1568
    %v1570 = vpop.f32.mrf.mxu0
    %v1571 = vadd.f32 0.0, %v1570
    %1572 = vmatprep.mubr.f32.mxu0 0.0
    %1573 = vmatmul.mubr.f32.gmra.mxu0 %v584
    %v1574 = vpop.f32.mrf.mxu0
    %v1575 = vadd.f32 0.0, %v1574
    %v1576 = vpop.f32.mrf.mxu0
    %v1577 = vadd.f32 0.0, %v1576
    %1578 = vmatprep.mubr.f32.mxu0 0.0
    %1579 = vmatmul.mubr.f32.gmra.mxu0 %v587
    %v1580 = vpop.f32.mrf.mxu0
    %v1581 = vadd.f32 0.0, %v1580
    %v1582 = vpop.f32.mrf.mxu0
    %v1583 = vadd.f32 0.0, %v1582
    %1584 = vmatprep.mubr.f32.mxu0 0.0
    %1585 = vmatmul.mubr.f32.gmra.mxu0 %v590
    %v1586 = vpop.f32.mrf.mxu0
    %v1587 = vadd.f32 0.0, %v1586
    %v1588 = vpop.f32.mrf.mxu0
    %v1589 = vadd.f32 0.0, %v1588
    %1590 = vmatprep.mubr.f32.mxu0 0.0
    %1591 = vmatmul.mubr.f32.gmra.mxu0 %v593
    %v1592 = vpop.f32.mrf.mxu0
    %v1593 = vadd.f32 0.0, %v1592
    %v1594 = vpop.f32.mrf.mxu0
    %v1595 = vadd.f32 0.0, %v1594
    %1596 = vmatprep.mubr.f32.mxu0 0.0
    %1597 = vmatmul.mubr.f32.gmra.mxu0 %v596
    %v1598 = vpop.f32.mrf.mxu0
    %v1599 = vadd.f32 0.0, %v1598
    %v1600 = vpop.f32.mrf.mxu0
    %v1601 = vadd.f32 0.0, %v1600
    %1602 = vmatprep.mubr.f32.mxu0 0.0
    %1603 = vmatmul.mubr.f32.gmra.mxu0 %v599
    %v1604 = vpop.f32.mrf.mxu0
    %v1605 = vadd.f32 0.0, %v1604
    %v1606 = vpop.f32.mrf.mxu0
    %v1607 = vadd.f32 0.0, %v1606
    %1608 = vmatprep.mubr.f32.mxu0 0.0
    %1609 = vmatmul.mubr.f32.gmra.mxu0 %v602
    %v1610 = vpop.f32.mrf.mxu0
    %v1611 = vadd.f32 0.0, %v1610
    %v1612 = vpop.f32.mrf.mxu0
    %v1613 = vadd.f32 0.0, %v1612
    %1614 = vmatprep.mubr.f32.mxu0 0.0
    %1615 = vmatmul.mubr.f32.gmra.mxu0 %v605
    %v1616 = vpop.f32.mrf.mxu0
    %v1617 = vadd.f32 0.0, %v1616
    %v1618 = vpop.f32.mrf.mxu0
    %v1619 = vadd.f32 0.0, %v1618
    %1620 = vmatprep.mubr.f32.mxu0 0.0
    %1621 = vmatmul.mubr.f32.gmra.mxu0 %v608
    %v1622 = vpop.f32.mrf.mxu0
    %v1623 = vadd.f32 0.0, %v1622
    %v1624 = vpop.f32.mrf.mxu0
    %v1625 = vadd.f32 0.0, %v1624
    %1626 = vmatprep.mubr.f32.mxu0 0.0
    %1627 = vmatmul.mubr.f32.gmra.mxu0 %v611
    %v1628 = vpop.f32.mrf.mxu0
    %v1629 = vadd.f32 0.0, %v1628
    %v1630 = vpop.f32.mrf.mxu0
    %v1631 = vadd.f32 0.0, %v1630
    %1632 = vdwg.mxu0
    %v1633 = vsub.f32 %v437, %v1557
    %v1634 = vsub.f32 %v438, %v1559
    %v1635 = vsub.f32 %v439, %v1563
    %v1636 = vsub.f32 %v440, %v1565
    %v1637 = vsub.f32 %v441, %v1569
    %v1638 = vsub.f32 %v442, %v1571
    %v1639 = vsub.f32 %v443, %v1575
    %v1640 = vsub.f32 %v444, %v1577
    %v1641 = vsub.f32 %v445, %v1581
    %v1642 = vsub.f32 %v446, %v1583
    %v1643 = vsub.f32 %v447, %v1587
    %v1644 = vsub.f32 %v448, %v1589
    %v1645 = vsub.f32 %v449, %v1593
    %v1646 = vsub.f32 %v450, %v1595
    %v1647 = vsub.f32 %v451, %v1599
    %v1648 = vsub.f32 %v452, %v1601
    %v1649 = vsub.f32 %v453, %v1605
    %v1650 = vsub.f32 %v454, %v1607
    %v1651 = vsub.f32 %v455, %v1611
    %v1652 = vsub.f32 %v456, %v1613
    %v1653 = vsub.f32 %v457, %v1617
    %v1654 = vsub.f32 %v458, %v1619
    %v1655 = vsub.f32 %v459, %v1623
    %v1656 = vsub.f32 %v460, %v1625
    %v1657 = vsub.f32 %v461, %v1629
    %v1658 = vsub.f32 %v462, %v1631
    %v1659 = vmul.f32 %v1633, %v1633
    %v1660 = vmul.f32 %v1634, %v1634
    %v1661 = vmul.f32 %v1635, %v1635
    %v1662 = vmul.f32 %v1636, %v1636
    %v1663 = vmul.f32 %v1637, %v1637
    %v1664 = vmul.f32 %v1638, %v1638
    %v1665 = vmul.f32 %v1639, %v1639
    %v1666 = vmul.f32 %v1640, %v1640
    %v1667 = vmul.f32 %v1641, %v1641
    %v1668 = vmul.f32 %v1642, %v1642
    %v1669 = vmul.f32 %v1643, %v1643
    %v1670 = vmul.f32 %v1644, %v1644
    %v1671 = vmul.f32 %v1645, %v1645
    %v1672 = vmul.f32 %v1646, %v1646
    %v1673 = vmul.f32 %v1647, %v1647
    %v1674 = vmul.f32 %v1648, %v1648
    %v1675 = vmul.f32 %v1649, %v1649
    %v1676 = vmul.f32 %v1650, %v1650
    %v1677 = vmul.f32 %v1651, %v1651
    %v1678 = vmul.f32 %v1652, %v1652
    %v1679 = vmul.f32 %v1653, %v1653
    %v1680 = vmul.f32 %v1654, %v1654
    %v1681 = vmul.f32 %v1655, %v1655
    %v1682 = vmul.f32 %v1656, %v1656
    %v1683 = vmul.f32 %v1657, %v1657
    %v1684 = vmul.f32 %v1658, %v1658
    %v1686 = vsel %vm493, %v1683, 0
    %v1689 = vsel %vm493, %v1684, 0
    %1691 = vmatprep.subr.mxu0 0.0
    %1692 = vmatpush1.msra.mxu0 0.0
    %1693 = vmatprep.subr.mxu0 0.0
    %1694 = vmatpush1.msra.mxu0 0.0
    %1695 = vmatprep.subr.mxu0 0.0
    %1696 = vmatpush1.msra.mxu0 0.0
    %1697 = vmatprep.subr.mxu0 %v1689
    %1698 = vmatpush1.msra.mxu0 %v1686
    %1699 = vmatprep.subr.mxu0 %v1682
    %1700 = vmatpush1.msra.mxu0 %v1681
    %1701 = vmatprep.subr.mxu0 %v1680
    %1702 = vmatpush1.msra.mxu0 %v1679
    %1703 = vmatprep.subr.mxu0 %v1678
    %1704 = vmatpush1.msra.mxu0 %v1677
    %1705 = vmatprep.subr.mxu0 %v1676
    %1706 = vmatpush1.msra.mxu0 %v1675
    %1707 = vmatprep.subr.mxu0 %v1674
    %1708 = vmatpush1.msra.mxu0 %v1673
    %1709 = vmatprep.subr.mxu0 %v1672
    %1710 = vmatpush1.msra.mxu0 %v1671
    %1711 = vmatprep.subr.mxu0 %v1670
    %1712 = vmatpush1.msra.mxu0 %v1669
    %1713 = vmatprep.subr.mxu0 %v1668
    %1714 = vmatpush1.msra.mxu0 %v1667
    %1715 = vmatprep.subr.mxu0 %v1666
    %1716 = vmatpush1.msra.mxu0 %v1665
    %1717 = vmatprep.subr.mxu0 %v1664
    %1718 = vmatpush1.msra.mxu0 %v1663
    %1719 = vmatprep.subr.mxu0 %v1662
    %1720 = vmatpush1.msra.mxu0 %v1661
    %1721 = vmatprep.subr.mxu0 %v1660
    %1722 = vmatpush1.msra.mxu0 %v1659
    %1723 = vmatprep.subr.mxu0 0.0
    %1724 = vmatpush2.msra.mxu0 0.0
    %1725 = vmatprep.subr.mxu0 0.0
    %1726 = vmatpush2.msra.mxu0 0.0
    %1727 = vmatprep.subr.mxu0 0.0
    %1728 = vmatpush2.msra.mxu0 0.0
    %1729 = vmatprep.subr.mxu0 0.0
    %1730 = vmatpush2.msra.mxu0 0.0
    %1731 = vmatprep.subr.mxu0 0.0
    %1732 = vmatpush2.msra.mxu0 0.0
    %1733 = vmatprep.subr.mxu0 0.0
    %1734 = vmatpush2.msra.mxu0 0.0
    %1735 = vmatprep.subr.mxu0 0.0
    %1736 = vmatpush2.msra.mxu0 0.0
    %1737 = vmatprep.subr.mxu0 0.0
    %1738 = vmatpush2.msra.mxu0 0.0
    %1739 = vmatprep.subr.mxu0 0.0
    %1740 = vmatpush2.msra.mxu0 0.0
    %1741 = vmatprep.subr.mxu0 0.0
    %1742 = vmatpush2.msra.mxu0 0.0
    %1743 = vmatprep.subr.mxu0 0.0
    %1744 = vmatpush2.msra.mxu0 0.0
    %1745 = vmatprep.subr.mxu0 0.0
    %1746 = vmatpush2.msra.mxu0 0.0
    %1747 = vmatprep.subr.mxu0 0.0
    %1748 = vmatpush2.msra.mxu0 0.0
    %1749 = vmatprep.subr.mxu0 0.0
    %1750 = vmatpush2.msra.mxu0 0.0
    %1751 = vmatprep.subr.mxu0 0.0
    %1752 = vmatpush2.msra.mxu0 0.0
    %1753 = vmatprep.subr.mxu0 0.0
    %1754 = vmatpush2.msra.mxu0 0.0
    %1755 = vmatprep.mubr.f32.mxu0 0.0
    %1756 = vmatmul.mubr.f32.gmra.mxu0 %v491
    %v1757 = vpop.f32.mrf.mxu0
    %v1758 = vadd.f32 0.0, %v1757
    %v1759 = vpop.f32.mrf.mxu0
    %v1760 = vadd.f32 0.0, %v1759
    %1761 = vdwg.mxu0
    %v1762 = vmul.f32 %v1758, 0.020833334
    %v1763 = vmul.f32 %v1760, 0.020833334
    %v1764 = vadd.f32 %v1762, 1e-05
    %v1765 = vadd.f32 %v1763, 1e-05
    %v1766 = vrsqrt.pop %v1764
    %v1767 = vrsqrt.pop %v1765
    %v1769 = vsel %vm493, %v1766, 0
    %v1772 = vsel %vm493, %v1767, 0
    %1774 = vmatprep.subr.mxu0 0.0
    %1775 = vmatpush1.msra.mxu0 0.0
    %1776 = vmatprep.subr.mxu0 0.0
    %1777 = vmatpush1.msra.mxu0 0.0
    %1778 = vmatprep.subr.mxu0 0.0
    %1779 = vmatpush1.msra.mxu0 0.0
    %1780 = vmatprep.subr.mxu0 0.0
    %1781 = vmatpush1.msra.mxu0 0.0
    %1782 = vmatprep.subr.mxu0 0.0
    %1783 = vmatpush1.msra.mxu0 0.0
    %1784 = vmatprep.subr.mxu0 0.0
    %1785 = vmatpush1.msra.mxu0 0.0
    %1786 = vmatprep.subr.mxu0 0.0
    %1787 = vmatpush1.msra.mxu0 0.0
    %1788 = vmatprep.subr.mxu0 0.0
    %1789 = vmatpush1.msra.mxu0 0.0
    %1790 = vmatprep.subr.mxu0 0.0
    %1791 = vmatpush1.msra.mxu0 0.0
    %1792 = vmatprep.subr.mxu0 0.0
    %1793 = vmatpush1.msra.mxu0 0.0
    %1794 = vmatprep.subr.mxu0 0.0
    %1795 = vmatpush1.msra.mxu0 0.0
    %1796 = vmatprep.subr.mxu0 0.0
    %1797 = vmatpush1.msra.mxu0 0.0
    %1798 = vmatprep.subr.mxu0 0.0
    %1799 = vmatpush1.msra.mxu0 0.0
    %1800 = vmatprep.subr.mxu0 0.0
    %1801 = vmatpush1.msra.mxu0 0.0
    %1802 = vmatprep.subr.mxu0 0.0
    %1803 = vmatpush1.msra.mxu0 0.0
    %1804 = vmatprep.subr.mxu0 %v1772
    %1805 = vmatpush1.msra.mxu0 %v1769
    %1806 = vmatprep.subr.mxu0 0.0
    %1807 = vmatpush2.msra.mxu0 0.0
    %1808 = vmatprep.subr.mxu0 0.0
    %1809 = vmatpush2.msra.mxu0 0.0
    %1810 = vmatprep.subr.mxu0 0.0
    %1811 = vmatpush2.msra.mxu0 0.0
    %1812 = vmatprep.subr.mxu0 0.0
    %1813 = vmatpush2.msra.mxu0 0.0
    %1814 = vmatprep.subr.mxu0 0.0
    %1815 = vmatpush2.msra.mxu0 0.0
    %1816 = vmatprep.subr.mxu0 0.0
    %1817 = vmatpush2.msra.mxu0 0.0
    %1818 = vmatprep.subr.mxu0 0.0
    %1819 = vmatpush2.msra.mxu0 0.0
    %1820 = vmatprep.subr.mxu0 0.0
    %1821 = vmatpush2.msra.mxu0 0.0
    %1822 = vmatprep.subr.mxu0 0.0
    %1823 = vmatpush2.msra.mxu0 0.0
    %1824 = vmatprep.subr.mxu0 0.0
    %1825 = vmatpush2.msra.mxu0 0.0
    %1826 = vmatprep.subr.mxu0 0.0
    %1827 = vmatpush2.msra.mxu0 0.0
    %1828 = vmatprep.subr.mxu0 0.0
    %1829 = vmatpush2.msra.mxu0 0.0
    %1830 = vmatprep.subr.mxu0 0.0
    %1831 = vmatpush2.msra.mxu0 0.0
    %1832 = vmatprep.subr.mxu0 0.0
    %1833 = vmatpush2.msra.mxu0 0.0
    %1834 = vmatprep.subr.mxu0 0.0
    %1835 = vmatpush2.msra.mxu0 0.0
    %1836 = vmatprep.subr.mxu0 0.0
    %1837 = vmatpush2.msra.mxu0 0.0
    %1838 = vmatprep.mubr.f32.mxu0 0.0
    %1839 = vmatmul.mubr.f32.gmra.mxu0 %v575
    %v1840 = vpop.f32.mrf.mxu0
    %v1841 = vadd.f32 0.0, %v1840
    %v1842 = vpop.f32.mrf.mxu0
    %v1843 = vadd.f32 0.0, %v1842
    %1844 = vmatprep.mubr.f32.mxu0 0.0
    %1845 = vmatmul.mubr.f32.gmra.mxu0 %v578
    %v1846 = vpop.f32.mrf.mxu0
    %v1847 = vadd.f32 0.0, %v1846
    %v1848 = vpop.f32.mrf.mxu0
    %v1849 = vadd.f32 0.0, %v1848
    %1850 = vmatprep.mubr.f32.mxu0 0.0
    %1851 = vmatmul.mubr.f32.gmra.mxu0 %v581
    %v1852 = vpop.f32.mrf.mxu0
    %v1853 = vadd.f32 0.0, %v1852
    %v1854 = vpop.f32.mrf.mxu0
    %v1855 = vadd.f32 0.0, %v1854
    %1856 = vmatprep.mubr.f32.mxu0 0.0
    %1857 = vmatmul.mubr.f32.gmra.mxu0 %v584
    %v1858 = vpop.f32.mrf.mxu0
    %v1859 = vadd.f32 0.0, %v1858
    %v1860 = vpop.f32.mrf.mxu0
    %v1861 = vadd.f32 0.0, %v1860
    %1862 = vmatprep.mubr.f32.mxu0 0.0
    %1863 = vmatmul.mubr.f32.gmra.mxu0 %v587
    %v1864 = vpop.f32.mrf.mxu0
    %v1865 = vadd.f32 0.0, %v1864
    %v1866 = vpop.f32.mrf.mxu0
    %v1867 = vadd.f32 0.0, %v1866
    %1868 = vmatprep.mubr.f32.mxu0 0.0
    %1869 = vmatmul.mubr.f32.gmra.mxu0 %v590
    %v1870 = vpop.f32.mrf.mxu0
    %v1871 = vadd.f32 0.0, %v1870
    %v1872 = vpop.f32.mrf.mxu0
    %v1873 = vadd.f32 0.0, %v1872
    %1874 = vmatprep.mubr.f32.mxu0 0.0
    %1875 = vmatmul.mubr.f32.gmra.mxu0 %v593
    %v1876 = vpop.f32.mrf.mxu0
    %v1877 = vadd.f32 0.0, %v1876
    %v1878 = vpop.f32.mrf.mxu0
    %v1879 = vadd.f32 0.0, %v1878
    %1880 = vmatprep.mubr.f32.mxu0 0.0
    %1881 = vmatmul.mubr.f32.gmra.mxu0 %v596
    %v1882 = vpop.f32.mrf.mxu0
    %v1883 = vadd.f32 0.0, %v1882
    %v1884 = vpop.f32.mrf.mxu0
    %v1885 = vadd.f32 0.0, %v1884
    %1886 = vmatprep.mubr.f32.mxu0 0.0
    %1887 = vmatmul.mubr.f32.gmra.mxu0 %v599
    %v1888 = vpop.f32.mrf.mxu0
    %v1889 = vadd.f32 0.0, %v1888
    %v1890 = vpop.f32.mrf.mxu0
    %v1891 = vadd.f32 0.0, %v1890
    %1892 = vmatprep.mubr.f32.mxu0 0.0
    %1893 = vmatmul.mubr.f32.gmra.mxu0 %v602
    %v1894 = vpop.f32.mrf.mxu0
    %v1895 = vadd.f32 0.0, %v1894
    %v1896 = vpop.f32.mrf.mxu0
    %v1897 = vadd.f32 0.0, %v1896
    %1898 = vmatprep.mubr.f32.mxu0 0.0
    %1899 = vmatmul.mubr.f32.gmra.mxu0 %v605
    %v1900 = vpop.f32.mrf.mxu0
    %v1901 = vadd.f32 0.0, %v1900
    %v1902 = vpop.f32.mrf.mxu0
    %v1903 = vadd.f32 0.0, %v1902
    %1904 = vmatprep.mubr.f32.mxu0 0.0
    %1905 = vmatmul.mubr.f32.gmra.mxu0 %v608
    %v1906 = vpop.f32.mrf.mxu0
    %v1907 = vadd.f32 0.0, %v1906
    %v1908 = vpop.f32.mrf.mxu0
    %v1909 = vadd.f32 0.0, %v1908
    %1910 = vmatprep.mubr.f32.mxu0 0.0
    %1911 = vmatmul.mubr.f32.gmra.mxu0 %v611
    %v1912 = vpop.f32.mrf.mxu0
    %v1913 = vadd.f32 0.0, %v1912
    %v1914 = vpop.f32.mrf.mxu0
    %v1915 = vadd.f32 0.0, %v1914
    %1916 = vdwg.mxu0
    %v1917 = vmul.f32 %v1633, %v1841
    %v1918 = vmul.f32 %v1634, %v1843
    %v1919 = vmul.f32 %v1635, %v1847
    %v1920 = vmul.f32 %v1636, %v1849
    %v1921 = vmul.f32 %v1637, %v1853
    %v1922 = vmul.f32 %v1638, %v1855
    %v1923 = vmul.f32 %v1639, %v1859
    %v1924 = vmul.f32 %v1640, %v1861
    %v1925 = vmul.f32 %v1641, %v1865
    %v1926 = vmul.f32 %v1642, %v1867
    %v1927 = vmul.f32 %v1643, %v1871
    %v1928 = vmul.f32 %v1644, %v1873
    %v1929 = vmul.f32 %v1645, %v1877
    %v1930 = vmul.f32 %v1646, %v1879
    %v1931 = vmul.f32 %v1647, %v1883
    %v1932 = vmul.f32 %v1648, %v1885
    %v1933 = vmul.f32 %v1649, %v1889
    %v1934 = vmul.f32 %v1650, %v1891
    %v1935 = vmul.f32 %v1651, %v1895
    %v1936 = vmul.f32 %v1652, %v1897
    %v1937 = vmul.f32 %v1653, %v1901
    %v1938 = vmul.f32 %v1654, %v1903
    %v1939 = vmul.f32 %v1655, %v1907
    %v1940 = vmul.f32 %v1656, %v1909
    %v1941 = vmul.f32 %v1657, %v1913
    %v1942 = vmul.f32 %v1658, %v1915
    %v1943 = vpack.c.bf16 %v1919, %v1917
    %v1944 = vpack.c.bf16 %v1920, %v1918
    %v1945 = vpack.c.bf16 %v1923, %v1921
    %v1946 = vpack.c.bf16 %v1924, %v1922
    %v1947 = vpack.c.bf16 %v1927, %v1925
    %v1948 = vpack.c.bf16 %v1928, %v1926
    %v1949 = vpack.c.bf16 %v1931, %v1929
    %v1950 = vpack.c.bf16 %v1932, %v1930
    %v1951 = vpack.c.bf16 %v1935, %v1933
    %v1952 = vpack.c.bf16 %v1936, %v1934
    %v1953 = vpack.c.bf16 %v1939, %v1937
    %v1954 = vpack.c.bf16 %v1940, %v1938
    %v1955 = vpack.c.bf16 %v1941, %v1941
    %v1956 = vpack.c.bf16 %v1942, %v1942
    %v1957 = vld [vmem:[#allocation16] sm:$0xff]
    %v1958 = vld [vmem:[#allocation16 + $0x8] sm:$0xff]
    %v1959 = vld [vmem:[#allocation16 + $0x10] sm:$0xff]
    %v1960 = vld [vmem:[#allocation16 + $0x18] sm:$0xff]
    %v1961 = vld [vmem:[#allocation16 + $0x20] sm:$0xff]
    %v1962 = vld [vmem:[#allocation16 + $0x28] sm:$0xff]
    %v1963 = vld [vmem:[#allocation16 + $0x30] sm:$0xff]
    %v1964 = vld [vmem:[#allocation16 + $0x38] sm:$0xff]
    %v1965 = vld [vmem:[#allocation16 + $0x40] sm:$0xff]
    %v1966 = vld [vmem:[#allocation16 + $0x48] sm:$0xff]
    %v1967 = vld [vmem:[#allocation16 + $0x50] sm:$0xff]
    %v1968 = vld [vmem:[#allocation16 + $0x58] sm:$0xff]
    %v1969 = vld [vmem:[#allocation16 + $0x60] sm:$0xff]
    %v1970 = vld [vmem:[#allocation16 + $0x68] sm:$0xff]
    %v1971 = vld [vmem:[#allocation16 + $0x70] sm:$0xff]
    %v1972 = vld [vmem:[#allocation16 + $0x78] sm:$0xff]
    %v1973 = vld [vmem:[#allocation16 + $0x80] sm:$0xff]
    %v1974 = vld [vmem:[#allocation16 + $0x88] sm:$0xff]
    %v1975 = vld [vmem:[#allocation16 + $0x90] sm:$0xff]
    %v1976 = vld [vmem:[#allocation16 + $0x98] sm:$0xff]
    %v1977 = vld [vmem:[#allocation16 + $0xa0] sm:$0xff]
    %v1978 = vld [vmem:[#allocation16 + $0xa8] sm:$0xff]
    %v1979 = vld [vmem:[#allocation16 + $0xb0] sm:$0xff]
    %v1980 = vld [vmem:[#allocation16 + $0xb8] sm:$0xff]
    %v1981 = vld [vmem:[#allocation16 + $0xc0] sm:$0xff]
    %v1982 = vld [vmem:[#allocation16 + $0xc8] sm:$0xff]
    %v1983 = vld [vmem:[#allocation16 + $0xd0] sm:$0xff]
    %v1984 = vld [vmem:[#allocation16 + $0xd8] sm:$0xff]
    %v1985 = vld [vmem:[#allocation16 + $0xe0] sm:$0xff]
    %v1986 = vld [vmem:[#allocation16 + $0xe8] sm:$0xff]
    %v1987 = vld [vmem:[#allocation16 + $0xf0] sm:$0xff]
    %v1988 = vld [vmem:[#allocation16 + $0xf8] sm:$0xff]
    %v1989 = vld [vmem:[#allocation17] sm:$0x3]
    %v1991 = vlaneseq
    %v1992 = vshrl.u32 %v1991, 7
    %v1993 = vsub.s32 0, %v1992
    %v1994 = vrot.slane %v1989, %v1993
    %v1995 = vlaneseq
    %v1996 = vshrl.u32 %v1995, 7
    %v1997 = vsub.s32 1, %v1996
    %v1998 = vrot.slane %v1989, %v1997
    %v2033 = vunpack.c.l.b16 %v1957
    %v2034 = vunpack.c.h.b16 %v1957
    %v2035 = vunpack.c.l.b16 %v1958
    %v2036 = vunpack.c.h.b16 %v1958
    %v2037 = vunpack.c.l.b16 %v1959
    %v2038 = vunpack.c.h.b16 %v1959
    %v2039 = vunpack.c.l.b16 %v1960
    %v2040 = vunpack.c.h.b16 %v1960
    %v2041 = vunpack.c.l.b16 %v1961
    %v2042 = vunpack.c.h.b16 %v1961
    %v2043 = vunpack.c.l.b16 %v1962
    %v2044 = vunpack.c.h.b16 %v1962
    %v2045 = vunpack.c.l.b16 %v1963
    %v2046 = vunpack.c.h.b16 %v1963
    %v2047 = vunpack.c.l.b16 %v1964
    %v2048 = vunpack.c.h.b16 %v1964
    %v2049 = vunpack.c.l.b16 %v1965
    %v2050 = vunpack.c.h.b16 %v1965
    %v2051 = vunpack.c.l.b16 %v1966
    %v2052 = vunpack.c.h.b16 %v1966
    %v2053 = vunpack.c.l.b16 %v1967
    %v2054 = vunpack.c.h.b16 %v1967
    %v2055 = vunpack.c.l.b16 %v1968
    %v2056 = vunpack.c.h.b16 %v1968
    %v2057 = vunpack.c.l.b16 %v1969
    %v2058 = vunpack.c.h.b16 %v1969
    %v2059 = vunpack.c.l.b16 %v1970
    %v2060 = vunpack.c.h.b16 %v1970
    %v2061 = vunpack.c.l.b16 %v1971
    %v2062 = vunpack.c.h.b16 %v1971
    %v2063 = vunpack.c.l.b16 %v1972
    %v2064 = vunpack.c.h.b16 %v1972
    %v2065 = vunpack.c.l.b16 %v1973
    %v2066 = vunpack.c.h.b16 %v1973
    %v2067 = vunpack.c.l.b16 %v1974
    %v2068 = vunpack.c.h.b16 %v1974
    %v2069 = vunpack.c.l.b16 %v1975
    %v2070 = vunpack.c.h.b16 %v1975
    %v2071 = vunpack.c.l.b16 %v1976
    %v2072 = vunpack.c.h.b16 %v1976
    %v2073 = vunpack.c.l.b16 %v1977
    %v2074 = vunpack.c.h.b16 %v1977
    %v2075 = vunpack.c.l.b16 %v1978
    %v2076 = vunpack.c.h.b16 %v1978
    %v2077 = vunpack.c.l.b16 %v1979
    %v2078 = vunpack.c.h.b16 %v1979
    %v2079 = vunpack.c.l.b16 %v1980
    %v2080 = vunpack.c.h.b16 %v1980
    %v2081 = vunpack.c.l.b16 %v1981
    %v2082 = vunpack.c.h.b16 %v1981
    %v2083 = vunpack.c.l.b16 %v1982
    %v2084 = vunpack.c.h.b16 %v1982
    %v2085 = vunpack.c.l.b16 %v1983
    %v2086 = vunpack.c.h.b16 %v1983
    %v2087 = vunpack.c.l.b16 %v1984
    %v2088 = vunpack.c.h.b16 %v1984
    %v2089 = vunpack.c.l.b16 %v1985
    %v2090 = vunpack.c.h.b16 %v1985
    %v2091 = vunpack.c.l.b16 %v1986
    %v2092 = vunpack.c.h.b16 %v1986
    %v2093 = vunpack.c.l.b16 %v1987
    %v2094 = vunpack.c.h.b16 %v1987
    %v2095 = vunpack.c.l.b16 %v1988
    %v2096 = vunpack.c.h.b16 %v1988
    %v2097 = vpack.c.b16 %v2035, %v2033
    %v2098 = vpack.c.b16 %v2036, %v2034
    %v2099 = vpack.c.b16 %v2039, %v2037
    %v2100 = vpack.c.b16 %v2040, %v2038
    %v2101 = vpack.c.b16 %v2043, %v2041
    %v2102 = vpack.c.b16 %v2044, %v2042
    %v2103 = vpack.c.b16 %v2047, %v2045
    %v2104 = vpack.c.b16 %v2048, %v2046
    %v2105 = vpack.c.b16 %v2051, %v2049
    %v2106 = vpack.c.b16 %v2052, %v2050
    %v2107 = vpack.c.b16 %v2055, %v2053
    %v2108 = vpack.c.b16 %v2056, %v2054
    %v2109 = vpack.c.b16 %v2059, %v2057
    %v2110 = vpack.c.b16 %v2060, %v2058
    %v2111 = vpack.c.b16 %v2063, %v2061
    %v2112 = vpack.c.b16 %v2064, %v2062
    %v2113 = vpack.c.b16 %v2067, %v2065
    %v2114 = vpack.c.b16 %v2068, %v2066
    %v2115 = vpack.c.b16 %v2071, %v2069
    %v2116 = vpack.c.b16 %v2072, %v2070
    %v2117 = vpack.c.b16 %v2075, %v2073
    %v2118 = vpack.c.b16 %v2076, %v2074
    %v2119 = vpack.c.b16 %v2079, %v2077
    %v2120 = vpack.c.b16 %v2080, %v2078
    %v2121 = vpack.c.b16 %v2083, %v2081
    %v2122 = vpack.c.b16 %v2084, %v2082
    %v2123 = vpack.c.b16 %v2087, %v2085
    %v2124 = vpack.c.b16 %v2088, %v2086
    %v2125 = vpack.c.b16 %v2091, %v2089
    %v2126 = vpack.c.b16 %v2092, %v2090
    %v2127 = vpack.c.b16 %v2095, %v2093
    %v2128 = vpack.c.b16 %v2096, %v2094
    %2161 = vmatprep.subr.bf16.mxu0 %v2112
    %2162 = vmatpush1.bf16.msra.mxu0 %v2111
    %2163 = vmatprep.subr.bf16.mxu0 %v2110
    %2164 = vmatpush1.bf16.msra.mxu0 %v2109
    %2165 = vmatprep.subr.bf16.mxu0 %v2108
    %2166 = vmatpush1.bf16.msra.mxu0 %v2107
    %2167 = vmatprep.subr.bf16.mxu0 %v2106
    %2168 = vmatpush1.bf16.msra.mxu0 %v2105
    %2169 = vmatprep.subr.bf16.mxu0 %v2104
    %2170 = vmatpush1.bf16.msra.mxu0 %v2103
    %2171 = vmatprep.subr.bf16.mxu0 %v2102
    %2172 = vmatpush1.bf16.msra.mxu0 %v2101
    %2173 = vmatprep.subr.bf16.mxu0 %v2100
    %2174 = vmatpush1.bf16.msra.mxu0 %v2099
    %2175 = vmatprep.subr.bf16.mxu0 %v2098
    %2176 = vmatpush1.bf16.msra.mxu0 %v2097
    %2177 = vmatprep.subr.bf16.mxu0 %v2128
    %2178 = vmatpush2.bf16.msra.mxu0 %v2127
    %2179 = vmatprep.subr.bf16.mxu0 %v2126
    %2180 = vmatpush2.bf16.msra.mxu0 %v2125
    %2181 = vmatprep.subr.bf16.mxu0 %v2124
    %2182 = vmatpush2.bf16.msra.mxu0 %v2123
    %2183 = vmatprep.subr.bf16.mxu0 %v2122
    %2184 = vmatpush2.bf16.msra.mxu0 %v2121
    %2185 = vmatprep.subr.bf16.mxu0 %v2120
    %2186 = vmatpush2.bf16.msra.mxu0 %v2119
    %2187 = vmatprep.subr.bf16.mxu0 %v2118
    %2188 = vmatpush2.bf16.msra.mxu0 %v2117
    %2189 = vmatprep.subr.bf16.mxu0 %v2116
    %2190 = vmatpush2.bf16.msra.mxu0 %v2115
    %2191 = vmatprep.subr.bf16.mxu0 %v2114
    %2192 = vmatpush2.bf16.msra.mxu0 %v2113
    %2193 = vmatprep.mubr.bf16.mxu0 %v1944
    %2194 = vmatmul.mubr.bf16.gmra.mxu0 %v1943
    %v2195 = vpop.f32.mrf.mxu0
    %v2196 = vadd.f32 %v1994, %v2195
    %v2197 = vpop.f32.mrf.mxu0
    %v2198 = vadd.f32 %v1998, %v2197
    %v2199 = vpop.f32.mrf.mxu0
    %v2200 = vadd.f32 %v1994, %v2199
    %v2201 = vpop.f32.mrf.mxu0
    %v2202 = vadd.f32 %v1998, %v2201
    %2203 = vmatprep.mubr.bf16.mxu0 %v1946
    %2204 = vmatmul.mubr.bf16.gmra.mxu0 %v1945
    %v2205 = vpop.f32.mrf.mxu0
    %v2206 = vadd.f32 %v1994, %v2205
    %v2207 = vpop.f32.mrf.mxu0
    %v2208 = vadd.f32 %v1998, %v2207
    %v2209 = vpop.f32.mrf.mxu0
    %v2210 = vadd.f32 %v1994, %v2209
    %v2211 = vpop.f32.mrf.mxu0
    %v2212 = vadd.f32 %v1998, %v2211
    %2213 = vmatprep.mubr.bf16.mxu0 %v1948
    %2214 = vmatmul.mubr.bf16.gmra.mxu0 %v1947
    %v2215 = vpop.f32.mrf.mxu0
    %v2216 = vadd.f32 %v1994, %v2215
    %v2217 = vpop.f32.mrf.mxu0
    %v2218 = vadd.f32 %v1998, %v2217
    %v2219 = vpop.f32.mrf.mxu0
    %v2220 = vadd.f32 %v1994, %v2219
    %v2221 = vpop.f32.mrf.mxu0
    %v2222 = vadd.f32 %v1998, %v2221
    %2223 = vmatprep.mubr.bf16.mxu0 %v1950
    %2224 = vmatmul.mubr.bf16.gmra.mxu0 %v1949
    %v2225 = vpop.f32.mrf.mxu0
    %v2226 = vadd.f32 %v1994, %v2225
    %v2227 = vpop.f32.mrf.mxu0
    %v2228 = vadd.f32 %v1998, %v2227
    %v2229 = vpop.f32.mrf.mxu0
    %v2230 = vadd.f32 %v1994, %v2229
    %v2231 = vpop.f32.mrf.mxu0
    %v2232 = vadd.f32 %v1998, %v2231
    %2233 = vmatprep.mubr.bf16.mxu0 %v1952
    %2234 = vmatmul.mubr.bf16.gmra.mxu0 %v1951
    %v2235 = vpop.f32.mrf.mxu0
    %v2236 = vadd.f32 %v1994, %v2235
    %v2237 = vpop.f32.mrf.mxu0
    %v2238 = vadd.f32 %v1998, %v2237
    %v2239 = vpop.f32.mrf.mxu0
    %v2240 = vadd.f32 %v1994, %v2239
    %v2241 = vpop.f32.mrf.mxu0
    %v2242 = vadd.f32 %v1998, %v2241
    %2243 = vmatprep.mubr.bf16.mxu0 %v1954
    %2244 = vmatmul.mubr.bf16.gmra.mxu0 %v1953
    %v2245 = vpop.f32.mrf.mxu0
    %v2246 = vadd.f32 %v1994, %v2245
    %v2247 = vpop.f32.mrf.mxu0
    %v2248 = vadd.f32 %v1998, %v2247
    %v2249 = vpop.f32.mrf.mxu0
    %v2250 = vadd.f32 %v1994, %v2249
    %v2251 = vpop.f32.mrf.mxu0
    %v2252 = vadd.f32 %v1998, %v2251
    %2253 = vmatprep.mubr.bf16.mxu0 %v1956
    %2254 = vmatmul.mubr.bf16.gmra.mxu0 %v1955
    %v2255 = vpop.f32.mrf.mxu0
    %v2256 = vadd.f32 %v1994, %v2255
    %v2257 = vpop.f32.mrf.mxu0
    %v2258 = vadd.f32 %v1998, %v2257
    %v2259 = vpop.f32.mrf.mxu0
    %v2260 = vpop.f32.mrf.mxu0
    %2261 = vdwg.mxu0
    %v2262 = vpack.c.bf16 %v2200, %v2196
    %v2263 = vpack.c.bf16 %v2202, %v2198
    %v2264 = vpack.c.bf16 %v2210, %v2206
    %v2265 = vpack.c.bf16 %v2212, %v2208
    %v2266 = vpack.c.bf16 %v2220, %v2216
    %v2267 = vpack.c.bf16 %v2222, %v2218
    %v2268 = vpack.c.bf16 %v2230, %v2226
    %v2269 = vpack.c.bf16 %v2232, %v2228
    %v2270 = vpack.c.bf16 %v2240, %v2236
    %v2271 = vpack.c.bf16 %v2242, %v2238
    %v2272 = vpack.c.bf16 %v2250, %v2246
    %v2273 = vpack.c.bf16 %v2252, %v2248
    %v2274 = vpack.c.bf16 %v2256, %v2256
    %v2275 = vpack.c.bf16 %v2258, %v2258
    %v2276 = vpack.c.bf16 %v439, %v437
    %v2277 = vpack.c.bf16 %v440, %v438
    %v2278 = vpack.c.bf16 %v443, %v441
    %v2279 = vpack.c.bf16 %v444, %v442
    %v2280 = vpack.c.bf16 %v447, %v445
    %v2281 = vpack.c.bf16 %v448, %v446
    %v2282 = vpack.c.bf16 %v451, %v449
    %v2283 = vpack.c.bf16 %v452, %v450
    %v2284 = vpack.c.bf16 %v455, %v453
    %v2285 = vpack.c.bf16 %v456, %v454
    %v2286 = vpack.c.bf16 %v459, %v457
    %v2287 = vpack.c.bf16 %v460, %v458
    %v2288 = vpack.c.bf16 %v461, %v461
    %v2289 = vpack.c.bf16 %v462, %v462
    %v2290 = vld [vmem:[#allocation19] sm:$0xff]
    %v2291 = vld [vmem:[#allocation19 + $0x8] sm:$0xff]
    %v2292 = vld [vmem:[#allocation19 + $0x10] sm:$0xff]
    %v2293 = vld [vmem:[#allocation19 + $0x18] sm:$0xff]
    %v2294 = vld [vmem:[#allocation19 + $0x20] sm:$0xff]
    %v2295 = vld [vmem:[#allocation19 + $0x28] sm:$0xff]
    %v2296 = vld [vmem:[#allocation19 + $0x30] sm:$0xff]
    %v2297 = vld [vmem:[#allocation19 + $0x38] sm:$0xff]
    %v2298 = vld [vmem:[#allocation19 + $0x40] sm:$0xff]
    %v2299 = vld [vmem:[#allocation19 + $0x48] sm:$0xff]
    %v2300 = vld [vmem:[#allocation19 + $0x50] sm:$0xff]
    %v2301 = vld [vmem:[#allocation19 + $0x58] sm:$0xff]
    %v2302 = vld [vmem:[#allocation19 + $0x60] sm:$0xff]
    %v2303 = vld [vmem:[#allocation19 + $0x68] sm:$0xff]
    %v2304 = vld [vmem:[#allocation19 + $0x70] sm:$0xff]
    %v2305 = vld [vmem:[#allocation19 + $0x78] sm:$0xff]
    %v2306 = vld [vmem:[#allocation19 + $0x80] sm:$0xff]
    %v2307 = vld [vmem:[#allocation19 + $0x88] sm:$0xff]
    %v2308 = vld [vmem:[#allocation19 + $0x90] sm:$0xff]
    %v2309 = vld [vmem:[#allocation19 + $0x98] sm:$0xff]
    %v2310 = vld [vmem:[#allocation19 + $0xa0] sm:$0xff]
    %v2311 = vld [vmem:[#allocation19 + $0xa8] sm:$0xff]
    %v2312 = vld [vmem:[#allocation19 + $0xb0] sm:$0xff]
    %v2313 = vld [vmem:[#allocation19 + $0xb8] sm:$0xff]
    %v2314 = vld [vmem:[#allocation19 + $0xc0] sm:$0xff]
    %v2315 = vld [vmem:[#allocation19 + $0xc8] sm:$0xff]
    %v2316 = vld [vmem:[#allocation19 + $0xd0] sm:$0xff]
    %v2317 = vld [vmem:[#allocation19 + $0xd8] sm:$0xff]
    %v2318 = vld [vmem:[#allocation19 + $0xe0] sm:$0xff]
    %v2319 = vld [vmem:[#allocation19 + $0xe8] sm:$0xff]
    %v2320 = vld [vmem:[#allocation19 + $0xf0] sm:$0xff]
    %v2321 = vld [vmem:[#allocation19 + $0xf8] sm:$0xff]
    %v2322 = vld [vmem:[#allocation20] sm:$0x3]
    %v2324 = vlaneseq
    %v2325 = vshrl.u32 %v2324, 7
    %v2326 = vsub.s32 0, %v2325
    %v2327 = vrot.slane %v2322, %v2326
    %v2328 = vlaneseq
    %v2329 = vshrl.u32 %v2328, 7
    %v2330 = vsub.s32 1, %v2329
    %v2331 = vrot.slane %v2322, %v2330
    %v2366 = vunpack.c.l.b16 %v2290
    %v2367 = vunpack.c.h.b16 %v2290
    %v2368 = vunpack.c.l.b16 %v2291
    %v2369 = vunpack.c.h.b16 %v2291
    %v2370 = vunpack.c.l.b16 %v2292
    %v2371 = vunpack.c.h.b16 %v2292
    %v2372 = vunpack.c.l.b16 %v2293
    %v2373 = vunpack.c.h.b16 %v2293
    %v2374 = vunpack.c.l.b16 %v2294
    %v2375 = vunpack.c.h.b16 %v2294
    %v2376 = vunpack.c.l.b16 %v2295
    %v2377 = vunpack.c.h.b16 %v2295
    %v2378 = vunpack.c.l.b16 %v2296
    %v2379 = vunpack.c.h.b16 %v2296
    %v2380 = vunpack.c.l.b16 %v2297
    %v2381 = vunpack.c.h.b16 %v2297
    %v2382 = vunpack.c.l.b16 %v2298
    %v2383 = vunpack.c.h.b16 %v2298
    %v2384 = vunpack.c.l.b16 %v2299
    %v2385 = vunpack.c.h.b16 %v2299
    %v2386 = vunpack.c.l.b16 %v2300
    %v2387 = vunpack.c.h.b16 %v2300
    %v2388 = vunpack.c.l.b16 %v2301
    %v2389 = vunpack.c.h.b16 %v2301
    %v2390 = vunpack.c.l.b16 %v2302
    %v2391 = vunpack.c.h.b16 %v2302
    %v2392 = vunpack.c.l.b16 %v2303
    %v2393 = vunpack.c.h.b16 %v2303
    %v2394 = vunpack.c.l.b16 %v2304
    %v2395 = vunpack.c.h.b16 %v2304
    %v2396 = vunpack.c.l.b16 %v2305
    %v2397 = vunpack.c.h.b16 %v2305
    %v2398 = vunpack.c.l.b16 %v2306
    %v2399 = vunpack.c.h.b16 %v2306
    %v2400 = vunpack.c.l.b16 %v2307
    %v2401 = vunpack.c.h.b16 %v2307
    %v2402 = vunpack.c.l.b16 %v2308
    %v2403 = vunpack.c.h.b16 %v2308
    %v2404 = vunpack.c.l.b16 %v2309
    %v2405 = vunpack.c.h.b16 %v2309
    %v2406 = vunpack.c.l.b16 %v2310
    %v2407 = vunpack.c.h.b16 %v2310
    %v2408 = vunpack.c.l.b16 %v2311
    %v2409 = vunpack.c.h.b16 %v2311
    %v2410 = vunpack.c.l.b16 %v2312
    %v2411 = vunpack.c.h.b16 %v2312
    %v2412 = vunpack.c.l.b16 %v2313
    %v2413 = vunpack.c.h.b16 %v2313
    %v2414 = vunpack.c.l.b16 %v2314
    %v2415 = vunpack.c.h.b16 %v2314
    %v2416 = vunpack.c.l.b16 %v2315
    %v2417 = vunpack.c.h.b16 %v2315
    %v2418 = vunpack.c.l.b16 %v2316
    %v2419 = vunpack.c.h.b16 %v2316
    %v2420 = vunpack.c.l.b16 %v2317
    %v2421 = vunpack.c.h.b16 %v2317
    %v2422 = vunpack.c.l.b16 %v2318
    %v2423 = vunpack.c.h.b16 %v2318
    %v2424 = vunpack.c.l.b16 %v2319
    %v2425 = vunpack.c.h.b16 %v2319
    %v2426 = vunpack.c.l.b16 %v2320
    %v2427 = vunpack.c.h.b16 %v2320
    %v2428 = vunpack.c.l.b16 %v2321
    %v2429 = vunpack.c.h.b16 %v2321
    %v2430 = vpack.c.b16 %v2368, %v2366
    %v2431 = vpack.c.b16 %v2369, %v2367
    %v2432 = vpack.c.b16 %v2372, %v2370
    %v2433 = vpack.c.b16 %v2373, %v2371
    %v2434 = vpack.c.b16 %v2376, %v2374
    %v2435 = vpack.c.b16 %v2377, %v2375
    %v2436 = vpack.c.b16 %v2380, %v2378
    %v2437 = vpack.c.b16 %v2381, %v2379
    %v2438 = vpack.c.b16 %v2384, %v2382
    %v2439 = vpack.c.b16 %v2385, %v2383
    %v2440 = vpack.c.b16 %v2388, %v2386
    %v2441 = vpack.c.b16 %v2389, %v2387
    %v2442 = vpack.c.b16 %v2392, %v2390
    %v2443 = vpack.c.b16 %v2393, %v2391
    %v2444 = vpack.c.b16 %v2396, %v2394
    %v2445 = vpack.c.b16 %v2397, %v2395
    %v2446 = vpack.c.b16 %v2400, %v2398
    %v2447 = vpack.c.b16 %v2401, %v2399
    %v2448 = vpack.c.b16 %v2404, %v2402
    %v2449 = vpack.c.b16 %v2405, %v2403
    %v2450 = vpack.c.b16 %v2408, %v2406
    %v2451 = vpack.c.b16 %v2409, %v2407
    %v2452 = vpack.c.b16 %v2412, %v2410
    %v2453 = vpack.c.b16 %v2413, %v2411
    %v2454 = vpack.c.b16 %v2416, %v2414
    %v2455 = vpack.c.b16 %v2417, %v2415
    %v2456 = vpack.c.b16 %v2420, %v2418
    %v2457 = vpack.c.b16 %v2421, %v2419
    %v2458 = vpack.c.b16 %v2424, %v2422
    %v2459 = vpack.c.b16 %v2425, %v2423
    %v2460 = vpack.c.b16 %v2428, %v2426
    %v2461 = vpack.c.b16 %v2429, %v2427
    %2494 = vmatprep.subr.bf16.mxu0 %v2445
    %2495 = vmatpush1.bf16.msra.mxu0 %v2444
    %2496 = vmatprep.subr.bf16.mxu0 %v2443
    %2497 = vmatpush1.bf16.msra.mxu0 %v2442
    %2498 = vmatprep.subr.bf16.mxu0 %v2441
    %2499 = vmatpush1.bf16.msra.mxu0 %v2440
    %2500 = vmatprep.subr.bf16.mxu0 %v2439
    %2501 = vmatpush1.bf16.msra.mxu0 %v2438
    %2502 = vmatprep.subr.bf16.mxu0 %v2437
    %2503 = vmatpush1.bf16.msra.mxu0 %v2436
    %2504 = vmatprep.subr.bf16.mxu0 %v2435
    %2505 = vmatpush1.bf16.msra.mxu0 %v2434
    %2506 = vmatprep.subr.bf16.mxu0 %v2433
    %2507 = vmatpush1.bf16.msra.mxu0 %v2432
    %2508 = vmatprep.subr.bf16.mxu0 %v2431
    %2509 = vmatpush1.bf16.msra.mxu0 %v2430
    %2510 = vmatprep.subr.bf16.mxu0 %v2461
    %2511 = vmatpush2.bf16.msra.mxu0 %v2460
    %2512 = vmatprep.subr.bf16.mxu0 %v2459
    %2513 = vmatpush2.bf16.msra.mxu0 %v2458
    %2514 = vmatprep.subr.bf16.mxu0 %v2457
    %2515 = vmatpush2.bf16.msra.mxu0 %v2456
    %2516 = vmatprep.subr.bf16.mxu0 %v2455
    %2517 = vmatpush2.bf16.msra.mxu0 %v2454
    %2518 = vmatprep.subr.bf16.mxu0 %v2453
    %2519 = vmatpush2.bf16.msra.mxu0 %v2452
    %2520 = vmatprep.subr.bf16.mxu0 %v2451
    %2521 = vmatpush2.bf16.msra.mxu0 %v2450
    %2522 = vmatprep.subr.bf16.mxu0 %v2449
    %2523 = vmatpush2.bf16.msra.mxu0 %v2448
    %2524 = vmatprep.subr.bf16.mxu0 %v2447
    %2525 = vmatpush2.bf16.msra.mxu0 %v2446
    %2526 = vmatprep.mubr.bf16.mxu0 %v2277
    %2527 = vmatmul.mubr.bf16.gmra.mxu0 %v2276
    %v2528 = vpop.f32.mrf.mxu0
    %v2529 = vadd.f32 %v2327, %v2528
    %v2530 = vpop.f32.mrf.mxu0
    %v2531 = vadd.f32 %v2331, %v2530
    %v2532 = vpop.f32.mrf.mxu0
    %v2533 = vadd.f32 %v2327, %v2532
    %v2534 = vpop.f32.mrf.mxu0
    %v2535 = vadd.f32 %v2331, %v2534
    %2536 = vmatprep.mubr.bf16.mxu0 %v2279
    %2537 = vmatmul.mubr.bf16.gmra.mxu0 %v2278
    %v2538 = vpop.f32.mrf.mxu0
    %v2539 = vadd.f32 %v2327, %v2538
    %v2540 = vpop.f32.mrf.mxu0
    %v2541 = vadd.f32 %v2331, %v2540
    %v2542 = vpop.f32.mrf.mxu0
    %v2543 = vadd.f32 %v2327, %v2542
    %v2544 = vpop.f32.mrf.mxu0
    %v2545 = vadd.f32 %v2331, %v2544
    %2546 = vmatprep.mubr.bf16.mxu0 %v2281
    %2547 = vmatmul.mubr.bf16.gmra.mxu0 %v2280
    %v2548 = vpop.f32.mrf.mxu0
    %v2549 = vadd.f32 %v2327, %v2548
    %v2550 = vpop.f32.mrf.mxu0
    %v2551 = vadd.f32 %v2331, %v2550
    %v2552 = vpop.f32.mrf.mxu0
    %v2553 = vadd.f32 %v2327, %v2552
    %v2554 = vpop.f32.mrf.mxu0
    %v2555 = vadd.f32 %v2331, %v2554
    %2556 = vmatprep.mubr.bf16.mxu0 %v2283
    %2557 = vmatmul.mubr.bf16.gmra.mxu0 %v2282
    %v2558 = vpop.f32.mrf.mxu0
    %v2559 = vadd.f32 %v2327, %v2558
    %v2560 = vpop.f32.mrf.mxu0
    %v2561 = vadd.f32 %v2331, %v2560
    %v2562 = vpop.f32.mrf.mxu0
    %v2563 = vadd.f32 %v2327, %v2562
    %v2564 = vpop.f32.mrf.mxu0
    %v2565 = vadd.f32 %v2331, %v2564
    %2566 = vmatprep.mubr.bf16.mxu0 %v2285
    %2567 = vmatmul.mubr.bf16.gmra.mxu0 %v2284
    %v2568 = vpop.f32.mrf.mxu0
    %v2569 = vadd.f32 %v2327, %v2568
    %v2570 = vpop.f32.mrf.mxu0
    %v2571 = vadd.f32 %v2331, %v2570
    %v2572 = vpop.f32.mrf.mxu0
    %v2573 = vadd.f32 %v2327, %v2572
    %v2574 = vpop.f32.mrf.mxu0
    %v2575 = vadd.f32 %v2331, %v2574
    %2576 = vmatprep.mubr.bf16.mxu0 %v2287
    %2577 = vmatmul.mubr.bf16.gmra.mxu0 %v2286
    %v2578 = vpop.f32.mrf.mxu0
    %v2579 = vadd.f32 %v2327, %v2578
    %v2580 = vpop.f32.mrf.mxu0
    %v2581 = vadd.f32 %v2331, %v2580
    %v2582 = vpop.f32.mrf.mxu0
    %v2583 = vadd.f32 %v2327, %v2582
    %v2584 = vpop.f32.mrf.mxu0
    %v2585 = vadd.f32 %v2331, %v2584
    %2586 = vmatprep.mubr.bf16.mxu0 %v2289
    %2587 = vmatmul.mubr.bf16.gmra.mxu0 %v2288
    %v2588 = vpop.f32.mrf.mxu0
    %v2589 = vadd.f32 %v2327, %v2588
    %v2590 = vpop.f32.mrf.mxu0
    %v2591 = vadd.f32 %v2331, %v2590
    %v2592 = vpop.f32.mrf.mxu0
    %v2593 = vpop.f32.mrf.mxu0
    %2594 = vdwg.mxu0
    %v2595 = vpack.c.bf16 %v2533, %v2529
    %v2596 = vpack.c.bf16 %v2535, %v2531
    %v2597 = vpack.c.bf16 %v2543, %v2539
    %v2598 = vpack.c.bf16 %v2545, %v2541
    %v2599 = vpack.c.bf16 %v2553, %v2549
    %v2600 = vpack.c.bf16 %v2555, %v2551
    %v2601 = vpack.c.bf16 %v2563, %v2559
    %v2602 = vpack.c.bf16 %v2565, %v2561
    %v2603 = vpack.c.bf16 %v2573, %v2569
    %v2604 = vpack.c.bf16 %v2575, %v2571
    %v2605 = vpack.c.bf16 %v2583, %v2579
    %v2606 = vpack.c.bf16 %v2585, %v2581
    %v2607 = vpack.c.bf16 %v2589, %v2589
    %v2608 = vpack.c.bf16 %v2591, %v2591
    %2609 = vmatprep.subr.bf16.mxu0 0
    %2610 = vmatpush1.bf16.xpose.msra.mxu0 0
    %2611 = vmatprep.subr.bf16.mxu0 %v2275
    %2612 = vmatpush1.bf16.xpose.msra.mxu0 %v2274
    %2613 = vmatprep.subr.bf16.mxu0 %v2273
    %2614 = vmatpush1.bf16.xpose.msra.mxu0 %v2272
    %2615 = vmatprep.subr.bf16.mxu0 %v2271
    %2616 = vmatpush1.bf16.xpose.msra.mxu0 %v2270
    %2617 = vmatprep.subr.bf16.mxu0 %v2269
    %2618 = vmatpush1.bf16.xpose.msra.mxu0 %v2268
    %2619 = vmatprep.subr.bf16.mxu0 %v2267
    %2620 = vmatpush1.bf16.xpose.msra.mxu0 %v2266
    %2621 = vmatprep.subr.bf16.mxu0 %v2265
    %2622 = vmatpush1.bf16.xpose.msra.mxu0 %v2264
    %2623 = vmatprep.subr.bf16.mxu0 %v2263
    %2624 = vmatpush1.bf16.xpose.msra.mxu0 %v2262
    %2625 = vmatprep.subr.bf16.mxu0 0
    %2626 = vmatpush2.bf16.xpose.msra.mxu0 0
    %2627 = vmatprep.subr.bf16.mxu0 0
    %2628 = vmatpush2.bf16.xpose.msra.mxu0 0
    %2629 = vmatprep.subr.bf16.mxu0 0
    %2630 = vmatpush2.bf16.xpose.msra.mxu0 0
    %2631 = vmatprep.subr.bf16.mxu0 0
    %2632 = vmatpush2.bf16.xpose.msra.mxu0 0
    %2633 = vmatprep.subr.bf16.mxu0 0
    %2634 = vmatpush2.bf16.xpose.msra.mxu0 0
    %2635 = vmatprep.subr.bf16.mxu0 0
    %2636 = vmatpush2.bf16.xpose.msra.mxu0 0
    %2637 = vmatprep.subr.bf16.mxu0 0
    %2638 = vmatpush2.bf16.xpose.msra.mxu0 0
    %2639 = vmatprep.subr.bf16.mxu0 0
    %2640 = vmatpush2.bf16.xpose.msra.mxu0 0
    %2641 = vmatprep.mubr.bf16.mxu0 %v1392
    %2642 = vmatmul.mubr.bf16.gmra.mxu0 %v1391
    %v2643 = vpop.f32.mrf.mxu0
    %v2644 = vadd.f32 %v385, %v2643
    %v2645 = vpop.f32.mrf.mxu0
    %v2646 = vpop.f32.mrf.mxu0
    %v2647 = vadd.f32 %v386, %v2646
    %v2648 = vpop.f32.mrf.mxu0
    %2649 = vmatprep.mubr.bf16.mxu0 %v1394
    %2650 = vmatmul.mubr.bf16.gmra.mxu0 %v1393
    %v2651 = vpop.f32.mrf.mxu0
    %v2652 = vadd.f32 %v387, %v2651
    %v2653 = vpop.f32.mrf.mxu0
    %v2654 = vpop.f32.mrf.mxu0
    %v2655 = vadd.f32 %v388, %v2654
    %v2656 = vpop.f32.mrf.mxu0
    %2657 = vmatprep.mubr.bf16.mxu0 %v1396
    %2658 = vmatmul.mubr.bf16.gmra.mxu0 %v1395
    %v2659 = vpop.f32.mrf.mxu0
    %v2660 = vadd.f32 %v389, %v2659
    %v2661 = vpop.f32.mrf.mxu0
    %v2662 = vpop.f32.mrf.mxu0
    %v2663 = vadd.f32 %v390, %v2662
    %v2664 = vpop.f32.mrf.mxu0
    %2665 = vmatprep.mubr.bf16.mxu0 %v1398
    %2666 = vmatmul.mubr.bf16.gmra.mxu0 %v1397
    %v2667 = vpop.f32.mrf.mxu0
    %v2668 = vadd.f32 %v391, %v2667
    %v2669 = vpop.f32.mrf.mxu0
    %v2670 = vpop.f32.mrf.mxu0
    %v2671 = vadd.f32 %v392, %v2670
    %v2672 = vpop.f32.mrf.mxu0
    %2673 = vmatprep.mubr.bf16.mxu0 %v1400
    %2674 = vmatmul.mubr.bf16.gmra.mxu0 %v1399
    %v2675 = vpop.f32.mrf.mxu0
    %v2676 = vadd.f32 %v393, %v2675
    %v2677 = vpop.f32.mrf.mxu0
    %v2678 = vpop.f32.mrf.mxu0
    %v2679 = vadd.f32 %v394, %v2678
    %v2680 = vpop.f32.mrf.mxu0
    %2681 = vmatprep.mubr.bf16.mxu0 %v1402
    %2682 = vmatmul.mubr.bf16.gmra.mxu0 %v1401
    %v2683 = vpop.f32.mrf.mxu0
    %v2684 = vadd.f32 %v395, %v2683
    %v2685 = vpop.f32.mrf.mxu0
    %v2686 = vpop.f32.mrf.mxu0
    %v2687 = vadd.f32 %v396, %v2686
    %v2688 = vpop.f32.mrf.mxu0
    %2689 = vmatprep.mubr.bf16.mxu0 %v1404
    %2690 = vmatmul.mubr.bf16.gmra.mxu0 %v1403
    %v2691 = vpop.f32.mrf.mxu0
    %v2692 = vadd.f32 %v397, %v2691
    %v2693 = vpop.f32.mrf.mxu0
    %v2694 = vpop.f32.mrf.mxu0
    %v2695 = vpop.f32.mrf.mxu0
    %2696 = vdwg.mxu0
    %v2697 = vsel %vm489, %v2644, -inf
    %2698 = vmax.xlane.f32.xlu0 %v2697
    %v2699 = vpop.xlane.xlu0 %2698
    %v2700 = vsel %vm489, %v2647, -inf
    %2701 = vmax.xlane.f32.xlu0 %v2700
    %v2702 = vpop.xlane.xlu0 %2701
    %v2703 = vsel %vm489, %v2652, -inf
    %2704 = vmax.xlane.f32.xlu0 %v2703
    %v2705 = vpop.xlane.xlu0 %2704
    %v2706 = vsel %vm489, %v2655, -inf
    %2707 = vmax.xlane.f32.xlu0 %v2706
    %v2708 = vpop.xlane.xlu0 %2707
    %v2709 = vsel %vm489, %v2660, -inf
    %2710 = vmax.xlane.f32.xlu0 %v2709
    %v2711 = vpop.xlane.xlu0 %2710
    %v2712 = vsel %vm489, %v2663, -inf
    %2713 = vmax.xlane.f32.xlu0 %v2712
    %v2714 = vpop.xlane.xlu0 %2713
    %v2715 = vsel %vm489, %v2668, -inf
    %2716 = vmax.xlane.f32.xlu0 %v2715
    %v2717 = vpop.xlane.xlu0 %2716
    %v2718 = vsel %vm489, %v2671, -inf
    %2719 = vmax.xlane.f32.xlu0 %v2718
    %v2720 = vpop.xlane.xlu0 %2719
    %v2721 = vsel %vm489, %v2676, -inf
    %2722 = vmax.xlane.f32.xlu0 %v2721
    %v2723 = vpop.xlane.xlu0 %2722
    %v2724 = vsel %vm489, %v2679, -inf
    %2725 = vmax.xlane.f32.xlu0 %v2724
    %v2726 = vpop.xlane.xlu0 %2725
    %v2727 = vsel %vm489, %v2684, -inf
    %2728 = vmax.xlane.f32.xlu0 %v2727
    %v2729 = vpop.xlane.xlu0 %2728
    %v2730 = vsel %vm489, %v2687, -inf
    %2731 = vmax.xlane.f32.xlu0 %v2730
    %v2732 = vpop.xlane.xlu0 %2731
    %vm2733 = vcmask 795648
    %v2734 = vsel %vm2733, %v2692, -inf
    %2735 = vmax.xlane.f32.xlu0 %v2734
    %v2736 = vpop.xlane.xlu0 %2735
    %v2737 = vsub.f32 %v2644, %v2699
    %v2738 = vsub.f32 %v2647, %v2702
    %v2739 = vsub.f32 %v2652, %v2705
    %v2740 = vsub.f32 %v2655, %v2708
    %v2741 = vsub.f32 %v2660, %v2711
    %v2742 = vsub.f32 %v2663, %v2714
    %v2743 = vsub.f32 %v2668, %v2717
    %v2744 = vsub.f32 %v2671, %v2720
    %v2745 = vsub.f32 %v2676, %v2723
    %v2746 = vsub.f32 %v2679, %v2726
    %v2747 = vsub.f32 %v2684, %v2729
    %v2748 = vsub.f32 %v2687, %v2732
    %v2749 = vsub.f32 %v2692, %v2736
    %v2750 = vmul.f32 %v2737, 1.442695
    %v2751 = vpow.pop %v2750
    %v2752 = vmul.f32 %v2738, 1.442695
    %v2753 = vpow.pop %v2752
    %v2754 = vmul.f32 %v2739, 1.442695
    %v2755 = vpow.pop %v2754
    %v2756 = vmul.f32 %v2740, 1.442695
    %v2757 = vpow.pop %v2756
    %v2758 = vmul.f32 %v2741, 1.442695
    %v2759 = vpow.pop %v2758
    %v2760 = vmul.f32 %v2742, 1.442695
    %v2761 = vpow.pop %v2760
    %v2762 = vmul.f32 %v2743, 1.442695
    %v2763 = vpow.pop %v2762
    %v2764 = vmul.f32 %v2744, 1.442695
    %v2765 = vpow.pop %v2764
    %v2766 = vmul.f32 %v2745, 1.442695
    %v2767 = vpow.pop %v2766
    %v2768 = vmul.f32 %v2746, 1.442695
    %v2769 = vpow.pop %v2768
    %v2770 = vmul.f32 %v2747, 1.442695
    %v2771 = vpow.pop %v2770
    %v2772 = vmul.f32 %v2748, 1.442695
    %v2773 = vpow.pop %v2772
    %v2774 = vmul.f32 %v2749, 1.442695
    %v2775 = vpow.pop %v2774
    %v2776 = vsel %vm489, %v2751, 0.0
    %2777 = vadd.xlane.f32.xlu0 %v2776
    %v2778 = vpop.xlane.xlu0 %2777
    %v2779 = vsel %vm489, %v2753, 0.0
    %2780 = vadd.xlane.f32.xlu0 %v2779
    %v2781 = vpop.xlane.xlu0 %2780
    %v2782 = vsel %vm489, %v2755, 0.0
    %2783 = vadd.xlane.f32.xlu0 %v2782
    %v2784 = vpop.xlane.xlu0 %2783
    %v2785 = vsel %vm489, %v2757, 0.0
    %2786 = vadd.xlane.f32.xlu0 %v2785
    %v2787 = vpop.xlane.xlu0 %2786
    %v2788 = vsel %vm489, %v2759, 0.0
    %2789 = vadd.xlane.f32.xlu0 %v2788
    %v2790 = vpop.xlane.xlu0 %2789
    %v2791 = vsel %vm489, %v2761, 0.0
    %2792 = vadd.xlane.f32.xlu0 %v2791
    %v2793 = vpop.xlane.xlu0 %2792
    %v2794 = vsel %vm489, %v2763, 0.0
    %2795 = vadd.xlane.f32.xlu0 %v2794
    %v2796 = vpop.xlane.xlu0 %2795
    %v2797 = vsel %vm489, %v2765, 0.0
    %2798 = vadd.xlane.f32.xlu0 %v2797
    %v2799 = vpop.xlane.xlu0 %2798
    %v2800 = vsel %vm489, %v2767, 0.0
    %2801 = vadd.xlane.f32.xlu0 %v2800
    %v2802 = vpop.xlane.xlu0 %2801
    %v2803 = vsel %vm489, %v2769, 0.0
    %2804 = vadd.xlane.f32.xlu0 %v2803
    %v2805 = vpop.xlane.xlu0 %2804
    %v2806 = vsel %vm489, %v2771, 0.0
    %2807 = vadd.xlane.f32.xlu0 %v2806
    %v2808 = vpop.xlane.xlu0 %2807
    %v2809 = vsel %vm489, %v2773, 0.0
    %2810 = vadd.xlane.f32.xlu0 %v2809
    %v2811 = vpop.xlane.xlu0 %2810
    %v2812 = vsel %vm2733, %v2775, 0.0
    %2813 = vadd.xlane.f32.xlu0 %v2812
    %v2814 = vpop.xlane.xlu0 %2813
    %v2815 = vrcp.pop %v2778
    %v2816 = vmul.f32 %v2751, %v2815
    %v2817 = vrcp.pop %v2781
    %v2818 = vmul.f32 %v2753, %v2817
    %v2819 = vrcp.pop %v2784
    %v2820 = vmul.f32 %v2755, %v2819
    %v2821 = vrcp.pop %v2787
    %v2822 = vmul.f32 %v2757, %v2821
    %v2823 = vrcp.pop %v2790
    %v2824 = vmul.f32 %v2759, %v2823
    %v2825 = vrcp.pop %v2793
    %v2826 = vmul.f32 %v2761, %v2825
    %v2827 = vrcp.pop %v2796
    %v2828 = vmul.f32 %v2763, %v2827
    %v2829 = vrcp.pop %v2799
    %v2830 = vmul.f32 %v2765, %v2829
    %v2831 = vrcp.pop %v2802
    %v2832 = vmul.f32 %v2767, %v2831
    %v2833 = vrcp.pop %v2805
    %v2834 = vmul.f32 %v2769, %v2833
    %v2835 = vrcp.pop %v2808
    %v2836 = vmul.f32 %v2771, %v2835
    %v2837 = vrcp.pop %v2811
    %v2838 = vmul.f32 %v2773, %v2837
    %v2839 = vrcp.pop %v2814
    %v2840 = vmul.f32 %v2775, %v2839
    %v2841 = vpack.c.bf16 %v2818, %v2816
    %v2842 = vpack.c.bf16 %v2822, %v2820
    %v2843 = vpack.c.bf16 %v2826, %v2824
    %v2844 = vpack.c.bf16 %v2830, %v2828
    %v2845 = vpack.c.bf16 %v2834, %v2832
    %v2846 = vpack.c.bf16 %v2838, %v2836
    %v2847 = vpack.c.bf16 %v2840, %v2840
    %v2849 = vsel %vm489, %v2841, 0
    %v2852 = vsel %vm489, %v2842, 0
    %v2855 = vsel %vm489, %v2843, 0
    %v2858 = vsel %vm489, %v2844, 0
    %v2861 = vsel %vm489, %v2845, 0
    %v2864 = vsel %vm489, %v2846, 0
    %v2867 = vsel %vm489, %v2847, 0
    %vm2869 = vcmask 1040384
    %v2871 = vsel %vm2869, %v2607, 0
    %v2874 = vsel %vm2869, %v2608, 0
    %2876 = vmatprep.subr.bf16.mxu0 0
    %2877 = vmatpush1.bf16.msra.mxu0 0
    %2878 = vmatprep.subr.bf16.mxu0 %v2874
    %2879 = vmatpush1.bf16.msra.mxu0 %v2871
    %2880 = vmatprep.subr.bf16.mxu0 %v2606
    %2881 = vmatpush1.bf16.msra.mxu0 %v2605
    %2882 = vmatprep.subr.bf16.mxu0 %v2604
    %2883 = vmatpush1.bf16.msra.mxu0 %v2603
    %2884 = vmatprep.subr.bf16.mxu0 %v2602
    %2885 = vmatpush1.bf16.msra.mxu0 %v2601
    %2886 = vmatprep.subr.bf16.mxu0 %v2600
    %2887 = vmatpush1.bf16.msra.mxu0 %v2599
    %2888 = vmatprep.subr.bf16.mxu0 %v2598
    %2889 = vmatpush1.bf16.msra.mxu0 %v2597
    %2890 = vmatprep.subr.bf16.mxu0 %v2596
    %2891 = vmatpush1.bf16.msra.mxu0 %v2595
    %2892 = vmatprep.subr.bf16.mxu0 0
    %2893 = vmatpush2.bf16.msra.mxu0 0
    %2894 = vmatprep.subr.bf16.mxu0 0
    %2895 = vmatpush2.bf16.msra.mxu0 0
    %2896 = vmatprep.subr.bf16.mxu0 0
    %2897 = vmatpush2.bf16.msra.mxu0 0
    %2898 = vmatprep.subr.bf16.mxu0 0
    %2899 = vmatpush2.bf16.msra.mxu0 0
    %2900 = vmatprep.subr.bf16.mxu0 0
    %2901 = vmatpush2.bf16.msra.mxu0 0
    %2902 = vmatprep.subr.bf16.mxu0 0
    %2903 = vmatpush2.bf16.msra.mxu0 0
    %2904 = vmatprep.subr.bf16.mxu0 0
    %2905 = vmatpush2.bf16.msra.mxu0 0
    %2906 = vmatprep.subr.bf16.mxu0 0
    %2907 = vmatpush2.bf16.msra.mxu0 0
    %2908 = vmatprep.mubr.bf16.mxu0 0
    %2909 = vmatmul.mubr.bf16.gmra.mxu0 %v2849
    %v2910 = vpop.f32.mrf.mxu0
    %v2911 = vadd.f32 0.0, %v2910
    %v2912 = vpop.f32.mrf.mxu0
    %v2913 = vadd.f32 0.0, %v2912
    %v2914 = vpop.f32.mrf.mxu0
    %v2915 = vadd.f32 0.0, %v2914
    %v2916 = vpop.f32.mrf.mxu0
    %v2917 = vadd.f32 0.0, %v2916
    %2918 = vmatprep.mubr.bf16.mxu0 0
    %2919 = vmatmul.mubr.bf16.gmra.mxu0 %v2852
    %v2920 = vpop.f32.mrf.mxu0
    %v2921 = vadd.f32 0.0, %v2920
    %v2922 = vpop.f32.mrf.mxu0
    %v2923 = vadd.f32 0.0, %v2922
    %v2924 = vpop.f32.mrf.mxu0
    %v2925 = vadd.f32 0.0, %v2924
    %v2926 = vpop.f32.mrf.mxu0
    %v2927 = vadd.f32 0.0, %v2926
    %2928 = vmatprep.mubr.bf16.mxu0 0
    %2929 = vmatmul.mubr.bf16.gmra.mxu0 %v2855
    %v2930 = vpop.f32.mrf.mxu0
    %v2931 = vadd.f32 0.0, %v2930
    %v2932 = vpop.f32.mrf.mxu0
    %v2933 = vadd.f32 0.0, %v2932
    %v2934 = vpop.f32.mrf.mxu0
    %v2935 = vadd.f32 0.0, %v2934
    %v2936 = vpop.f32.mrf.mxu0
    %v2937 = vadd.f32 0.0, %v2936
    %2938 = vmatprep.mubr.bf16.mxu0 0
    %2939 = vmatmul.mubr.bf16.gmra.mxu0 %v2858
    %v2940 = vpop.f32.mrf.mxu0
    %v2941 = vadd.f32 0.0, %v2940
    %v2942 = vpop.f32.mrf.mxu0
    %v2943 = vadd.f32 0.0, %v2942
    %v2944 = vpop.f32.mrf.mxu0
    %v2945 = vadd.f32 0.0, %v2944
    %v2946 = vpop.f32.mrf.mxu0
    %v2947 = vadd.f32 0.0, %v2946
    %2948 = vmatprep.mubr.bf16.mxu0 0
    %2949 = vmatmul.mubr.bf16.gmra.mxu0 %v2861
    %v2950 = vpop.f32.mrf.mxu0
    %v2951 = vadd.f32 0.0, %v2950
    %v2952 = vpop.f32.mrf.mxu0
    %v2953 = vadd.f32 0.0, %v2952
    %v2954 = vpop.f32.mrf.mxu0
    %v2955 = vadd.f32 0.0, %v2954
    %v2956 = vpop.f32.mrf.mxu0
    %v2957 = vadd.f32 0.0, %v2956
    %2958 = vmatprep.mubr.bf16.mxu0 0
    %2959 = vmatmul.mubr.bf16.gmra.mxu0 %v2864
    %v2960 = vpop.f32.mrf.mxu0
    %v2961 = vadd.f32 0.0, %v2960
    %v2962 = vpop.f32.mrf.mxu0
    %v2963 = vadd.f32 0.0, %v2962
    %v2964 = vpop.f32.mrf.mxu0
    %v2965 = vadd.f32 0.0, %v2964
    %v2966 = vpop.f32.mrf.mxu0
    %v2967 = vadd.f32 0.0, %v2966
    %2968 = vmatprep.mubr.bf16.mxu0 0
    %2969 = vmatmul.mubr.bf16.gmra.mxu0 %v2867
    %v2970 = vpop.f32.mrf.mxu0
    %v2971 = vadd.f32 0.0, %v2970
    %v2972 = vpop.f32.mrf.mxu0
    %v2973 = vadd.f32 0.0, %v2972
    %v2974 = vpop.f32.mrf.mxu0
    %v2975 = vpop.f32.mrf.mxu0
    %2976 = vdwg.mxu0
    %v2977 = vpack.c.bf16 %v2915, %v2911
    %v2978 = vpack.c.bf16 %v2917, %v2913
    %v2979 = vpack.c.bf16 %v2925, %v2921
    %v2980 = vpack.c.bf16 %v2927, %v2923
    %v2981 = vpack.c.bf16 %v2935, %v2931
    %v2982 = vpack.c.bf16 %v2937, %v2933
    %v2983 = vpack.c.bf16 %v2945, %v2941
    %v2984 = vpack.c.bf16 %v2947, %v2943
    %v2985 = vpack.c.bf16 %v2955, %v2951
    %v2986 = vpack.c.bf16 %v2957, %v2953
    %v2987 = vpack.c.bf16 %v2965, %v2961
    %v2988 = vpack.c.bf16 %v2967, %v2963
    %v2989 = vpack.c.bf16 %v2971, %v2971
    %v2990 = vpack.c.bf16 %v2973, %v2973
    %v2991 = vld [vmem:[#allocation22] sm:$0xff]
    %v2992 = vld [vmem:[#allocation22 + $0x8] sm:$0xff]
    %v2993 = vld [vmem:[#allocation22 + $0x10] sm:$0xff]
    %v2994 = vld [vmem:[#allocation22 + $0x18] sm:$0xff]
    %v2995 = vld [vmem:[#allocation22 + $0x20] sm:$0xff]
    %v2996 = vld [vmem:[#allocation22 + $0x28] sm:$0xff]
    %v2997 = vld [vmem:[#allocation22 + $0x30] sm:$0xff]
    %v2998 = vld [vmem:[#allocation22 + $0x38] sm:$0xff]
    %v2999 = vld [vmem:[#allocation22 + $0x40] sm:$0xff]
    %v3000 = vld [vmem:[#allocation22 + $0x48] sm:$0xff]
    %v3001 = vld [vmem:[#allocation22 + $0x50] sm:$0xff]
    %v3002 = vld [vmem:[#allocation22 + $0x58] sm:$0xff]
    %v3003 = vld [vmem:[#allocation22 + $0x60] sm:$0xff]
    %v3004 = vld [vmem:[#allocation22 + $0x68] sm:$0xff]
    %v3005 = vld [vmem:[#allocation22 + $0x70] sm:$0xff]
    %v3006 = vld [vmem:[#allocation22 + $0x78] sm:$0xff]
    %v3007 = vld [vmem:[#allocation22 + $0x80] sm:$0xff]
    %v3008 = vld [vmem:[#allocation22 + $0x88] sm:$0xff]
    %v3009 = vld [vmem:[#allocation22 + $0x90] sm:$0xff]
    %v3010 = vld [vmem:[#allocation22 + $0x98] sm:$0xff]
    %v3011 = vld [vmem:[#allocation22 + $0xa0] sm:$0xff]
    %v3012 = vld [vmem:[#allocation22 + $0xa8] sm:$0xff]
    %v3013 = vld [vmem:[#allocation22 + $0xb0] sm:$0xff]
    %v3014 = vld [vmem:[#allocation22 + $0xb8] sm:$0xff]
    %v3015 = vld [vmem:[#allocation22 + $0xc0] sm:$0xff]
    %v3016 = vld [vmem:[#allocation22 + $0xc8] sm:$0xff]
    %v3017 = vld [vmem:[#allocation22 + $0xd0] sm:$0xff]
    %v3018 = vld [vmem:[#allocation22 + $0xd8] sm:$0xff]
    %v3019 = vld [vmem:[#allocation22 + $0xe0] sm:$0xff]
    %v3020 = vld [vmem:[#allocation22 + $0xe8] sm:$0xff]
    %v3021 = vld [vmem:[#allocation22 + $0xf0] sm:$0xff]
    %v3022 = vld [vmem:[#allocation22 + $0xf8] sm:$0xff]
    %v3023 = vld [vmem:[#allocation23] sm:$0x3]
    %v3025 = vlaneseq
    %v3026 = vshrl.u32 %v3025, 7
    %v3027 = vsub.s32 0, %v3026
    %v3028 = vrot.slane %v3023, %v3027
    %v3029 = vlaneseq
    %v3030 = vshrl.u32 %v3029, 7
    %v3031 = vsub.s32 1, %v3030
    %v3032 = vrot.slane %v3023, %v3031
    %v3067 = vunpack.c.l.b16 %v2991
    %v3068 = vunpack.c.h.b16 %v2991
    %v3069 = vunpack.c.l.b16 %v2992
    %v3070 = vunpack.c.h.b16 %v2992
    %v3071 = vunpack.c.l.b16 %v2993
    %v3072 = vunpack.c.h.b16 %v2993
    %v3073 = vunpack.c.l.b16 %v2994
    %v3074 = vunpack.c.h.b16 %v2994
    %v3075 = vunpack.c.l.b16 %v2995
    %v3076 = vunpack.c.h.b16 %v2995
    %v3077 = vunpack.c.l.b16 %v2996
    %v3078 = vunpack.c.h.b16 %v2996
    %v3079 = vunpack.c.l.b16 %v2997
    %v3080 = vunpack.c.h.b16 %v2997
    %v3081 = vunpack.c.l.b16 %v2998
    %v3082 = vunpack.c.h.b16 %v2998
    %v3083 = vunpack.c.l.b16 %v2999
    %v3084 = vunpack.c.h.b16 %v2999
    %v3085 = vunpack.c.l.b16 %v3000
    %v3086 = vunpack.c.h.b16 %v3000
    %v3087 = vunpack.c.l.b16 %v3001
    %v3088 = vunpack.c.h.b16 %v3001
    %v3089 = vunpack.c.l.b16 %v3002
    %v3090 = vunpack.c.h.b16 %v3002
    %v3091 = vunpack.c.l.b16 %v3003
    %v3092 = vunpack.c.h.b16 %v3003
    %v3093 = vunpack.c.l.b16 %v3004
    %v3094 = vunpack.c.h.b16 %v3004
    %v3095 = vunpack.c.l.b16 %v3005
    %v3096 = vunpack.c.h.b16 %v3005
    %v3097 = vunpack.c.l.b16 %v3006
    %v3098 = vunpack.c.h.b16 %v3006
    %v3099 = vunpack.c.l.b16 %v3007
    %v3100 = vunpack.c.h.b16 %v3007
    %v3101 = vunpack.c.l.b16 %v3008
    %v3102 = vunpack.c.h.b16 %v3008
    %v3103 = vunpack.c.l.b16 %v3009
    %v3104 = vunpack.c.h.b16 %v3009
    %v3105 = vunpack.c.l.b16 %v3010
    %v3106 = vunpack.c.h.b16 %v3010
    %v3107 = vunpack.c.l.b16 %v3011
    %v3108 = vunpack.c.h.b16 %v3011
    %v3109 = vunpack.c.l.b16 %v3012
    %v3110 = vunpack.c.h.b16 %v3012
    %v3111 = vunpack.c.l.b16 %v3013
    %v3112 = vunpack.c.h.b16 %v3013
    %v3113 = vunpack.c.l.b16 %v3014
    %v3114 = vunpack.c.h.b16 %v3014
    %v3115 = vunpack.c.l.b16 %v3015
    %v3116 = vunpack.c.h.b16 %v3015
    %v3117 = vunpack.c.l.b16 %v3016
    %v3118 = vunpack.c.h.b16 %v3016
    %v3119 = vunpack.c.l.b16 %v3017
    %v3120 = vunpack.c.h.b16 %v3017
    %v3121 = vunpack.c.l.b16 %v3018
    %v3122 = vunpack.c.h.b16 %v3018
    %v3123 = vunpack.c.l.b16 %v3019
    %v3124 = vunpack.c.h.b16 %v3019
    %v3125 = vunpack.c.l.b16 %v3020
    %v3126 = vunpack.c.h.b16 %v3020
    %v3127 = vunpack.c.l.b16 %v3021
    %v3128 = vunpack.c.h.b16 %v3021
    %v3129 = vunpack.c.l.b16 %v3022
    %v3130 = vunpack.c.h.b16 %v3022
    %v3131 = vpack.c.b16 %v3069, %v3067
    %v3132 = vpack.c.b16 %v3070, %v3068
    %v3133 = vpack.c.b16 %v3073, %v3071
    %v3134 = vpack.c.b16 %v3074, %v3072
    %v3135 = vpack.c.b16 %v3077, %v3075
    %v3136 = vpack.c.b16 %v3078, %v3076
    %v3137 = vpack.c.b16 %v3081, %v3079
    %v3138 = vpack.c.b16 %v3082, %v3080
    %v3139 = vpack.c.b16 %v3085, %v3083
    %v3140 = vpack.c.b16 %v3086, %v3084
    %v3141 = vpack.c.b16 %v3089, %v3087
    %v3142 = vpack.c.b16 %v3090, %v3088
    %v3143 = vpack.c.b16 %v3093, %v3091
    %v3144 = vpack.c.b16 %v3094, %v3092
    %v3145 = vpack.c.b16 %v3097, %v3095
    %v3146 = vpack.c.b16 %v3098, %v3096
    %v3147 = vpack.c.b16 %v3101, %v3099
    %v3148 = vpack.c.b16 %v3102, %v3100
    %v3149 = vpack.c.b16 %v3105, %v3103
    %v3150 = vpack.c.b16 %v3106, %v3104
    %v3151 = vpack.c.b16 %v3109, %v3107
    %v3152 = vpack.c.b16 %v3110, %v3108
    %v3153 = vpack.c.b16 %v3113, %v3111
    %v3154 = vpack.c.b16 %v3114, %v3112
    %v3155 = vpack.c.b16 %v3117, %v3115
    %v3156 = vpack.c.b16 %v3118, %v3116
    %v3157 = vpack.c.b16 %v3121, %v3119
    %v3158 = vpack.c.b16 %v3122, %v3120
    %v3159 = vpack.c.b16 %v3125, %v3123
    %v3160 = vpack.c.b16 %v3126, %v3124
    %v3161 = vpack.c.b16 %v3129, %v3127
    %v3162 = vpack.c.b16 %v3130, %v3128
    %3195 = vmatprep.subr.bf16.mxu0 %v3146
    %3196 = vmatpush1.bf16.msra.mxu0 %v3145
    %3197 = vmatprep.subr.bf16.mxu0 %v3144
    %3198 = vmatpush1.bf16.msra.mxu0 %v3143
    %3199 = vmatprep.subr.bf16.mxu0 %v3142
    %3200 = vmatpush1.bf16.msra.mxu0 %v3141
    %3201 = vmatprep.subr.bf16.mxu0 %v3140
    %3202 = vmatpush1.bf16.msra.mxu0 %v3139
    %3203 = vmatprep.subr.bf16.mxu0 %v3138
    %3204 = vmatpush1.bf16.msra.mxu0 %v3137
    %3205 = vmatprep.subr.bf16.mxu0 %v3136
    %3206 = vmatpush1.bf16.msra.mxu0 %v3135
    %3207 = vmatprep.subr.bf16.mxu0 %v3134
    %3208 = vmatpush1.bf16.msra.mxu0 %v3133
    %3209 = vmatprep.subr.bf16.mxu0 %v3132
    %3210 = vmatpush1.bf16.msra.mxu0 %v3131
    %3211 = vmatprep.subr.bf16.mxu0 %v3162
    %3212 = vmatpush2.bf16.msra.mxu0 %v3161
    %3213 = vmatprep.subr.bf16.mxu0 %v3160
    %3214 = vmatpush2.bf16.msra.mxu0 %v3159
    %3215 = vmatprep.subr.bf16.mxu0 %v3158
    %3216 = vmatpush2.bf16.msra.mxu0 %v3157
    %3217 = vmatprep.subr.bf16.mxu0 %v3156
    %3218 = vmatpush2.bf16.msra.mxu0 %v3155
    %3219 = vmatprep.subr.bf16.mxu0 %v3154
    %3220 = vmatpush2.bf16.msra.mxu0 %v3153
    %3221 = vmatprep.subr.bf16.mxu0 %v3152
    %3222 = vmatpush2.bf16.msra.mxu0 %v3151
    %3223 = vmatprep.subr.bf16.mxu0 %v3150
    %3224 = vmatpush2.bf16.msra.mxu0 %v3149
    %3225 = vmatprep.subr.bf16.mxu0 %v3148
    %3226 = vmatpush2.bf16.msra.mxu0 %v3147
    %3227 = vmatprep.mubr.bf16.mxu0 %v2978
    %3228 = vmatmul.mubr.bf16.gmra.mxu0 %v2977
    %v3229 = vpop.f32.mrf.mxu0
    %v3230 = vadd.f32 %v3028, %v3229
    %v3231 = vpop.f32.mrf.mxu0
    %v3232 = vadd.f32 %v3032, %v3231
    %v3233 = vpop.f32.mrf.mxu0
    %v3234 = vadd.f32 %v3028, %v3233
    %v3235 = vpop.f32.mrf.mxu0
    %v3236 = vadd.f32 %v3032, %v3235
    %3237 = vmatprep.mubr.bf16.mxu0 %v2980
    %3238 = vmatmul.mubr.bf16.gmra.mxu0 %v2979
    %v3239 = vpop.f32.mrf.mxu0
    %v3240 = vadd.f32 %v3028, %v3239
    %v3241 = vpop.f32.mrf.mxu0
    %v3242 = vadd.f32 %v3032, %v3241
    %v3243 = vpop.f32.mrf.mxu0
    %v3244 = vadd.f32 %v3028, %v3243
    %v3245 = vpop.f32.mrf.mxu0
    %v3246 = vadd.f32 %v3032, %v3245
    %3247 = vmatprep.mubr.bf16.mxu0 %v2982
    %3248 = vmatmul.mubr.bf16.gmra.mxu0 %v2981
    %v3249 = vpop.f32.mrf.mxu0
    %v3250 = vadd.f32 %v3028, %v3249
    %v3251 = vpop.f32.mrf.mxu0
    %v3252 = vadd.f32 %v3032, %v3251
    %v3253 = vpop.f32.mrf.mxu0
    %v3254 = vadd.f32 %v3028, %v3253
    %v3255 = vpop.f32.mrf.mxu0
    %v3256 = vadd.f32 %v3032, %v3255
    %3257 = vmatprep.mubr.bf16.mxu0 %v2984
    %3258 = vmatmul.mubr.bf16.gmra.mxu0 %v2983
    %v3259 = vpop.f32.mrf.mxu0
    %v3260 = vadd.f32 %v3028, %v3259
    %v3261 = vpop.f32.mrf.mxu0
    %v3262 = vadd.f32 %v3032, %v3261
    %v3263 = vpop.f32.mrf.mxu0
    %v3264 = vadd.f32 %v3028, %v3263
    %v3265 = vpop.f32.mrf.mxu0
    %v3266 = vadd.f32 %v3032, %v3265
    %3267 = vmatprep.mubr.bf16.mxu0 %v2986
    %3268 = vmatmul.mubr.bf16.gmra.mxu0 %v2985
    %v3269 = vpop.f32.mrf.mxu0
    %v3270 = vadd.f32 %v3028, %v3269
    %v3271 = vpop.f32.mrf.mxu0
    %v3272 = vadd.f32 %v3032, %v3271
    %v3273 = vpop.f32.mrf.mxu0
    %v3274 = vadd.f32 %v3028, %v3273
    %v3275 = vpop.f32.mrf.mxu0
    %v3276 = vadd.f32 %v3032, %v3275
    %3277 = vmatprep.mubr.bf16.mxu0 %v2988
    %3278 = vmatmul.mubr.bf16.gmra.mxu0 %v2987
    %v3279 = vpop.f32.mrf.mxu0
    %v3280 = vadd.f32 %v3028, %v3279
    %v3281 = vpop.f32.mrf.mxu0
    %v3282 = vadd.f32 %v3032, %v3281
    %v3283 = vpop.f32.mrf.mxu0
    %v3284 = vadd.f32 %v3028, %v3283
    %v3285 = vpop.f32.mrf.mxu0
    %v3286 = vadd.f32 %v3032, %v3285
    %3287 = vmatprep.mubr.bf16.mxu0 %v2990
    %3288 = vmatmul.mubr.bf16.gmra.mxu0 %v2989
    %v3289 = vpop.f32.mrf.mxu0
    %v3290 = vadd.f32 %v3028, %v3289
    %v3291 = vpop.f32.mrf.mxu0
    %v3292 = vadd.f32 %v3032, %v3291
    %v3293 = vpop.f32.mrf.mxu0
    %v3294 = vpop.f32.mrf.mxu0
    %3295 = vdwg.mxu0
    %v3296 = vadd.f32 %v3230, %v411
    %v3297 = vadd.f32 %v3232, %v412
    %v3298 = vadd.f32 %v3234, %v413
    %v3299 = vadd.f32 %v3236, %v414
    %v3300 = vadd.f32 %v3240, %v415
    %v3301 = vadd.f32 %v3242, %v416
    %v3302 = vadd.f32 %v3244, %v417
    %v3303 = vadd.f32 %v3246, %v418
    %v3304 = vadd.f32 %v3250, %v419
    %v3305 = vadd.f32 %v3252, %v420
    %v3306 = vadd.f32 %v3254, %v421
    %v3307 = vadd.f32 %v3256, %v422
    %v3308 = vadd.f32 %v3260, %v423
    %v3309 = vadd.f32 %v3262, %v424
    %v3310 = vadd.f32 %v3264, %v425
    %v3311 = vadd.f32 %v3266, %v426
    %v3312 = vadd.f32 %v3270, %v427
    %v3313 = vadd.f32 %v3272, %v428
    %v3314 = vadd.f32 %v3274, %v429
    %v3315 = vadd.f32 %v3276, %v430
    %v3316 = vadd.f32 %v3280, %v431
    %v3317 = vadd.f32 %v3282, %v432
    %v3318 = vadd.f32 %v3284, %v433
    %v3319 = vadd.f32 %v3286, %v434
    %v3320 = vadd.f32 %v3290, %v435
    %v3321 = vadd.f32 %v3292, %v436
    %v3322 = vmax.f32 %v3296, 0.0
    %v3323 = vmax.f32 %v3297, 0.0
    %v3324 = vmax.f32 %v3298, 0.0
    %v3325 = vmax.f32 %v3299, 0.0
    %v3326 = vmax.f32 %v3300, 0.0
    %v3327 = vmax.f32 %v3301, 0.0
    %v3328 = vmax.f32 %v3302, 0.0
    %v3329 = vmax.f32 %v3303, 0.0
    %v3330 = vmax.f32 %v3304, 0.0
    %v3331 = vmax.f32 %v3305, 0.0
    %v3332 = vmax.f32 %v3306, 0.0
    %v3333 = vmax.f32 %v3307, 0.0
    %v3334 = vmax.f32 %v3308, 0.0
    %v3335 = vmax.f32 %v3309, 0.0
    %v3336 = vmax.f32 %v3310, 0.0
    %v3337 = vmax.f32 %v3311, 0.0
    %v3338 = vmax.f32 %v3312, 0.0
    %v3339 = vmax.f32 %v3313, 0.0
    %v3340 = vmax.f32 %v3314, 0.0
    %v3341 = vmax.f32 %v3315, 0.0
    %v3342 = vmax.f32 %v3316, 0.0
    %v3343 = vmax.f32 %v3317, 0.0
    %v3344 = vmax.f32 %v3318, 0.0
    %v3345 = vmax.f32 %v3319, 0.0
    %v3346 = vmax.f32 %v3320, 0.0
    %v3347 = vmax.f32 %v3321, 0.0
    %v3348 = vpack.c.bf16 %v3324, %v3322
    %v3349 = vpack.c.bf16 %v3325, %v3323
    %v3350 = vpack.c.bf16 %v3328, %v3326
    %v3351 = vpack.c.bf16 %v3329, %v3327
    %v3352 = vpack.c.bf16 %v3332, %v3330
    %v3353 = vpack.c.bf16 %v3333, %v3331
    %v3354 = vpack.c.bf16 %v3336, %v3334
    %v3355 = vpack.c.bf16 %v3337, %v3335
    %v3356 = vpack.c.bf16 %v3340, %v3338
    %v3357 = vpack.c.bf16 %v3341, %v3339
    %v3358 = vpack.c.bf16 %v3344, %v3342
    %v3359 = vpack.c.bf16 %v3345, %v3343
    %v3360 = vpack.c.bf16 %v3346, %v3346
    %v3361 = vpack.c.bf16 %v3347, %v3347
    %v3362 = vld [vmem:[#allocation26] sm:$0x7]
    %v3363 = vld [vmem:[#allocation25] sm:$0xff]
    %v3364 = vld [vmem:[#allocation25 + $0x8] sm:$0xf]
    %v3365 = vld [vmem:[#allocation25 + $0xc] sm:$0xff]
    %v3366 = vld [vmem:[#allocation25 + $0x14] sm:$0xf]
    %v3367 = vld [vmem:[#allocation25 + $0x18] sm:$0xff]
    %v3368 = vld [vmem:[#allocation25 + $0x20] sm:$0xf]
    %v3369 = vld [vmem:[#allocation25 + $0x24] sm:$0xff]
    %v3370 = vld [vmem:[#allocation25 + $0x2c] sm:$0xf]
    %v3371 = vld [vmem:[#allocation25 + $0x30] sm:$0xff]
    %v3372 = vld [vmem:[#allocation25 + $0x38] sm:$0xf]
    %v3373 = vld [vmem:[#allocation25 + $0x3c] sm:$0xff]
    %v3374 = vld [vmem:[#allocation25 + $0x44] sm:$0xf]
    %v3375 = vld [vmem:[#allocation25 + $0x48] sm:$0xff]
    %v3376 = vld [vmem:[#allocation25 + $0x50] sm:$0xf]
    %v3377 = vld [vmem:[#allocation25 + $0x54] sm:$0xff]
    %v3378 = vld [vmem:[#allocation25 + $0x5c] sm:$0xf]
    %v3379 = vld [vmem:[#allocation25 + $0x60] sm:$0xff]
    %v3380 = vld [vmem:[#allocation25 + $0x68] sm:$0xf]
    %v3381 = vld [vmem:[#allocation25 + $0x6c] sm:$0xff]
    %v3382 = vld [vmem:[#allocation25 + $0x74] sm:$0xf]
    %v3383 = vld [vmem:[#allocation25 + $0x78] sm:$0xff]
    %v3384 = vld [vmem:[#allocation25 + $0x80] sm:$0xf]
    %v3385 = vld [vmem:[#allocation25 + $0x84] sm:$0xff]
    %v3386 = vld [vmem:[#allocation25 + $0x8c] sm:$0xf]
    %v3387 = vld [vmem:[#allocation25 + $0x90] sm:$0xff]
    %v3388 = vld [vmem:[#allocation25 + $0x98] sm:$0xf]
    %v3389 = vld [vmem:[#allocation25 + $0x9c] sm:$0xff]
    %v3390 = vld [vmem:[#allocation25 + $0xa4] sm:$0xf]
    %v3391 = vld [vmem:[#allocation25 + $0xa8] sm:$0xff]
    %v3392 = vld [vmem:[#allocation25 + $0xb0] sm:$0xf]
    %v3393 = vld [vmem:[#allocation25 + $0xb4] sm:$0xff]
    %v3394 = vld [vmem:[#allocation25 + $0xbc] sm:$0xf]
    %v3395 = vld [vmem:[#allocation25 + $0xc0] sm:$0xff]
    %v3396 = vld [vmem:[#allocation25 + $0xc8] sm:$0xf]
    %v3397 = vld [vmem:[#allocation25 + $0xcc] sm:$0xff]
    %v3398 = vld [vmem:[#allocation25 + $0xd4] sm:$0xf]
    %v3399 = vld [vmem:[#allocation25 + $0xd8] sm:$0xff]
    %v3400 = vld [vmem:[#allocation25 + $0xe0] sm:$0xf]
    %v3401 = vld [vmem:[#allocation25 + $0xe4] sm:$0xff]
    %v3402 = vld [vmem:[#allocation25 + $0xec] sm:$0xf]
    %v3403 = vld [vmem:[#allocation25 + $0xf0] sm:$0xff]
    %v3404 = vld [vmem:[#allocation25 + $0xf8] sm:$0xf]
    %v3405 = vld [vmem:[#allocation25 + $0xfc] sm:$0xff]
    %v3406 = vld [vmem:[#allocation25 + $0x104] sm:$0xf]
    %v3407 = vld [vmem:[#allocation25 + $0x108] sm:$0xff]
    %v3408 = vld [vmem:[#allocation25 + $0x110] sm:$0xf]
    %v3409 = vld [vmem:[#allocation25 + $0x114] sm:$0xff]
    %v3410 = vld [vmem:[#allocation25 + $0x11c] sm:$0xf]
    %v3411 = vld [vmem:[#allocation25 + $0x120] sm:$0xff]
    %v3412 = vld [vmem:[#allocation25 + $0x128] sm:$0xf]
    %v3413 = vld [vmem:[#allocation25 + $0x12c] sm:$0xff]
    %v3414 = vld [vmem:[#allocation25 + $0x134] sm:$0xf]
    %v3415 = vld [vmem:[#allocation25 + $0x138] sm:$0xff]
    %v3416 = vld [vmem:[#allocation25 + $0x140] sm:$0xf]
    %v3417 = vld [vmem:[#allocation25 + $0x144] sm:$0xff]
    %v3418 = vld [vmem:[#allocation25 + $0x14c] sm:$0xf]
    %v3419 = vld [vmem:[#allocation25 + $0x150] sm:$0xff]
    %v3420 = vld [vmem:[#allocation25 + $0x158] sm:$0xf]
    %v3421 = vld [vmem:[#allocation25 + $0x15c] sm:$0xff]
    %v3422 = vld [vmem:[#allocation25 + $0x164] sm:$0xf]
    %v3423 = vld [vmem:[#allocation25 + $0x168] sm:$0xff]
    %v3424 = vld [vmem:[#allocation25 + $0x170] sm:$0xf]
    %v3425 = vld [vmem:[#allocation25 + $0x174] sm:$0xff]
    %v3426 = vld [vmem:[#allocation25 + $0x17c] sm:$0xf]
    %v3491 = vunpack.c.l.b16 %v3363
    %v3492 = vunpack.c.h.b16 %v3363
    %v3493 = vunpack.c.l.b16 %v3364
    %v3494 = vunpack.c.l.b16 %v3365
    %v3495 = vunpack.c.h.b16 %v3365
    %v3496 = vunpack.c.l.b16 %v3366
    %v3497 = vunpack.c.l.b16 %v3367
    %v3498 = vunpack.c.h.b16 %v3367
    %v3499 = vunpack.c.l.b16 %v3368
    %v3500 = vunpack.c.l.b16 %v3369
    %v3501 = vunpack.c.h.b16 %v3369
    %v3502 = vunpack.c.l.b16 %v3370
    %v3503 = vunpack.c.l.b16 %v3371
    %v3504 = vunpack.c.h.b16 %v3371
    %v3505 = vunpack.c.l.b16 %v3372
    %v3506 = vunpack.c.l.b16 %v3373
    %v3507 = vunpack.c.h.b16 %v3373
    %v3508 = vunpack.c.l.b16 %v3374
    %v3509 = vunpack.c.l.b16 %v3375
    %v3510 = vunpack.c.h.b16 %v3375
    %v3511 = vunpack.c.l.b16 %v3376
    %v3512 = vunpack.c.l.b16 %v3377
    %v3513 = vunpack.c.h.b16 %v3377
    %v3514 = vunpack.c.l.b16 %v3378
    %v3515 = vunpack.c.l.b16 %v3379
    %v3516 = vunpack.c.h.b16 %v3379
    %v3517 = vunpack.c.l.b16 %v3380
    %v3518 = vunpack.c.l.b16 %v3381
    %v3519 = vunpack.c.h.b16 %v3381
    %v3520 = vunpack.c.l.b16 %v3382
    %v3521 = vunpack.c.l.b16 %v3383
    %v3522 = vunpack.c.h.b16 %v3383
    %v3523 = vunpack.c.l.b16 %v3384
    %v3524 = vunpack.c.l.b16 %v3385
    %v3525 = vunpack.c.h.b16 %v3385
    %v3526 = vunpack.c.l.b16 %v3386
    %v3527 = vunpack.c.l.b16 %v3387
    %v3528 = vunpack.c.h.b16 %v3387
    %v3529 = vunpack.c.l.b16 %v3388
    %v3530 = vunpack.c.l.b16 %v3389
    %v3531 = vunpack.c.h.b16 %v3389
    %v3532 = vunpack.c.l.b16 %v3390
    %v3533 = vunpack.c.l.b16 %v3391
    %v3534 = vunpack.c.h.b16 %v3391
    %v3535 = vunpack.c.l.b16 %v3392
    %v3536 = vunpack.c.l.b16 %v3393
    %v3537 = vunpack.c.h.b16 %v3393
    %v3538 = vunpack.c.l.b16 %v3394
    %v3539 = vunpack.c.l.b16 %v3395
    %v3540 = vunpack.c.h.b16 %v3395
    %v3541 = vunpack.c.l.b16 %v3396
    %v3542 = vunpack.c.l.b16 %v3397
    %v3543 = vunpack.c.h.b16 %v3397
    %v3544 = vunpack.c.l.b16 %v3398
    %v3545 = vunpack.c.l.b16 %v3399
    %v3546 = vunpack.c.h.b16 %v3399
    %v3547 = vunpack.c.l.b16 %v3400
    %v3548 = vunpack.c.l.b16 %v3401
    %v3549 = vunpack.c.h.b16 %v3401
    %v3550 = vunpack.c.l.b16 %v3402
    %v3551 = vunpack.c.l.b16 %v3403
    %v3552 = vunpack.c.h.b16 %v3403
    %v3553 = vunpack.c.l.b16 %v3404
    %v3554 = vunpack.c.l.b16 %v3405
    %v3555 = vunpack.c.h.b16 %v3405
    %v3556 = vunpack.c.l.b16 %v3406
    %v3557 = vunpack.c.l.b16 %v3407
    %v3558 = vunpack.c.h.b16 %v3407
    %v3559 = vunpack.c.l.b16 %v3408
    %v3560 = vunpack.c.l.b16 %v3409
    %v3561 = vunpack.c.h.b16 %v3409
    %v3562 = vunpack.c.l.b16 %v3410
    %v3563 = vunpack.c.l.b16 %v3411
    %v3564 = vunpack.c.h.b16 %v3411
    %v3565 = vunpack.c.l.b16 %v3412
    %v3566 = vunpack.c.l.b16 %v3413
    %v3567 = vunpack.c.h.b16 %v3413
    %v3568 = vunpack.c.l.b16 %v3414
    %v3569 = vunpack.c.l.b16 %v3415
    %v3570 = vunpack.c.h.b16 %v3415
    %v3571 = vunpack.c.l.b16 %v3416
    %v3572 = vunpack.c.l.b16 %v3417
    %v3573 = vunpack.c.h.b16 %v3417
    %v3574 = vunpack.c.l.b16 %v3418
    %v3575 = vunpack.c.l.b16 %v3419
    %v3576 = vunpack.c.h.b16 %v3419
    %v3577 = vunpack.c.l.b16 %v3420
    %v3578 = vunpack.c.l.b16 %v3421
    %v3579 = vunpack.c.h.b16 %v3421
    %v3580 = vunpack.c.l.b16 %v3422
    %v3581 = vunpack.c.l.b16 %v3423
    %v3582 = vunpack.c.h.b16 %v3423
    %v3583 = vunpack.c.l.b16 %v3424
    %v3584 = vunpack.c.l.b16 %v3425
    %v3585 = vunpack.c.h.b16 %v3425
    %v3586 = vunpack.c.l.b16 %v3426
    %v3587 = vpack.c.b16 %v3494, %v3491
    %v3588 = vpack.c.b16 %v3495, %v3492
    %v3589 = vpack.c.b16 %v3496, %v3493
    %v3590 = vpack.c.b16 %v3500, %v3497
    %v3591 = vpack.c.b16 %v3501, %v3498
    %v3592 = vpack.c.b16 %v3502, %v3499
    %v3593 = vpack.c.b16 %v3506, %v3503
    %v3594 = vpack.c.b16 %v3507, %v3504
    %v3595 = vpack.c.b16 %v3508, %v3505
    %v3596 = vpack.c.b16 %v3512, %v3509
    %v3597 = vpack.c.b16 %v3513, %v3510
    %v3598 = vpack.c.b16 %v3514, %v3511
    %v3599 = vpack.c.b16 %v3518, %v3515
    %v3600 = vpack.c.b16 %v3519, %v3516
    %v3601 = vpack.c.b16 %v3520, %v3517
    %v3602 = vpack.c.b16 %v3524, %v3521
    %v3603 = vpack.c.b16 %v3525, %v3522
    %v3604 = vpack.c.b16 %v3526, %v3523
    %v3605 = vpack.c.b16 %v3530, %v3527
    %v3606 = vpack.c.b16 %v3531, %v3528
    %v3607 = vpack.c.b16 %v3532, %v3529
    %v3608 = vpack.c.b16 %v3536, %v3533
    %v3609 = vpack.c.b16 %v3537, %v3534
    %v3610 = vpack.c.b16 %v3538, %v3535
    %v3611 = vpack.c.b16 %v3542, %v3539
    %v3612 = vpack.c.b16 %v3543, %v3540
    %v3613 = vpack.c.b16 %v3544, %v3541
    %v3614 = vpack.c.b16 %v3548, %v3545
    %v3615 = vpack.c.b16 %v3549, %v3546
    %v3616 = vpack.c.b16 %v3550, %v3547
    %v3617 = vpack.c.b16 %v3554, %v3551
    %v3618 = vpack.c.b16 %v3555, %v3552
    %v3619 = vpack.c.b16 %v3556, %v3553
    %v3620 = vpack.c.b16 %v3560, %v3557
    %v3621 = vpack.c.b16 %v3561, %v3558
    %v3622 = vpack.c.b16 %v3562, %v3559
    %v3623 = vpack.c.b16 %v3566, %v3563
    %v3624 = vpack.c.b16 %v3567, %v3564
    %v3625 = vpack.c.b16 %v3568, %v3565
    %v3626 = vpack.c.b16 %v3572, %v3569
    %v3627 = vpack.c.b16 %v3573, %v3570
    %v3628 = vpack.c.b16 %v3574, %v3571
    %v3629 = vpack.c.b16 %v3578, %v3575
    %v3630 = vpack.c.b16 %v3579, %v3576
    %v3631 = vpack.c.b16 %v3580, %v3577
    %v3632 = vpack.c.b16 %v3584, %v3581
    %v3633 = vpack.c.b16 %v3585, %v3582
    %v3634 = vpack.c.b16 %v3586, %v3583
    %3683 = vmatprep.subr.bf16.mxu0 %v3609
    %3684 = vmatpush1.bf16.msra.mxu0 %v3608
    %3685 = vmatprep.subr.bf16.mxu0 %v3606
    %3686 = vmatpush1.bf16.msra.mxu0 %v3605
    %3687 = vmatprep.subr.bf16.mxu0 %v3603
    %3688 = vmatpush1.bf16.msra.mxu0 %v3602
    %3689 = vmatprep.subr.bf16.mxu0 %v3600
    %3690 = vmatpush1.bf16.msra.mxu0 %v3599
    %3691 = vmatprep.subr.bf16.mxu0 %v3597
    %3692 = vmatpush1.bf16.msra.mxu0 %v3596
    %3693 = vmatprep.subr.bf16.mxu0 %v3594
    %3694 = vmatpush1.bf16.msra.mxu0 %v3593
    %3695 = vmatprep.subr.bf16.mxu0 %v3591
    %3696 = vmatpush1.bf16.msra.mxu0 %v3590
    %3697 = vmatprep.subr.bf16.mxu0 %v3588
    %3698 = vmatpush1.bf16.msra.mxu0 %v3587
    %3699 = vmatprep.subr.bf16.mxu0 %v3633
    %3700 = vmatpush2.bf16.msra.mxu0 %v3632
    %3701 = vmatprep.subr.bf16.mxu0 %v3630
    %3702 = vmatpush2.bf16.msra.mxu0 %v3629
    %3703 = vmatprep.subr.bf16.mxu0 %v3627
    %3704 = vmatpush2.bf16.msra.mxu0 %v3626
    %3705 = vmatprep.subr.bf16.mxu0 %v3624
    %3706 = vmatpush2.bf16.msra.mxu0 %v3623
    %3707 = vmatprep.subr.bf16.mxu0 %v3621
    %3708 = vmatpush2.bf16.msra.mxu0 %v3620
    %3709 = vmatprep.subr.bf16.mxu0 %v3618
    %3710 = vmatpush2.bf16.msra.mxu0 %v3617
    %3711 = vmatprep.subr.bf16.mxu0 %v3615
    %3712 = vmatpush2.bf16.msra.mxu0 %v3614
    %3713 = vmatprep.subr.bf16.mxu0 %v3612
    %3714 = vmatpush2.bf16.msra.mxu0 %v3611
    %3715 = vmatprep.mubr.bf16.mxu0 %v3349
    %3716 = vmatmul.mubr.bf16.gmra.mxu0 %v3348
    %v3717 = vpop.f32.mrf.mxu0
    %v3718 = vadd.f32 0.0, %v3717
    %v3719 = vpop.f32.mrf.mxu0
    %v3720 = vadd.f32 0.0, %v3719
    %v3721 = vpop.f32.mrf.mxu0
    %v3722 = vadd.f32 0.0, %v3721
    %v3723 = vpop.f32.mrf.mxu0
    %v3724 = vadd.f32 0.0, %v3723
    %3725 = vmatprep.mubr.bf16.mxu0 %v3351
    %3726 = vmatmul.mubr.bf16.gmra.mxu0 %v3350
    %v3727 = vpop.f32.mrf.mxu0
    %v3728 = vadd.f32 0.0, %v3727
    %v3729 = vpop.f32.mrf.mxu0
    %v3730 = vadd.f32 0.0, %v3729
    %v3731 = vpop.f32.mrf.mxu0
    %v3732 = vadd.f32 0.0, %v3731
    %v3733 = vpop.f32.mrf.mxu0
    %v3734 = vadd.f32 0.0, %v3733
    %3735 = vmatprep.mubr.bf16.mxu0 %v3353
    %3736 = vmatmul.mubr.bf16.gmra.mxu0 %v3352
    %v3737 = vpop.f32.mrf.mxu0
    %v3738 = vadd.f32 0.0, %v3737
    %v3739 = vpop.f32.mrf.mxu0
    %v3740 = vadd.f32 0.0, %v3739
    %v3741 = vpop.f32.mrf.mxu0
    %v3742 = vadd.f32 0.0, %v3741
    %v3743 = vpop.f32.mrf.mxu0
    %v3744 = vadd.f32 0.0, %v3743
    %3745 = vmatprep.mubr.bf16.mxu0 %v3355
    %3746 = vmatmul.mubr.bf16.gmra.mxu0 %v3354
    %v3747 = vpop.f32.mrf.mxu0
    %v3748 = vadd.f32 0.0, %v3747
    %v3749 = vpop.f32.mrf.mxu0
    %v3750 = vadd.f32 0.0, %v3749
    %v3751 = vpop.f32.mrf.mxu0
    %v3752 = vadd.f32 0.0, %v3751
    %v3753 = vpop.f32.mrf.mxu0
    %v3754 = vadd.f32 0.0, %v3753
    %3755 = vmatprep.mubr.bf16.mxu0 %v3357
    %3756 = vmatmul.mubr.bf16.gmra.mxu0 %v3356
    %v3757 = vpop.f32.mrf.mxu0
    %v3758 = vadd.f32 0.0, %v3757
    %v3759 = vpop.f32.mrf.mxu0
    %v3760 = vadd.f32 0.0, %v3759
    %v3761 = vpop.f32.mrf.mxu0
    %v3762 = vadd.f32 0.0, %v3761
    %v3763 = vpop.f32.mrf.mxu0
    %v3764 = vadd.f32 0.0, %v3763
    %3765 = vmatprep.mubr.bf16.mxu0 %v3359
    %3766 = vmatmul.mubr.bf16.gmra.mxu0 %v3358
    %v3767 = vpop.f32.mrf.mxu0
    %v3768 = vadd.f32 0.0, %v3767
    %v3769 = vpop.f32.mrf.mxu0
    %v3770 = vadd.f32 0.0, %v3769
    %v3771 = vpop.f32.mrf.mxu0
    %v3772 = vadd.f32 0.0, %v3771
    %v3773 = vpop.f32.mrf.mxu0
    %v3774 = vadd.f32 0.0, %v3773
    %3775 = vmatprep.mubr.bf16.mxu0 %v3361
    %3776 = vmatmul.mubr.bf16.gmra.mxu0 %v3360
    %v3777 = vpop.f32.mrf.mxu0
    %v3778 = vadd.f32 0.0, %v3777
    %v3779 = vpop.f32.mrf.mxu0
    %v3780 = vadd.f32 0.0, %v3779
    %v3781 = vpop.f32.mrf.mxu0
    %v3782 = vpop.f32.mrf.mxu0
    %3783 = vdwg.mxu0
    %3784 = vmatprep.subr.bf16.mxu0 0
    %3785 = vmatpush1.bf16.msra.mxu0 %v3610
    %3786 = vmatprep.subr.bf16.mxu0 0
    %3787 = vmatpush1.bf16.msra.mxu0 %v3607
    %3788 = vmatprep.subr.bf16.mxu0 0
    %3789 = vmatpush1.bf16.msra.mxu0 %v3604
    %3790 = vmatprep.subr.bf16.mxu0 0
    %3791 = vmatpush1.bf16.msra.mxu0 %v3601
    %3792 = vmatprep.subr.bf16.mxu0 0
    %3793 = vmatpush1.bf16.msra.mxu0 %v3598
    %3794 = vmatprep.subr.bf16.mxu0 0
    %3795 = vmatpush1.bf16.msra.mxu0 %v3595
    %3796 = vmatprep.subr.bf16.mxu0 0
    %3797 = vmatpush1.bf16.msra.mxu0 %v3592
    %3798 = vmatprep.subr.bf16.mxu0 0
    %3799 = vmatpush1.bf16.msra.mxu0 %v3589
    %3800 = vmatprep.subr.bf16.mxu0 0
    %3801 = vmatpush2.bf16.msra.mxu0 %v3634
    %3802 = vmatprep.subr.bf16.mxu0 0
    %3803 = vmatpush2.bf16.msra.mxu0 %v3631
    %3804 = vmatprep.subr.bf16.mxu0 0
    %3805 = vmatpush2.bf16.msra.mxu0 %v3628
    %3806 = vmatprep.subr.bf16.mxu0 0
    %3807 = vmatpush2.bf16.msra.mxu0 %v3625
    %3808 = vmatprep.subr.bf16.mxu0 0
    %3809 = vmatpush2.bf16.msra.mxu0 %v3622
    %3810 = vmatprep.subr.bf16.mxu0 0
    %3811 = vmatpush2.bf16.msra.mxu0 %v3619
    %3812 = vmatprep.subr.bf16.mxu0 0
    %3813 = vmatpush2.bf16.msra.mxu0 %v3616
    %3814 = vmatprep.subr.bf16.mxu0 0
    %3815 = vmatpush2.bf16.msra.mxu0 %v3613
    %3816 = vmatprep.mubr.bf16.mxu0 %v3349
    %3817 = vmatmul.mubr.bf16.gmra.mxu0 %v3348
    %v3818 = vpop.f32.mrf.mxu0
    %v3819 = vadd.f32 0.0, %v3818
    %v3820 = vpop.f32.mrf.mxu0
    %v3821 = vpop.f32.mrf.mxu0
    %v3822 = vadd.f32 0.0, %v3821
    %v3823 = vpop.f32.mrf.mxu0
    %3824 = vmatprep.mubr.bf16.mxu0 %v3351
    %3825 = vmatmul.mubr.bf16.gmra.mxu0 %v3350
    %v3826 = vpop.f32.mrf.mxu0
    %v3827 = vadd.f32 0.0, %v3826
    %v3828 = vpop.f32.mrf.mxu0
    %v3829 = vpop.f32.mrf.mxu0
    %v3830 = vadd.f32 0.0, %v3829
    %v3831 = vpop.f32.mrf.mxu0
    %3832 = vmatprep.mubr.bf16.mxu0 %v3353
    %3833 = vmatmul.mubr.bf16.gmra.mxu0 %v3352
    %v3834 = vpop.f32.mrf.mxu0
    %v3835 = vadd.f32 0.0, %v3834
    %v3836 = vpop.f32.mrf.mxu0
    %v3837 = vpop.f32.mrf.mxu0
    %v3838 = vadd.f32 0.0, %v3837
    %v3839 = vpop.f32.mrf.mxu0
    %3840 = vmatprep.mubr.bf16.mxu0 %v3355
    %3841 = vmatmul.mubr.bf16.gmra.mxu0 %v3354
    %v3842 = vpop.f32.mrf.mxu0
    %v3843 = vadd.f32 0.0, %v3842
    %v3844 = vpop.f32.mrf.mxu0
    %v3845 = vpop.f32.mrf.mxu0
    %v3846 = vadd.f32 0.0, %v3845
    %v3847 = vpop.f32.mrf.mxu0
    %3848 = vmatprep.mubr.bf16.mxu0 %v3357
    %3849 = vmatmul.mubr.bf16.gmra.mxu0 %v3356
    %v3850 = vpop.f32.mrf.mxu0
    %v3851 = vadd.f32 0.0, %v3850
    %v3852 = vpop.f32.mrf.mxu0
    %v3853 = vpop.f32.mrf.mxu0
    %v3854 = vadd.f32 0.0, %v3853
    %v3855 = vpop.f32.mrf.mxu0
    %3856 = vmatprep.mubr.bf16.mxu0 %v3359
    %3857 = vmatmul.mubr.bf16.gmra.mxu0 %v3358
    %v3858 = vpop.f32.mrf.mxu0
    %v3859 = vadd.f32 0.0, %v3858
    %v3860 = vpop.f32.mrf.mxu0
    %v3861 = vpop.f32.mrf.mxu0
    %v3862 = vadd.f32 0.0, %v3861
    %v3863 = vpop.f32.mrf.mxu0
    %3864 = vmatprep.mubr.bf16.mxu0 %v3361
    %3865 = vmatmul.mubr.bf16.gmra.mxu0 %v3360
    %v3866 = vpop.f32.mrf.mxu0
    %v3867 = vadd.f32 0.0, %v3866
    %v3868 = vpop.f32.mrf.mxu0
    %v3869 = vpop.f32.mrf.mxu0
    %v3870 = vpop.f32.mrf.mxu0
    %3871 = vdwg.mxu0
    %v3873 = vlaneseq
    %v3874 = vshrl.u32 %v3873, 7
    %v3875 = vsub.s32 0, %v3874
    %v3876 = vrot.slane %v3362, %v3875
    %v3877 = vlaneseq
    %v3878 = vshrl.u32 %v3877, 7
    %v3879 = vsub.s32 1, %v3878
    %v3880 = vrot.slane %v3362, %v3879
    %v3881 = vlaneseq
    %v3882 = vshrl.u32 %v3881, 7
    %v3883 = vsub.s32 2, %v3882
    %v3884 = vrot.slane %v3362, %v3883
    %v3888 = vadd.f32 %v3876, %v3718
    %v3889 = vadd.f32 %v3880, %v3720
    %v3890 = vadd.f32 %v3884, %v3819
    %v3891 = vadd.f32 %v3876, %v3722
    %v3892 = vadd.f32 %v3880, %v3724
    %v3893 = vadd.f32 %v3884, %v3822
    %v3894 = vadd.f32 %v3876, %v3728
    %v3895 = vadd.f32 %v3880, %v3730
    %v3896 = vadd.f32 %v3884, %v3827
    %v3897 = vadd.f32 %v3876, %v3732
    %v3898 = vadd.f32 %v3880, %v3734
    %v3899 = vadd.f32 %v3884, %v3830
    %v3900 = vadd.f32 %v3876, %v3738
    %v3901 = vadd.f32 %v3880, %v3740
    %v3902 = vadd.f32 %v3884, %v3835
    %v3903 = vadd.f32 %v3876, %v3742
    %v3904 = vadd.f32 %v3880, %v3744
    %v3905 = vadd.f32 %v3884, %v3838
    %v3906 = vadd.f32 %v3876, %v3748
    %v3907 = vadd.f32 %v3880, %v3750
    %v3908 = vadd.f32 %v3884, %v3843
    %v3909 = vadd.f32 %v3876, %v3752
    %v3910 = vadd.f32 %v3880, %v3754
    %v3911 = vadd.f32 %v3884, %v3846
    %v3912 = vadd.f32 %v3876, %v3758
    %v3913 = vadd.f32 %v3880, %v3760
    %v3914 = vadd.f32 %v3884, %v3851
    %v3915 = vadd.f32 %v3876, %v3762
    %v3916 = vadd.f32 %v3880, %v3764
    %v3917 = vadd.f32 %v3884, %v3854
    %v3918 = vadd.f32 %v3876, %v3768
    %v3919 = vadd.f32 %v3880, %v3770
    %v3920 = vadd.f32 %v3884, %v3859
    %v3921 = vadd.f32 %v3876, %v3772
    %v3922 = vadd.f32 %v3880, %v3774
    %v3923 = vadd.f32 %v3884, %v3862
    %v3924 = vadd.f32 %v3876, %v3778
    %v3925 = vadd.f32 %v3880, %v3780
    %v3926 = vadd.f32 %v3884, %v3867
    %vm3927 = vcmask 1047554
    %v3928 = vrot.slane %v3888, 6
    %v3929 = vsel %vm3927, %v3928, %v3924
    %vm3943 = vcmask 1046528
    %v3944 = vrot.slane %v3888, 1
    %v3945 = vrot.slane %v3891, 1
    %v3946 = vsel %vm3943, %v3944, %v3945
    %v3947 = vrot.slane %v3894, 1
    %v3948 = vsel %vm3943, %v3945, %v3947
    %v3949 = vrot.slane %v3897, 1
    %v3950 = vsel %vm3943, %v3947, %v3949
    %v3951 = vrot.slane %v3900, 1
    %v3952 = vsel %vm3943, %v3949, %v3951
    %v3953 = vrot.slane %v3903, 1
    %v3954 = vsel %vm3943, %v3951, %v3953
    %v3955 = vrot.slane %v3906, 1
    %v3956 = vsel %vm3943, %v3953, %v3955
    %v3957 = vrot.slane %v3909, 1
    %v3958 = vsel %vm3943, %v3955, %v3957
    %v3959 = vrot.slane %v3912, 1
    %v3960 = vsel %vm3943, %v3957, %v3959
    %v3961 = vrot.slane %v3915, 1
    %v3962 = vsel %vm3943, %v3959, %v3961
    %v3963 = vrot.slane %v3918, 1
    %v3964 = vsel %vm3943, %v3961, %v3963
    %v3965 = vrot.slane %v3921, 1
    %v3966 = vsel %vm3943, %v3963, %v3965
    %v3967 = vrot.slane %v3929, 1
    %v3968 = vsel %vm3943, %v3965, %v3967
    %v3982 = vmax.f32 %v3888, %v3946
    %v3983 = vmax.f32 %v3891, %v3948
    %v3984 = vmax.f32 %v3894, %v3950
    %v3985 = vmax.f32 %v3897, %v3952
    %v3986 = vmax.f32 %v3900, %v3954
    %v3987 = vmax.f32 %v3903, %v3956
    %v3988 = vmax.f32 %v3906, %v3958
    %v3989 = vmax.f32 %v3909, %v3960
    %v3990 = vmax.f32 %v3912, %v3962
    %v3991 = vmax.f32 %v3915, %v3964
    %v3992 = vmax.f32 %v3918, %v3966
    %v3993 = vmax.f32 %v3921, %v3968
    %v3994 = vmax.f32 %v3924, %v3967
    %v3995 = vrot.slane %v3982, 6
    %v3996 = vrot.slane %v3983, 6
    %v3997 = vsel %vm3927, %v3995, %v3994
    %v3998 = vsel %vm3927, %v3996, %v3995
    %v4013 = vrot.slane %v3982, 7
    %v4014 = vrot.slane %v3983, 7
    %v4015 = vsel %vm2869, %v4013, %v4014
    %v4016 = vrot.slane %v3984, 7
    %v4017 = vsel %vm2869, %v4014, %v4016
    %v4018 = vrot.slane %v3985, 7
    %v4019 = vsel %vm2869, %v4016, %v4018
    %v4020 = vrot.slane %v3986, 7
    %v4021 = vsel %vm2869, %v4018, %v4020
    %v4022 = vrot.slane %v3987, 7
    %v4023 = vsel %vm2869, %v4020, %v4022
    %v4024 = vrot.slane %v3988, 7
    %v4025 = vsel %vm2869, %v4022, %v4024
    %v4026 = vrot.slane %v3989, 7
    %v4027 = vsel %vm2869, %v4024, %v4026
    %v4028 = vrot.slane %v3990, 7
    %v4029 = vsel %vm2869, %v4026, %v4028
    %v4030 = vrot.slane %v3991, 7
    %v4031 = vsel %vm2869, %v4028, %v4030
    %v4032 = vrot.slane %v3992, 7
    %v4033 = vsel %vm2869, %v4030, %v4032
    %v4034 = vrot.slane %v3993, 7
    %v4035 = vsel %vm2869, %v4032, %v4034
    %v4036 = vrot.slane %v3997, 7
    %v4037 = vsel %vm2869, %v4034, %v4036
    %v4038 = vrot.slane %v3998, 7
    %v4039 = vsel %vm2869, %v4036, %v4038
    %v4053 = vmax.f32 %v3982, %v4015
    %v4054 = vmax.f32 %v3983, %v4017
    %v4055 = vmax.f32 %v3984, %v4019
    %v4056 = vmax.f32 %v3985, %v4021
    %v4057 = vmax.f32 %v3986, %v4023
    %v4058 = vmax.f32 %v3987, %v4025
    %v4059 = vmax.f32 %v3988, %v4027
    %v4060 = vmax.f32 %v3989, %v4029
    %v4061 = vmax.f32 %v3990, %v4031
    %v4062 = vmax.f32 %v3991, %v4033
    %v4063 = vmax.f32 %v3992, %v4035
    %v4064 = vmax.f32 %v3993, %v4037
    %v4065 = vmax.f32 %v3994, %v4039
    %v4066 = vpack.c.bf16 %v4054, %v4053
    %v4067 = vpack.c.bf16 %v4056, %v4055
    %v4068 = vpack.c.bf16 %v4058, %v4057
    %v4069 = vpack.c.bf16 %v4060, %v4059
    %v4070 = vpack.c.bf16 %v4062, %v4061
    %v4071 = vpack.c.bf16 %v4064, %v4063
    %v4072 = vpack.c.bf16 %v4065, %v4065
    %v4073 = vpack.c.bf16 %v3892, %v3889
    %v4074 = vpack.c.bf16 %v3898, %v3895
    %v4075 = vpack.c.bf16 %v3904, %v3901
    %v4076 = vpack.c.bf16 %v3910, %v3907
    %v4077 = vpack.c.bf16 %v3916, %v3913
    %v4078 = vpack.c.bf16 %v3922, %v3919
    %v4079 = vpack.c.bf16 %v3925, %v3925
    %v4080 = vrot.slane %v3890, 6
    %v4081 = vsel %vm3927, %v4080, %v3926
    %v4095 = vrot.slane %v3890, 1
    %v4096 = vrot.slane %v3893, 1
    %v4097 = vsel %vm3943, %v4095, %v4096
    %v4098 = vrot.slane %v3896, 1
    %v4099 = vsel %vm3943, %v4096, %v4098
    %v4100 = vrot.slane %v3899, 1
    %v4101 = vsel %vm3943, %v4098, %v4100
    %v4102 = vrot.slane %v3902, 1
    %v4103 = vsel %vm3943, %v4100, %v4102
    %v4104 = vrot.slane %v3905, 1
    %v4105 = vsel %vm3943, %v4102, %v4104
    %v4106 = vrot.slane %v3908, 1
    %v4107 = vsel %vm3943, %v4104, %v4106
    %v4108 = vrot.slane %v3911, 1
    %v4109 = vsel %vm3943, %v4106, %v4108
    %v4110 = vrot.slane %v3914, 1
    %v4111 = vsel %vm3943, %v4108, %v4110
    %v4112 = vrot.slane %v3917, 1
    %v4113 = vsel %vm3943, %v4110, %v4112
    %v4114 = vrot.slane %v3920, 1
    %v4115 = vsel %vm3943, %v4112, %v4114
    %v4116 = vrot.slane %v3923, 1
    %v4117 = vsel %vm3943, %v4114, %v4116
    %v4118 = vrot.slane %v4081, 1
    %v4119 = vsel %vm3943, %v4116, %v4118
    %v4133 = vmax.f32 %v3890, %v4097
    %v4134 = vmax.f32 %v3893, %v4099
    %v4135 = vmax.f32 %v3896, %v4101
    %v4136 = vmax.f32 %v3899, %v4103
    %v4137 = vmax.f32 %v3902, %v4105
    %v4138 = vmax.f32 %v3905, %v4107
    %v4139 = vmax.f32 %v3908, %v4109
    %v4140 = vmax.f32 %v3911, %v4111
    %v4141 = vmax.f32 %v3914, %v4113
    %v4142 = vmax.f32 %v3917, %v4115
    %v4143 = vmax.f32 %v3920, %v4117
    %v4144 = vmax.f32 %v3923, %v4119
    %v4145 = vmax.f32 %v3926, %v4118
    %v4146 = vrot.slane %v4133, 6
    %v4147 = vrot.slane %v4134, 6
    %v4148 = vsel %vm3927, %v4146, %v4145
    %v4149 = vsel %vm3927, %v4147, %v4146
    %v4164 = vrot.slane %v4133, 7
    %v4165 = vrot.slane %v4134, 7
    %v4166 = vsel %vm2869, %v4164, %v4165
    %v4167 = vrot.slane %v4135, 7
    %v4168 = vsel %vm2869, %v4165, %v4167
    %v4169 = vrot.slane %v4136, 7
    %v4170 = vsel %vm2869, %v4167, %v4169
    %v4171 = vrot.slane %v4137, 7
    %v4172 = vsel %vm2869, %v4169, %v4171
    %v4173 = vrot.slane %v4138, 7
    %v4174 = vsel %vm2869, %v4171, %v4173
    %v4175 = vrot.slane %v4139, 7
    %v4176 = vsel %vm2869, %v4173, %v4175
    %v4177 = vrot.slane %v4140, 7
    %v4178 = vsel %vm2869, %v4175, %v4177
    %v4179 = vrot.slane %v4141, 7
    %v4180 = vsel %vm2869, %v4177, %v4179
    %v4181 = vrot.slane %v4142, 7
    %v4182 = vsel %vm2869, %v4179, %v4181
    %v4183 = vrot.slane %v4143, 7
    %v4184 = vsel %vm2869, %v4181, %v4183
    %v4185 = vrot.slane %v4144, 7
    %v4186 = vsel %vm2869, %v4183, %v4185
    %v4187 = vrot.slane %v4148, 7
    %v4188 = vsel %vm2869, %v4185, %v4187
    %v4189 = vrot.slane %v4149, 7
    %v4190 = vsel %vm2869, %v4187, %v4189
    %v4204 = vmax.f32 %v4133, %v4166
    %v4205 = vmax.f32 %v4134, %v4168
    %v4206 = vmax.f32 %v4135, %v4170
    %v4207 = vmax.f32 %v4136, %v4172
    %v4208 = vmax.f32 %v4137, %v4174
    %v4209 = vmax.f32 %v4138, %v4176
    %v4210 = vmax.f32 %v4139, %v4178
    %v4211 = vmax.f32 %v4140, %v4180
    %v4212 = vmax.f32 %v4141, %v4182
    %v4213 = vmax.f32 %v4142, %v4184
    %v4214 = vmax.f32 %v4143, %v4186
    %v4215 = vmax.f32 %v4144, %v4188
    %v4216 = vmax.f32 %v4145, %v4190
    %v4217 = vpack.c.bf16 %v4205, %v4204
    %v4218 = vpack.c.bf16 %v4207, %v4206
    %v4219 = vpack.c.bf16 %v4209, %v4208
    %v4220 = vpack.c.bf16 %v4211, %v4210
    %v4221 = vpack.c.bf16 %v4213, %v4212
    %v4222 = vpack.c.bf16 %v4215, %v4214
    %v4223 = vpack.c.bf16 %v4216, %v4216
    %4224 = vmatprep.subr.bf16.mxu0 0
    %4225 = vmatpush1.bf16.xpose.msra.mxu0 0
    %4226 = vmatprep.subr.bf16.mxu0 0
    %4227 = vmatpush1.bf16.xpose.msra.mxu0 %v4223
    %4228 = vmatprep.subr.bf16.mxu0 0
    %4229 = vmatpush1.bf16.xpose.msra.mxu0 %v4222
    %4230 = vmatprep.subr.bf16.mxu0 0
    %4231 = vmatpush1.bf16.xpose.msra.mxu0 %v4221
    %4232 = vmatprep.subr.bf16.mxu0 0
    %4233 = vmatpush1.bf16.xpose.msra.mxu0 %v4220
    %4234 = vmatprep.subr.bf16.mxu0 0
    %4235 = vmatpush1.bf16.xpose.msra.mxu0 %v4219
    %4236 = vmatprep.subr.bf16.mxu0 0
    %4237 = vmatpush1.bf16.xpose.msra.mxu0 %v4218
    %4238 = vmatprep.subr.bf16.mxu0 0
    %4239 = vmatpush1.bf16.xpose.msra.mxu0 %v4217
    %4240 = vmatprep.subr.bf16.mxu0 0
    %4241 = vmatpush2.bf16.xpose.msra.mxu0 0
    %4242 = vmatprep.subr.bf16.mxu0 0
    %4243 = vmatpush2.bf16.xpose.msra.mxu0 0
    %4244 = vmatprep.subr.bf16.mxu0 0
    %4245 = vmatpush2.bf16.xpose.msra.mxu0 0
    %4246 = vmatprep.subr.bf16.mxu0 0
    %4247 = vmatpush2.bf16.xpose.msra.mxu0 0
    %4248 = vmatprep.subr.bf16.mxu0 0
    %4249 = vmatpush2.bf16.xpose.msra.mxu0 0
    %4250 = vmatprep.subr.bf16.mxu0 0
    %4251 = vmatpush2.bf16.xpose.msra.mxu0 0
    %4252 = vmatprep.subr.bf16.mxu0 0
    %4253 = vmatpush2.bf16.xpose.msra.mxu0 0
    %4254 = vmatprep.subr.bf16.mxu0 0
    %4255 = vmatpush2.bf16.xpose.msra.mxu0 0
    %4256 = vmatprep.mubr.bf16.mxu0 0
    %4257 = vmatmul.mubr.bf16.gmra.mxu0 %v4073
    %v4258 = vpop.f32.mrf.mxu0
    %v4259 = vadd.f32 %v398, %v4258
    %v4260 = vpop.f32.mrf.mxu0
    %v4261 = vpop.f32.mrf.mxu0
    %v4262 = vadd.f32 %v399, %v4261
    %v4263 = vpop.f32.mrf.mxu0
    %4264 = vmatprep.mubr.bf16.mxu0 0
    %4265 = vmatmul.mubr.bf16.gmra.mxu0 %v4074
    %v4266 = vpop.f32.mrf.mxu0
    %v4267 = vadd.f32 %v400, %v4266
    %v4268 = vpop.f32.mrf.mxu0
    %v4269 = vpop.f32.mrf.mxu0
    %v4270 = vadd.f32 %v401, %v4269
    %v4271 = vpop.f32.mrf.mxu0
    %4272 = vmatprep.mubr.bf16.mxu0 0
    %4273 = vmatmul.mubr.bf16.gmra.mxu0 %v4075
    %v4274 = vpop.f32.mrf.mxu0
    %v4275 = vadd.f32 %v402, %v4274
    %v4276 = vpop.f32.mrf.mxu0
    %v4277 = vpop.f32.mrf.mxu0
    %v4278 = vadd.f32 %v403, %v4277
    %v4279 = vpop.f32.mrf.mxu0
    %4280 = vmatprep.mubr.bf16.mxu0 0
    %4281 = vmatmul.mubr.bf16.gmra.mxu0 %v4076
    %v4282 = vpop.f32.mrf.mxu0
    %v4283 = vadd.f32 %v404, %v4282
    %v4284 = vpop.f32.mrf.mxu0
    %v4285 = vpop.f32.mrf.mxu0
    %v4286 = vadd.f32 %v405, %v4285
    %v4287 = vpop.f32.mrf.mxu0
    %4288 = vmatprep.mubr.bf16.mxu0 0
    %4289 = vmatmul.mubr.bf16.gmra.mxu0 %v4077
    %v4290 = vpop.f32.mrf.mxu0
    %v4291 = vadd.f32 %v406, %v4290
    %v4292 = vpop.f32.mrf.mxu0
    %v4293 = vpop.f32.mrf.mxu0
    %v4294 = vadd.f32 %v407, %v4293
    %v4295 = vpop.f32.mrf.mxu0
    %4296 = vmatprep.mubr.bf16.mxu0 0
    %4297 = vmatmul.mubr.bf16.gmra.mxu0 %v4078
    %v4298 = vpop.f32.mrf.mxu0
    %v4299 = vadd.f32 %v408, %v4298
    %v4300 = vpop.f32.mrf.mxu0
    %v4301 = vpop.f32.mrf.mxu0
    %v4302 = vadd.f32 %v409, %v4301
    %v4303 = vpop.f32.mrf.mxu0
    %4304 = vmatprep.mubr.bf16.mxu0 0
    %4305 = vmatmul.mubr.bf16.gmra.mxu0 %v4079
    %v4306 = vpop.f32.mrf.mxu0
    %v4307 = vadd.f32 %v410, %v4306
    %v4308 = vpop.f32.mrf.mxu0
    %v4309 = vpop.f32.mrf.mxu0
    %v4310 = vpop.f32.mrf.mxu0
    %4311 = vdwg.mxu0
    %v4312 = vsel %vm489, %v4259, -inf
    %4313 = vmax.xlane.f32.xlu0 %v4312
    %v4314 = vpop.xlane.xlu0 %4313
    %v4315 = vsel %vm489, %v4262, -inf
    %4316 = vmax.xlane.f32.xlu0 %v4315
    %v4317 = vpop.xlane.xlu0 %4316
    %v4318 = vsel %vm489, %v4267, -inf
    %4319 = vmax.xlane.f32.xlu0 %v4318
    %v4320 = vpop.xlane.xlu0 %4319
    %v4321 = vsel %vm489, %v4270, -inf
    %4322 = vmax.xlane.f32.xlu0 %v4321
    %v4323 = vpop.xlane.xlu0 %4322
    %v4324 = vsel %vm489, %v4275, -inf
    %4325 = vmax.xlane.f32.xlu0 %v4324
    %v4326 = vpop.xlane.xlu0 %4325
    %v4327 = vsel %vm489, %v4278, -inf
    %4328 = vmax.xlane.f32.xlu0 %v4327
    %v4329 = vpop.xlane.xlu0 %4328
    %v4330 = vsel %vm489, %v4283, -inf
    %4331 = vmax.xlane.f32.xlu0 %v4330
    %v4332 = vpop.xlane.xlu0 %4331
    %v4333 = vsel %vm489, %v4286, -inf
    %4334 = vmax.xlane.f32.xlu0 %v4333
    %v4335 = vpop.xlane.xlu0 %4334
    %v4336 = vsel %vm489, %v4291, -inf
    %4337 = vmax.xlane.f32.xlu0 %v4336
    %v4338 = vpop.xlane.xlu0 %4337
    %v4339 = vsel %vm489, %v4294, -inf
    %4340 = vmax.xlane.f32.xlu0 %v4339
    %v4341 = vpop.xlane.xlu0 %4340
    %v4342 = vsel %vm489, %v4299, -inf
    %4343 = vmax.xlane.f32.xlu0 %v4342
    %v4344 = vpop.xlane.xlu0 %4343
    %v4345 = vsel %vm489, %v4302, -inf
    %4346 = vmax.xlane.f32.xlu0 %v4345
    %v4347 = vpop.xlane.xlu0 %4346
    %v4348 = vsel %vm2733, %v4307, -inf
    %4349 = vmax.xlane.f32.xlu0 %v4348
    %v4350 = vpop.xlane.xlu0 %4349
    %v4351 = vsub.f32 %v4259, %v4314
    %v4352 = vsub.f32 %v4262, %v4317
    %v4353 = vsub.f32 %v4267, %v4320
    %v4354 = vsub.f32 %v4270, %v4323
    %v4355 = vsub.f32 %v4275, %v4326
    %v4356 = vsub.f32 %v4278, %v4329
    %v4357 = vsub.f32 %v4283, %v4332
    %v4358 = vsub.f32 %v4286, %v4335
    %v4359 = vsub.f32 %v4291, %v4338
    %v4360 = vsub.f32 %v4294, %v4341
    %v4361 = vsub.f32 %v4299, %v4344
    %v4362 = vsub.f32 %v4302, %v4347
    %v4363 = vsub.f32 %v4307, %v4350
    %v4364 = vmul.f32 %v4351, 1.442695
    %v4365 = vpow.pop %v4364
    %v4366 = vmul.f32 %v4352, 1.442695
    %v4367 = vpow.pop %v4366
    %v4368 = vmul.f32 %v4353, 1.442695
    %v4369 = vpow.pop %v4368
    %v4370 = vmul.f32 %v4354, 1.442695
    %v4371 = vpow.pop %v4370
    %v4372 = vmul.f32 %v4355, 1.442695
    %v4373 = vpow.pop %v4372
    %v4374 = vmul.f32 %v4356, 1.442695
    %v4375 = vpow.pop %v4374
    %v4376 = vmul.f32 %v4357, 1.442695
    %v4377 = vpow.pop %v4376
    %v4378 = vmul.f32 %v4358, 1.442695
    %v4379 = vpow.pop %v4378
    %v4380 = vmul.f32 %v4359, 1.442695
    %v4381 = vpow.pop %v4380
    %v4382 = vmul.f32 %v4360, 1.442695
    %v4383 = vpow.pop %v4382
    %v4384 = vmul.f32 %v4361, 1.442695
    %v4385 = vpow.pop %v4384
    %v4386 = vmul.f32 %v4362, 1.442695
    %v4387 = vpow.pop %v4386
    %v4388 = vmul.f32 %v4363, 1.442695
    %v4389 = vpow.pop %v4388
    %v4390 = vsel %vm489, %v4365, 0.0
    %4391 = vadd.xlane.f32.xlu0 %v4390
    %v4392 = vpop.xlane.xlu0 %4391
    %v4393 = vsel %vm489, %v4367, 0.0
    %4394 = vadd.xlane.f32.xlu0 %v4393
    %v4395 = vpop.xlane.xlu0 %4394
    %v4396 = vsel %vm489, %v4369, 0.0
    %4397 = vadd.xlane.f32.xlu0 %v4396
    %v4398 = vpop.xlane.xlu0 %4397
    %v4399 = vsel %vm489, %v4371, 0.0
    %4400 = vadd.xlane.f32.xlu0 %v4399
    %v4401 = vpop.xlane.xlu0 %4400
    %v4402 = vsel %vm489, %v4373, 0.0
    %4403 = vadd.xlane.f32.xlu0 %v4402
    %v4404 = vpop.xlane.xlu0 %4403
    %v4405 = vsel %vm489, %v4375, 0.0
    %4406 = vadd.xlane.f32.xlu0 %v4405
    %v4407 = vpop.xlane.xlu0 %4406
    %v4408 = vsel %vm489, %v4377, 0.0
    %4409 = vadd.xlane.f32.xlu0 %v4408
    %v4410 = vpop.xlane.xlu0 %4409
    %v4411 = vsel %vm489, %v4379, 0.0
    %4412 = vadd.xlane.f32.xlu0 %v4411
    %v4413 = vpop.xlane.xlu0 %4412
    %v4414 = vsel %vm489, %v4381, 0.0
    %4415 = vadd.xlane.f32.xlu0 %v4414
    %v4416 = vpop.xlane.xlu0 %4415
    %v4417 = vsel %vm489, %v4383, 0.0
    %4418 = vadd.xlane.f32.xlu0 %v4417
    %v4419 = vpop.xlane.xlu0 %4418
    %v4420 = vsel %vm489, %v4385, 0.0
    %4421 = vadd.xlane.f32.xlu0 %v4420
    %v4422 = vpop.xlane.xlu0 %4421
    %v4423 = vsel %vm489, %v4387, 0.0
    %4424 = vadd.xlane.f32.xlu0 %v4423
    %v4425 = vpop.xlane.xlu0 %4424
    %v4426 = vsel %vm2733, %v4389, 0.0
    %4427 = vadd.xlane.f32.xlu0 %v4426
    %v4428 = vpop.xlane.xlu0 %4427
    %v4429 = vrcp.pop %v4392
    %v4430 = vmul.f32 %v4365, %v4429
    %v4431 = vrcp.pop %v4395
    %v4432 = vmul.f32 %v4367, %v4431
    %v4433 = vrcp.pop %v4398
    %v4434 = vmul.f32 %v4369, %v4433
    %v4435 = vrcp.pop %v4401
    %v4436 = vmul.f32 %v4371, %v4435
    %v4437 = vrcp.pop %v4404
    %v4438 = vmul.f32 %v4373, %v4437
    %v4439 = vrcp.pop %v4407
    %v4440 = vmul.f32 %v4375, %v4439
    %v4441 = vrcp.pop %v4410
    %v4442 = vmul.f32 %v4377, %v4441
    %v4443 = vrcp.pop %v4413
    %v4444 = vmul.f32 %v4379, %v4443
    %v4445 = vrcp.pop %v4416
    %v4446 = vmul.f32 %v4381, %v4445
    %v4447 = vrcp.pop %v4419
    %v4448 = vmul.f32 %v4383, %v4447
    %v4449 = vrcp.pop %v4422
    %v4450 = vmul.f32 %v4385, %v4449
    %v4451 = vrcp.pop %v4425
    %v4452 = vmul.f32 %v4387, %v4451
    %v4453 = vrcp.pop %v4428
    %v4454 = vmul.f32 %v4389, %v4453
    %v4455 = vpack.c.bf16 %v4432, %v4430
    %v4456 = vpack.c.bf16 %v4436, %v4434
    %v4457 = vpack.c.bf16 %v4440, %v4438
    %v4458 = vpack.c.bf16 %v4444, %v4442
    %v4459 = vpack.c.bf16 %v4448, %v4446
    %v4460 = vpack.c.bf16 %v4452, %v4450
    %v4461 = vpack.c.bf16 %v4454, %v4454
    %v4463 = vsel %vm489, %v4455, 0
    %v4466 = vsel %vm489, %v4456, 0
    %v4469 = vsel %vm489, %v4457, 0
    %v4472 = vsel %vm489, %v4458, 0
    %v4475 = vsel %vm489, %v4459, 0
    %v4478 = vsel %vm489, %v4460, 0
    %v4481 = vsel %vm489, %v4461, 0
    %v4484 = vsel %vm2869, %v4072, 0
    %4486 = vmatprep.subr.bf16.mxu0 0
    %4487 = vmatpush1.bf16.msra.mxu0 0
    %4488 = vmatprep.subr.bf16.mxu0 0
    %4489 = vmatpush1.bf16.msra.mxu0 %v4484
    %4490 = vmatprep.subr.bf16.mxu0 0
    %4491 = vmatpush1.bf16.msra.mxu0 %v4071
    %4492 = vmatprep.subr.bf16.mxu0 0
    %4493 = vmatpush1.bf16.msra.mxu0 %v4070
    %4494 = vmatprep.subr.bf16.mxu0 0
    %4495 = vmatpush1.bf16.msra.mxu0 %v4069
    %4496 = vmatprep.subr.bf16.mxu0 0
    %4497 = vmatpush1.bf16.msra.mxu0 %v4068
    %4498 = vmatprep.subr.bf16.mxu0 0
    %4499 = vmatpush1.bf16.msra.mxu0 %v4067
    %4500 = vmatprep.subr.bf16.mxu0 0
    %4501 = vmatpush1.bf16.msra.mxu0 %v4066
    %4502 = vmatprep.subr.bf16.mxu0 0
    %4503 = vmatpush2.bf16.msra.mxu0 0
    %4504 = vmatprep.subr.bf16.mxu0 0
    %4505 = vmatpush2.bf16.msra.mxu0 0
    %4506 = vmatprep.subr.bf16.mxu0 0
    %4507 = vmatpush2.bf16.msra.mxu0 0
    %4508 = vmatprep.subr.bf16.mxu0 0
    %4509 = vmatpush2.bf16.msra.mxu0 0
    %4510 = vmatprep.subr.bf16.mxu0 0
    %4511 = vmatpush2.bf16.msra.mxu0 0
    %4512 = vmatprep.subr.bf16.mxu0 0
    %4513 = vmatpush2.bf16.msra.mxu0 0
    %4514 = vmatprep.subr.bf16.mxu0 0
    %4515 = vmatpush2.bf16.msra.mxu0 0
    %4516 = vmatprep.subr.bf16.mxu0 0
    %4517 = vmatpush2.bf16.msra.mxu0 0
    %4518 = vmatprep.mubr.bf16.mxu0 0
    %4519 = vmatmul.mubr.bf16.gmra.mxu0 %v4463
    %v4520 = vpop.f32.mrf.mxu0
    %v4521 = vadd.f32 0.0, %v4520
    %v4522 = vpop.f32.mrf.mxu0
    %v4523 = vpop.f32.mrf.mxu0
    %v4524 = vadd.f32 0.0, %v4523
    %v4525 = vpop.f32.mrf.mxu0
    %4526 = vmatprep.mubr.bf16.mxu0 0
    %4527 = vmatmul.mubr.bf16.gmra.mxu0 %v4466
    %v4528 = vpop.f32.mrf.mxu0
    %v4529 = vadd.f32 0.0, %v4528
    %v4530 = vpop.f32.mrf.mxu0
    %v4531 = vpop.f32.mrf.mxu0
    %v4532 = vadd.f32 0.0, %v4531
    %v4533 = vpop.f32.mrf.mxu0
    %4534 = vmatprep.mubr.bf16.mxu0 0
    %4535 = vmatmul.mubr.bf16.gmra.mxu0 %v4469
    %v4536 = vpop.f32.mrf.mxu0
    %v4537 = vadd.f32 0.0, %v4536
    %v4538 = vpop.f32.mrf.mxu0
    %v4539 = vpop.f32.mrf.mxu0
    %v4540 = vadd.f32 0.0, %v4539
    %v4541 = vpop.f32.mrf.mxu0
    %4542 = vmatprep.mubr.bf16.mxu0 0
    %4543 = vmatmul.mubr.bf16.gmra.mxu0 %v4472
    %v4544 = vpop.f32.mrf.mxu0
    %v4545 = vadd.f32 0.0, %v4544
    %v4546 = vpop.f32.mrf.mxu0
    %v4547 = vpop.f32.mrf.mxu0
    %v4548 = vadd.f32 0.0, %v4547
    %v4549 = vpop.f32.mrf.mxu0
    %4550 = vmatprep.mubr.bf16.mxu0 0
    %4551 = vmatmul.mubr.bf16.gmra.mxu0 %v4475
    %v4552 = vpop.f32.mrf.mxu0
    %v4553 = vadd.f32 0.0, %v4552
    %v4554 = vpop.f32.mrf.mxu0
    %v4555 = vpop.f32.mrf.mxu0
    %v4556 = vadd.f32 0.0, %v4555
    %v4557 = vpop.f32.mrf.mxu0
    %4558 = vmatprep.mubr.bf16.mxu0 0
    %4559 = vmatmul.mubr.bf16.gmra.mxu0 %v4478
    %v4560 = vpop.f32.mrf.mxu0
    %v4561 = vadd.f32 0.0, %v4560
    %v4562 = vpop.f32.mrf.mxu0
    %v4563 = vpop.f32.mrf.mxu0
    %v4564 = vadd.f32 0.0, %v4563
    %v4565 = vpop.f32.mrf.mxu0
    %4566 = vmatprep.mubr.bf16.mxu0 0
    %4567 = vmatmul.mubr.bf16.gmra.mxu0 %v4481
    %v4568 = vpop.f32.mrf.mxu0
    %v4569 = vadd.f32 0.0, %v4568
    %v4570 = vpop.f32.mrf.mxu0
    %v4571 = vpop.f32.mrf.mxu0
    %v4572 = vpop.f32.mrf.mxu0
    %4573 = vdwg.mxu0
    %v4574 = vpack.c.bf16 %v4524, %v4521
    %v4575 = vpack.c.bf16 %v4532, %v4529
    %v4576 = vpack.c.bf16 %v4540, %v4537
    %v4577 = vpack.c.bf16 %v4548, %v4545
    %v4578 = vpack.c.bf16 %v4556, %v4553
    %v4579 = vpack.c.bf16 %v4564, %v4561
    %v4580 = vpack.c.bf16 %v4569, %v4569
    %v4581 = vld [vmem:[%s17] sm:$0xff]
    %v4582 = vld [vmem:[%s17 + $0x8] sm:$0xff]
    %v4583 = vld [vmem:[%s17 + $0x10] sm:$0xff]
    %v4584 = vld [vmem:[%s17 + $0x18] sm:$0xff]
    %v4585 = vld [vmem:[%s17 + $0x20] sm:$0xff]
    %v4586 = vld [vmem:[%s17 + $0x28] sm:$0xff]
    %v4587 = vld [vmem:[%s17 + $0x30] sm:$0xff]
    %v4588 = vld [vmem:[%s17 + $0x38] sm:$0xff]
    %v4589 = vld [vmem:[%s17 + $0x40] sm:$0xff]
    %v4590 = vld [vmem:[%s17 + $0x48] sm:$0xff]
    %v4591 = vld [vmem:[%s17 + $0x50] sm:$0xff]
    %v4592 = vld [vmem:[%s17 + $0x58] sm:$0xff]
    %v4593 = vld [vmem:[%s17 + $0x60] sm:$0xff]
    %v4594 = vld [vmem:[%s17 + $0x68] sm:$0xff]
    %v4595 = vld [vmem:[%s17 + $0x70] sm:$0xff]
    %v4596 = vld [vmem:[%s17 + $0x78] sm:$0xff]
    %v4597 = vld [vmem:[#allocation28] sm:$0x3]
    %v4599 = vlaneseq
    %v4600 = vshrl.u32 %v4599, 7
    %v4601 = vsub.s32 0, %v4600
    %v4602 = vrot.slane %v4597, %v4601
    %v4603 = vlaneseq
    %v4604 = vshrl.u32 %v4603, 7
    %v4605 = vsub.s32 1, %v4604
    %v4606 = vrot.slane %v4597, %v4605
    %v4625 = vunpack.c.l.b16 %v4581
    %v4626 = vunpack.c.h.b16 %v4581
    %v4627 = vunpack.c.l.b16 %v4582
    %v4628 = vunpack.c.h.b16 %v4582
    %v4629 = vunpack.c.l.b16 %v4583
    %v4630 = vunpack.c.h.b16 %v4583
    %v4631 = vunpack.c.l.b16 %v4584
    %v4632 = vunpack.c.h.b16 %v4584
    %v4633 = vunpack.c.l.b16 %v4585
    %v4634 = vunpack.c.h.b16 %v4585
    %v4635 = vunpack.c.l.b16 %v4586
    %v4636 = vunpack.c.h.b16 %v4586
    %v4637 = vunpack.c.l.b16 %v4587
    %v4638 = vunpack.c.h.b16 %v4587
    %v4639 = vunpack.c.l.b16 %v4588
    %v4640 = vunpack.c.h.b16 %v4588
    %v4641 = vunpack.c.l.b16 %v4589
    %v4642 = vunpack.c.h.b16 %v4589
    %v4643 = vunpack.c.l.b16 %v4590
    %v4644 = vunpack.c.h.b16 %v4590
    %v4645 = vunpack.c.l.b16 %v4591
    %v4646 = vunpack.c.h.b16 %v4591
    %v4647 = vunpack.c.l.b16 %v4592
    %v4648 = vunpack.c.h.b16 %v4592
    %v4649 = vunpack.c.l.b16 %v4593
    %v4650 = vunpack.c.h.b16 %v4593
    %v4651 = vunpack.c.l.b16 %v4594
    %v4652 = vunpack.c.h.b16 %v4594
    %v4653 = vunpack.c.l.b16 %v4595
    %v4654 = vunpack.c.h.b16 %v4595
    %v4655 = vunpack.c.l.b16 %v4596
    %v4656 = vunpack.c.h.b16 %v4596
    %v4657 = vpack.c.b16 %v4627, %v4625
    %v4658 = vpack.c.b16 %v4628, %v4626
    %v4659 = vpack.c.b16 %v4631, %v4629
    %v4660 = vpack.c.b16 %v4632, %v4630
    %v4661 = vpack.c.b16 %v4635, %v4633
    %v4662 = vpack.c.b16 %v4636, %v4634
    %v4663 = vpack.c.b16 %v4639, %v4637
    %v4664 = vpack.c.b16 %v4640, %v4638
    %v4665 = vpack.c.b16 %v4643, %v4641
    %v4666 = vpack.c.b16 %v4644, %v4642
    %v4667 = vpack.c.b16 %v4647, %v4645
    %v4668 = vpack.c.b16 %v4648, %v4646
    %v4669 = vpack.c.b16 %v4651, %v4649
    %v4670 = vpack.c.b16 %v4652, %v4650
    %v4671 = vpack.c.b16 %v4655, %v4653
    %v4672 = vpack.c.b16 %v4656, %v4654
    %4689 = vmatprep.subr.bf16.mxu0 %v4672
    %4690 = vmatpush1.bf16.msra.mxu0 %v4671
    %4691 = vmatprep.subr.bf16.mxu0 %v4670
    %4692 = vmatpush1.bf16.msra.mxu0 %v4669
    %4693 = vmatprep.subr.bf16.mxu0 %v4668
    %4694 = vmatpush1.bf16.msra.mxu0 %v4667
    %4695 = vmatprep.subr.bf16.mxu0 %v4666
    %4696 = vmatpush1.bf16.msra.mxu0 %v4665
    %4697 = vmatprep.subr.bf16.mxu0 %v4664
    %4698 = vmatpush1.bf16.msra.mxu0 %v4663
    %4699 = vmatprep.subr.bf16.mxu0 %v4662
    %4700 = vmatpush1.bf16.msra.mxu0 %v4661
    %4701 = vmatprep.subr.bf16.mxu0 %v4660
    %4702 = vmatpush1.bf16.msra.mxu0 %v4659
    %4703 = vmatprep.subr.bf16.mxu0 %v4658
    %4704 = vmatpush1.bf16.msra.mxu0 %v4657
    %4705 = vmatprep.subr.bf16.mxu0 0
    %4706 = vmatpush2.bf16.msra.mxu0 0
    %4707 = vmatprep.subr.bf16.mxu0 0
    %4708 = vmatpush2.bf16.msra.mxu0 0
    %4709 = vmatprep.subr.bf16.mxu0 0
    %4710 = vmatpush2.bf16.msra.mxu0 0
    %4711 = vmatprep.subr.bf16.mxu0 0
    %4712 = vmatpush2.bf16.msra.mxu0 0
    %4713 = vmatprep.subr.bf16.mxu0 0
    %4714 = vmatpush2.bf16.msra.mxu0 0
    %4715 = vmatprep.subr.bf16.mxu0 0
    %4716 = vmatpush2.bf16.msra.mxu0 0
    %4717 = vmatprep.subr.bf16.mxu0 0
    %4718 = vmatpush2.bf16.msra.mxu0 0
    %4719 = vmatprep.subr.bf16.mxu0 0
    %4720 = vmatpush2.bf16.msra.mxu0 0
    %4721 = vmatprep.mubr.bf16.mxu0 0
    %4722 = vmatmul.mubr.bf16.gmra.mxu0 %v4574
    %v4723 = vpop.f32.mrf.mxu0
    %v4724 = vadd.f32 %v4602, %v4723
    %v4725 = vpop.f32.mrf.mxu0
    %v4726 = vadd.f32 %v4606, %v4725
    %v4727 = vpop.f32.mrf.mxu0
    %v4728 = vadd.f32 %v4602, %v4727
    %v4729 = vpop.f32.mrf.mxu0
    %v4730 = vadd.f32 %v4606, %v4729
    %4731 = vmatprep.mubr.bf16.mxu0 0
    %4732 = vmatmul.mubr.bf16.gmra.mxu0 %v4575
    %v4733 = vpop.f32.mrf.mxu0
    %v4734 = vadd.f32 %v4602, %v4733
    %v4735 = vpop.f32.mrf.mxu0
    %v4736 = vadd.f32 %v4606, %v4735
    %v4737 = vpop.f32.mrf.mxu0
    %v4738 = vadd.f32 %v4602, %v4737
    %v4739 = vpop.f32.mrf.mxu0
    %v4740 = vadd.f32 %v4606, %v4739
    %4741 = vmatprep.mubr.bf16.mxu0 0
    %4742 = vmatmul.mubr.bf16.gmra.mxu0 %v4576
    %v4743 = vpop.f32.mrf.mxu0
    %v4744 = vadd.f32 %v4602, %v4743
    %v4745 = vpop.f32.mrf.mxu0
    %v4746 = vadd.f32 %v4606, %v4745
    %v4747 = vpop.f32.mrf.mxu0
    %v4748 = vadd.f32 %v4602, %v4747
    %v4749 = vpop.f32.mrf.mxu0
    %v4750 = vadd.f32 %v4606, %v4749
    %4751 = vmatprep.mubr.bf16.mxu0 0
    %4752 = vmatmul.mubr.bf16.gmra.mxu0 %v4577
    %v4753 = vpop.f32.mrf.mxu0
    %v4754 = vadd.f32 %v4602, %v4753
    %v4755 = vpop.f32.mrf.mxu0
    %v4756 = vadd.f32 %v4606, %v4755
    %v4757 = vpop.f32.mrf.mxu0
    %v4758 = vadd.f32 %v4602, %v4757
    %v4759 = vpop.f32.mrf.mxu0
    %v4760 = vadd.f32 %v4606, %v4759
    %4761 = vmatprep.mubr.bf16.mxu0 0
    %4762 = vmatmul.mubr.bf16.gmra.mxu0 %v4578
    %v4763 = vpop.f32.mrf.mxu0
    %v4764 = vadd.f32 %v4602, %v4763
    %v4765 = vpop.f32.mrf.mxu0
    %v4766 = vadd.f32 %v4606, %v4765
    %v4767 = vpop.f32.mrf.mxu0
    %v4768 = vadd.f32 %v4602, %v4767
    %v4769 = vpop.f32.mrf.mxu0
    %v4770 = vadd.f32 %v4606, %v4769
    %4771 = vmatprep.mubr.bf16.mxu0 0
    %4772 = vmatmul.mubr.bf16.gmra.mxu0 %v4579
    %v4773 = vpop.f32.mrf.mxu0
    %v4774 = vadd.f32 %v4602, %v4773
    %v4775 = vpop.f32.mrf.mxu0
    %v4776 = vadd.f32 %v4606, %v4775
    %v4777 = vpop.f32.mrf.mxu0
    %v4778 = vadd.f32 %v4602, %v4777
    %v4779 = vpop.f32.mrf.mxu0
    %v4780 = vadd.f32 %v4606, %v4779
    %4781 = vmatprep.mubr.bf16.mxu0 0
    %4782 = vmatmul.mubr.bf16.gmra.mxu0 %v4580
    %v4783 = vpop.f32.mrf.mxu0
    %v4784 = vadd.f32 %v4602, %v4783
    %v4785 = vpop.f32.mrf.mxu0
    %v4786 = vadd.f32 %v4606, %v4785
    %v4787 = vpop.f32.mrf.mxu0
    %v4788 = vpop.f32.mrf.mxu0
    %4789 = vdwg.mxu0
    %v4790 = vld [vmem:[#allocation29] sm:$0x3]
    %v4792 = vlaneseq
    %v4793 = vshrl.u32 %v4792, 7
    %v4794 = vsub.s32 0, %v4793
    %v4795 = vrot.slane %v4790, %v4794
    %v4796 = vlaneseq
    %v4797 = vshrl.u32 %v4796, 7
    %v4798 = vsub.s32 1, %v4797
    %v4799 = vrot.slane %v4790, %v4798
    %v4802 = vmul.f32 %v4724, %v4795
    %v4803 = vmul.f32 %v4726, %v4799
    %v4804 = vmul.f32 %v4728, %v4795
    %v4805 = vmul.f32 %v4730, %v4799
    %v4806 = vmul.f32 %v4734, %v4795
    %v4807 = vmul.f32 %v4736, %v4799
    %v4808 = vmul.f32 %v4738, %v4795
    %v4809 = vmul.f32 %v4740, %v4799
    %v4810 = vmul.f32 %v4744, %v4795
    %v4811 = vmul.f32 %v4746, %v4799
    %v4812 = vmul.f32 %v4748, %v4795
    %v4813 = vmul.f32 %v4750, %v4799
    %v4814 = vmul.f32 %v4754, %v4795
    %v4815 = vmul.f32 %v4756, %v4799
    %v4816 = vmul.f32 %v4758, %v4795
    %v4817 = vmul.f32 %v4760, %v4799
    %v4818 = vmul.f32 %v4764, %v4795
    %v4819 = vmul.f32 %v4766, %v4799
    %v4820 = vmul.f32 %v4768, %v4795
    %v4821 = vmul.f32 %v4770, %v4799
    %v4822 = vmul.f32 %v4774, %v4795
    %v4823 = vmul.f32 %v4776, %v4799
    %v4824 = vmul.f32 %v4778, %v4795
    %v4825 = vmul.f32 %v4780, %v4799
    %v4826 = vmul.f32 %v4784, %v4795
    %v4827 = vmul.f32 %v4786, %v4799
    %v4828 = vld [vmem:[#allocation31] sm:$0x3]
    %v4830 = vlaneseq
    %v4831 = vshrl.u32 %v4830, 7
    %v4832 = vsub.s32 0, %v4831
    %v4833 = vrot.slane %v4828, %v4832
    %v4834 = vlaneseq
    %v4835 = vshrl.u32 %v4834, 7
    %v4836 = vsub.s32 1, %v4835
    %v4837 = vrot.slane %v4828, %v4836
    %v4840 = vadd.f32 %v4802, %v4833
    %v4841 = vadd.f32 %v4803, %v4837
    %v4842 = vadd.f32 %v4804, %v4833
    %v4843 = vadd.f32 %v4805, %v4837
    %v4844 = vadd.f32 %v4806, %v4833
    %v4845 = vadd.f32 %v4807, %v4837
    %v4846 = vadd.f32 %v4808, %v4833
    %v4847 = vadd.f32 %v4809, %v4837
    %v4848 = vadd.f32 %v4810, %v4833
    %v4849 = vadd.f32 %v4811, %v4837
    %v4850 = vadd.f32 %v4812, %v4833
    %v4851 = vadd.f32 %v4813, %v4837
    %v4852 = vadd.f32 %v4814, %v4833
    %v4853 = vadd.f32 %v4815, %v4837
    %v4854 = vadd.f32 %v4816, %v4833
    %v4855 = vadd.f32 %v4817, %v4837
    %v4856 = vadd.f32 %v4818, %v4833
    %v4857 = vadd.f32 %v4819, %v4837
    %v4858 = vadd.f32 %v4820, %v4833
    %v4859 = vadd.f32 %v4821, %v4837
    %v4860 = vadd.f32 %v4822, %v4833
    %v4861 = vadd.f32 %v4823, %v4837
    %v4862 = vadd.f32 %v4824, %v4833
    %v4863 = vadd.f32 %v4825, %v4837
    %v4864 = vadd.f32 %v4826, %v4833
    %v4865 = vadd.f32 %v4827, %v4837
    %v4866 = vadd.f32 %v4840, %v3322
    %v4867 = vadd.f32 %v4841, %v3323
    %v4868 = vadd.f32 %v4842, %v3324
    %v4869 = vadd.f32 %v4843, %v3325
    %v4870 = vadd.f32 %v4844, %v3326
    %v4871 = vadd.f32 %v4845, %v3327
    %v4872 = vadd.f32 %v4846, %v3328
    %v4873 = vadd.f32 %v4847, %v3329
    %v4874 = vadd.f32 %v4848, %v3330
    %v4875 = vadd.f32 %v4849, %v3331
    %v4876 = vadd.f32 %v4850, %v3332
    %v4877 = vadd.f32 %v4851, %v3333
    %v4878 = vadd.f32 %v4852, %v3334
    %v4879 = vadd.f32 %v4853, %v3335
    %v4880 = vadd.f32 %v4854, %v3336
    %v4881 = vadd.f32 %v4855, %v3337
    %v4882 = vadd.f32 %v4856, %v3338
    %v4883 = vadd.f32 %v4857, %v3339
    %v4884 = vadd.f32 %v4858, %v3340
    %v4885 = vadd.f32 %v4859, %v3341
    %v4886 = vadd.f32 %v4860, %v3342
    %v4887 = vadd.f32 %v4861, %v3343
    %v4888 = vadd.f32 %v4862, %v3344
    %v4889 = vadd.f32 %v4863, %v3345
    %v4890 = vadd.f32 %v4864, %v3346
    %v4891 = vadd.f32 %v4865, %v3347
    %v4892 = vpack.c.bf16 %v4868, %v4866
    %v4893 = vpack.c.bf16 %v4869, %v4867
    %v4894 = vpack.c.bf16 %v4872, %v4870
    %v4895 = vpack.c.bf16 %v4873, %v4871
    %v4896 = vpack.c.bf16 %v4876, %v4874
    %v4897 = vpack.c.bf16 %v4877, %v4875
    %v4898 = vpack.c.bf16 %v4880, %v4878
    %v4899 = vpack.c.bf16 %v4881, %v4879
    %v4900 = vpack.c.bf16 %v4884, %v4882
    %v4901 = vpack.c.bf16 %v4885, %v4883
    %v4902 = vpack.c.bf16 %v4888, %v4886
    %v4903 = vpack.c.bf16 %v4889, %v4887
    %v4904 = vpack.c.bf16 %v4890, %v4890
    %v4905 = vpack.c.bf16 %v4891, %v4891
    %v4906 = vpack.c.bf16 %v465, %v463
    %v4907 = vpack.c.bf16 %v466, %v464
    %v4908 = vpack.c.bf16 %v469, %v467
    %v4909 = vpack.c.bf16 %v470, %v468
    %v4910 = vpack.c.bf16 %v473, %v471
    %v4911 = vpack.c.bf16 %v474, %v472
    %v4912 = vpack.c.bf16 %v477, %v475
    %v4913 = vpack.c.bf16 %v478, %v476
    %v4914 = vpack.c.bf16 %v481, %v479
    %v4915 = vpack.c.bf16 %v482, %v480
    %v4916 = vpack.c.bf16 %v485, %v483
    %v4917 = vpack.c.bf16 %v486, %v484
    %v4918 = vpack.c.bf16 %v487, %v487
    %v4919 = vpack.c.bf16 %v488, %v488
    %v4920 = vld [vmem:[%s23] sm:$0x3f]
    %v4921 = vld [vmem:[#allocation32] sm:$0xff]
    %v4922 = vld [vmem:[#allocation32 + $0x8] sm:$0xff]
    %v4923 = vld [vmem:[#allocation32 + $0x10] sm:$0xff]
    %v4924 = vld [vmem:[#allocation32 + $0x18] sm:$0xff]
    %v4925 = vld [vmem:[#allocation32 + $0x20] sm:$0xff]
    %v4926 = vld [vmem:[#allocation32 + $0x28] sm:$0xff]
    %v4927 = vld [vmem:[#allocation32 + $0x30] sm:$0xff]
    %v4928 = vld [vmem:[#allocation32 + $0x38] sm:$0xff]
    %v4929 = vld [vmem:[#allocation32 + $0x40] sm:$0xff]
    %v4930 = vld [vmem:[#allocation32 + $0x48] sm:$0xff]
    %v4931 = vld [vmem:[#allocation32 + $0x50] sm:$0xff]
    %v4932 = vld [vmem:[#allocation32 + $0x58] sm:$0xff]
    %v4933 = vld [vmem:[#allocation32 + $0x60] sm:$0xff]
    %v4934 = vld [vmem:[#allocation32 + $0x68] sm:$0xff]
    %v4935 = vld [vmem:[#allocation32 + $0x70] sm:$0xff]
    %v4936 = vld [vmem:[#allocation32 + $0x78] sm:$0xff]
    %v4937 = vld [vmem:[#allocation32 + $0x80] sm:$0xff]
    %v4938 = vld [vmem:[#allocation32 + $0x88] sm:$0xff]
    %v4939 = vld [vmem:[#allocation32 + $0x90] sm:$0xff]
    %v4940 = vld [vmem:[#allocation32 + $0x98] sm:$0xff]
    %v4941 = vld [vmem:[#allocation32 + $0xa0] sm:$0xff]
    %v4942 = vld [vmem:[#allocation32 + $0xa8] sm:$0xff]
    %v4943 = vld [vmem:[#allocation32 + $0xb0] sm:$0xff]
    %v4944 = vld [vmem:[#allocation32 + $0xb8] sm:$0xff]
    %v4945 = vld [vmem:[#allocation32 + $0xc0] sm:$0xff]
    %v4946 = vld [vmem:[#allocation32 + $0xc8] sm:$0xff]
    %v4947 = vld [vmem:[#allocation32 + $0xd0] sm:$0xff]
    %v4948 = vld [vmem:[#allocation32 + $0xd8] sm:$0xff]
    %v4949 = vld [vmem:[#allocation32 + $0xe0] sm:$0xff]
    %v4950 = vld [vmem:[#allocation32 + $0xe8] sm:$0xff]
    %v4951 = vld [vmem:[#allocation32 + $0xf0] sm:$0xff]
    %v4952 = vld [vmem:[#allocation32 + $0xf8] sm:$0xff]
    %v4953 = vld [vmem:[#allocation32 + $0x100] sm:$0xff]
    %v4954 = vld [vmem:[#allocation32 + $0x108] sm:$0xff]
    %v4955 = vld [vmem:[#allocation32 + $0x110] sm:$0xff]
    %v4956 = vld [vmem:[#allocation32 + $0x118] sm:$0xff]
    %v4957 = vld [vmem:[#allocation32 + $0x120] sm:$0xff]
    %v4958 = vld [vmem:[#allocation32 + $0x128] sm:$0xff]
    %v4959 = vld [vmem:[#allocation32 + $0x130] sm:$0xff]
    %v4960 = vld [vmem:[#allocation32 + $0x138] sm:$0xff]
    %v4961 = vld [vmem:[#allocation32 + $0x140] sm:$0xff]
    %v4962 = vld [vmem:[#allocation32 + $0x148] sm:$0xff]
    %v4963 = vld [vmem:[#allocation32 + $0x150] sm:$0xff]
    %v4964 = vld [vmem:[#allocation32 + $0x158] sm:$0xff]
    %v4965 = vld [vmem:[#allocation32 + $0x160] sm:$0xff]
    %v4966 = vld [vmem:[#allocation32 + $0x168] sm:$0xff]
    %v4967 = vld [vmem:[#allocation32 + $0x170] sm:$0xff]
    %v4968 = vld [vmem:[#allocation32 + $0x178] sm:$0xff]
    %v4969 = vld [vmem:[#allocation32 + $0x180] sm:$0xff]
    %v4970 = vld [vmem:[#allocation32 + $0x188] sm:$0xff]
    %v4971 = vld [vmem:[#allocation32 + $0x190] sm:$0xff]
    %v4972 = vld [vmem:[#allocation32 + $0x198] sm:$0xff]
    %v4973 = vld [vmem:[#allocation32 + $0x1a0] sm:$0xff]
    %v4974 = vld [vmem:[#allocation32 + $0x1a8] sm:$0xff]
    %v4975 = vld [vmem:[#allocation32 + $0x1b0] sm:$0xff]
    %v4976 = vld [vmem:[#allocation32 + $0x1b8] sm:$0xff]
    %v4977 = vld [vmem:[#allocation32 + $0x1c0] sm:$0xff]
    %v4978 = vld [vmem:[#allocation32 + $0x1c8] sm:$0xff]
    %v4979 = vld [vmem:[#allocation32 + $0x1d0] sm:$0xff]
    %v4980 = vld [vmem:[#allocation32 + $0x1d8] sm:$0xff]
    %v4981 = vld [vmem:[#allocation32 + $0x1e0] sm:$0xff]
    %v4982 = vld [vmem:[#allocation32 + $0x1e8] sm:$0xff]
    %v4983 = vld [vmem:[#allocation32 + $0x1f0] sm:$0xff]
    %v4984 = vld [vmem:[#allocation32 + $0x1f8] sm:$0xff]
    %v4985 = vld [vmem:[#allocation32 + $0x200] sm:$0xff]
    %v4986 = vld [vmem:[#allocation32 + $0x208] sm:$0xff]
    %v4987 = vld [vmem:[#allocation32 + $0x210] sm:$0xff]
    %v4988 = vld [vmem:[#allocation32 + $0x218] sm:$0xff]
    %v4989 = vld [vmem:[#allocation32 + $0x220] sm:$0xff]
    %v4990 = vld [vmem:[#allocation32 + $0x228] sm:$0xff]
    %v4991 = vld [vmem:[#allocation32 + $0x230] sm:$0xff]
    %v4992 = vld [vmem:[#allocation32 + $0x238] sm:$0xff]
    %v4993 = vld [vmem:[#allocation32 + $0x240] sm:$0xff]
    %v4994 = vld [vmem:[#allocation32 + $0x248] sm:$0xff]
    %v4995 = vld [vmem:[#allocation32 + $0x250] sm:$0xff]
    %v4996 = vld [vmem:[#allocation32 + $0x258] sm:$0xff]
    %v4997 = vld [vmem:[#allocation32 + $0x260] sm:$0xff]
    %v4998 = vld [vmem:[#allocation32 + $0x268] sm:$0xff]
    %v4999 = vld [vmem:[#allocation32 + $0x270] sm:$0xff]
    %v5000 = vld [vmem:[#allocation32 + $0x278] sm:$0xff]
    %v5001 = vld [vmem:[#allocation32 + $0x280] sm:$0xff]
    %v5002 = vld [vmem:[#allocation32 + $0x288] sm:$0xff]
    %v5003 = vld [vmem:[#allocation32 + $0x290] sm:$0xff]
    %v5004 = vld [vmem:[#allocation32 + $0x298] sm:$0xff]
    %v5005 = vld [vmem:[#allocation32 + $0x2a0] sm:$0xff]
    %v5006 = vld [vmem:[#allocation32 + $0x2a8] sm:$0xff]
    %v5007 = vld [vmem:[#allocation32 + $0x2b0] sm:$0xff]
    %v5008 = vld [vmem:[#allocation32 + $0x2b8] sm:$0xff]
    %v5009 = vld [vmem:[#allocation32 + $0x2c0] sm:$0xff]
    %v5010 = vld [vmem:[#allocation32 + $0x2c8] sm:$0xff]
    %v5011 = vld [vmem:[#allocation32 + $0x2d0] sm:$0xff]
    %v5012 = vld [vmem:[#allocation32 + $0x2d8] sm:$0xff]
    %v5013 = vld [vmem:[#allocation32 + $0x2e0] sm:$0xff]
    %v5014 = vld [vmem:[#allocation32 + $0x2e8] sm:$0xff]
    %v5015 = vld [vmem:[#allocation32 + $0x2f0] sm:$0xff]
    %v5016 = vld [vmem:[#allocation32 + $0x2f8] sm:$0xff]
    %v5113 = vunpack.c.l.b16 %v4921
    %v5114 = vunpack.c.h.b16 %v4921
    %v5115 = vunpack.c.l.b16 %v4922
    %v5116 = vunpack.c.h.b16 %v4922
    %v5117 = vunpack.c.l.b16 %v4923
    %v5118 = vunpack.c.h.b16 %v4923
    %v5119 = vunpack.c.l.b16 %v4924
    %v5120 = vunpack.c.h.b16 %v4924
    %v5121 = vunpack.c.l.b16 %v4925
    %v5122 = vunpack.c.h.b16 %v4925
    %v5123 = vunpack.c.l.b16 %v4926
    %v5124 = vunpack.c.h.b16 %v4926
    %v5125 = vunpack.c.l.b16 %v4927
    %v5126 = vunpack.c.h.b16 %v4927
    %v5127 = vunpack.c.l.b16 %v4928
    %v5128 = vunpack.c.h.b16 %v4928
    %v5129 = vunpack.c.l.b16 %v4929
    %v5130 = vunpack.c.h.b16 %v4929
    %v5131 = vunpack.c.l.b16 %v4930
    %v5132 = vunpack.c.h.b16 %v4930
    %v5133 = vunpack.c.l.b16 %v4931
    %v5134 = vunpack.c.h.b16 %v4931
    %v5135 = vunpack.c.l.b16 %v4932
    %v5136 = vunpack.c.h.b16 %v4932
    %v5137 = vunpack.c.l.b16 %v4933
    %v5138 = vunpack.c.h.b16 %v4933
    %v5139 = vunpack.c.l.b16 %v4934
    %v5140 = vunpack.c.h.b16 %v4934
    %v5141 = vunpack.c.l.b16 %v4935
    %v5142 = vunpack.c.h.b16 %v4935
    %v5143 = vunpack.c.l.b16 %v4936
    %v5144 = vunpack.c.h.b16 %v4936
    %v5145 = vunpack.c.l.b16 %v4937
    %v5146 = vunpack.c.h.b16 %v4937
    %v5147 = vunpack.c.l.b16 %v4938
    %v5148 = vunpack.c.h.b16 %v4938
    %v5149 = vunpack.c.l.b16 %v4939
    %v5150 = vunpack.c.h.b16 %v4939
    %v5151 = vunpack.c.l.b16 %v4940
    %v5152 = vunpack.c.h.b16 %v4940
    %v5153 = vunpack.c.l.b16 %v4941
    %v5154 = vunpack.c.h.b16 %v4941
    %v5155 = vunpack.c.l.b16 %v4942
    %v5156 = vunpack.c.h.b16 %v4942
    %v5157 = vunpack.c.l.b16 %v4943
    %v5158 = vunpack.c.h.b16 %v4943
    %v5159 = vunpack.c.l.b16 %v4944
    %v5160 = vunpack.c.h.b16 %v4944
    %v5161 = vunpack.c.l.b16 %v4945
    %v5162 = vunpack.c.h.b16 %v4945
    %v5163 = vunpack.c.l.b16 %v4946
    %v5164 = vunpack.c.h.b16 %v4946
    %v5165 = vunpack.c.l.b16 %v4947
    %v5166 = vunpack.c.h.b16 %v4947
    %v5167 = vunpack.c.l.b16 %v4948
    %v5168 = vunpack.c.h.b16 %v4948
    %v5169 = vunpack.c.l.b16 %v4949
    %v5170 = vunpack.c.h.b16 %v4949
    %v5171 = vunpack.c.l.b16 %v4950
    %v5172 = vunpack.c.h.b16 %v4950
    %v5173 = vunpack.c.l.b16 %v4951
    %v5174 = vunpack.c.h.b16 %v4951
    %v5175 = vunpack.c.l.b16 %v4952
    %v5176 = vunpack.c.h.b16 %v4952
    %v5177 = vunpack.c.l.b16 %v4953
    %v5178 = vunpack.c.h.b16 %v4953
    %v5179 = vunpack.c.l.b16 %v4954
    %v5180 = vunpack.c.h.b16 %v4954
    %v5181 = vunpack.c.l.b16 %v4955
    %v5182 = vunpack.c.h.b16 %v4955
    %v5183 = vunpack.c.l.b16 %v4956
    %v5184 = vunpack.c.h.b16 %v4956
    %v5185 = vunpack.c.l.b16 %v4957
    %v5186 = vunpack.c.h.b16 %v4957
    %v5187 = vunpack.c.l.b16 %v4958
    %v5188 = vunpack.c.h.b16 %v4958
    %v5189 = vunpack.c.l.b16 %v4959
    %v5190 = vunpack.c.h.b16 %v4959
    %v5191 = vunpack.c.l.b16 %v4960
    %v5192 = vunpack.c.h.b16 %v4960
    %v5193 = vunpack.c.l.b16 %v4961
    %v5194 = vunpack.c.h.b16 %v4961
    %v5195 = vunpack.c.l.b16 %v4962
    %v5196 = vunpack.c.h.b16 %v4962
    %v5197 = vunpack.c.l.b16 %v4963
    %v5198 = vunpack.c.h.b16 %v4963
    %v5199 = vunpack.c.l.b16 %v4964
    %v5200 = vunpack.c.h.b16 %v4964
    %v5201 = vunpack.c.l.b16 %v4965
    %v5202 = vunpack.c.h.b16 %v4965
    %v5203 = vunpack.c.l.b16 %v4966
    %v5204 = vunpack.c.h.b16 %v4966
    %v5205 = vunpack.c.l.b16 %v4967
    %v5206 = vunpack.c.h.b16 %v4967
    %v5207 = vunpack.c.l.b16 %v4968
    %v5208 = vunpack.c.h.b16 %v4968
    %v5209 = vunpack.c.l.b16 %v4969
    %v5210 = vunpack.c.h.b16 %v4969
    %v5211 = vunpack.c.l.b16 %v4970
    %v5212 = vunpack.c.h.b16 %v4970
    %v5213 = vunpack.c.l.b16 %v4971
    %v5214 = vunpack.c.h.b16 %v4971
    %v5215 = vunpack.c.l.b16 %v4972
    %v5216 = vunpack.c.h.b16 %v4972
    %v5217 = vunpack.c.l.b16 %v4973
    %v5218 = vunpack.c.h.b16 %v4973
    %v5219 = vunpack.c.l.b16 %v4974
    %v5220 = vunpack.c.h.b16 %v4974
    %v5221 = vunpack.c.l.b16 %v4975
    %v5222 = vunpack.c.h.b16 %v4975
    %v5223 = vunpack.c.l.b16 %v4976
    %v5224 = vunpack.c.h.b16 %v4976
    %v5225 = vunpack.c.l.b16 %v4977
    %v5226 = vunpack.c.h.b16 %v4977
    %v5227 = vunpack.c.l.b16 %v4978
    %v5228 = vunpack.c.h.b16 %v4978
    %v5229 = vunpack.c.l.b16 %v4979
    %v5230 = vunpack.c.h.b16 %v4979
    %v5231 = vunpack.c.l.b16 %v4980
    %v5232 = vunpack.c.h.b16 %v4980
    %v5233 = vunpack.c.l.b16 %v4981
    %v5234 = vunpack.c.h.b16 %v4981
    %v5235 = vunpack.c.l.b16 %v4982
    %v5236 = vunpack.c.h.b16 %v4982
    %v5237 = vunpack.c.l.b16 %v4983
    %v5238 = vunpack.c.h.b16 %v4983
    %v5239 = vunpack.c.l.b16 %v4984
    %v5240 = vunpack.c.h.b16 %v4984
    %v5241 = vunpack.c.l.b16 %v4985
    %v5242 = vunpack.c.h.b16 %v4985
    %v5243 = vunpack.c.l.b16 %v4986
    %v5244 = vunpack.c.h.b16 %v4986
    %v5245 = vunpack.c.l.b16 %v4987
    %v5246 = vunpack.c.h.b16 %v4987
    %v5247 = vunpack.c.l.b16 %v4988
    %v5248 = vunpack.c.h.b16 %v4988
    %v5249 = vunpack.c.l.b16 %v4989
    %v5250 = vunpack.c.h.b16 %v4989
    %v5251 = vunpack.c.l.b16 %v4990
    %v5252 = vunpack.c.h.b16 %v4990
    %v5253 = vunpack.c.l.b16 %v4991
    %v5254 = vunpack.c.h.b16 %v4991
    %v5255 = vunpack.c.l.b16 %v4992
    %v5256 = vunpack.c.h.b16 %v4992
    %v5257 = vunpack.c.l.b16 %v4993
    %v5258 = vunpack.c.h.b16 %v4993
    %v5259 = vunpack.c.l.b16 %v4994
    %v5260 = vunpack.c.h.b16 %v4994
    %v5261 = vunpack.c.l.b16 %v4995
    %v5262 = vunpack.c.h.b16 %v4995
    %v5263 = vunpack.c.l.b16 %v4996
    %v5264 = vunpack.c.h.b16 %v4996
    %v5265 = vunpack.c.l.b16 %v4997
    %v5266 = vunpack.c.h.b16 %v4997
    %v5267 = vunpack.c.l.b16 %v4998
    %v5268 = vunpack.c.h.b16 %v4998
    %v5269 = vunpack.c.l.b16 %v4999
    %v5270 = vunpack.c.h.b16 %v4999
    %v5271 = vunpack.c.l.b16 %v5000
    %v5272 = vunpack.c.h.b16 %v5000
    %v5273 = vunpack.c.l.b16 %v5001
    %v5274 = vunpack.c.h.b16 %v5001
    %v5275 = vunpack.c.l.b16 %v5002
    %v5276 = vunpack.c.h.b16 %v5002
    %v5277 = vunpack.c.l.b16 %v5003
    %v5278 = vunpack.c.h.b16 %v5003
    %v5279 = vunpack.c.l.b16 %v5004
    %v5280 = vunpack.c.h.b16 %v5004
    %v5281 = vunpack.c.l.b16 %v5005
    %v5282 = vunpack.c.h.b16 %v5005
    %v5283 = vunpack.c.l.b16 %v5006
    %v5284 = vunpack.c.h.b16 %v5006
    %v5285 = vunpack.c.l.b16 %v5007
    %v5286 = vunpack.c.h.b16 %v5007
    %v5287 = vunpack.c.l.b16 %v5008
    %v5288 = vunpack.c.h.b16 %v5008
    %v5289 = vunpack.c.l.b16 %v5009
    %v5290 = vunpack.c.h.b16 %v5009
    %v5291 = vunpack.c.l.b16 %v5010
    %v5292 = vunpack.c.h.b16 %v5010
    %v5293 = vunpack.c.l.b16 %v5011
    %v5294 = vunpack.c.h.b16 %v5011
    %v5295 = vunpack.c.l.b16 %v5012
    %v5296 = vunpack.c.h.b16 %v5012
    %v5297 = vunpack.c.l.b16 %v5013
    %v5298 = vunpack.c.h.b16 %v5013
    %v5299 = vunpack.c.l.b16 %v5014
    %v5300 = vunpack.c.h.b16 %v5014
    %v5301 = vunpack.c.l.b16 %v5015
    %v5302 = vunpack.c.h.b16 %v5015
    %v5303 = vunpack.c.l.b16 %v5016
    %v5304 = vunpack.c.h.b16 %v5016
    %v5305 = vpack.c.b16 %v5119, %v5113
    %v5306 = vpack.c.b16 %v5120, %v5114
    %v5307 = vpack.c.b16 %v5121, %v5115
    %v5308 = vpack.c.b16 %v5122, %v5116
    %v5309 = vpack.c.b16 %v5123, %v5117
    %v5310 = vpack.c.b16 %v5124, %v5118
    %v5311 = vpack.c.b16 %v5131, %v5125
    %v5312 = vpack.c.b16 %v5132, %v5126
    %v5313 = vpack.c.b16 %v5133, %v5127
    %v5314 = vpack.c.b16 %v5134, %v5128
    %v5315 = vpack.c.b16 %v5135, %v5129
    %v5316 = vpack.c.b16 %v5136, %v5130
    %v5317 = vpack.c.b16 %v5143, %v5137
    %v5318 = vpack.c.b16 %v5144, %v5138
    %v5319 = vpack.c.b16 %v5145, %v5139
    %v5320 = vpack.c.b16 %v5146, %v5140
    %v5321 = vpack.c.b16 %v5147, %v5141
    %v5322 = vpack.c.b16 %v5148, %v5142
    %v5323 = vpack.c.b16 %v5155, %v5149
    %v5324 = vpack.c.b16 %v5156, %v5150
    %v5325 = vpack.c.b16 %v5157, %v5151
    %v5326 = vpack.c.b16 %v5158, %v5152
    %v5327 = vpack.c.b16 %v5159, %v5153
    %v5328 = vpack.c.b16 %v5160, %v5154
    %v5329 = vpack.c.b16 %v5167, %v5161
    %v5330 = vpack.c.b16 %v5168, %v5162
    %v5331 = vpack.c.b16 %v5169, %v5163
    %v5332 = vpack.c.b16 %v5170, %v5164
    %v5333 = vpack.c.b16 %v5171, %v5165
    %v5334 = vpack.c.b16 %v5172, %v5166
    %v5335 = vpack.c.b16 %v5179, %v5173
    %v5336 = vpack.c.b16 %v5180, %v5174
    %v5337 = vpack.c.b16 %v5181, %v5175
    %v5338 = vpack.c.b16 %v5182, %v5176
    %v5339 = vpack.c.b16 %v5183, %v5177
    %v5340 = vpack.c.b16 %v5184, %v5178
    %v5341 = vpack.c.b16 %v5191, %v5185
    %v5342 = vpack.c.b16 %v5192, %v5186
    %v5343 = vpack.c.b16 %v5193, %v5187
    %v5344 = vpack.c.b16 %v5194, %v5188
    %v5345 = vpack.c.b16 %v5195, %v5189
    %v5346 = vpack.c.b16 %v5196, %v5190
    %v5347 = vpack.c.b16 %v5203, %v5197
    %v5348 = vpack.c.b16 %v5204, %v5198
    %v5349 = vpack.c.b16 %v5205, %v5199
    %v5350 = vpack.c.b16 %v5206, %v5200
    %v5351 = vpack.c.b16 %v5207, %v5201
    %v5352 = vpack.c.b16 %v5208, %v5202
    %v5353 = vpack.c.b16 %v5215, %v5209
    %v5354 = vpack.c.b16 %v5216, %v5210
    %v5355 = vpack.c.b16 %v5217, %v5211
    %v5356 = vpack.c.b16 %v5218, %v5212
    %v5357 = vpack.c.b16 %v5219, %v5213
    %v5358 = vpack.c.b16 %v5220, %v5214
    %v5359 = vpack.c.b16 %v5227, %v5221
    %v5360 = vpack.c.b16 %v5228, %v5222
    %v5361 = vpack.c.b16 %v5229, %v5223
    %v5362 = vpack.c.b16 %v5230, %v5224
    %v5363 = vpack.c.b16 %v5231, %v5225
    %v5364 = vpack.c.b16 %v5232, %v5226
    %v5365 = vpack.c.b16 %v5239, %v5233
    %v5366 = vpack.c.b16 %v5240, %v5234
    %v5367 = vpack.c.b16 %v5241, %v5235
    %v5368 = vpack.c.b16 %v5242, %v5236
    %v5369 = vpack.c.b16 %v5243, %v5237
    %v5370 = vpack.c.b16 %v5244, %v5238
    %v5371 = vpack.c.b16 %v5251, %v5245
    %v5372 = vpack.c.b16 %v5252, %v5246
    %v5373 = vpack.c.b16 %v5253, %v5247
    %v5374 = vpack.c.b16 %v5254, %v5248
    %v5375 = vpack.c.b16 %v5255, %v5249
    %v5376 = vpack.c.b16 %v5256, %v5250
    %v5377 = vpack.c.b16 %v5263, %v5257
    %v5378 = vpack.c.b16 %v5264, %v5258
    %v5379 = vpack.c.b16 %v5265, %v5259
    %v5380 = vpack.c.b16 %v5266, %v5260
    %v5381 = vpack.c.b16 %v5267, %v5261
    %v5382 = vpack.c.b16 %v5268, %v5262
    %v5383 = vpack.c.b16 %v5275, %v5269
    %v5384 = vpack.c.b16 %v5276, %v5270
    %v5385 = vpack.c.b16 %v5277, %v5271
    %v5386 = vpack.c.b16 %v5278, %v5272
    %v5387 = vpack.c.b16 %v5279, %v5273
    %v5388 = vpack.c.b16 %v5280, %v5274
    %v5389 = vpack.c.b16 %v5287, %v5281
    %v5390 = vpack.c.b16 %v5288, %v5282
    %v5391 = vpack.c.b16 %v5289, %v5283
    %v5392 = vpack.c.b16 %v5290, %v5284
    %v5393 = vpack.c.b16 %v5291, %v5285
    %v5394 = vpack.c.b16 %v5292, %v5286
    %v5395 = vpack.c.b16 %v5299, %v5293
    %v5396 = vpack.c.b16 %v5300, %v5294
    %v5397 = vpack.c.b16 %v5301, %v5295
    %v5398 = vpack.c.b16 %v5302, %v5296
    %v5399 = vpack.c.b16 %v5303, %v5297
    %v5400 = vpack.c.b16 %v5304, %v5298
    %5497 = vmatprep.subr.bf16.mxu0 %v5348
    %5498 = vmatpush1.bf16.msra.mxu0 %v5347
    %5499 = vmatprep.subr.bf16.mxu0 %v5342
    %5500 = vmatpush1.bf16.msra.mxu0 %v5341
    %5501 = vmatprep.subr.bf16.mxu0 %v5336
    %5502 = vmatpush1.bf16.msra.mxu0 %v5335
    %5503 = vmatprep.subr.bf16.mxu0 %v5330
    %5504 = vmatpush1.bf16.msra.mxu0 %v5329
    %5505 = vmatprep.subr.bf16.mxu0 %v5324
    %5506 = vmatpush1.bf16.msra.mxu0 %v5323
    %5507 = vmatprep.subr.bf16.mxu0 %v5318
    %5508 = vmatpush1.bf16.msra.mxu0 %v5317
    %5509 = vmatprep.subr.bf16.mxu0 %v5312
    %5510 = vmatpush1.bf16.msra.mxu0 %v5311
    %5511 = vmatprep.subr.bf16.mxu0 %v5306
    %5512 = vmatpush1.bf16.msra.mxu0 %v5305
    %5513 = vmatprep.subr.bf16.mxu0 %v5396
    %5514 = vmatpush2.bf16.msra.mxu0 %v5395
    %5515 = vmatprep.subr.bf16.mxu0 %v5390
    %5516 = vmatpush2.bf16.msra.mxu0 %v5389
    %5517 = vmatprep.subr.bf16.mxu0 %v5384
    %5518 = vmatpush2.bf16.msra.mxu0 %v5383
    %5519 = vmatprep.subr.bf16.mxu0 %v5378
    %5520 = vmatpush2.bf16.msra.mxu0 %v5377
    %5521 = vmatprep.subr.bf16.mxu0 %v5372
    %5522 = vmatpush2.bf16.msra.mxu0 %v5371
    %5523 = vmatprep.subr.bf16.mxu0 %v5366
    %5524 = vmatpush2.bf16.msra.mxu0 %v5365
    %5525 = vmatprep.subr.bf16.mxu0 %v5360
    %5526 = vmatpush2.bf16.msra.mxu0 %v5359
    %5527 = vmatprep.subr.bf16.mxu0 %v5354
    %5528 = vmatpush2.bf16.msra.mxu0 %v5353
    %5529 = vmatprep.mubr.bf16.mxu0 %v4893
    %5530 = vmatmul.mubr.bf16.gmra.mxu0 %v4892
    %v5531 = vpop.f32.mrf.mxu0
    %v5532 = vadd.f32 0.0, %v5531
    %v5533 = vpop.f32.mrf.mxu0
    %v5534 = vadd.f32 0.0, %v5533
    %v5535 = vpop.f32.mrf.mxu0
    %v5536 = vadd.f32 0.0, %v5535
    %v5537 = vpop.f32.mrf.mxu0
    %v5538 = vadd.f32 0.0, %v5537
    %5539 = vmatprep.mubr.bf16.mxu0 %v4895
    %5540 = vmatmul.mubr.bf16.gmra.mxu0 %v4894
    %v5541 = vpop.f32.mrf.mxu0
    %v5542 = vadd.f32 0.0, %v5541
    %v5543 = vpop.f32.mrf.mxu0
    %v5544 = vadd.f32 0.0, %v5543
    %v5545 = vpop.f32.mrf.mxu0
    %v5546 = vadd.f32 0.0, %v5545
    %v5547 = vpop.f32.mrf.mxu0
    %v5548 = vadd.f32 0.0, %v5547
    %5549 = vmatprep.mubr.bf16.mxu0 %v4897
    %5550 = vmatmul.mubr.bf16.gmra.mxu0 %v4896
    %v5551 = vpop.f32.mrf.mxu0
    %v5552 = vadd.f32 0.0, %v5551
    %v5553 = vpop.f32.mrf.mxu0
    %v5554 = vadd.f32 0.0, %v5553
    %v5555 = vpop.f32.mrf.mxu0
    %v5556 = vadd.f32 0.0, %v5555
    %v5557 = vpop.f32.mrf.mxu0
    %v5558 = vadd.f32 0.0, %v5557
    %5559 = vmatprep.mubr.bf16.mxu0 %v4899
    %5560 = vmatmul.mubr.bf16.gmra.mxu0 %v4898
    %v5561 = vpop.f32.mrf.mxu0
    %v5562 = vadd.f32 0.0, %v5561
    %v5563 = vpop.f32.mrf.mxu0
    %v5564 = vadd.f32 0.0, %v5563
    %v5565 = vpop.f32.mrf.mxu0
    %v5566 = vadd.f32 0.0, %v5565
    %v5567 = vpop.f32.mrf.mxu0
    %v5568 = vadd.f32 0.0, %v5567
    %5569 = vmatprep.mubr.bf16.mxu0 %v4901
    %5570 = vmatmul.mubr.bf16.gmra.mxu0 %v4900
    %v5571 = vpop.f32.mrf.mxu0
    %v5572 = vadd.f32 0.0, %v5571
    %v5573 = vpop.f32.mrf.mxu0
    %v5574 = vadd.f32 0.0, %v5573
    %v5575 = vpop.f32.mrf.mxu0
    %v5576 = vadd.f32 0.0, %v5575
    %v5577 = vpop.f32.mrf.mxu0
    %v5578 = vadd.f32 0.0, %v5577
    %5579 = vmatprep.mubr.bf16.mxu0 %v4903
    %5580 = vmatmul.mubr.bf16.gmra.mxu0 %v4902
    %v5581 = vpop.f32.mrf.mxu0
    %v5582 = vadd.f32 0.0, %v5581
    %v5583 = vpop.f32.mrf.mxu0
    %v5584 = vadd.f32 0.0, %v5583
    %v5585 = vpop.f32.mrf.mxu0
    %v5586 = vadd.f32 0.0, %v5585
    %v5587 = vpop.f32.mrf.mxu0
    %v5588 = vadd.f32 0.0, %v5587
    %5589 = vmatprep.mubr.bf16.mxu0 %v4905
    %5590 = vmatmul.mubr.bf16.gmra.mxu0 %v4904
    %v5591 = vpop.f32.mrf.mxu0
    %v5592 = vadd.f32 0.0, %v5591
    %v5593 = vpop.f32.mrf.mxu0
    %v5594 = vadd.f32 0.0, %v5593
    %v5595 = vpop.f32.mrf.mxu0
    %v5596 = vpop.f32.mrf.mxu0
    %5597 = vdwg.mxu0
    %5598 = vmatprep.subr.bf16.mxu0 %v5350
    %5599 = vmatpush1.bf16.msra.mxu0 %v5349
    %5600 = vmatprep.subr.bf16.mxu0 %v5344
    %5601 = vmatpush1.bf16.msra.mxu0 %v5343
    %5602 = vmatprep.subr.bf16.mxu0 %v5338
    %5603 = vmatpush1.bf16.msra.mxu0 %v5337
    %5604 = vmatprep.subr.bf16.mxu0 %v5332
    %5605 = vmatpush1.bf16.msra.mxu0 %v5331
    %5606 = vmatprep.subr.bf16.mxu0 %v5326
    %5607 = vmatpush1.bf16.msra.mxu0 %v5325
    %5608 = vmatprep.subr.bf16.mxu0 %v5320
    %5609 = vmatpush1.bf16.msra.mxu0 %v5319
    %5610 = vmatprep.subr.bf16.mxu0 %v5314
    %5611 = vmatpush1.bf16.msra.mxu0 %v5313
    %5612 = vmatprep.subr.bf16.mxu0 %v5308
    %5613 = vmatpush1.bf16.msra.mxu0 %v5307
    %5614 = vmatprep.subr.bf16.mxu0 %v5398
    %5615 = vmatpush2.bf16.msra.mxu0 %v5397
    %5616 = vmatprep.subr.bf16.mxu0 %v5392
    %5617 = vmatpush2.bf16.msra.mxu0 %v5391
    %5618 = vmatprep.subr.bf16.mxu0 %v5386
    %5619 = vmatpush2.bf16.msra.mxu0 %v5385
    %5620 = vmatprep.subr.bf16.mxu0 %v5380
    %5621 = vmatpush2.bf16.msra.mxu0 %v5379
    %5622 = vmatprep.subr.bf16.mxu0 %v5374
    %5623 = vmatpush2.bf16.msra.mxu0 %v5373
    %5624 = vmatprep.subr.bf16.mxu0 %v5368
    %5625 = vmatpush2.bf16.msra.mxu0 %v5367
    %5626 = vmatprep.subr.bf16.mxu0 %v5362
    %5627 = vmatpush2.bf16.msra.mxu0 %v5361
    %5628 = vmatprep.subr.bf16.mxu0 %v5356
    %5629 = vmatpush2.bf16.msra.mxu0 %v5355
    %5630 = vmatprep.mubr.bf16.mxu0 %v4893
    %5631 = vmatmul.mubr.bf16.gmra.mxu0 %v4892
    %v5632 = vpop.f32.mrf.mxu0
    %v5633 = vadd.f32 0.0, %v5632
    %v5634 = vpop.f32.mrf.mxu0
    %v5635 = vadd.f32 0.0, %v5634
    %v5636 = vpop.f32.mrf.mxu0
    %v5637 = vadd.f32 0.0, %v5636
    %v5638 = vpop.f32.mrf.mxu0
    %v5639 = vadd.f32 0.0, %v5638
    %5640 = vmatprep.mubr.bf16.mxu0 %v4895
    %5641 = vmatmul.mubr.bf16.gmra.mxu0 %v4894
    %v5642 = vpop.f32.mrf.mxu0
    %v5643 = vadd.f32 0.0, %v5642
    %v5644 = vpop.f32.mrf.mxu0
    %v5645 = vadd.f32 0.0, %v5644
    %v5646 = vpop.f32.mrf.mxu0
    %v5647 = vadd.f32 0.0, %v5646
    %v5648 = vpop.f32.mrf.mxu0
    %v5649 = vadd.f32 0.0, %v5648
    %5650 = vmatprep.mubr.bf16.mxu0 %v4897
    %5651 = vmatmul.mubr.bf16.gmra.mxu0 %v4896
    %v5652 = vpop.f32.mrf.mxu0
    %v5653 = vadd.f32 0.0, %v5652
    %v5654 = vpop.f32.mrf.mxu0
    %v5655 = vadd.f32 0.0, %v5654
    %v5656 = vpop.f32.mrf.mxu0
    %v5657 = vadd.f32 0.0, %v5656
    %v5658 = vpop.f32.mrf.mxu0
    %v5659 = vadd.f32 0.0, %v5658
    %5660 = vmatprep.mubr.bf16.mxu0 %v4899
    %5661 = vmatmul.mubr.bf16.gmra.mxu0 %v4898
    %v5662 = vpop.f32.mrf.mxu0
    %v5663 = vadd.f32 0.0, %v5662
    %v5664 = vpop.f32.mrf.mxu0
    %v5665 = vadd.f32 0.0, %v5664
    %v5666 = vpop.f32.mrf.mxu0
    %v5667 = vadd.f32 0.0, %v5666
    %v5668 = vpop.f32.mrf.mxu0
    %v5669 = vadd.f32 0.0, %v5668
    %5670 = vmatprep.mubr.bf16.mxu0 %v4901
    %5671 = vmatmul.mubr.bf16.gmra.mxu0 %v4900
    %v5672 = vpop.f32.mrf.mxu0
    %v5673 = vadd.f32 0.0, %v5672
    %v5674 = vpop.f32.mrf.mxu0
    %v5675 = vadd.f32 0.0, %v5674
    %v5676 = vpop.f32.mrf.mxu0
    %v5677 = vadd.f32 0.0, %v5676
    %v5678 = vpop.f32.mrf.mxu0
    %v5679 = vadd.f32 0.0, %v5678
    %5680 = vmatprep.mubr.bf16.mxu0 %v4903
    %5681 = vmatmul.mubr.bf16.gmra.mxu0 %v4902
    %v5682 = vpop.f32.mrf.mxu0
    %v5683 = vadd.f32 0.0, %v5682
    %v5684 = vpop.f32.mrf.mxu0
    %v5685 = vadd.f32 0.0, %v5684
    %v5686 = vpop.f32.mrf.mxu0
    %v5687 = vadd.f32 0.0, %v5686
    %v5688 = vpop.f32.mrf.mxu0
    %v5689 = vadd.f32 0.0, %v5688
    %5690 = vmatprep.mubr.bf16.mxu0 %v4905
    %5691 = vmatmul.mubr.bf16.gmra.mxu0 %v4904
    %v5692 = vpop.f32.mrf.mxu0
    %v5693 = vadd.f32 0.0, %v5692
    %v5694 = vpop.f32.mrf.mxu0
    %v5695 = vadd.f32 0.0, %v5694
    %v5696 = vpop.f32.mrf.mxu0
    %v5697 = vpop.f32.mrf.mxu0
    %5698 = vdwg.mxu0
    %5699 = vmatprep.subr.bf16.mxu0 %v5352
    %5700 = vmatpush1.bf16.msra.mxu0 %v5351
    %5701 = vmatprep.subr.bf16.mxu0 %v5346
    %5702 = vmatpush1.bf16.msra.mxu0 %v5345
    %5703 = vmatprep.subr.bf16.mxu0 %v5340
    %5704 = vmatpush1.bf16.msra.mxu0 %v5339
    %5705 = vmatprep.subr.bf16.mxu0 %v5334
    %5706 = vmatpush1.bf16.msra.mxu0 %v5333
    %5707 = vmatprep.subr.bf16.mxu0 %v5328
    %5708 = vmatpush1.bf16.msra.mxu0 %v5327
    %5709 = vmatprep.subr.bf16.mxu0 %v5322
    %5710 = vmatpush1.bf16.msra.mxu0 %v5321
    %5711 = vmatprep.subr.bf16.mxu0 %v5316
    %5712 = vmatpush1.bf16.msra.mxu0 %v5315
    %5713 = vmatprep.subr.bf16.mxu0 %v5310
    %5714 = vmatpush1.bf16.msra.mxu0 %v5309
    %5715 = vmatprep.subr.bf16.mxu0 %v5400
    %5716 = vmatpush2.bf16.msra.mxu0 %v5399
    %5717 = vmatprep.subr.bf16.mxu0 %v5394
    %5718 = vmatpush2.bf16.msra.mxu0 %v5393
    %5719 = vmatprep.subr.bf16.mxu0 %v5388
    %5720 = vmatpush2.bf16.msra.mxu0 %v5387
    %5721 = vmatprep.subr.bf16.mxu0 %v5382
    %5722 = vmatpush2.bf16.msra.mxu0 %v5381
    %5723 = vmatprep.subr.bf16.mxu0 %v5376
    %5724 = vmatpush2.bf16.msra.mxu0 %v5375
    %5725 = vmatprep.subr.bf16.mxu0 %v5370
    %5726 = vmatpush2.bf16.msra.mxu0 %v5369
    %5727 = vmatprep.subr.bf16.mxu0 %v5364
    %5728 = vmatpush2.bf16.msra.mxu0 %v5363
    %5729 = vmatprep.subr.bf16.mxu0 %v5358
    %5730 = vmatpush2.bf16.msra.mxu0 %v5357
    %5731 = vmatprep.mubr.bf16.mxu0 %v4893
    %5732 = vmatmul.mubr.bf16.gmra.mxu0 %v4892
    %v5733 = vpop.f32.mrf.mxu0
    %v5734 = vadd.f32 0.0, %v5733
    %v5735 = vpop.f32.mrf.mxu0
    %v5736 = vadd.f32 0.0, %v5735
    %v5737 = vpop.f32.mrf.mxu0
    %v5738 = vadd.f32 0.0, %v5737
    %v5739 = vpop.f32.mrf.mxu0
    %v5740 = vadd.f32 0.0, %v5739
    %5741 = vmatprep.mubr.bf16.mxu0 %v4895
    %5742 = vmatmul.mubr.bf16.gmra.mxu0 %v4894
    %v5743 = vpop.f32.mrf.mxu0
    %v5744 = vadd.f32 0.0, %v5743
    %v5745 = vpop.f32.mrf.mxu0
    %v5746 = vadd.f32 0.0, %v5745
    %v5747 = vpop.f32.mrf.mxu0
    %v5748 = vadd.f32 0.0, %v5747
    %v5749 = vpop.f32.mrf.mxu0
    %v5750 = vadd.f32 0.0, %v5749
    %5751 = vmatprep.mubr.bf16.mxu0 %v4897
    %5752 = vmatmul.mubr.bf16.gmra.mxu0 %v4896
    %v5753 = vpop.f32.mrf.mxu0
    %v5754 = vadd.f32 0.0, %v5753
    %v5755 = vpop.f32.mrf.mxu0
    %v5756 = vadd.f32 0.0, %v5755
    %v5757 = vpop.f32.mrf.mxu0
    %v5758 = vadd.f32 0.0, %v5757
    %v5759 = vpop.f32.mrf.mxu0
    %v5760 = vadd.f32 0.0, %v5759
    %5761 = vmatprep.mubr.bf16.mxu0 %v4899
    %5762 = vmatmul.mubr.bf16.gmra.mxu0 %v4898
    %v5763 = vpop.f32.mrf.mxu0
    %v5764 = vadd.f32 0.0, %v5763
    %v5765 = vpop.f32.mrf.mxu0
    %v5766 = vadd.f32 0.0, %v5765
    %v5767 = vpop.f32.mrf.mxu0
    %v5768 = vadd.f32 0.0, %v5767
    %v5769 = vpop.f32.mrf.mxu0
    %v5770 = vadd.f32 0.0, %v5769
    %5771 = vmatprep.mubr.bf16.mxu0 %v4901
    %5772 = vmatmul.mubr.bf16.gmra.mxu0 %v4900
    %v5773 = vpop.f32.mrf.mxu0
    %v5774 = vadd.f32 0.0, %v5773
    %v5775 = vpop.f32.mrf.mxu0
    %v5776 = vadd.f32 0.0, %v5775
    %v5777 = vpop.f32.mrf.mxu0
    %v5778 = vadd.f32 0.0, %v5777
    %v5779 = vpop.f32.mrf.mxu0
    %v5780 = vadd.f32 0.0, %v5779
    %5781 = vmatprep.mubr.bf16.mxu0 %v4903
    %5782 = vmatmul.mubr.bf16.gmra.mxu0 %v4902
    %v5783 = vpop.f32.mrf.mxu0
    %v5784 = vadd.f32 0.0, %v5783
    %v5785 = vpop.f32.mrf.mxu0
    %v5786 = vadd.f32 0.0, %v5785
    %v5787 = vpop.f32.mrf.mxu0
    %v5788 = vadd.f32 0.0, %v5787
    %v5789 = vpop.f32.mrf.mxu0
    %v5790 = vadd.f32 0.0, %v5789
    %5791 = vmatprep.mubr.bf16.mxu0 %v4905
    %5792 = vmatmul.mubr.bf16.gmra.mxu0 %v4904
    %v5793 = vpop.f32.mrf.mxu0
    %v5794 = vadd.f32 0.0, %v5793
    %v5795 = vpop.f32.mrf.mxu0
    %v5796 = vadd.f32 0.0, %v5795
    %v5797 = vpop.f32.mrf.mxu0
    %v5798 = vpop.f32.mrf.mxu0
    %5799 = vdwg.mxu0
    %v5801 = vlaneseq
    %v5802 = vshrl.u32 %v5801, 7
    %v5803 = vsub.s32 0, %v5802
    %v5804 = vrot.slane %v4920, %v5803
    %v5805 = vlaneseq
    %v5806 = vshrl.u32 %v5805, 7
    %v5807 = vsub.s32 1, %v5806
    %v5808 = vrot.slane %v4920, %v5807
    %v5809 = vlaneseq
    %v5810 = vshrl.u32 %v5809, 7
    %v5811 = vsub.s32 2, %v5810
    %v5812 = vrot.slane %v4920, %v5811
    %v5813 = vlaneseq
    %v5814 = vshrl.u32 %v5813, 7
    %v5815 = vsub.s32 3, %v5814
    %v5816 = vrot.slane %v4920, %v5815
    %v5817 = vlaneseq
    %v5818 = vshrl.u32 %v5817, 7
    %v5819 = vsub.s32 4, %v5818
    %v5820 = vrot.slane %v4920, %v5819
    %v5821 = vlaneseq
    %v5822 = vshrl.u32 %v5821, 7
    %v5823 = vsub.s32 5, %v5822
    %v5824 = vrot.slane %v4920, %v5823
    %v5831 = vadd.f32 %v5804, %v5532
    %v5832 = vadd.f32 %v5808, %v5534
    %v5833 = vadd.f32 %v5812, %v5633
    %v5834 = vadd.f32 %v5816, %v5635
    %v5835 = vadd.f32 %v5820, %v5734
    %v5836 = vadd.f32 %v5824, %v5736
    %v5837 = vadd.f32 %v5804, %v5536
    %v5838 = vadd.f32 %v5808, %v5538
    %v5839 = vadd.f32 %v5812, %v5637
    %v5840 = vadd.f32 %v5816, %v5639
    %v5841 = vadd.f32 %v5820, %v5738
    %v5842 = vadd.f32 %v5824, %v5740
    %v5843 = vadd.f32 %v5804, %v5542
    %v5844 = vadd.f32 %v5808, %v5544
    %v5845 = vadd.f32 %v5812, %v5643
    %v5846 = vadd.f32 %v5816, %v5645
    %v5847 = vadd.f32 %v5820, %v5744
    %v5848 = vadd.f32 %v5824, %v5746
    %v5849 = vadd.f32 %v5804, %v5546
    %v5850 = vadd.f32 %v5808, %v5548
    %v5851 = vadd.f32 %v5812, %v5647
    %v5852 = vadd.f32 %v5816, %v5649
    %v5853 = vadd.f32 %v5820, %v5748
    %v5854 = vadd.f32 %v5824, %v5750
    %v5855 = vadd.f32 %v5804, %v5552
    %v5856 = vadd.f32 %v5808, %v5554
    %v5857 = vadd.f32 %v5812, %v5653
    %v5858 = vadd.f32 %v5816, %v5655
    %v5859 = vadd.f32 %v5820, %v5754
    %v5860 = vadd.f32 %v5824, %v5756
    %v5861 = vadd.f32 %v5804, %v5556
    %v5862 = vadd.f32 %v5808, %v5558
    %v5863 = vadd.f32 %v5812, %v5657
    %v5864 = vadd.f32 %v5816, %v5659
    %v5865 = vadd.f32 %v5820, %v5758
    %v5866 = vadd.f32 %v5824, %v5760
    %v5867 = vadd.f32 %v5804, %v5562
    %v5868 = vadd.f32 %v5808, %v5564
    %v5869 = vadd.f32 %v5812, %v5663
    %v5870 = vadd.f32 %v5816, %v5665
    %v5871 = vadd.f32 %v5820, %v5764
    %v5872 = vadd.f32 %v5824, %v5766
    %v5873 = vadd.f32 %v5804, %v5566
    %v5874 = vadd.f32 %v5808, %v5568
    %v5875 = vadd.f32 %v5812, %v5667
    %v5876 = vadd.f32 %v5816, %v5669
    %v5877 = vadd.f32 %v5820, %v5768
    %v5878 = vadd.f32 %v5824, %v5770
    %v5879 = vadd.f32 %v5804, %v5572
    %v5880 = vadd.f32 %v5808, %v5574
    %v5881 = vadd.f32 %v5812, %v5673
    %v5882 = vadd.f32 %v5816, %v5675
    %v5883 = vadd.f32 %v5820, %v5774
    %v5884 = vadd.f32 %v5824, %v5776
    %v5885 = vadd.f32 %v5804, %v5576
    %v5886 = vadd.f32 %v5808, %v5578
    %v5887 = vadd.f32 %v5812, %v5677
    %v5888 = vadd.f32 %v5816, %v5679
    %v5889 = vadd.f32 %v5820, %v5778
    %v5890 = vadd.f32 %v5824, %v5780
    %v5891 = vadd.f32 %v5804, %v5582
    %v5892 = vadd.f32 %v5808, %v5584
    %v5893 = vadd.f32 %v5812, %v5683
    %v5894 = vadd.f32 %v5816, %v5685
    %v5895 = vadd.f32 %v5820, %v5784
    %v5896 = vadd.f32 %v5824, %v5786
    %v5897 = vadd.f32 %v5804, %v5586
    %v5898 = vadd.f32 %v5808, %v5588
    %v5899 = vadd.f32 %v5812, %v5687
    %v5900 = vadd.f32 %v5816, %v5689
    %v5901 = vadd.f32 %v5820, %v5788
    %v5902 = vadd.f32 %v5824, %v5790
    %v5903 = vadd.f32 %v5804, %v5592
    %v5904 = vadd.f32 %v5808, %v5594
    %v5905 = vadd.f32 %v5812, %v5693
    %v5906 = vadd.f32 %v5816, %v5695
    %v5907 = vadd.f32 %v5820, %v5794
    %v5908 = vadd.f32 %v5824, %v5796
    %v5909 = vld [vmem:[#allocation34] sm:$0xff]
    %v5910 = vld [vmem:[#allocation34 + $0x8] sm:$0xff]
    %v5911 = vld [vmem:[#allocation34 + $0x10] sm:$0xff]
    %v5912 = vld [vmem:[#allocation34 + $0x18] sm:$0xff]
    %v5913 = vld [vmem:[#allocation34 + $0x20] sm:$0xff]
    %v5914 = vld [vmem:[#allocation34 + $0x28] sm:$0xff]
    %v5915 = vld [vmem:[#allocation34 + $0x30] sm:$0xff]
    %v5916 = vld [vmem:[#allocation34 + $0x38] sm:$0xff]
    %v5917 = vld [vmem:[#allocation34 + $0x40] sm:$0xff]
    %v5918 = vld [vmem:[#allocation34 + $0x48] sm:$0xff]
    %v5919 = vld [vmem:[#allocation34 + $0x50] sm:$0xff]
    %v5920 = vld [vmem:[#allocation34 + $0x58] sm:$0xff]
    %v5921 = vld [vmem:[#allocation34 + $0x60] sm:$0xff]
    %v5922 = vld [vmem:[#allocation34 + $0x68] sm:$0xff]
    %v5923 = vld [vmem:[#allocation34 + $0x70] sm:$0xff]
    %v5924 = vld [vmem:[#allocation34 + $0x78] sm:$0xff]
    %v5925 = vld [vmem:[#allocation34 + $0x80] sm:$0xff]
    %v5926 = vld [vmem:[#allocation34 + $0x88] sm:$0xff]
    %v5927 = vld [vmem:[#allocation34 + $0x90] sm:$0xff]
    %v5928 = vld [vmem:[#allocation34 + $0x98] sm:$0xff]
    %v5929 = vld [vmem:[#allocation34 + $0xa0] sm:$0xff]
    %v5930 = vld [vmem:[#allocation34 + $0xa8] sm:$0xff]
    %v5931 = vld [vmem:[#allocation34 + $0xb0] sm:$0xff]
    %v5932 = vld [vmem:[#allocation34 + $0xb8] sm:$0xff]
    %v5933 = vld [vmem:[#allocation34 + $0xc0] sm:$0xff]
    %v5934 = vld [vmem:[#allocation34 + $0xc8] sm:$0xff]
    %v5935 = vld [vmem:[#allocation34 + $0xd0] sm:$0xff]
    %v5936 = vld [vmem:[#allocation34 + $0xd8] sm:$0xff]
    %v5937 = vld [vmem:[#allocation34 + $0xe0] sm:$0xff]
    %v5938 = vld [vmem:[#allocation34 + $0xe8] sm:$0xff]
    %v5939 = vld [vmem:[#allocation34 + $0xf0] sm:$0xff]
    %v5940 = vld [vmem:[#allocation34 + $0xf8] sm:$0xff]
    %v5941 = vld [vmem:[#allocation34 + $0x100] sm:$0xff]
    %v5942 = vld [vmem:[#allocation34 + $0x108] sm:$0xff]
    %v5943 = vld [vmem:[#allocation34 + $0x110] sm:$0xff]
    %v5944 = vld [vmem:[#allocation34 + $0x118] sm:$0xff]
    %v5945 = vld [vmem:[#allocation34 + $0x120] sm:$0xff]
    %v5946 = vld [vmem:[#allocation34 + $0x128] sm:$0xff]
    %v5947 = vld [vmem:[#allocation34 + $0x130] sm:$0xff]
    %v5948 = vld [vmem:[#allocation34 + $0x138] sm:$0xff]
    %v5949 = vld [vmem:[#allocation34 + $0x140] sm:$0xff]
    %v5950 = vld [vmem:[#allocation34 + $0x148] sm:$0xff]
    %v5951 = vld [vmem:[#allocation34 + $0x150] sm:$0xff]
    %v5952 = vld [vmem:[#allocation34 + $0x158] sm:$0xff]
    %v5953 = vld [vmem:[#allocation34 + $0x160] sm:$0xff]
    %v5954 = vld [vmem:[#allocation34 + $0x168] sm:$0xff]
    %v5955 = vld [vmem:[#allocation34 + $0x170] sm:$0xff]
    %v5956 = vld [vmem:[#allocation34 + $0x178] sm:$0xff]
    %v5957 = vld [vmem:[#allocation34 + $0x180] sm:$0xff]
    %v5958 = vld [vmem:[#allocation34 + $0x188] sm:$0xff]
    %v5959 = vld [vmem:[#allocation34 + $0x190] sm:$0xff]
    %v5960 = vld [vmem:[#allocation34 + $0x198] sm:$0xff]
    %v5961 = vld [vmem:[#allocation34 + $0x1a0] sm:$0xff]
    %v5962 = vld [vmem:[#allocation34 + $0x1a8] sm:$0xff]
    %v5963 = vld [vmem:[#allocation34 + $0x1b0] sm:$0xff]
    %v5964 = vld [vmem:[#allocation34 + $0x1b8] sm:$0xff]
    %v5965 = vld [vmem:[#allocation34 + $0x1c0] sm:$0xff]
    %v5966 = vld [vmem:[#allocation34 + $0x1c8] sm:$0xff]
    %v5967 = vld [vmem:[#allocation34 + $0x1d0] sm:$0xff]
    %v5968 = vld [vmem:[#allocation34 + $0x1d8] sm:$0xff]
    %v5969 = vld [vmem:[#allocation34 + $0x1e0] sm:$0xff]
    %v5970 = vld [vmem:[#allocation34 + $0x1e8] sm:$0xff]
    %v5971 = vld [vmem:[#allocation34 + $0x1f0] sm:$0xff]
    %v5972 = vld [vmem:[#allocation34 + $0x1f8] sm:$0xff]
    %v5973 = vld [vmem:[#allocation34 + $0x200] sm:$0xff]
    %v5974 = vld [vmem:[#allocation34 + $0x208] sm:$0xff]
    %v5975 = vld [vmem:[#allocation34 + $0x210] sm:$0xff]
    %v5976 = vld [vmem:[#allocation34 + $0x218] sm:$0xff]
    %v5977 = vld [vmem:[#allocation34 + $0x220] sm:$0xff]
    %v5978 = vld [vmem:[#allocation34 + $0x228] sm:$0xff]
    %v5979 = vld [vmem:[#allocation34 + $0x230] sm:$0xff]
    %v5980 = vld [vmem:[#allocation34 + $0x238] sm:$0xff]
    %v5981 = vld [vmem:[#allocation34 + $0x240] sm:$0xff]
    %v5982 = vld [vmem:[#allocation34 + $0x248] sm:$0xff]
    %v5983 = vld [vmem:[#allocation34 + $0x250] sm:$0xff]
    %v5984 = vld [vmem:[#allocation34 + $0x258] sm:$0xff]
    %v5985 = vld [vmem:[#allocation34 + $0x260] sm:$0xff]
    %v5986 = vld [vmem:[#allocation34 + $0x268] sm:$0xff]
    %v5987 = vld [vmem:[#allocation34 + $0x270] sm:$0xff]
    %v5988 = vld [vmem:[#allocation34 + $0x278] sm:$0xff]
    %v5989 = vld [vmem:[#allocation34 + $0x280] sm:$0xff]
    %v5990 = vld [vmem:[#allocation34 + $0x288] sm:$0xff]
    %v5991 = vld [vmem:[#allocation34 + $0x290] sm:$0xff]
    %v5992 = vld [vmem:[#allocation34 + $0x298] sm:$0xff]
    %v5993 = vld [vmem:[#allocation34 + $0x2a0] sm:$0xff]
    %v5994 = vld [vmem:[#allocation34 + $0x2a8] sm:$0xff]
    %v5995 = vld [vmem:[#allocation34 + $0x2b0] sm:$0xff]
    %v5996 = vld [vmem:[#allocation34 + $0x2b8] sm:$0xff]
    %v5997 = vld [vmem:[#allocation34 + $0x2c0] sm:$0xff]
    %v5998 = vld [vmem:[#allocation34 + $0x2c8] sm:$0xff]
    %v5999 = vld [vmem:[#allocation34 + $0x2d0] sm:$0xff]
    %v6000 = vld [vmem:[#allocation34 + $0x2d8] sm:$0xff]
    %v6001 = vld [vmem:[#allocation34 + $0x2e0] sm:$0xff]
    %v6002 = vld [vmem:[#allocation34 + $0x2e8] sm:$0xff]
    %v6003 = vld [vmem:[#allocation34 + $0x2f0] sm:$0xff]
    %v6004 = vld [vmem:[#allocation34 + $0x2f8] sm:$0xff]
    %v6101 = vunpack.c.l.b16 %v5909
    %v6102 = vunpack.c.h.b16 %v5909
    %v6103 = vunpack.c.l.b16 %v5910
    %v6104 = vunpack.c.h.b16 %v5910
    %v6105 = vunpack.c.l.b16 %v5911
    %v6106 = vunpack.c.h.b16 %v5911
    %v6107 = vunpack.c.l.b16 %v5912
    %v6108 = vunpack.c.h.b16 %v5912
    %v6109 = vunpack.c.l.b16 %v5913
    %v6110 = vunpack.c.h.b16 %v5913
    %v6111 = vunpack.c.l.b16 %v5914
    %v6112 = vunpack.c.h.b16 %v5914
    %v6113 = vunpack.c.l.b16 %v5915
    %v6114 = vunpack.c.h.b16 %v5915
    %v6115 = vunpack.c.l.b16 %v5916
    %v6116 = vunpack.c.h.b16 %v5916
    %v6117 = vunpack.c.l.b16 %v5917
    %v6118 = vunpack.c.h.b16 %v5917
    %v6119 = vunpack.c.l.b16 %v5918
    %v6120 = vunpack.c.h.b16 %v5918
    %v6121 = vunpack.c.l.b16 %v5919
    %v6122 = vunpack.c.h.b16 %v5919
    %v6123 = vunpack.c.l.b16 %v5920
    %v6124 = vunpack.c.h.b16 %v5920
    %v6125 = vunpack.c.l.b16 %v5921
    %v6126 = vunpack.c.h.b16 %v5921
    %v6127 = vunpack.c.l.b16 %v5922
    %v6128 = vunpack.c.h.b16 %v5922
    %v6129 = vunpack.c.l.b16 %v5923
    %v6130 = vunpack.c.h.b16 %v5923
    %v6131 = vunpack.c.l.b16 %v5924
    %v6132 = vunpack.c.h.b16 %v5924
    %v6133 = vunpack.c.l.b16 %v5925
    %v6134 = vunpack.c.h.b16 %v5925
    %v6135 = vunpack.c.l.b16 %v5926
    %v6136 = vunpack.c.h.b16 %v5926
    %v6137 = vunpack.c.l.b16 %v5927
    %v6138 = vunpack.c.h.b16 %v5927
    %v6139 = vunpack.c.l.b16 %v5928
    %v6140 = vunpack.c.h.b16 %v5928
    %v6141 = vunpack.c.l.b16 %v5929
    %v6142 = vunpack.c.h.b16 %v5929
    %v6143 = vunpack.c.l.b16 %v5930
    %v6144 = vunpack.c.h.b16 %v5930
    %v6145 = vunpack.c.l.b16 %v5931
    %v6146 = vunpack.c.h.b16 %v5931
    %v6147 = vunpack.c.l.b16 %v5932
    %v6148 = vunpack.c.h.b16 %v5932
    %v6149 = vunpack.c.l.b16 %v5933
    %v6150 = vunpack.c.h.b16 %v5933
    %v6151 = vunpack.c.l.b16 %v5934
    %v6152 = vunpack.c.h.b16 %v5934
    %v6153 = vunpack.c.l.b16 %v5935
    %v6154 = vunpack.c.h.b16 %v5935
    %v6155 = vunpack.c.l.b16 %v5936
    %v6156 = vunpack.c.h.b16 %v5936
    %v6157 = vunpack.c.l.b16 %v5937
    %v6158 = vunpack.c.h.b16 %v5937
    %v6159 = vunpack.c.l.b16 %v5938
    %v6160 = vunpack.c.h.b16 %v5938
    %v6161 = vunpack.c.l.b16 %v5939
    %v6162 = vunpack.c.h.b16 %v5939
    %v6163 = vunpack.c.l.b16 %v5940
    %v6164 = vunpack.c.h.b16 %v5940
    %v6165 = vunpack.c.l.b16 %v5941
    %v6166 = vunpack.c.h.b16 %v5941
    %v6167 = vunpack.c.l.b16 %v5942
    %v6168 = vunpack.c.h.b16 %v5942
    %v6169 = vunpack.c.l.b16 %v5943
    %v6170 = vunpack.c.h.b16 %v5943
    %v6171 = vunpack.c.l.b16 %v5944
    %v6172 = vunpack.c.h.b16 %v5944
    %v6173 = vunpack.c.l.b16 %v5945
    %v6174 = vunpack.c.h.b16 %v5945
    %v6175 = vunpack.c.l.b16 %v5946
    %v6176 = vunpack.c.h.b16 %v5946
    %v6177 = vunpack.c.l.b16 %v5947
    %v6178 = vunpack.c.h.b16 %v5947
    %v6179 = vunpack.c.l.b16 %v5948
    %v6180 = vunpack.c.h.b16 %v5948
    %v6181 = vunpack.c.l.b16 %v5949
    %v6182 = vunpack.c.h.b16 %v5949
    %v6183 = vunpack.c.l.b16 %v5950
    %v6184 = vunpack.c.h.b16 %v5950
    %v6185 = vunpack.c.l.b16 %v5951
    %v6186 = vunpack.c.h.b16 %v5951
    %v6187 = vunpack.c.l.b16 %v5952
    %v6188 = vunpack.c.h.b16 %v5952
    %v6189 = vunpack.c.l.b16 %v5953
    %v6190 = vunpack.c.h.b16 %v5953
    %v6191 = vunpack.c.l.b16 %v5954
    %v6192 = vunpack.c.h.b16 %v5954
    %v6193 = vunpack.c.l.b16 %v5955
    %v6194 = vunpack.c.h.b16 %v5955
    %v6195 = vunpack.c.l.b16 %v5956
    %v6196 = vunpack.c.h.b16 %v5956
    %v6197 = vunpack.c.l.b16 %v5957
    %v6198 = vunpack.c.h.b16 %v5957
    %v6199 = vunpack.c.l.b16 %v5958
    %v6200 = vunpack.c.h.b16 %v5958
    %v6201 = vunpack.c.l.b16 %v5959
    %v6202 = vunpack.c.h.b16 %v5959
    %v6203 = vunpack.c.l.b16 %v5960
    %v6204 = vunpack.c.h.b16 %v5960
    %v6205 = vunpack.c.l.b16 %v5961
    %v6206 = vunpack.c.h.b16 %v5961
    %v6207 = vunpack.c.l.b16 %v5962
    %v6208 = vunpack.c.h.b16 %v5962
    %v6209 = vunpack.c.l.b16 %v5963
    %v6210 = vunpack.c.h.b16 %v5963
    %v6211 = vunpack.c.l.b16 %v5964
    %v6212 = vunpack.c.h.b16 %v5964
    %v6213 = vunpack.c.l.b16 %v5965
    %v6214 = vunpack.c.h.b16 %v5965
    %v6215 = vunpack.c.l.b16 %v5966
    %v6216 = vunpack.c.h.b16 %v5966
    %v6217 = vunpack.c.l.b16 %v5967
    %v6218 = vunpack.c.h.b16 %v5967
    %v6219 = vunpack.c.l.b16 %v5968
    %v6220 = vunpack.c.h.b16 %v5968
    %v6221 = vunpack.c.l.b16 %v5969
    %v6222 = vunpack.c.h.b16 %v5969
    %v6223 = vunpack.c.l.b16 %v5970
    %v6224 = vunpack.c.h.b16 %v5970
    %v6225 = vunpack.c.l.b16 %v5971
    %v6226 = vunpack.c.h.b16 %v5971
    %v6227 = vunpack.c.l.b16 %v5972
    %v6228 = vunpack.c.h.b16 %v5972
    %v6229 = vunpack.c.l.b16 %v5973
    %v6230 = vunpack.c.h.b16 %v5973
    %v6231 = vunpack.c.l.b16 %v5974
    %v6232 = vunpack.c.h.b16 %v5974
    %v6233 = vunpack.c.l.b16 %v5975
    %v6234 = vunpack.c.h.b16 %v5975
    %v6235 = vunpack.c.l.b16 %v5976
    %v6236 = vunpack.c.h.b16 %v5976
    %v6237 = vunpack.c.l.b16 %v5977
    %v6238 = vunpack.c.h.b16 %v5977
    %v6239 = vunpack.c.l.b16 %v5978
    %v6240 = vunpack.c.h.b16 %v5978
    %v6241 = vunpack.c.l.b16 %v5979
    %v6242 = vunpack.c.h.b16 %v5979
    %v6243 = vunpack.c.l.b16 %v5980
    %v6244 = vunpack.c.h.b16 %v5980
    %v6245 = vunpack.c.l.b16 %v5981
    %v6246 = vunpack.c.h.b16 %v5981
    %v6247 = vunpack.c.l.b16 %v5982
    %v6248 = vunpack.c.h.b16 %v5982
    %v6249 = vunpack.c.l.b16 %v5983
    %v6250 = vunpack.c.h.b16 %v5983
    %v6251 = vunpack.c.l.b16 %v5984
    %v6252 = vunpack.c.h.b16 %v5984
    %v6253 = vunpack.c.l.b16 %v5985
    %v6254 = vunpack.c.h.b16 %v5985
    %v6255 = vunpack.c.l.b16 %v5986
    %v6256 = vunpack.c.h.b16 %v5986
    %v6257 = vunpack.c.l.b16 %v5987
    %v6258 = vunpack.c.h.b16 %v5987
    %v6259 = vunpack.c.l.b16 %v5988
    %v6260 = vunpack.c.h.b16 %v5988
    %v6261 = vunpack.c.l.b16 %v5989
    %v6262 = vunpack.c.h.b16 %v5989
    %v6263 = vunpack.c.l.b16 %v5990
    %v6264 = vunpack.c.h.b16 %v5990
    %v6265 = vunpack.c.l.b16 %v5991
    %v6266 = vunpack.c.h.b16 %v5991
    %v6267 = vunpack.c.l.b16 %v5992
    %v6268 = vunpack.c.h.b16 %v5992
    %v6269 = vunpack.c.l.b16 %v5993
    %v6270 = vunpack.c.h.b16 %v5993
    %v6271 = vunpack.c.l.b16 %v5994
    %v6272 = vunpack.c.h.b16 %v5994
    %v6273 = vunpack.c.l.b16 %v5995
    %v6274 = vunpack.c.h.b16 %v5995
    %v6275 = vunpack.c.l.b16 %v5996
    %v6276 = vunpack.c.h.b16 %v5996
    %v6277 = vunpack.c.l.b16 %v5997
    %v6278 = vunpack.c.h.b16 %v5997
    %v6279 = vunpack.c.l.b16 %v5998
    %v6280 = vunpack.c.h.b16 %v5998
    %v6281 = vunpack.c.l.b16 %v5999
    %v6282 = vunpack.c.h.b16 %v5999
    %v6283 = vunpack.c.l.b16 %v6000
    %v6284 = vunpack.c.h.b16 %v6000
    %v6285 = vunpack.c.l.b16 %v6001
    %v6286 = vunpack.c.h.b16 %v6001
    %v6287 = vunpack.c.l.b16 %v6002
    %v6288 = vunpack.c.h.b16 %v6002
    %v6289 = vunpack.c.l.b16 %v6003
    %v6290 = vunpack.c.h.b16 %v6003
    %v6291 = vunpack.c.l.b16 %v6004
    %v6292 = vunpack.c.h.b16 %v6004
    %v6293 = vpack.c.b16 %v6107, %v6101
    %v6294 = vpack.c.b16 %v6108, %v6102
    %v6295 = vpack.c.b16 %v6109, %v6103
    %v6296 = vpack.c.b16 %v6110, %v6104
    %v6297 = vpack.c.b16 %v6111, %v6105
    %v6298 = vpack.c.b16 %v6112, %v6106
    %v6299 = vpack.c.b16 %v6119, %v6113
    %v6300 = vpack.c.b16 %v6120, %v6114
    %v6301 = vpack.c.b16 %v6121, %v6115
    %v6302 = vpack.c.b16 %v6122, %v6116
    %v6303 = vpack.c.b16 %v6123, %v6117
    %v6304 = vpack.c.b16 %v6124, %v6118
    %v6305 = vpack.c.b16 %v6131, %v6125
    %v6306 = vpack.c.b16 %v6132, %v6126
    %v6307 = vpack.c.b16 %v6133, %v6127
    %v6308 = vpack.c.b16 %v6134, %v6128
    %v6309 = vpack.c.b16 %v6135, %v6129
    %v6310 = vpack.c.b16 %v6136, %v6130
    %v6311 = vpack.c.b16 %v6143, %v6137
    %v6312 = vpack.c.b16 %v6144, %v6138
    %v6313 = vpack.c.b16 %v6145, %v6139
    %v6314 = vpack.c.b16 %v6146, %v6140
    %v6315 = vpack.c.b16 %v6147, %v6141
    %v6316 = vpack.c.b16 %v6148, %v6142
    %v6317 = vpack.c.b16 %v6155, %v6149
    %v6318 = vpack.c.b16 %v6156, %v6150
    %v6319 = vpack.c.b16 %v6157, %v6151
    %v6320 = vpack.c.b16 %v6158, %v6152
    %v6321 = vpack.c.b16 %v6159, %v6153
    %v6322 = vpack.c.b16 %v6160, %v6154
    %v6323 = vpack.c.b16 %v6167, %v6161
    %v6324 = vpack.c.b16 %v6168, %v6162
    %v6325 = vpack.c.b16 %v6169, %v6163
    %v6326 = vpack.c.b16 %v6170, %v6164
    %v6327 = vpack.c.b16 %v6171, %v6165
    %v6328 = vpack.c.b16 %v6172, %v6166
    %v6329 = vpack.c.b16 %v6179, %v6173
    %v6330 = vpack.c.b16 %v6180, %v6174
    %v6331 = vpack.c.b16 %v6181, %v6175
    %v6332 = vpack.c.b16 %v6182, %v6176
    %v6333 = vpack.c.b16 %v6183, %v6177
    %v6334 = vpack.c.b16 %v6184, %v6178
    %v6335 = vpack.c.b16 %v6191, %v6185
    %v6336 = vpack.c.b16 %v6192, %v6186
    %v6337 = vpack.c.b16 %v6193, %v6187
    %v6338 = vpack.c.b16 %v6194, %v6188
    %v6339 = vpack.c.b16 %v6195, %v6189
    %v6340 = vpack.c.b16 %v6196, %v6190
    %v6341 = vpack.c.b16 %v6203, %v6197
    %v6342 = vpack.c.b16 %v6204, %v6198
    %v6343 = vpack.c.b16 %v6205, %v6199
    %v6344 = vpack.c.b16 %v6206, %v6200
    %v6345 = vpack.c.b16 %v6207, %v6201
    %v6346 = vpack.c.b16 %v6208, %v6202
    %v6347 = vpack.c.b16 %v6215, %v6209
    %v6348 = vpack.c.b16 %v6216, %v6210
    %v6349 = vpack.c.b16 %v6217, %v6211
    %v6350 = vpack.c.b16 %v6218, %v6212
    %v6351 = vpack.c.b16 %v6219, %v6213
    %v6352 = vpack.c.b16 %v6220, %v6214
    %v6353 = vpack.c.b16 %v6227, %v6221
    %v6354 = vpack.c.b16 %v6228, %v6222
    %v6355 = vpack.c.b16 %v6229, %v6223
    %v6356 = vpack.c.b16 %v6230, %v6224
    %v6357 = vpack.c.b16 %v6231, %v6225
    %v6358 = vpack.c.b16 %v6232, %v6226
    %v6359 = vpack.c.b16 %v6239, %v6233
    %v6360 = vpack.c.b16 %v6240, %v6234
    %v6361 = vpack.c.b16 %v6241, %v6235
    %v6362 = vpack.c.b16 %v6242, %v6236
    %v6363 = vpack.c.b16 %v6243, %v6237
    %v6364 = vpack.c.b16 %v6244, %v6238
    %v6365 = vpack.c.b16 %v6251, %v6245
    %v6366 = vpack.c.b16 %v6252, %v6246
    %v6367 = vpack.c.b16 %v6253, %v6247
    %v6368 = vpack.c.b16 %v6254, %v6248
    %v6369 = vpack.c.b16 %v6255, %v6249
    %v6370 = vpack.c.b16 %v6256, %v6250
    %v6371 = vpack.c.b16 %v6263, %v6257
    %v6372 = vpack.c.b16 %v6264, %v6258
    %v6373 = vpack.c.b16 %v6265, %v6259
    %v6374 = vpack.c.b16 %v6266, %v6260
    %v6375 = vpack.c.b16 %v6267, %v6261
    %v6376 = vpack.c.b16 %v6268, %v6262
    %v6377 = vpack.c.b16 %v6275, %v6269
    %v6378 = vpack.c.b16 %v6276, %v6270
    %v6379 = vpack.c.b16 %v6277, %v6271
    %v6380 = vpack.c.b16 %v6278, %v6272
    %v6381 = vpack.c.b16 %v6279, %v6273
    %v6382 = vpack.c.b16 %v6280, %v6274
    %v6383 = vpack.c.b16 %v6287, %v6281
    %v6384 = vpack.c.b16 %v6288, %v6282
    %v6385 = vpack.c.b16 %v6289, %v6283
    %v6386 = vpack.c.b16 %v6290, %v6284
    %v6387 = vpack.c.b16 %v6291, %v6285
    %v6388 = vpack.c.b16 %v6292, %v6286
    %6485 = vmatprep.subr.bf16.mxu0 %v6336
    %6486 = vmatpush1.bf16.msra.mxu0 %v6335
    %6487 = vmatprep.subr.bf16.mxu0 %v6330
    %6488 = vmatpush1.bf16.msra.mxu0 %v6329
    %6489 = vmatprep.subr.bf16.mxu0 %v6324
    %6490 = vmatpush1.bf16.msra.mxu0 %v6323
    %6491 = vmatprep.subr.bf16.mxu0 %v6318
    %6492 = vmatpush1.bf16.msra.mxu0 %v6317
    %6493 = vmatprep.subr.bf16.mxu0 %v6312
    %6494 = vmatpush1.bf16.msra.mxu0 %v6311
    %6495 = vmatprep.subr.bf16.mxu0 %v6306
    %6496 = vmatpush1.bf16.msra.mxu0 %v6305
    %6497 = vmatprep.subr.bf16.mxu0 %v6300
    %6498 = vmatpush1.bf16.msra.mxu0 %v6299
    %6499 = vmatprep.subr.bf16.mxu0 %v6294
    %6500 = vmatpush1.bf16.msra.mxu0 %v6293
    %6501 = vmatprep.subr.bf16.mxu0 %v6384
    %6502 = vmatpush2.bf16.msra.mxu0 %v6383
    %6503 = vmatprep.subr.bf16.mxu0 %v6378
    %6504 = vmatpush2.bf16.msra.mxu0 %v6377
    %6505 = vmatprep.subr.bf16.mxu0 %v6372
    %6506 = vmatpush2.bf16.msra.mxu0 %v6371
    %6507 = vmatprep.subr.bf16.mxu0 %v6366
    %6508 = vmatpush2.bf16.msra.mxu0 %v6365
    %6509 = vmatprep.subr.bf16.mxu0 %v6360
    %6510 = vmatpush2.bf16.msra.mxu0 %v6359
    %6511 = vmatprep.subr.bf16.mxu0 %v6354
    %6512 = vmatpush2.bf16.msra.mxu0 %v6353
    %6513 = vmatprep.subr.bf16.mxu0 %v6348
    %6514 = vmatpush2.bf16.msra.mxu0 %v6347
    %6515 = vmatprep.subr.bf16.mxu0 %v6342
    %6516 = vmatpush2.bf16.msra.mxu0 %v6341
    %6517 = vmatprep.mubr.bf16.mxu0 %v4907
    %6518 = vmatmul.mubr.bf16.gmra.mxu0 %v4906
    %v6519 = vpop.f32.mrf.mxu0
    %v6520 = vadd.f32 0.0, %v6519
    %v6521 = vpop.f32.mrf.mxu0
    %v6522 = vadd.f32 0.0, %v6521
    %v6523 = vpop.f32.mrf.mxu0
    %v6524 = vadd.f32 0.0, %v6523
    %v6525 = vpop.f32.mrf.mxu0
    %v6526 = vadd.f32 0.0, %v6525
    %6527 = vmatprep.mubr.bf16.mxu0 %v4909
    %6528 = vmatmul.mubr.bf16.gmra.mxu0 %v4908
    %v6529 = vpop.f32.mrf.mxu0
    %v6530 = vadd.f32 0.0, %v6529
    %v6531 = vpop.f32.mrf.mxu0
    %v6532 = vadd.f32 0.0, %v6531
    %v6533 = vpop.f32.mrf.mxu0
    %v6534 = vadd.f32 0.0, %v6533
    %v6535 = vpop.f32.mrf.mxu0
    %v6536 = vadd.f32 0.0, %v6535
    %6537 = vmatprep.mubr.bf16.mxu0 %v4911
    %6538 = vmatmul.mubr.bf16.gmra.mxu0 %v4910
    %v6539 = vpop.f32.mrf.mxu0
    %v6540 = vadd.f32 0.0, %v6539
    %v6541 = vpop.f32.mrf.mxu0
    %v6542 = vadd.f32 0.0, %v6541
    %v6543 = vpop.f32.mrf.mxu0
    %v6544 = vadd.f32 0.0, %v6543
    %v6545 = vpop.f32.mrf.mxu0
    %v6546 = vadd.f32 0.0, %v6545
    %6547 = vmatprep.mubr.bf16.mxu0 %v4913
    %6548 = vmatmul.mubr.bf16.gmra.mxu0 %v4912
    %v6549 = vpop.f32.mrf.mxu0
    %v6550 = vadd.f32 0.0, %v6549
    %v6551 = vpop.f32.mrf.mxu0
    %v6552 = vadd.f32 0.0, %v6551
    %v6553 = vpop.f32.mrf.mxu0
    %v6554 = vadd.f32 0.0, %v6553
    %v6555 = vpop.f32.mrf.mxu0
    %v6556 = vadd.f32 0.0, %v6555
    %6557 = vmatprep.mubr.bf16.mxu0 %v4915
    %6558 = vmatmul.mubr.bf16.gmra.mxu0 %v4914
    %v6559 = vpop.f32.mrf.mxu0
    %v6560 = vadd.f32 0.0, %v6559
    %v6561 = vpop.f32.mrf.mxu0
    %v6562 = vadd.f32 0.0, %v6561
    %v6563 = vpop.f32.mrf.mxu0
    %v6564 = vadd.f32 0.0, %v6563
    %v6565 = vpop.f32.mrf.mxu0
    %v6566 = vadd.f32 0.0, %v6565
    %6567 = vmatprep.mubr.bf16.mxu0 %v4917
    %6568 = vmatmul.mubr.bf16.gmra.mxu0 %v4916
    %v6569 = vpop.f32.mrf.mxu0
    %v6570 = vadd.f32 0.0, %v6569
    %v6571 = vpop.f32.mrf.mxu0
    %v6572 = vadd.f32 0.0, %v6571
    %v6573 = vpop.f32.mrf.mxu0
    %v6574 = vadd.f32 0.0, %v6573
    %v6575 = vpop.f32.mrf.mxu0
    %v6576 = vadd.f32 0.0, %v6575
    %6577 = vmatprep.mubr.bf16.mxu0 %v4919
    %6578 = vmatmul.mubr.bf16.gmra.mxu0 %v4918
    %v6579 = vpop.f32.mrf.mxu0
    %v6580 = vadd.f32 0.0, %v6579
    %v6581 = vpop.f32.mrf.mxu0
    %v6582 = vadd.f32 0.0, %v6581
    %v6583 = vpop.f32.mrf.mxu0
    %v6584 = vpop.f32.mrf.mxu0
    %6585 = vdwg.mxu0
    %6586 = vmatprep.subr.bf16.mxu0 %v6338
    %6587 = vmatpush1.bf16.msra.mxu0 %v6337
    %6588 = vmatprep.subr.bf16.mxu0 %v6332
    %6589 = vmatpush1.bf16.msra.mxu0 %v6331
    %6590 = vmatprep.subr.bf16.mxu0 %v6326
    %6591 = vmatpush1.bf16.msra.mxu0 %v6325
    %6592 = vmatprep.subr.bf16.mxu0 %v6320
    %6593 = vmatpush1.bf16.msra.mxu0 %v6319
    %6594 = vmatprep.subr.bf16.mxu0 %v6314
    %6595 = vmatpush1.bf16.msra.mxu0 %v6313
    %6596 = vmatprep.subr.bf16.mxu0 %v6308
    %6597 = vmatpush1.bf16.msra.mxu0 %v6307
    %6598 = vmatprep.subr.bf16.mxu0 %v6302
    %6599 = vmatpush1.bf16.msra.mxu0 %v6301
    %6600 = vmatprep.subr.bf16.mxu0 %v6296
    %6601 = vmatpush1.bf16.msra.mxu0 %v6295
    %6602 = vmatprep.subr.bf16.mxu0 %v6386
    %6603 = vmatpush2.bf16.msra.mxu0 %v6385
    %6604 = vmatprep.subr.bf16.mxu0 %v6380
    %6605 = vmatpush2.bf16.msra.mxu0 %v6379
    %6606 = vmatprep.subr.bf16.mxu0 %v6374
    %6607 = vmatpush2.bf16.msra.mxu0 %v6373
    %6608 = vmatprep.subr.bf16.mxu0 %v6368
    %6609 = vmatpush2.bf16.msra.mxu0 %v6367
    %6610 = vmatprep.subr.bf16.mxu0 %v6362
    %6611 = vmatpush2.bf16.msra.mxu0 %v6361
    %6612 = vmatprep.subr.bf16.mxu0 %v6356
    %6613 = vmatpush2.bf16.msra.mxu0 %v6355
    %6614 = vmatprep.subr.bf16.mxu0 %v6350
    %6615 = vmatpush2.bf16.msra.mxu0 %v6349
    %6616 = vmatprep.subr.bf16.mxu0 %v6344
    %6617 = vmatpush2.bf16.msra.mxu0 %v6343
    %6618 = vmatprep.mubr.bf16.mxu0 %v4907
    %6619 = vmatmul.mubr.bf16.gmra.mxu0 %v4906
    %v6620 = vpop.f32.mrf.mxu0
    %v6621 = vadd.f32 0.0, %v6620
    %v6622 = vpop.f32.mrf.mxu0
    %v6623 = vadd.f32 0.0, %v6622
    %v6624 = vpop.f32.mrf.mxu0
    %v6625 = vadd.f32 0.0, %v6624
    %v6626 = vpop.f32.mrf.mxu0
    %v6627 = vadd.f32 0.0, %v6626
    %6628 = vmatprep.mubr.bf16.mxu0 %v4909
    %6629 = vmatmul.mubr.bf16.gmra.mxu0 %v4908
    %v6630 = vpop.f32.mrf.mxu0
    %v6631 = vadd.f32 0.0, %v6630
    %v6632 = vpop.f32.mrf.mxu0
    %v6633 = vadd.f32 0.0, %v6632
    %v6634 = vpop.f32.mrf.mxu0
    %v6635 = vadd.f32 0.0, %v6634
    %v6636 = vpop.f32.mrf.mxu0
    %v6637 = vadd.f32 0.0, %v6636
    %6638 = vmatprep.mubr.bf16.mxu0 %v4911
    %6639 = vmatmul.mubr.bf16.gmra.mxu0 %v4910
    %v6640 = vpop.f32.mrf.mxu0
    %v6641 = vadd.f32 0.0, %v6640
    %v6642 = vpop.f32.mrf.mxu0
    %v6643 = vadd.f32 0.0, %v6642
    %v6644 = vpop.f32.mrf.mxu0
    %v6645 = vadd.f32 0.0, %v6644
    %v6646 = vpop.f32.mrf.mxu0
    %v6647 = vadd.f32 0.0, %v6646
    %6648 = vmatprep.mubr.bf16.mxu0 %v4913
    %6649 = vmatmul.mubr.bf16.gmra.mxu0 %v4912
    %v6650 = vpop.f32.mrf.mxu0
    %v6651 = vadd.f32 0.0, %v6650
    %v6652 = vpop.f32.mrf.mxu0
    %v6653 = vadd.f32 0.0, %v6652
    %v6654 = vpop.f32.mrf.mxu0
    %v6655 = vadd.f32 0.0, %v6654
    %v6656 = vpop.f32.mrf.mxu0
    %v6657 = vadd.f32 0.0, %v6656
    %6658 = vmatprep.mubr.bf16.mxu0 %v4915
    %6659 = vmatmul.mubr.bf16.gmra.mxu0 %v4914
    %v6660 = vpop.f32.mrf.mxu0
    %v6661 = vadd.f32 0.0, %v6660
    %v6662 = vpop.f32.mrf.mxu0
    %v6663 = vadd.f32 0.0, %v6662
    %v6664 = vpop.f32.mrf.mxu0
    %v6665 = vadd.f32 0.0, %v6664
    %v6666 = vpop.f32.mrf.mxu0
    %v6667 = vadd.f32 0.0, %v6666
    %6668 = vmatprep.mubr.bf16.mxu0 %v4917
    %6669 = vmatmul.mubr.bf16.gmra.mxu0 %v4916
    %v6670 = vpop.f32.mrf.mxu0
    %v6671 = vadd.f32 0.0, %v6670
    %v6672 = vpop.f32.mrf.mxu0
    %v6673 = vadd.f32 0.0, %v6672
    %v6674 = vpop.f32.mrf.mxu0
    %v6675 = vadd.f32 0.0, %v6674
    %v6676 = vpop.f32.mrf.mxu0
    %v6677 = vadd.f32 0.0, %v6676
    %6678 = vmatprep.mubr.bf16.mxu0 %v4919
    %6679 = vmatmul.mubr.bf16.gmra.mxu0 %v4918
    %v6680 = vpop.f32.mrf.mxu0
    %v6681 = vadd.f32 0.0, %v6680
    %v6682 = vpop.f32.mrf.mxu0
    %v6683 = vadd.f32 0.0, %v6682
    %v6684 = vpop.f32.mrf.mxu0
    %v6685 = vpop.f32.mrf.mxu0
    %6686 = vdwg.mxu0
    %6687 = vmatprep.subr.bf16.mxu0 %v6340
    %6688 = vmatpush1.bf16.msra.mxu0 %v6339
    %6689 = vmatprep.subr.bf16.mxu0 %v6334
    %6690 = vmatpush1.bf16.msra.mxu0 %v6333
    %6691 = vmatprep.subr.bf16.mxu0 %v6328
    %6692 = vmatpush1.bf16.msra.mxu0 %v6327
    %6693 = vmatprep.subr.bf16.mxu0 %v6322
    %6694 = vmatpush1.bf16.msra.mxu0 %v6321
    %6695 = vmatprep.subr.bf16.mxu0 %v6316
    %6696 = vmatpush1.bf16.msra.mxu0 %v6315
    %6697 = vmatprep.subr.bf16.mxu0 %v6310
    %6698 = vmatpush1.bf16.msra.mxu0 %v6309
    %6699 = vmatprep.subr.bf16.mxu0 %v6304
    %6700 = vmatpush1.bf16.msra.mxu0 %v6303
    %6701 = vmatprep.subr.bf16.mxu0 %v6298
    %6702 = vmatpush1.bf16.msra.mxu0 %v6297
    %6703 = vmatprep.subr.bf16.mxu0 %v6388
    %6704 = vmatpush2.bf16.msra.mxu0 %v6387
    %6705 = vmatprep.subr.bf16.mxu0 %v6382
    %6706 = vmatpush2.bf16.msra.mxu0 %v6381
    %6707 = vmatprep.subr.bf16.mxu0 %v6376
    %6708 = vmatpush2.bf16.msra.mxu0 %v6375
    %6709 = vmatprep.subr.bf16.mxu0 %v6370
    %6710 = vmatpush2.bf16.msra.mxu0 %v6369
    %6711 = vmatprep.subr.bf16.mxu0 %v6364
    %6712 = vmatpush2.bf16.msra.mxu0 %v6363
    %6713 = vmatprep.subr.bf16.mxu0 %v6358
    %6714 = vmatpush2.bf16.msra.mxu0 %v6357
    %6715 = vmatprep.subr.bf16.mxu0 %v6352
    %6716 = vmatpush2.bf16.msra.mxu0 %v6351
    %6717 = vmatprep.subr.bf16.mxu0 %v6346
    %6718 = vmatpush2.bf16.msra.mxu0 %v6345
    %6719 = vmatprep.mubr.bf16.mxu0 %v4907
    %6720 = vmatmul.mubr.bf16.gmra.mxu0 %v4906
    %v6721 = vpop.f32.mrf.mxu0
    %v6722 = vadd.f32 0.0, %v6721
    %v6723 = vpop.f32.mrf.mxu0
    %v6724 = vadd.f32 0.0, %v6723
    %v6725 = vpop.f32.mrf.mxu0
    %v6726 = vadd.f32 0.0, %v6725
    %v6727 = vpop.f32.mrf.mxu0
    %v6728 = vadd.f32 0.0, %v6727
    %6729 = vmatprep.mubr.bf16.mxu0 %v4909
    %6730 = vmatmul.mubr.bf16.gmra.mxu0 %v4908
    %v6731 = vpop.f32.mrf.mxu0
    %v6732 = vadd.f32 0.0, %v6731
    %v6733 = vpop.f32.mrf.mxu0
    %v6734 = vadd.f32 0.0, %v6733
    %v6735 = vpop.f32.mrf.mxu0
    %v6736 = vadd.f32 0.0, %v6735
    %v6737 = vpop.f32.mrf.mxu0
    %v6738 = vadd.f32 0.0, %v6737
    %6739 = vmatprep.mubr.bf16.mxu0 %v4911
    %6740 = vmatmul.mubr.bf16.gmra.mxu0 %v4910
    %v6741 = vpop.f32.mrf.mxu0
    %v6742 = vadd.f32 0.0, %v6741
    %v6743 = vpop.f32.mrf.mxu0
    %v6744 = vadd.f32 0.0, %v6743
    %v6745 = vpop.f32.mrf.mxu0
    %v6746 = vadd.f32 0.0, %v6745
    %v6747 = vpop.f32.mrf.mxu0
    %v6748 = vadd.f32 0.0, %v6747
    %6749 = vmatprep.mubr.bf16.mxu0 %v4913
    %6750 = vmatmul.mubr.bf16.gmra.mxu0 %v4912
    %v6751 = vpop.f32.mrf.mxu0
    %v6752 = vadd.f32 0.0, %v6751
    %v6753 = vpop.f32.mrf.mxu0
    %v6754 = vadd.f32 0.0, %v6753
    %v6755 = vpop.f32.mrf.mxu0
    %v6756 = vadd.f32 0.0, %v6755
    %v6757 = vpop.f32.mrf.mxu0
    %v6758 = vadd.f32 0.0, %v6757
    %6759 = vmatprep.mubr.bf16.mxu0 %v4915
    %6760 = vmatmul.mubr.bf16.gmra.mxu0 %v4914
    %v6761 = vpop.f32.mrf.mxu0
    %v6762 = vadd.f32 0.0, %v6761
    %v6763 = vpop.f32.mrf.mxu0
    %v6764 = vadd.f32 0.0, %v6763
    %v6765 = vpop.f32.mrf.mxu0
    %v6766 = vadd.f32 0.0, %v6765
    %v6767 = vpop.f32.mrf.mxu0
    %v6768 = vadd.f32 0.0, %v6767
    %6769 = vmatprep.mubr.bf16.mxu0 %v4917
    %6770 = vmatmul.mubr.bf16.gmra.mxu0 %v4916
    %v6771 = vpop.f32.mrf.mxu0
    %v6772 = vadd.f32 0.0, %v6771
    %v6773 = vpop.f32.mrf.mxu0
    %v6774 = vadd.f32 0.0, %v6773
    %v6775 = vpop.f32.mrf.mxu0
    %v6776 = vadd.f32 0.0, %v6775
    %v6777 = vpop.f32.mrf.mxu0
    %v6778 = vadd.f32 0.0, %v6777
    %6779 = vmatprep.mubr.bf16.mxu0 %v4919
    %6780 = vmatmul.mubr.bf16.gmra.mxu0 %v4918
    %v6781 = vpop.f32.mrf.mxu0
    %v6782 = vadd.f32 0.0, %v6781
    %v6783 = vpop.f32.mrf.mxu0
    %v6784 = vadd.f32 0.0, %v6783
    %v6785 = vpop.f32.mrf.mxu0
    %v6786 = vpop.f32.mrf.mxu0
    %6787 = vdwg.mxu0
    %v6788 = vadd.f32 %v5831, %v6520
    %v6789 = vadd.f32 %v5832, %v6522
    %v6790 = vadd.f32 %v5833, %v6621
    %v6791 = vadd.f32 %v5834, %v6623
    %v6792 = vadd.f32 %v5835, %v6722
    %v6793 = vadd.f32 %v5836, %v6724
    %v6794 = vadd.f32 %v5837, %v6524
    %v6795 = vadd.f32 %v5838, %v6526
    %v6796 = vadd.f32 %v5839, %v6625
    %v6797 = vadd.f32 %v5840, %v6627
    %v6798 = vadd.f32 %v5841, %v6726
    %v6799 = vadd.f32 %v5842, %v6728
    %v6800 = vadd.f32 %v5843, %v6530
    %v6801 = vadd.f32 %v5844, %v6532
    %v6802 = vadd.f32 %v5845, %v6631
    %v6803 = vadd.f32 %v5846, %v6633
    %v6804 = vadd.f32 %v5847, %v6732
    %v6805 = vadd.f32 %v5848, %v6734
    %v6806 = vadd.f32 %v5849, %v6534
    %v6807 = vadd.f32 %v5850, %v6536
    %v6808 = vadd.f32 %v5851, %v6635
    %v6809 = vadd.f32 %v5852, %v6637
    %v6810 = vadd.f32 %v5853, %v6736
    %v6811 = vadd.f32 %v5854, %v6738
    %v6812 = vadd.f32 %v5855, %v6540
    %v6813 = vadd.f32 %v5856, %v6542
    %v6814 = vadd.f32 %v5857, %v6641
    %v6815 = vadd.f32 %v5858, %v6643
    %v6816 = vadd.f32 %v5859, %v6742
    %v6817 = vadd.f32 %v5860, %v6744
    %v6818 = vadd.f32 %v5861, %v6544
    %v6819 = vadd.f32 %v5862, %v6546
    %v6820 = vadd.f32 %v5863, %v6645
    %v6821 = vadd.f32 %v5864, %v6647
    %v6822 = vadd.f32 %v5865, %v6746
    %v6823 = vadd.f32 %v5866, %v6748
    %v6824 = vadd.f32 %v5867, %v6550
    %v6825 = vadd.f32 %v5868, %v6552
    %v6826 = vadd.f32 %v5869, %v6651
    %v6827 = vadd.f32 %v5870, %v6653
    %v6828 = vadd.f32 %v5871, %v6752
    %v6829 = vadd.f32 %v5872, %v6754
    %v6830 = vadd.f32 %v5873, %v6554
    %v6831 = vadd.f32 %v5874, %v6556
    %v6832 = vadd.f32 %v5875, %v6655
    %v6833 = vadd.f32 %v5876, %v6657
    %v6834 = vadd.f32 %v5877, %v6756
    %v6835 = vadd.f32 %v5878, %v6758
    %v6836 = vadd.f32 %v5879, %v6560
    %v6837 = vadd.f32 %v5880, %v6562
    %v6838 = vadd.f32 %v5881, %v6661
    %v6839 = vadd.f32 %v5882, %v6663
    %v6840 = vadd.f32 %v5883, %v6762
    %v6841 = vadd.f32 %v5884, %v6764
    %v6842 = vadd.f32 %v5885, %v6564
    %v6843 = vadd.f32 %v5886, %v6566
    %v6844 = vadd.f32 %v5887, %v6665
    %v6845 = vadd.f32 %v5888, %v6667
    %v6846 = vadd.f32 %v5889, %v6766
    %v6847 = vadd.f32 %v5890, %v6768
    %v6848 = vadd.f32 %v5891, %v6570
    %v6849 = vadd.f32 %v5892, %v6572
    %v6850 = vadd.f32 %v5893, %v6671
    %v6851 = vadd.f32 %v5894, %v6673
    %v6852 = vadd.f32 %v5895, %v6772
    %v6853 = vadd.f32 %v5896, %v6774
    %v6854 = vadd.f32 %v5897, %v6574
    %v6855 = vadd.f32 %v5898, %v6576
    %v6856 = vadd.f32 %v5899, %v6675
    %v6857 = vadd.f32 %v5900, %v6677
    %v6858 = vadd.f32 %v5901, %v6776
    %v6859 = vadd.f32 %v5902, %v6778
    %v6860 = vadd.f32 %v5903, %v6580
    %v6861 = vadd.f32 %v5904, %v6582
    %v6862 = vadd.f32 %v5905, %v6681
    %v6863 = vadd.f32 %v5906, %v6683
    %v6864 = vadd.f32 %v5907, %v6782
    %v6865 = vadd.f32 %v5908, %v6784
    %v6866 = vrot.slane %v6788, 6
    %v6867 = vrot.slane %v6789, 6
    %v6868 = vsel %vm3927, %v6866, %v6860
    %v6869 = vsel %vm3927, %v6867, %v6861
    %v6896 = vrot.slane %v6788, 1
    %v6897 = vrot.slane %v6794, 1
    %v6898 = vsel %vm3943, %v6896, %v6897
    %v6899 = vrot.slane %v6789, 1
    %v6900 = vrot.slane %v6795, 1
    %v6901 = vsel %vm3943, %v6899, %v6900
    %v6902 = vrot.slane %v6800, 1
    %v6903 = vsel %vm3943, %v6897, %v6902
    %v6904 = vrot.slane %v6801, 1
    %v6905 = vsel %vm3943, %v6900, %v6904
    %v6906 = vrot.slane %v6806, 1
    %v6907 = vsel %vm3943, %v6902, %v6906
    %v6908 = vrot.slane %v6807, 1
    %v6909 = vsel %vm3943, %v6904, %v6908
    %v6910 = vrot.slane %v6812, 1
    %v6911 = vsel %vm3943, %v6906, %v6910
    %v6912 = vrot.slane %v6813, 1
    %v6913 = vsel %vm3943, %v6908, %v6912
    %v6914 = vrot.slane %v6818, 1
    %v6915 = vsel %vm3943, %v6910, %v6914
    %v6916 = vrot.slane %v6819, 1
    %v6917 = vsel %vm3943, %v6912, %v6916
    %v6918 = vrot.slane %v6824, 1
    %v6919 = vsel %vm3943, %v6914, %v6918
    %v6920 = vrot.slane %v6825, 1
    %v6921 = vsel %vm3943, %v6916, %v6920
    %v6922 = vrot.slane %v6830, 1
    %v6923 = vsel %vm3943, %v6918, %v6922
    %v6924 = vrot.slane %v6831, 1
    %v6925 = vsel %vm3943, %v6920, %v6924
    %v6926 = vrot.slane %v6836, 1
    %v6927 = vsel %vm3943, %v6922, %v6926
    %v6928 = vrot.slane %v6837, 1
    %v6929 = vsel %vm3943, %v6924, %v6928
    %v6930 = vrot.slane %v6842, 1
    %v6931 = vsel %vm3943, %v6926, %v6930
    %v6932 = vrot.slane %v6843, 1
    %v6933 = vsel %vm3943, %v6928, %v6932
    %v6934 = vrot.slane %v6848, 1
    %v6935 = vsel %vm3943, %v6930, %v6934
    %v6936 = vrot.slane %v6849, 1
    %v6937 = vsel %vm3943, %v6932, %v6936
    %v6938 = vrot.slane %v6854, 1
    %v6939 = vsel %vm3943, %v6934, %v6938
    %v6940 = vrot.slane %v6855, 1
    %v6941 = vsel %vm3943, %v6936, %v6940
    %v6942 = vrot.slane %v6868, 1
    %v6943 = vsel %vm3943, %v6938, %v6942
    %v6944 = vrot.slane %v6869, 1
    %v6945 = vsel %vm3943, %v6940, %v6944
    %v6972 = vmax.f32 %v6788, %v6898
    %v6973 = vmax.f32 %v6789, %v6901
    %v6974 = vmax.f32 %v6794, %v6903
    %v6975 = vmax.f32 %v6795, %v6905
    %v6976 = vmax.f32 %v6800, %v6907
    %v6977 = vmax.f32 %v6801, %v6909
    %v6978 = vmax.f32 %v6806, %v6911
    %v6979 = vmax.f32 %v6807, %v6913
    %v6980 = vmax.f32 %v6812, %v6915
    %v6981 = vmax.f32 %v6813, %v6917
    %v6982 = vmax.f32 %v6818, %v6919
    %v6983 = vmax.f32 %v6819, %v6921
    %v6984 = vmax.f32 %v6824, %v6923
    %v6985 = vmax.f32 %v6825, %v6925
    %v6986 = vmax.f32 %v6830, %v6927
    %v6987 = vmax.f32 %v6831, %v6929
    %v6988 = vmax.f32 %v6836, %v6931
    %v6989 = vmax.f32 %v6837, %v6933
    %v6990 = vmax.f32 %v6842, %v6935
    %v6991 = vmax.f32 %v6843, %v6937
    %v6992 = vmax.f32 %v6848, %v6939
    %v6993 = vmax.f32 %v6849, %v6941
    %v6994 = vmax.f32 %v6854, %v6943
    %v6995 = vmax.f32 %v6855, %v6945
    %v6996 = vmax.f32 %v6860, %v6942
    %v6997 = vmax.f32 %v6861, %v6944
    %v6998 = vrot.slane %v6972, 6
    %v6999 = vrot.slane %v6973, 6
    %v7000 = vrot.slane %v6974, 6
    %v7001 = vrot.slane %v6975, 6
    %v7002 = vsel %vm3927, %v6998, %v6996
    %v7003 = vsel %vm3927, %v6999, %v6997
    %v7004 = vsel %vm3927, %v7000, %v6998
    %v7005 = vsel %vm3927, %v7001, %v6999
    %v7034 = vrot.slane %v6972, 7
    %v7035 = vrot.slane %v6974, 7
    %v7036 = vsel %vm2869, %v7034, %v7035
    %v7037 = vrot.slane %v6973, 7
    %v7038 = vrot.slane %v6975, 7
    %v7039 = vsel %vm2869, %v7037, %v7038
    %v7040 = vrot.slane %v6976, 7
    %v7041 = vsel %vm2869, %v7035, %v7040
    %v7042 = vrot.slane %v6977, 7
    %v7043 = vsel %vm2869, %v7038, %v7042
    %v7044 = vrot.slane %v6978, 7
    %v7045 = vsel %vm2869, %v7040, %v7044
    %v7046 = vrot.slane %v6979, 7
    %v7047 = vsel %vm2869, %v7042, %v7046
    %v7048 = vrot.slane %v6980, 7
    %v7049 = vsel %vm2869, %v7044, %v7048
    %v7050 = vrot.slane %v6981, 7
    %v7051 = vsel %vm2869, %v7046, %v7050
    %v7052 = vrot.slane %v6982, 7
    %v7053 = vsel %vm2869, %v7048, %v7052
    %v7054 = vrot.slane %v6983, 7
    %v7055 = vsel %vm2869, %v7050, %v7054
    %v7056 = vrot.slane %v6984, 7
    %v7057 = vsel %vm2869, %v7052, %v7056
    %v7058 = vrot.slane %v6985, 7
    %v7059 = vsel %vm2869, %v7054, %v7058
    %v7060 = vrot.slane %v6986, 7
    %v7061 = vsel %vm2869, %v7056, %v7060
    %v7062 = vrot.slane %v6987, 7
    %v7063 = vsel %vm2869, %v7058, %v7062
    %v7064 = vrot.slane %v6988, 7
    %v7065 = vsel %vm2869, %v7060, %v7064
    %v7066 = vrot.slane %v6989, 7
    %v7067 = vsel %vm2869, %v7062, %v7066
    %v7068 = vrot.slane %v6990, 7
    %v7069 = vsel %vm2869, %v7064, %v7068
    %v7070 = vrot.slane %v6991, 7
    %v7071 = vsel %vm2869, %v7066, %v7070
    %v7072 = vrot.slane %v6992, 7
    %v7073 = vsel %vm2869, %v7068, %v7072
    %v7074 = vrot.slane %v6993, 7
    %v7075 = vsel %vm2869, %v7070, %v7074
    %v7076 = vrot.slane %v6994, 7
    %v7077 = vsel %vm2869, %v7072, %v7076
    %v7078 = vrot.slane %v6995, 7
    %v7079 = vsel %vm2869, %v7074, %v7078
    %v7080 = vrot.slane %v7002, 7
    %v7081 = vsel %vm2869, %v7076, %v7080
    %v7082 = vrot.slane %v7003, 7
    %v7083 = vsel %vm2869, %v7078, %v7082
    %v7084 = vrot.slane %v7004, 7
    %v7085 = vsel %vm2869, %v7080, %v7084
    %v7086 = vrot.slane %v7005, 7
    %v7087 = vsel %vm2869, %v7082, %v7086
    %v7114 = vmax.f32 %v6972, %v7036
    %v7115 = vmax.f32 %v6973, %v7039
    %v7116 = vmax.f32 %v6974, %v7041
    %v7117 = vmax.f32 %v6975, %v7043
    %v7118 = vmax.f32 %v6976, %v7045
    %v7119 = vmax.f32 %v6977, %v7047
    %v7120 = vmax.f32 %v6978, %v7049
    %v7121 = vmax.f32 %v6979, %v7051
    %v7122 = vmax.f32 %v6980, %v7053
    %v7123 = vmax.f32 %v6981, %v7055
    %v7124 = vmax.f32 %v6982, %v7057
    %v7125 = vmax.f32 %v6983, %v7059
    %v7126 = vmax.f32 %v6984, %v7061
    %v7127 = vmax.f32 %v6985, %v7063
    %v7128 = vmax.f32 %v6986, %v7065
    %v7129 = vmax.f32 %v6987, %v7067
    %v7130 = vmax.f32 %v6988, %v7069
    %v7131 = vmax.f32 %v6989, %v7071
    %v7132 = vmax.f32 %v6990, %v7073
    %v7133 = vmax.f32 %v6991, %v7075
    %v7134 = vmax.f32 %v6992, %v7077
    %v7135 = vmax.f32 %v6993, %v7079
    %v7136 = vmax.f32 %v6994, %v7081
    %v7137 = vmax.f32 %v6995, %v7083
    %v7138 = vmax.f32 %v6996, %v7085
    %v7139 = vmax.f32 %v6997, %v7087
    %v7140 = vpack.c.bf16 %v7116, %v7114
    %v7141 = vpack.c.bf16 %v7117, %v7115
    %v7142 = vpack.c.bf16 %v7120, %v7118
    %v7143 = vpack.c.bf16 %v7121, %v7119
    %v7144 = vpack.c.bf16 %v7124, %v7122
    %v7145 = vpack.c.bf16 %v7125, %v7123
    %v7146 = vpack.c.bf16 %v7128, %v7126
    %v7147 = vpack.c.bf16 %v7129, %v7127
    %v7148 = vpack.c.bf16 %v7132, %v7130
    %v7149 = vpack.c.bf16 %v7133, %v7131
    %v7150 = vpack.c.bf16 %v7136, %v7134
    %v7151 = vpack.c.bf16 %v7137, %v7135
    %v7152 = vpack.c.bf16 %v7138, %v7138
    %v7153 = vpack.c.bf16 %v7139, %v7139
    %v7154 = vpack.c.bf16 %v6796, %v6790
    %v7155 = vpack.c.bf16 %v6797, %v6791
    %v7156 = vpack.c.bf16 %v6808, %v6802
    %v7157 = vpack.c.bf16 %v6809, %v6803
    %v7158 = vpack.c.bf16 %v6820, %v6814
    %v7159 = vpack.c.bf16 %v6821, %v6815
    %v7160 = vpack.c.bf16 %v6832, %v6826
    %v7161 = vpack.c.bf16 %v6833, %v6827
    %v7162 = vpack.c.bf16 %v6844, %v6838
    %v7163 = vpack.c.bf16 %v6845, %v6839
    %v7164 = vpack.c.bf16 %v6856, %v6850
    %v7165 = vpack.c.bf16 %v6857, %v6851
    %v7166 = vpack.c.bf16 %v6862, %v6862
    %v7167 = vpack.c.bf16 %v6863, %v6863
    %v7168 = vrot.slane %v6792, 6
    %v7169 = vrot.slane %v6793, 6
    %v7170 = vsel %vm3927, %v7168, %v6864
    %v7171 = vsel %vm3927, %v7169, %v6865
    %v7198 = vrot.slane %v6792, 1
    %v7199 = vrot.slane %v6798, 1
    %v7200 = vsel %vm3943, %v7198, %v7199
    %v7201 = vrot.slane %v6793, 1
    %v7202 = vrot.slane %v6799, 1
    %v7203 = vsel %vm3943, %v7201, %v7202
    %v7204 = vrot.slane %v6804, 1
    %v7205 = vsel %vm3943, %v7199, %v7204
    %v7206 = vrot.slane %v6805, 1
    %v7207 = vsel %vm3943, %v7202, %v7206
    %v7208 = vrot.slane %v6810, 1
    %v7209 = vsel %vm3943, %v7204, %v7208
    %v7210 = vrot.slane %v6811, 1
    %v7211 = vsel %vm3943, %v7206, %v7210
    %v7212 = vrot.slane %v6816, 1
    %v7213 = vsel %vm3943, %v7208, %v7212
    %v7214 = vrot.slane %v6817, 1
    %v7215 = vsel %vm3943, %v7210, %v7214
    %v7216 = vrot.slane %v6822, 1
    %v7217 = vsel %vm3943, %v7212, %v7216
    %v7218 = vrot.slane %v6823, 1
    %v7219 = vsel %vm3943, %v7214, %v7218
    %v7220 = vrot.slane %v6828, 1
    %v7221 = vsel %vm3943, %v7216, %v7220
    %v7222 = vrot.slane %v6829, 1
    %v7223 = vsel %vm3943, %v7218, %v7222
    %v7224 = vrot.slane %v6834, 1
    %v7225 = vsel %vm3943, %v7220, %v7224
    %v7226 = vrot.slane %v6835, 1
    %v7227 = vsel %vm3943, %v7222, %v7226
    %v7228 = vrot.slane %v6840, 1
    %v7229 = vsel %vm3943, %v7224, %v7228
    %v7230 = vrot.slane %v6841, 1
    %v7231 = vsel %vm3943, %v7226, %v7230
    %v7232 = vrot.slane %v6846, 1
    %v7233 = vsel %vm3943, %v7228, %v7232
    %v7234 = vrot.slane %v6847, 1
    %v7235 = vsel %vm3943, %v7230, %v7234
    %v7236 = vrot.slane %v6852, 1
    %v7237 = vsel %vm3943, %v7232, %v7236
    %v7238 = vrot.slane %v6853, 1
    %v7239 = vsel %vm3943, %v7234, %v7238
    %v7240 = vrot.slane %v6858, 1
    %v7241 = vsel %vm3943, %v7236, %v7240
    %v7242 = vrot.slane %v6859, 1
    %v7243 = vsel %vm3943, %v7238, %v7242
    %v7244 = vrot.slane %v7170, 1
    %v7245 = vsel %vm3943, %v7240, %v7244
    %v7246 = vrot.slane %v7171, 1
    %v7247 = vsel %vm3943, %v7242, %v7246
    %v7274 = vmax.f32 %v6792, %v7200
    %v7275 = vmax.f32 %v6793, %v7203
    %v7276 = vmax.f32 %v6798, %v7205
    %v7277 = vmax.f32 %v6799, %v7207
    %v7278 = vmax.f32 %v6804, %v7209
    %v7279 = vmax.f32 %v6805, %v7211
    %v7280 = vmax.f32 %v6810, %v7213
    %v7281 = vmax.f32 %v6811, %v7215
    %v7282 = vmax.f32 %v6816, %v7217
    %v7283 = vmax.f32 %v6817, %v7219
    %v7284 = vmax.f32 %v6822, %v7221
    %v7285 = vmax.f32 %v6823, %v7223
    %v7286 = vmax.f32 %v6828, %v7225
    %v7287 = vmax.f32 %v6829, %v7227
    %v7288 = vmax.f32 %v6834, %v7229
    %v7289 = vmax.f32 %v6835, %v7231
    %v7290 = vmax.f32 %v6840, %v7233
    %v7291 = vmax.f32 %v6841, %v7235
    %v7292 = vmax.f32 %v6846, %v7237
    %v7293 = vmax.f32 %v6847, %v7239
    %v7294 = vmax.f32 %v6852, %v7241
    %v7295 = vmax.f32 %v6853, %v7243
    %v7296 = vmax.f32 %v6858, %v7245
    %v7297 = vmax.f32 %v6859, %v7247
    %v7298 = vmax.f32 %v6864, %v7244
    %v7299 = vmax.f32 %v6865, %v7246
    %v7300 = vrot.slane %v7274, 6
    %v7301 = vrot.slane %v7275, 6
    %v7302 = vrot.slane %v7276, 6
    %v7303 = vrot.slane %v7277, 6
    %v7304 = vsel %vm3927, %v7300, %v7298
    %v7305 = vsel %vm3927, %v7301, %v7299
    %v7306 = vsel %vm3927, %v7302, %v7300
    %v7307 = vsel %vm3927, %v7303, %v7301
    %v7336 = vrot.slane %v7274, 7
    %v7337 = vrot.slane %v7276, 7
    %v7338 = vsel %vm2869, %v7336, %v7337
    %v7339 = vrot.slane %v7275, 7
    %v7340 = vrot.slane %v7277, 7
    %v7341 = vsel %vm2869, %v7339, %v7340
    %v7342 = vrot.slane %v7278, 7
    %v7343 = vsel %vm2869, %v7337, %v7342
    %v7344 = vrot.slane %v7279, 7
    %v7345 = vsel %vm2869, %v7340, %v7344
    %v7346 = vrot.slane %v7280, 7
    %v7347 = vsel %vm2869, %v7342, %v7346
    %v7348 = vrot.slane %v7281, 7
    %v7349 = vsel %vm2869, %v7344, %v7348
    %v7350 = vrot.slane %v7282, 7
    %v7351 = vsel %vm2869, %v7346, %v7350
    %v7352 = vrot.slane %v7283, 7
    %v7353 = vsel %vm2869, %v7348, %v7352
    %v7354 = vrot.slane %v7284, 7
    %v7355 = vsel %vm2869, %v7350, %v7354
    %v7356 = vrot.slane %v7285, 7
    %v7357 = vsel %vm2869, %v7352, %v7356
    %v7358 = vrot.slane %v7286, 7
    %v7359 = vsel %vm2869, %v7354, %v7358
    %v7360 = vrot.slane %v7287, 7
    %v7361 = vsel %vm2869, %v7356, %v7360
    %v7362 = vrot.slane %v7288, 7
    %v7363 = vsel %vm2869, %v7358, %v7362
    %v7364 = vrot.slane %v7289, 7
    %v7365 = vsel %vm2869, %v7360, %v7364
    %v7366 = vrot.slane %v7290, 7
    %v7367 = vsel %vm2869, %v7362, %v7366
    %v7368 = vrot.slane %v7291, 7
    %v7369 = vsel %vm2869, %v7364, %v7368
    %v7370 = vrot.slane %v7292, 7
    %v7371 = vsel %vm2869, %v7366, %v7370
    %v7372 = vrot.slane %v7293, 7
    %v7373 = vsel %vm2869, %v7368, %v7372
    %v7374 = vrot.slane %v7294, 7
    %v7375 = vsel %vm2869, %v7370, %v7374
    %v7376 = vrot.slane %v7295, 7
    %v7377 = vsel %vm2869, %v7372, %v7376
    %v7378 = vrot.slane %v7296, 7
    %v7379 = vsel %vm2869, %v7374, %v7378
    %v7380 = vrot.slane %v7297, 7
    %v7381 = vsel %vm2869, %v7376, %v7380
    %v7382 = vrot.slane %v7304, 7
    %v7383 = vsel %vm2869, %v7378, %v7382
    %v7384 = vrot.slane %v7305, 7
    %v7385 = vsel %vm2869, %v7380, %v7384
    %v7386 = vrot.slane %v7306, 7
    %v7387 = vsel %vm2869, %v7382, %v7386
    %v7388 = vrot.slane %v7307, 7
    %v7389 = vsel %vm2869, %v7384, %v7388
    %v7416 = vmax.f32 %v7274, %v7338
    %v7417 = vmax.f32 %v7275, %v7341
    %v7418 = vmax.f32 %v7276, %v7343
    %v7419 = vmax.f32 %v7277, %v7345
    %v7420 = vmax.f32 %v7278, %v7347
    %v7421 = vmax.f32 %v7279, %v7349
    %v7422 = vmax.f32 %v7280, %v7351
    %v7423 = vmax.f32 %v7281, %v7353
    %v7424 = vmax.f32 %v7282, %v7355
    %v7425 = vmax.f32 %v7283, %v7357
    %v7426 = vmax.f32 %v7284, %v7359
    %v7427 = vmax.f32 %v7285, %v7361
    %v7428 = vmax.f32 %v7286, %v7363
    %v7429 = vmax.f32 %v7287, %v7365
    %v7430 = vmax.f32 %v7288, %v7367
    %v7431 = vmax.f32 %v7289, %v7369
    %v7432 = vmax.f32 %v7290, %v7371
    %v7433 = vmax.f32 %v7291, %v7373
    %v7434 = vmax.f32 %v7292, %v7375
    %v7435 = vmax.f32 %v7293, %v7377
    %v7436 = vmax.f32 %v7294, %v7379
    %v7437 = vmax.f32 %v7295, %v7381
    %v7438 = vmax.f32 %v7296, %v7383
    %v7439 = vmax.f32 %v7297, %v7385
    %v7440 = vmax.f32 %v7298, %v7387
    %v7441 = vmax.f32 %v7299, %v7389
    %v7442 = vpack.c.bf16 %v7418, %v7416
    %v7443 = vpack.c.bf16 %v7419, %v7417
    %v7444 = vpack.c.bf16 %v7422, %v7420
    %v7445 = vpack.c.bf16 %v7423, %v7421
    %v7446 = vpack.c.bf16 %v7426, %v7424
    %v7447 = vpack.c.bf16 %v7427, %v7425
    %v7448 = vpack.c.bf16 %v7430, %v7428
    %v7449 = vpack.c.bf16 %v7431, %v7429
    %v7450 = vpack.c.bf16 %v7434, %v7432
    %v7451 = vpack.c.bf16 %v7435, %v7433
    %v7452 = vpack.c.bf16 %v7438, %v7436
    %v7453 = vpack.c.bf16 %v7439, %v7437
    %v7454 = vpack.c.bf16 %v7440, %v7440
    %v7455 = vpack.c.bf16 %v7441, %v7441
    %7456 = vmatprep.subr.bf16.mxu0 0
    %7457 = vmatpush1.bf16.xpose.msra.mxu0 0
    %7458 = vmatprep.subr.bf16.mxu0 %v7455
    %7459 = vmatpush1.bf16.xpose.msra.mxu0 %v7454
    %7460 = vmatprep.subr.bf16.mxu0 %v7453
    %7461 = vmatpush1.bf16.xpose.msra.mxu0 %v7452
    %7462 = vmatprep.subr.bf16.mxu0 %v7451
    %7463 = vmatpush1.bf16.xpose.msra.mxu0 %v7450
    %7464 = vmatprep.subr.bf16.mxu0 %v7449
    %7465 = vmatpush1.bf16.xpose.msra.mxu0 %v7448
    %7466 = vmatprep.subr.bf16.mxu0 %v7447
    %7467 = vmatpush1.bf16.xpose.msra.mxu0 %v7446
    %7468 = vmatprep.subr.bf16.mxu0 %v7445
    %7469 = vmatpush1.bf16.xpose.msra.mxu0 %v7444
    %7470 = vmatprep.subr.bf16.mxu0 %v7443
    %7471 = vmatpush1.bf16.xpose.msra.mxu0 %v7442
    %7472 = vmatprep.subr.bf16.mxu0 0
    %7473 = vmatpush2.bf16.xpose.msra.mxu0 0
    %7474 = vmatprep.subr.bf16.mxu0 0
    %7475 = vmatpush2.bf16.xpose.msra.mxu0 0
    %7476 = vmatprep.subr.bf16.mxu0 0
    %7477 = vmatpush2.bf16.xpose.msra.mxu0 0
    %7478 = vmatprep.subr.bf16.mxu0 0
    %7479 = vmatpush2.bf16.xpose.msra.mxu0 0
    %7480 = vmatprep.subr.bf16.mxu0 0
    %7481 = vmatpush2.bf16.xpose.msra.mxu0 0
    %7482 = vmatprep.subr.bf16.mxu0 0
    %7483 = vmatpush2.bf16.xpose.msra.mxu0 0
    %7484 = vmatprep.subr.bf16.mxu0 0
    %7485 = vmatpush2.bf16.xpose.msra.mxu0 0
    %7486 = vmatprep.subr.bf16.mxu0 0
    %7487 = vmatpush2.bf16.xpose.msra.mxu0 0
    %7488 = vmatprep.mubr.bf16.mxu0 %v7155
    %7489 = vmatmul.mubr.bf16.gmra.mxu0 %v7154
    %v7490 = vpop.f32.mrf.mxu0
    %v7491 = vadd.f32 %v398, %v7490
    %v7492 = vpop.f32.mrf.mxu0
    %v7493 = vpop.f32.mrf.mxu0
    %v7494 = vadd.f32 %v399, %v7493
    %v7495 = vpop.f32.mrf.mxu0
    %7496 = vmatprep.mubr.bf16.mxu0 %v7157
    %7497 = vmatmul.mubr.bf16.gmra.mxu0 %v7156
    %v7498 = vpop.f32.mrf.mxu0
    %v7499 = vadd.f32 %v400, %v7498
    %v7500 = vpop.f32.mrf.mxu0
    %v7501 = vpop.f32.mrf.mxu0
    %v7502 = vadd.f32 %v401, %v7501
    %v7503 = vpop.f32.mrf.mxu0
    %7504 = vmatprep.mubr.bf16.mxu0 %v7159
    %7505 = vmatmul.mubr.bf16.gmra.mxu0 %v7158
    %v7506 = vpop.f32.mrf.mxu0
    %v7507 = vadd.f32 %v402, %v7506
    %v7508 = vpop.f32.mrf.mxu0
    %v7509 = vpop.f32.mrf.mxu0
    %v7510 = vadd.f32 %v403, %v7509
    %v7511 = vpop.f32.mrf.mxu0
    %7512 = vmatprep.mubr.bf16.mxu0 %v7161
    %7513 = vmatmul.mubr.bf16.gmra.mxu0 %v7160
    %v7514 = vpop.f32.mrf.mxu0
    %v7515 = vadd.f32 %v404, %v7514
    %v7516 = vpop.f32.mrf.mxu0
    %v7517 = vpop.f32.mrf.mxu0
    %v7518 = vadd.f32 %v405, %v7517
    %v7519 = vpop.f32.mrf.mxu0
    %7520 = vmatprep.mubr.bf16.mxu0 %v7163
    %7521 = vmatmul.mubr.bf16.gmra.mxu0 %v7162
    %v7522 = vpop.f32.mrf.mxu0
    %v7523 = vadd.f32 %v406, %v7522
    %v7524 = vpop.f32.mrf.mxu0
    %v7525 = vpop.f32.mrf.mxu0
    %v7526 = vadd.f32 %v407, %v7525
    %v7527 = vpop.f32.mrf.mxu0
    %7528 = vmatprep.mubr.bf16.mxu0 %v7165
    %7529 = vmatmul.mubr.bf16.gmra.mxu0 %v7164
    %v7530 = vpop.f32.mrf.mxu0
    %v7531 = vadd.f32 %v408, %v7530
    %v7532 = vpop.f32.mrf.mxu0
    %v7533 = vpop.f32.mrf.mxu0
    %v7534 = vadd.f32 %v409, %v7533
    %v7535 = vpop.f32.mrf.mxu0
    %7536 = vmatprep.mubr.bf16.mxu0 %v7167
    %7537 = vmatmul.mubr.bf16.gmra.mxu0 %v7166
    %v7538 = vpop.f32.mrf.mxu0
    %v7539 = vadd.f32 %v410, %v7538
    %v7540 = vpop.f32.mrf.mxu0
    %v7541 = vpop.f32.mrf.mxu0
    %v7542 = vpop.f32.mrf.mxu0
    %7543 = vdwg.mxu0
    %v7544 = vsel %vm489, %v7491, -inf
    %7545 = vmax.xlane.f32.xlu0 %v7544
    %v7546 = vpop.xlane.xlu0 %7545
    %v7547 = vsel %vm489, %v7494, -inf
    %7548 = vmax.xlane.f32.xlu0 %v7547
    %v7549 = vpop.xlane.xlu0 %7548
    %v7550 = vsel %vm489, %v7499, -inf
    %7551 = vmax.xlane.f32.xlu0 %v7550
    %v7552 = vpop.xlane.xlu0 %7551
    %v7553 = vsel %vm489, %v7502, -inf
    %7554 = vmax.xlane.f32.xlu0 %v7553
    %v7555 = vpop.xlane.xlu0 %7554
    %v7556 = vsel %vm489, %v7507, -inf
    %7557 = vmax.xlane.f32.xlu0 %v7556
    %v7558 = vpop.xlane.xlu0 %7557
    %v7559 = vsel %vm489, %v7510, -inf
    %7560 = vmax.xlane.f32.xlu0 %v7559
    %v7561 = vpop.xlane.xlu0 %7560
    %v7562 = vsel %vm489, %v7515, -inf
    %7563 = vmax.xlane.f32.xlu0 %v7562
    %v7564 = vpop.xlane.xlu0 %7563
    %v7565 = vsel %vm489, %v7518, -inf
    %7566 = vmax.xlane.f32.xlu0 %v7565
    %v7567 = vpop.xlane.xlu0 %7566
    %v7568 = vsel %vm489, %v7523, -inf
    %7569 = vmax.xlane.f32.xlu0 %v7568
    %v7570 = vpop.xlane.xlu0 %7569
    %v7571 = vsel %vm489, %v7526, -inf
    %7572 = vmax.xlane.f32.xlu0 %v7571
    %v7573 = vpop.xlane.xlu0 %7572
    %v7574 = vsel %vm489, %v7531, -inf
    %7575 = vmax.xlane.f32.xlu0 %v7574
    %v7576 = vpop.xlane.xlu0 %7575
    %v7577 = vsel %vm489, %v7534, -inf
    %7578 = vmax.xlane.f32.xlu0 %v7577
    %v7579 = vpop.xlane.xlu0 %7578
    %v7580 = vsel %vm2733, %v7539, -inf
    %7581 = vmax.xlane.f32.xlu0 %v7580
    %v7582 = vpop.xlane.xlu0 %7581
    %v7583 = vsub.f32 %v7491, %v7546
    %v7584 = vsub.f32 %v7494, %v7549
    %v7585 = vsub.f32 %v7499, %v7552
    %v7586 = vsub.f32 %v7502, %v7555
    %v7587 = vsub.f32 %v7507, %v7558
    %v7588 = vsub.f32 %v7510, %v7561
    %v7589 = vsub.f32 %v7515, %v7564
    %v7590 = vsub.f32 %v7518, %v7567
    %v7591 = vsub.f32 %v7523, %v7570
    %v7592 = vsub.f32 %v7526, %v7573
    %v7593 = vsub.f32 %v7531, %v7576
    %v7594 = vsub.f32 %v7534, %v7579
    %v7595 = vsub.f32 %v7539, %v7582
    %v7596 = vmul.f32 %v7583, 1.442695
    %v7597 = vpow.pop %v7596
    %v7598 = vmul.f32 %v7584, 1.442695
    %v7599 = vpow.pop %v7598
    %v7600 = vmul.f32 %v7585, 1.442695
    %v7601 = vpow.pop %v7600
    %v7602 = vmul.f32 %v7586, 1.442695
    %v7603 = vpow.pop %v7602
    %v7604 = vmul.f32 %v7587, 1.442695
    %v7605 = vpow.pop %v7604
    %v7606 = vmul.f32 %v7588, 1.442695
    %v7607 = vpow.pop %v7606
    %v7608 = vmul.f32 %v7589, 1.442695
    %v7609 = vpow.pop %v7608
    %v7610 = vmul.f32 %v7590, 1.442695
    %v7611 = vpow.pop %v7610
    %v7612 = vmul.f32 %v7591, 1.442695
    %v7613 = vpow.pop %v7612
    %v7614 = vmul.f32 %v7592, 1.442695
    %v7615 = vpow.pop %v7614
    %v7616 = vmul.f32 %v7593, 1.442695
    %v7617 = vpow.pop %v7616
    %v7618 = vmul.f32 %v7594, 1.442695
    %v7619 = vpow.pop %v7618
    %v7620 = vmul.f32 %v7595, 1.442695
    %v7621 = vpow.pop %v7620
    %v7622 = vsel %vm489, %v7597, 0.0
    %7623 = vadd.xlane.f32.xlu0 %v7622
    %v7624 = vpop.xlane.xlu0 %7623
    %v7625 = vsel %vm489, %v7599, 0.0
    %7626 = vadd.xlane.f32.xlu0 %v7625
    %v7627 = vpop.xlane.xlu0 %7626
    %v7628 = vsel %vm489, %v7601, 0.0
    %7629 = vadd.xlane.f32.xlu0 %v7628
    %v7630 = vpop.xlane.xlu0 %7629
    %v7631 = vsel %vm489, %v7603, 0.0
    %7632 = vadd.xlane.f32.xlu0 %v7631
    %v7633 = vpop.xlane.xlu0 %7632
    %v7634 = vsel %vm489, %v7605, 0.0
    %7635 = vadd.xlane.f32.xlu0 %v7634
    %v7636 = vpop.xlane.xlu0 %7635
    %v7637 = vsel %vm489, %v7607, 0.0
    %7638 = vadd.xlane.f32.xlu0 %v7637
    %v7639 = vpop.xlane.xlu0 %7638
    %v7640 = vsel %vm489, %v7609, 0.0
    %7641 = vadd.xlane.f32.xlu0 %v7640
    %v7642 = vpop.xlane.xlu0 %7641
    %v7643 = vsel %vm489, %v7611, 0.0
    %7644 = vadd.xlane.f32.xlu0 %v7643
    %v7645 = vpop.xlane.xlu0 %7644
    %v7646 = vsel %vm489, %v7613, 0.0
    %7647 = vadd.xlane.f32.xlu0 %v7646
    %v7648 = vpop.xlane.xlu0 %7647
    %v7649 = vsel %vm489, %v7615, 0.0
    %7650 = vadd.xlane.f32.xlu0 %v7649
    %v7651 = vpop.xlane.xlu0 %7650
    %v7652 = vsel %vm489, %v7617, 0.0
    %7653 = vadd.xlane.f32.xlu0 %v7652
    %v7654 = vpop.xlane.xlu0 %7653
    %v7655 = vsel %vm489, %v7619, 0.0
    %7656 = vadd.xlane.f32.xlu0 %v7655
    %v7657 = vpop.xlane.xlu0 %7656
    %v7658 = vsel %vm2733, %v7621, 0.0
    %7659 = vadd.xlane.f32.xlu0 %v7658
    %v7660 = vpop.xlane.xlu0 %7659
    %v7661 = vrcp.pop %v7624
    %v7662 = vmul.f32 %v7597, %v7661
    %v7663 = vrcp.pop %v7627
    %v7664 = vmul.f32 %v7599, %v7663
    %v7665 = vrcp.pop %v7630
    %v7666 = vmul.f32 %v7601, %v7665
    %v7667 = vrcp.pop %v7633
    %v7668 = vmul.f32 %v7603, %v7667
    %v7669 = vrcp.pop %v7636
    %v7670 = vmul.f32 %v7605, %v7669
    %v7671 = vrcp.pop %v7639
    %v7672 = vmul.f32 %v7607, %v7671
    %v7673 = vrcp.pop %v7642
    %v7674 = vmul.f32 %v7609, %v7673
    %v7675 = vrcp.pop %v7645
    %v7676 = vmul.f32 %v7611, %v7675
    %v7677 = vrcp.pop %v7648
    %v7678 = vmul.f32 %v7613, %v7677
    %v7679 = vrcp.pop %v7651
    %v7680 = vmul.f32 %v7615, %v7679
    %v7681 = vrcp.pop %v7654
    %v7682 = vmul.f32 %v7617, %v7681
    %v7683 = vrcp.pop %v7657
    %v7684 = vmul.f32 %v7619, %v7683
    %v7685 = vrcp.pop %v7660
    %v7686 = vmul.f32 %v7621, %v7685
    %v7687 = vpack.c.bf16 %v7664, %v7662
    %v7688 = vpack.c.bf16 %v7668, %v7666
    %v7689 = vpack.c.bf16 %v7672, %v7670
    %v7690 = vpack.c.bf16 %v7676, %v7674
    %v7691 = vpack.c.bf16 %v7680, %v7678
    %v7692 = vpack.c.bf16 %v7684, %v7682
    %v7693 = vpack.c.bf16 %v7686, %v7686
    %v7695 = vsel %vm489, %v7687, 0
    %v7698 = vsel %vm489, %v7688, 0
    %v7701 = vsel %vm489, %v7689, 0
    %v7704 = vsel %vm489, %v7690, 0
    %v7707 = vsel %vm489, %v7691, 0
    %v7710 = vsel %vm489, %v7692, 0
    %v7713 = vsel %vm489, %v7693, 0
    %v7716 = vsel %vm2869, %v7152, 0
    %v7719 = vsel %vm2869, %v7153, 0
    %7721 = vmatprep.subr.bf16.mxu0 0
    %7722 = vmatpush1.bf16.msra.mxu0 0
    %7723 = vmatprep.subr.bf16.mxu0 %v7719
    %7724 = vmatpush1.bf16.msra.mxu0 %v7716
    %7725 = vmatprep.subr.bf16.mxu0 %v7151
    %7726 = vmatpush1.bf16.msra.mxu0 %v7150
    %7727 = vmatprep.subr.bf16.mxu0 %v7149
    %7728 = vmatpush1.bf16.msra.mxu0 %v7148
    %7729 = vmatprep.subr.bf16.mxu0 %v7147
    %7730 = vmatpush1.bf16.msra.mxu0 %v7146
    %7731 = vmatprep.subr.bf16.mxu0 %v7145
    %7732 = vmatpush1.bf16.msra.mxu0 %v7144
    %7733 = vmatprep.subr.bf16.mxu0 %v7143
    %7734 = vmatpush1.bf16.msra.mxu0 %v7142
    %7735 = vmatprep.subr.bf16.mxu0 %v7141
    %7736 = vmatpush1.bf16.msra.mxu0 %v7140
    %7737 = vmatprep.subr.bf16.mxu0 0
    %7738 = vmatpush2.bf16.msra.mxu0 0
    %7739 = vmatprep.subr.bf16.mxu0 0
    %7740 = vmatpush2.bf16.msra.mxu0 0
    %7741 = vmatprep.subr.bf16.mxu0 0
    %7742 = vmatpush2.bf16.msra.mxu0 0
    %7743 = vmatprep.subr.bf16.mxu0 0
    %7744 = vmatpush2.bf16.msra.mxu0 0
    %7745 = vmatprep.subr.bf16.mxu0 0
    %7746 = vmatpush2.bf16.msra.mxu0 0
    %7747 = vmatprep.subr.bf16.mxu0 0
    %7748 = vmatpush2.bf16.msra.mxu0 0
    %7749 = vmatprep.subr.bf16.mxu0 0
    %7750 = vmatpush2.bf16.msra.mxu0 0
    %7751 = vmatprep.subr.bf16.mxu0 0
    %7752 = vmatpush2.bf16.msra.mxu0 0
    %7753 = vmatprep.mubr.bf16.mxu0 0
    %7754 = vmatmul.mubr.bf16.gmra.mxu0 %v7695
    %v7755 = vpop.f32.mrf.mxu0
    %v7756 = vadd.f32 0.0, %v7755
    %v7757 = vpop.f32.mrf.mxu0
    %v7758 = vadd.f32 0.0, %v7757
    %v7759 = vpop.f32.mrf.mxu0
    %v7760 = vadd.f32 0.0, %v7759
    %v7761 = vpop.f32.mrf.mxu0
    %v7762 = vadd.f32 0.0, %v7761
    %7763 = vmatprep.mubr.bf16.mxu0 0
    %7764 = vmatmul.mubr.bf16.gmra.mxu0 %v7698
    %v7765 = vpop.f32.mrf.mxu0
    %v7766 = vadd.f32 0.0, %v7765
    %v7767 = vpop.f32.mrf.mxu0
    %v7768 = vadd.f32 0.0, %v7767
    %v7769 = vpop.f32.mrf.mxu0
    %v7770 = vadd.f32 0.0, %v7769
    %v7771 = vpop.f32.mrf.mxu0
    %v7772 = vadd.f32 0.0, %v7771
    %7773 = vmatprep.mubr.bf16.mxu0 0
    %7774 = vmatmul.mubr.bf16.gmra.mxu0 %v7701
    %v7775 = vpop.f32.mrf.mxu0
    %v7776 = vadd.f32 0.0, %v7775
    %v7777 = vpop.f32.mrf.mxu0
    %v7778 = vadd.f32 0.0, %v7777
    %v7779 = vpop.f32.mrf.mxu0
    %v7780 = vadd.f32 0.0, %v7779
    %v7781 = vpop.f32.mrf.mxu0
    %v7782 = vadd.f32 0.0, %v7781
    %7783 = vmatprep.mubr.bf16.mxu0 0
    %7784 = vmatmul.mubr.bf16.gmra.mxu0 %v7704
    %v7785 = vpop.f32.mrf.mxu0
    %v7786 = vadd.f32 0.0, %v7785
    %v7787 = vpop.f32.mrf.mxu0
    %v7788 = vadd.f32 0.0, %v7787
    %v7789 = vpop.f32.mrf.mxu0
    %v7790 = vadd.f32 0.0, %v7789
    %v7791 = vpop.f32.mrf.mxu0
    %v7792 = vadd.f32 0.0, %v7791
    %7793 = vmatprep.mubr.bf16.mxu0 0
    %7794 = vmatmul.mubr.bf16.gmra.mxu0 %v7707
    %v7795 = vpop.f32.mrf.mxu0
    %v7796 = vadd.f32 0.0, %v7795
    %v7797 = vpop.f32.mrf.mxu0
    %v7798 = vadd.f32 0.0, %v7797
    %v7799 = vpop.f32.mrf.mxu0
    %v7800 = vadd.f32 0.0, %v7799
    %v7801 = vpop.f32.mrf.mxu0
    %v7802 = vadd.f32 0.0, %v7801
    %7803 = vmatprep.mubr.bf16.mxu0 0
    %7804 = vmatmul.mubr.bf16.gmra.mxu0 %v7710
    %v7805 = vpop.f32.mrf.mxu0
    %v7806 = vadd.f32 0.0, %v7805
    %v7807 = vpop.f32.mrf.mxu0
    %v7808 = vadd.f32 0.0, %v7807
    %v7809 = vpop.f32.mrf.mxu0
    %v7810 = vadd.f32 0.0, %v7809
    %v7811 = vpop.f32.mrf.mxu0
    %v7812 = vadd.f32 0.0, %v7811
    %7813 = vmatprep.mubr.bf16.mxu0 0
    %7814 = vmatmul.mubr.bf16.gmra.mxu0 %v7713
    %v7815 = vpop.f32.mrf.mxu0
    %v7816 = vadd.f32 0.0, %v7815
    %v7817 = vpop.f32.mrf.mxu0
    %v7818 = vadd.f32 0.0, %v7817
    %v7819 = vpop.f32.mrf.mxu0
    %v7820 = vpop.f32.mrf.mxu0
    %7821 = vdwg.mxu0
    %v7822 = vpack.c.bf16 %v7760, %v7756
    %v7823 = vpack.c.bf16 %v7762, %v7758
    %v7824 = vpack.c.bf16 %v7770, %v7766
    %v7825 = vpack.c.bf16 %v7772, %v7768
    %v7826 = vpack.c.bf16 %v7780, %v7776
    %v7827 = vpack.c.bf16 %v7782, %v7778
    %v7828 = vpack.c.bf16 %v7790, %v7786
    %v7829 = vpack.c.bf16 %v7792, %v7788
    %v7830 = vpack.c.bf16 %v7800, %v7796
    %v7831 = vpack.c.bf16 %v7802, %v7798
    %v7832 = vpack.c.bf16 %v7810, %v7806
    %v7833 = vpack.c.bf16 %v7812, %v7808
    %v7834 = vpack.c.bf16 %v7816, %v7816
    %v7835 = vpack.c.bf16 %v7818, %v7818
    %v7836 = vld [vmem:[#allocation35] sm:$0xff]
    %v7837 = vld [vmem:[#allocation35 + $0x8] sm:$0xff]
    %v7838 = vld [vmem:[#allocation35 + $0x10] sm:$0xff]
    %v7839 = vld [vmem:[#allocation35 + $0x18] sm:$0xff]
    %v7840 = vld [vmem:[#allocation35 + $0x20] sm:$0xff]
    %v7841 = vld [vmem:[#allocation35 + $0x28] sm:$0xff]
    %v7842 = vld [vmem:[#allocation35 + $0x30] sm:$0xff]
    %v7843 = vld [vmem:[#allocation35 + $0x38] sm:$0xff]
    %v7844 = vld [vmem:[#allocation35 + $0x40] sm:$0xff]
    %v7845 = vld [vmem:[#allocation35 + $0x48] sm:$0xff]
    %v7846 = vld [vmem:[#allocation35 + $0x50] sm:$0xff]
    %v7847 = vld [vmem:[#allocation35 + $0x58] sm:$0xff]
    %v7848 = vld [vmem:[#allocation35 + $0x60] sm:$0xff]
    %v7849 = vld [vmem:[#allocation35 + $0x68] sm:$0xff]
    %v7850 = vld [vmem:[#allocation35 + $0x70] sm:$0xff]
    %v7851 = vld [vmem:[#allocation35 + $0x78] sm:$0xff]
    %v7852 = vld [vmem:[#allocation35 + $0x80] sm:$0xff]
    %v7853 = vld [vmem:[#allocation35 + $0x88] sm:$0xff]
    %v7854 = vld [vmem:[#allocation35 + $0x90] sm:$0xff]
    %v7855 = vld [vmem:[#allocation35 + $0x98] sm:$0xff]
    %v7856 = vld [vmem:[#allocation35 + $0xa0] sm:$0xff]
    %v7857 = vld [vmem:[#allocation35 + $0xa8] sm:$0xff]
    %v7858 = vld [vmem:[#allocation35 + $0xb0] sm:$0xff]
    %v7859 = vld [vmem:[#allocation35 + $0xb8] sm:$0xff]
    %v7860 = vld [vmem:[#allocation35 + $0xc0] sm:$0xff]
    %v7861 = vld [vmem:[#allocation35 + $0xc8] sm:$0xff]
    %v7862 = vld [vmem:[#allocation35 + $0xd0] sm:$0xff]
    %v7863 = vld [vmem:[#allocation35 + $0xd8] sm:$0xff]
    %v7864 = vld [vmem:[#allocation35 + $0xe0] sm:$0xff]
    %v7865 = vld [vmem:[#allocation35 + $0xe8] sm:$0xff]
    %v7866 = vld [vmem:[#allocation35 + $0xf0] sm:$0xff]
    %v7867 = vld [vmem:[#allocation35 + $0xf8] sm:$0xff]
    %v7868 = vld [vmem:[#allocation35 + $0x100] sm:$0xff]
    %v7869 = vld [vmem:[#allocation35 + $0x108] sm:$0xff]
    %v7870 = vld [vmem:[#allocation35 + $0x110] sm:$0xff]
    %v7871 = vld [vmem:[#allocation35 + $0x118] sm:$0xff]
    %v7872 = vld [vmem:[#allocation35 + $0x120] sm:$0xff]
    %v7873 = vld [vmem:[#allocation35 + $0x128] sm:$0xff]
    %v7874 = vld [vmem:[#allocation35 + $0x130] sm:$0xff]
    %v7875 = vld [vmem:[#allocation35 + $0x138] sm:$0xff]
    %v7876 = vld [vmem:[#allocation35 + $0x140] sm:$0xff]
    %v7877 = vld [vmem:[#allocation35 + $0x148] sm:$0xff]
    %v7878 = vld [vmem:[#allocation35 + $0x150] sm:$0xff]
    %v7879 = vld [vmem:[#allocation35 + $0x158] sm:$0xff]
    %v7880 = vld [vmem:[#allocation35 + $0x160] sm:$0xff]
    %v7881 = vld [vmem:[#allocation35 + $0x168] sm:$0xff]
    %v7882 = vld [vmem:[#allocation35 + $0x170] sm:$0xff]
    %v7883 = vld [vmem:[#allocation35 + $0x178] sm:$0xff]
    %v7884 = vld [vmem:[#allocation35 + $0x180] sm:$0xff]
    %v7885 = vld [vmem:[#allocation35 + $0x188] sm:$0xff]
    %v7886 = vld [vmem:[#allocation35 + $0x190] sm:$0xff]
    %v7887 = vld [vmem:[#allocation35 + $0x198] sm:$0xff]
    %v7888 = vld [vmem:[#allocation35 + $0x1a0] sm:$0xff]
    %v7889 = vld [vmem:[#allocation35 + $0x1a8] sm:$0xff]
    %v7890 = vld [vmem:[#allocation35 + $0x1b0] sm:$0xff]
    %v7891 = vld [vmem:[#allocation35 + $0x1b8] sm:$0xff]
    %v7892 = vld [vmem:[#allocation35 + $0x1c0] sm:$0xff]
    %v7893 = vld [vmem:[#allocation35 + $0x1c8] sm:$0xff]
    %v7894 = vld [vmem:[#allocation35 + $0x1d0] sm:$0xff]
    %v7895 = vld [vmem:[#allocation35 + $0x1d8] sm:$0xff]
    %v7896 = vld [vmem:[#allocation35 + $0x1e0] sm:$0xff]
    %v7897 = vld [vmem:[#allocation35 + $0x1e8] sm:$0xff]
    %v7898 = vld [vmem:[#allocation35 + $0x1f0] sm:$0xff]
    %v7899 = vld [vmem:[#allocation35 + $0x1f8] sm:$0xff]
    %v7900 = vld [vmem:[%s25] sm:$0xf]
    %v7902 = vlaneseq
    %v7903 = vshrl.u32 %v7902, 7
    %v7904 = vsub.s32 0, %v7903
    %v7905 = vrot.slane %v7900, %v7904
    %v7906 = vlaneseq
    %v7907 = vshrl.u32 %v7906, 7
    %v7908 = vsub.s32 1, %v7907
    %v7909 = vrot.slane %v7900, %v7908
    %v7910 = vlaneseq
    %v7911 = vshrl.u32 %v7910, 7
    %v7912 = vsub.s32 2, %v7911
    %v7913 = vrot.slane %v7900, %v7912
    %v7914 = vlaneseq
    %v7915 = vshrl.u32 %v7914, 7
    %v7916 = vsub.s32 3, %v7915
    %v7917 = vrot.slane %v7900, %v7916
    %v7986 = vunpack.c.l.b16 %v7836
    %v7987 = vunpack.c.h.b16 %v7836
    %v7988 = vunpack.c.l.b16 %v7837
    %v7989 = vunpack.c.h.b16 %v7837
    %v7990 = vunpack.c.l.b16 %v7838
    %v7991 = vunpack.c.h.b16 %v7838
    %v7992 = vunpack.c.l.b16 %v7839
    %v7993 = vunpack.c.h.b16 %v7839
    %v7994 = vunpack.c.l.b16 %v7840
    %v7995 = vunpack.c.h.b16 %v7840
    %v7996 = vunpack.c.l.b16 %v7841
    %v7997 = vunpack.c.h.b16 %v7841
    %v7998 = vunpack.c.l.b16 %v7842
    %v7999 = vunpack.c.h.b16 %v7842
    %v8000 = vunpack.c.l.b16 %v7843
    %v8001 = vunpack.c.h.b16 %v7843
    %v8002 = vunpack.c.l.b16 %v7844
    %v8003 = vunpack.c.h.b16 %v7844
    %v8004 = vunpack.c.l.b16 %v7845
    %v8005 = vunpack.c.h.b16 %v7845
    %v8006 = vunpack.c.l.b16 %v7846
    %v8007 = vunpack.c.h.b16 %v7846
    %v8008 = vunpack.c.l.b16 %v7847
    %v8009 = vunpack.c.h.b16 %v7847
    %v8010 = vunpack.c.l.b16 %v7848
    %v8011 = vunpack.c.h.b16 %v7848
    %v8012 = vunpack.c.l.b16 %v7849
    %v8013 = vunpack.c.h.b16 %v7849
    %v8014 = vunpack.c.l.b16 %v7850
    %v8015 = vunpack.c.h.b16 %v7850
    %v8016 = vunpack.c.l.b16 %v7851
    %v8017 = vunpack.c.h.b16 %v7851
    %v8018 = vunpack.c.l.b16 %v7852
    %v8019 = vunpack.c.h.b16 %v7852
    %v8020 = vunpack.c.l.b16 %v7853
    %v8021 = vunpack.c.h.b16 %v7853
    %v8022 = vunpack.c.l.b16 %v7854
    %v8023 = vunpack.c.h.b16 %v7854
    %v8024 = vunpack.c.l.b16 %v7855
    %v8025 = vunpack.c.h.b16 %v7855
    %v8026 = vunpack.c.l.b16 %v7856
    %v8027 = vunpack.c.h.b16 %v7856
    %v8028 = vunpack.c.l.b16 %v7857
    %v8029 = vunpack.c.h.b16 %v7857
    %v8030 = vunpack.c.l.b16 %v7858
    %v8031 = vunpack.c.h.b16 %v7858
    %v8032 = vunpack.c.l.b16 %v7859
    %v8033 = vunpack.c.h.b16 %v7859
    %v8034 = vunpack.c.l.b16 %v7860
    %v8035 = vunpack.c.h.b16 %v7860
    %v8036 = vunpack.c.l.b16 %v7861
    %v8037 = vunpack.c.h.b16 %v7861
    %v8038 = vunpack.c.l.b16 %v7862
    %v8039 = vunpack.c.h.b16 %v7862
    %v8040 = vunpack.c.l.b16 %v7863
    %v8041 = vunpack.c.h.b16 %v7863
    %v8042 = vunpack.c.l.b16 %v7864
    %v8043 = vunpack.c.h.b16 %v7864
    %v8044 = vunpack.c.l.b16 %v7865
    %v8045 = vunpack.c.h.b16 %v7865
    %v8046 = vunpack.c.l.b16 %v7866
    %v8047 = vunpack.c.h.b16 %v7866
    %v8048 = vunpack.c.l.b16 %v7867
    %v8049 = vunpack.c.h.b16 %v7867
    %v8050 = vunpack.c.l.b16 %v7868
    %v8051 = vunpack.c.h.b16 %v7868
    %v8052 = vunpack.c.l.b16 %v7869
    %v8053 = vunpack.c.h.b16 %v7869
    %v8054 = vunpack.c.l.b16 %v7870
    %v8055 = vunpack.c.h.b16 %v7870
    %v8056 = vunpack.c.l.b16 %v7871
    %v8057 = vunpack.c.h.b16 %v7871
    %v8058 = vunpack.c.l.b16 %v7872
    %v8059 = vunpack.c.h.b16 %v7872
    %v8060 = vunpack.c.l.b16 %v7873
    %v8061 = vunpack.c.h.b16 %v7873
    %v8062 = vunpack.c.l.b16 %v7874
    %v8063 = vunpack.c.h.b16 %v7874
    %v8064 = vunpack.c.l.b16 %v7875
    %v8065 = vunpack.c.h.b16 %v7875
    %v8066 = vunpack.c.l.b16 %v7876
    %v8067 = vunpack.c.h.b16 %v7876
    %v8068 = vunpack.c.l.b16 %v7877
    %v8069 = vunpack.c.h.b16 %v7877
    %v8070 = vunpack.c.l.b16 %v7878
    %v8071 = vunpack.c.h.b16 %v7878
    %v8072 = vunpack.c.l.b16 %v7879
    %v8073 = vunpack.c.h.b16 %v7879
    %v8074 = vunpack.c.l.b16 %v7880
    %v8075 = vunpack.c.h.b16 %v7880
    %v8076 = vunpack.c.l.b16 %v7881
    %v8077 = vunpack.c.h.b16 %v7881
    %v8078 = vunpack.c.l.b16 %v7882
    %v8079 = vunpack.c.h.b16 %v7882
    %v8080 = vunpack.c.l.b16 %v7883
    %v8081 = vunpack.c.h.b16 %v7883
    %v8082 = vunpack.c.l.b16 %v7884
    %v8083 = vunpack.c.h.b16 %v7884
    %v8084 = vunpack.c.l.b16 %v7885
    %v8085 = vunpack.c.h.b16 %v7885
    %v8086 = vunpack.c.l.b16 %v7886
    %v8087 = vunpack.c.h.b16 %v7886
    %v8088 = vunpack.c.l.b16 %v7887
    %v8089 = vunpack.c.h.b16 %v7887
    %v8090 = vunpack.c.l.b16 %v7888
    %v8091 = vunpack.c.h.b16 %v7888
    %v8092 = vunpack.c.l.b16 %v7889
    %v8093 = vunpack.c.h.b16 %v7889
    %v8094 = vunpack.c.l.b16 %v7890
    %v8095 = vunpack.c.h.b16 %v7890
    %v8096 = vunpack.c.l.b16 %v7891
    %v8097 = vunpack.c.h.b16 %v7891
    %v8098 = vunpack.c.l.b16 %v7892
    %v8099 = vunpack.c.h.b16 %v7892
    %v8100 = vunpack.c.l.b16 %v7893
    %v8101 = vunpack.c.h.b16 %v7893
    %v8102 = vunpack.c.l.b16 %v7894
    %v8103 = vunpack.c.h.b16 %v7894
    %v8104 = vunpack.c.l.b16 %v7895
    %v8105 = vunpack.c.h.b16 %v7895
    %v8106 = vunpack.c.l.b16 %v7896
    %v8107 = vunpack.c.h.b16 %v7896
    %v8108 = vunpack.c.l.b16 %v7897
    %v8109 = vunpack.c.h.b16 %v7897
    %v8110 = vunpack.c.l.b16 %v7898
    %v8111 = vunpack.c.h.b16 %v7898
    %v8112 = vunpack.c.l.b16 %v7899
    %v8113 = vunpack.c.h.b16 %v7899
    %v8114 = vpack.c.b16 %v7990, %v7986
    %v8115 = vpack.c.b16 %v7991, %v7987
    %v8116 = vpack.c.b16 %v7992, %v7988
    %v8117 = vpack.c.b16 %v7993, %v7989
    %v8118 = vpack.c.b16 %v7998, %v7994
    %v8119 = vpack.c.b16 %v7999, %v7995
    %v8120 = vpack.c.b16 %v8000, %v7996
    %v8121 = vpack.c.b16 %v8001, %v7997
    %v8122 = vpack.c.b16 %v8006, %v8002
    %v8123 = vpack.c.b16 %v8007, %v8003
    %v8124 = vpack.c.b16 %v8008, %v8004
    %v8125 = vpack.c.b16 %v8009, %v8005
    %v8126 = vpack.c.b16 %v8014, %v8010
    %v8127 = vpack.c.b16 %v8015, %v8011
    %v8128 = vpack.c.b16 %v8016, %v8012
    %v8129 = vpack.c.b16 %v8017, %v8013
    %v8130 = vpack.c.b16 %v8022, %v8018
    %v8131 = vpack.c.b16 %v8023, %v8019
    %v8132 = vpack.c.b16 %v8024, %v8020
    %v8133 = vpack.c.b16 %v8025, %v8021
    %v8134 = vpack.c.b16 %v8030, %v8026
    %v8135 = vpack.c.b16 %v8031, %v8027
    %v8136 = vpack.c.b16 %v8032, %v8028
    %v8137 = vpack.c.b16 %v8033, %v8029
    %v8138 = vpack.c.b16 %v8038, %v8034
    %v8139 = vpack.c.b16 %v8039, %v8035
    %v8140 = vpack.c.b16 %v8040, %v8036
    %v8141 = vpack.c.b16 %v8041, %v8037
    %v8142 = vpack.c.b16 %v8046, %v8042
    %v8143 = vpack.c.b16 %v8047, %v8043
    %v8144 = vpack.c.b16 %v8048, %v8044
    %v8145 = vpack.c.b16 %v8049, %v8045
    %v8146 = vpack.c.b16 %v8054, %v8050
    %v8147 = vpack.c.b16 %v8055, %v8051
    %v8148 = vpack.c.b16 %v8056, %v8052
    %v8149 = vpack.c.b16 %v8057, %v8053
    %v8150 = vpack.c.b16 %v8062, %v8058
    %v8151 = vpack.c.b16 %v8063, %v8059
    %v8152 = vpack.c.b16 %v8064, %v8060
    %v8153 = vpack.c.b16 %v8065, %v8061
    %v8154 = vpack.c.b16 %v8070, %v8066
    %v8155 = vpack.c.b16 %v8071, %v8067
    %v8156 = vpack.c.b16 %v8072, %v8068
    %v8157 = vpack.c.b16 %v8073, %v8069
    %v8158 = vpack.c.b16 %v8078, %v8074
    %v8159 = vpack.c.b16 %v8079, %v8075
    %v8160 = vpack.c.b16 %v8080, %v8076
    %v8161 = vpack.c.b16 %v8081, %v8077
    %v8162 = vpack.c.b16 %v8086, %v8082
    %v8163 = vpack.c.b16 %v8087, %v8083
    %v8164 = vpack.c.b16 %v8088, %v8084
    %v8165 = vpack.c.b16 %v8089, %v8085
    %v8166 = vpack.c.b16 %v8094, %v8090
    %v8167 = vpack.c.b16 %v8095, %v8091
    %v8168 = vpack.c.b16 %v8096, %v8092
    %v8169 = vpack.c.b16 %v8097, %v8093
    %v8170 = vpack.c.b16 %v8102, %v8098
    %v8171 = vpack.c.b16 %v8103, %v8099
    %v8172 = vpack.c.b16 %v8104, %v8100
    %v8173 = vpack.c.b16 %v8105, %v8101
    %v8174 = vpack.c.b16 %v8110, %v8106
    %v8175 = vpack.c.b16 %v8111, %v8107
    %v8176 = vpack.c.b16 %v8112, %v8108
    %v8177 = vpack.c.b16 %v8113, %v8109
    %8242 = vmatprep.subr.bf16.mxu0 %v8143
    %8243 = vmatpush1.bf16.msra.mxu0 %v8142
    %8244 = vmatprep.subr.bf16.mxu0 %v8139
    %8245 = vmatpush1.bf16.msra.mxu0 %v8138
    %8246 = vmatprep.subr.bf16.mxu0 %v8135
    %8247 = vmatpush1.bf16.msra.mxu0 %v8134
    %8248 = vmatprep.subr.bf16.mxu0 %v8131
    %8249 = vmatpush1.bf16.msra.mxu0 %v8130
    %8250 = vmatprep.subr.bf16.mxu0 %v8127
    %8251 = vmatpush1.bf16.msra.mxu0 %v8126
    %8252 = vmatprep.subr.bf16.mxu0 %v8123
    %8253 = vmatpush1.bf16.msra.mxu0 %v8122
    %8254 = vmatprep.subr.bf16.mxu0 %v8119
    %8255 = vmatpush1.bf16.msra.mxu0 %v8118
    %8256 = vmatprep.subr.bf16.mxu0 %v8115
    %8257 = vmatpush1.bf16.msra.mxu0 %v8114
    %8258 = vmatprep.subr.bf16.mxu0 %v8175
    %8259 = vmatpush2.bf16.msra.mxu0 %v8174
    %8260 = vmatprep.subr.bf16.mxu0 %v8171
    %8261 = vmatpush2.bf16.msra.mxu0 %v8170
    %8262 = vmatprep.subr.bf16.mxu0 %v8167
    %8263 = vmatpush2.bf16.msra.mxu0 %v8166
    %8264 = vmatprep.subr.bf16.mxu0 %v8163
    %8265 = vmatpush2.bf16.msra.mxu0 %v8162
    %8266 = vmatprep.subr.bf16.mxu0 %v8159
    %8267 = vmatpush2.bf16.msra.mxu0 %v8158
    %8268 = vmatprep.subr.bf16.mxu0 %v8155
    %8269 = vmatpush2.bf16.msra.mxu0 %v8154
    %8270 = vmatprep.subr.bf16.mxu0 %v8151
    %8271 = vmatpush2.bf16.msra.mxu0 %v8150
    %8272 = vmatprep.subr.bf16.mxu0 %v8147
    %8273 = vmatpush2.bf16.msra.mxu0 %v8146
    %8274 = vmatprep.mubr.bf16.mxu0 %v7823
    %8275 = vmatmul.mubr.bf16.gmra.mxu0 %v7822
    %v8276 = vpop.f32.mrf.mxu0
    %v8277 = vadd.f32 %v7905, %v8276
    %v8278 = vpop.f32.mrf.mxu0
    %v8279 = vadd.f32 %v7909, %v8278
    %v8280 = vpop.f32.mrf.mxu0
    %v8281 = vadd.f32 %v7905, %v8280
    %v8282 = vpop.f32.mrf.mxu0
    %v8283 = vadd.f32 %v7909, %v8282
    %8284 = vmatprep.mubr.bf16.mxu0 %v7825
    %8285 = vmatmul.mubr.bf16.gmra.mxu0 %v7824
    %v8286 = vpop.f32.mrf.mxu0
    %v8287 = vadd.f32 %v7905, %v8286
    %v8288 = vpop.f32.mrf.mxu0
    %v8289 = vadd.f32 %v7909, %v8288
    %v8290 = vpop.f32.mrf.mxu0
    %v8291 = vadd.f32 %v7905, %v8290
    %v8292 = vpop.f32.mrf.mxu0
    %v8293 = vadd.f32 %v7909, %v8292
    %8294 = vmatprep.mubr.bf16.mxu0 %v7827
    %8295 = vmatmul.mubr.bf16.gmra.mxu0 %v7826
    %v8296 = vpop.f32.mrf.mxu0
    %v8297 = vadd.f32 %v7905, %v8296
    %v8298 = vpop.f32.mrf.mxu0
    %v8299 = vadd.f32 %v7909, %v8298
    %v8300 = vpop.f32.mrf.mxu0
    %v8301 = vadd.f32 %v7905, %v8300
    %v8302 = vpop.f32.mrf.mxu0
    %v8303 = vadd.f32 %v7909, %v8302
    %8304 = vmatprep.mubr.bf16.mxu0 %v7829
    %8305 = vmatmul.mubr.bf16.gmra.mxu0 %v7828
    %v8306 = vpop.f32.mrf.mxu0
    %v8307 = vadd.f32 %v7905, %v8306
    %v8308 = vpop.f32.mrf.mxu0
    %v8309 = vadd.f32 %v7909, %v8308
    %v8310 = vpop.f32.mrf.mxu0
    %v8311 = vadd.f32 %v7905, %v8310
    %v8312 = vpop.f32.mrf.mxu0
    %v8313 = vadd.f32 %v7909, %v8312
    %8314 = vmatprep.mubr.bf16.mxu0 %v7831
    %8315 = vmatmul.mubr.bf16.gmra.mxu0 %v7830
    %v8316 = vpop.f32.mrf.mxu0
    %v8317 = vadd.f32 %v7905, %v8316
    %v8318 = vpop.f32.mrf.mxu0
    %v8319 = vadd.f32 %v7909, %v8318
    %v8320 = vpop.f32.mrf.mxu0
    %v8321 = vadd.f32 %v7905, %v8320
    %v8322 = vpop.f32.mrf.mxu0
    %v8323 = vadd.f32 %v7909, %v8322
    %8324 = vmatprep.mubr.bf16.mxu0 %v7833
    %8325 = vmatmul.mubr.bf16.gmra.mxu0 %v7832
    %v8326 = vpop.f32.mrf.mxu0
    %v8327 = vadd.f32 %v7905, %v8326
    %v8328 = vpop.f32.mrf.mxu0
    %v8329 = vadd.f32 %v7909, %v8328
    %v8330 = vpop.f32.mrf.mxu0
    %v8331 = vadd.f32 %v7905, %v8330
    %v8332 = vpop.f32.mrf.mxu0
    %v8333 = vadd.f32 %v7909, %v8332
    %8334 = vmatprep.mubr.bf16.mxu0 %v7835
    %8335 = vmatmul.mubr.bf16.gmra.mxu0 %v7834
    %v8336 = vpop.f32.mrf.mxu0
    %v8337 = vadd.f32 %v7905, %v8336
    %v8338 = vpop.f32.mrf.mxu0
    %v8339 = vadd.f32 %v7909, %v8338
    %v8340 = vpop.f32.mrf.mxu0
    %v8341 = vpop.f32.mrf.mxu0
    %8342 = vdwg.mxu0
    %8343 = vmatprep.subr.bf16.mxu0 %v8145
    %8344 = vmatpush1.bf16.msra.mxu0 %v8144
    %8345 = vmatprep.subr.bf16.mxu0 %v8141
    %8346 = vmatpush1.bf16.msra.mxu0 %v8140
    %8347 = vmatprep.subr.bf16.mxu0 %v8137
    %8348 = vmatpush1.bf16.msra.mxu0 %v8136
    %8349 = vmatprep.subr.bf16.mxu0 %v8133
    %8350 = vmatpush1.bf16.msra.mxu0 %v8132
    %8351 = vmatprep.subr.bf16.mxu0 %v8129
    %8352 = vmatpush1.bf16.msra.mxu0 %v8128
    %8353 = vmatprep.subr.bf16.mxu0 %v8125
    %8354 = vmatpush1.bf16.msra.mxu0 %v8124
    %8355 = vmatprep.subr.bf16.mxu0 %v8121
    %8356 = vmatpush1.bf16.msra.mxu0 %v8120
    %8357 = vmatprep.subr.bf16.mxu0 %v8117
    %8358 = vmatpush1.bf16.msra.mxu0 %v8116
    %8359 = vmatprep.subr.bf16.mxu0 %v8177
    %8360 = vmatpush2.bf16.msra.mxu0 %v8176
    %8361 = vmatprep.subr.bf16.mxu0 %v8173
    %8362 = vmatpush2.bf16.msra.mxu0 %v8172
    %8363 = vmatprep.subr.bf16.mxu0 %v8169
    %8364 = vmatpush2.bf16.msra.mxu0 %v8168
    %8365 = vmatprep.subr.bf16.mxu0 %v8165
    %8366 = vmatpush2.bf16.msra.mxu0 %v8164
    %8367 = vmatprep.subr.bf16.mxu0 %v8161
    %8368 = vmatpush2.bf16.msra.mxu0 %v8160
    %8369 = vmatprep.subr.bf16.mxu0 %v8157
    %8370 = vmatpush2.bf16.msra.mxu0 %v8156
    %8371 = vmatprep.subr.bf16.mxu0 %v8153
    %8372 = vmatpush2.bf16.msra.mxu0 %v8152
    %8373 = vmatprep.subr.bf16.mxu0 %v8149
    %8374 = vmatpush2.bf16.msra.mxu0 %v8148
    %8375 = vmatprep.mubr.bf16.mxu0 %v7823
    %8376 = vmatmul.mubr.bf16.gmra.mxu0 %v7822
    %v8377 = vpop.f32.mrf.mxu0
    %v8378 = vadd.f32 %v7913, %v8377
    %v8379 = vpop.f32.mrf.mxu0
    %v8380 = vadd.f32 %v7917, %v8379
    %v8381 = vpop.f32.mrf.mxu0
    %v8382 = vadd.f32 %v7913, %v8381
    %v8383 = vpop.f32.mrf.mxu0
    %v8384 = vadd.f32 %v7917, %v8383
    %8385 = vmatprep.mubr.bf16.mxu0 %v7825
    %8386 = vmatmul.mubr.bf16.gmra.mxu0 %v7824
    %v8387 = vpop.f32.mrf.mxu0
    %v8388 = vadd.f32 %v7913, %v8387
    %v8389 = vpop.f32.mrf.mxu0
    %v8390 = vadd.f32 %v7917, %v8389
    %v8391 = vpop.f32.mrf.mxu0
    %v8392 = vadd.f32 %v7913, %v8391
    %v8393 = vpop.f32.mrf.mxu0
    %v8394 = vadd.f32 %v7917, %v8393
    %8395 = vmatprep.mubr.bf16.mxu0 %v7827
    %8396 = vmatmul.mubr.bf16.gmra.mxu0 %v7826
    %v8397 = vpop.f32.mrf.mxu0
    %v8398 = vadd.f32 %v7913, %v8397
    %v8399 = vpop.f32.mrf.mxu0
    %v8400 = vadd.f32 %v7917, %v8399
    %v8401 = vpop.f32.mrf.mxu0
    %v8402 = vadd.f32 %v7913, %v8401
    %v8403 = vpop.f32.mrf.mxu0
    %v8404 = vadd.f32 %v7917, %v8403
    %8405 = vmatprep.mubr.bf16.mxu0 %v7829
    %8406 = vmatmul.mubr.bf16.gmra.mxu0 %v7828
    %v8407 = vpop.f32.mrf.mxu0
    %v8408 = vadd.f32 %v7913, %v8407
    %v8409 = vpop.f32.mrf.mxu0
    %v8410 = vadd.f32 %v7917, %v8409
    %v8411 = vpop.f32.mrf.mxu0
    %v8412 = vadd.f32 %v7913, %v8411
    %v8413 = vpop.f32.mrf.mxu0
    %v8414 = vadd.f32 %v7917, %v8413
    %8415 = vmatprep.mubr.bf16.mxu0 %v7831
    %8416 = vmatmul.mubr.bf16.gmra.mxu0 %v7830
    %v8417 = vpop.f32.mrf.mxu0
    %v8418 = vadd.f32 %v7913, %v8417
    %v8419 = vpop.f32.mrf.mxu0
    %v8420 = vadd.f32 %v7917, %v8419
    %v8421 = vpop.f32.mrf.mxu0
    %v8422 = vadd.f32 %v7913, %v8421
    %v8423 = vpop.f32.mrf.mxu0
    %v8424 = vadd.f32 %v7917, %v8423
    %8425 = vmatprep.mubr.bf16.mxu0 %v7833
    %8426 = vmatmul.mubr.bf16.gmra.mxu0 %v7832
    %v8427 = vpop.f32.mrf.mxu0
    %v8428 = vadd.f32 %v7913, %v8427
    %v8429 = vpop.f32.mrf.mxu0
    %v8430 = vadd.f32 %v7917, %v8429
    %v8431 = vpop.f32.mrf.mxu0
    %v8432 = vadd.f32 %v7913, %v8431
    %v8433 = vpop.f32.mrf.mxu0
    %v8434 = vadd.f32 %v7917, %v8433
    %8435 = vmatprep.mubr.bf16.mxu0 %v7835
    %8436 = vmatmul.mubr.bf16.gmra.mxu0 %v7834
    %v8437 = vpop.f32.mrf.mxu0
    %v8438 = vadd.f32 %v7913, %v8437
    %v8439 = vpop.f32.mrf.mxu0
    %v8440 = vadd.f32 %v7917, %v8439
    %v8441 = vpop.f32.mrf.mxu0
    %v8442 = vpop.f32.mrf.mxu0
    %8443 = vdwg.mxu0
    %v8444 = vld [vmem:[%s26] sm:$0xf]
    %v8446 = vlaneseq
    %v8447 = vshrl.u32 %v8446, 7
    %v8448 = vsub.s32 0, %v8447
    %v8449 = vrot.slane %v8444, %v8448
    %v8450 = vlaneseq
    %v8451 = vshrl.u32 %v8450, 7
    %v8452 = vsub.s32 1, %v8451
    %v8453 = vrot.slane %v8444, %v8452
    %v8454 = vlaneseq
    %v8455 = vshrl.u32 %v8454, 7
    %v8456 = vsub.s32 2, %v8455
    %v8457 = vrot.slane %v8444, %v8456
    %v8458 = vlaneseq
    %v8459 = vshrl.u32 %v8458, 7
    %v8460 = vsub.s32 3, %v8459
    %v8461 = vrot.slane %v8444, %v8460
    %v8466 = vmul.f32 %v8277, %v8449
    %v8467 = vmul.f32 %v8279, %v8453
    %v8468 = vmul.f32 %v8378, %v8457
    %v8469 = vmul.f32 %v8380, %v8461
    %v8470 = vmul.f32 %v8281, %v8449
    %v8471 = vmul.f32 %v8283, %v8453
    %v8472 = vmul.f32 %v8382, %v8457
    %v8473 = vmul.f32 %v8384, %v8461
    %v8474 = vmul.f32 %v8287, %v8449
    %v8475 = vmul.f32 %v8289, %v8453
    %v8476 = vmul.f32 %v8388, %v8457
    %v8477 = vmul.f32 %v8390, %v8461
    %v8478 = vmul.f32 %v8291, %v8449
    %v8479 = vmul.f32 %v8293, %v8453
    %v8480 = vmul.f32 %v8392, %v8457
    %v8481 = vmul.f32 %v8394, %v8461
    %v8482 = vmul.f32 %v8297, %v8449
    %v8483 = vmul.f32 %v8299, %v8453
    %v8484 = vmul.f32 %v8398, %v8457
    %v8485 = vmul.f32 %v8400, %v8461
    %v8486 = vmul.f32 %v8301, %v8449
    %v8487 = vmul.f32 %v8303, %v8453
    %v8488 = vmul.f32 %v8402, %v8457
    %v8489 = vmul.f32 %v8404, %v8461
    %v8490 = vmul.f32 %v8307, %v8449
    %v8491 = vmul.f32 %v8309, %v8453
    %v8492 = vmul.f32 %v8408, %v8457
    %v8493 = vmul.f32 %v8410, %v8461
    %v8494 = vmul.f32 %v8311, %v8449
    %v8495 = vmul.f32 %v8313, %v8453
    %v8496 = vmul.f32 %v8412, %v8457
    %v8497 = vmul.f32 %v8414, %v8461
    %v8498 = vmul.f32 %v8317, %v8449
    %v8499 = vmul.f32 %v8319, %v8453
    %v8500 = vmul.f32 %v8418, %v8457
    %v8501 = vmul.f32 %v8420, %v8461
    %v8502 = vmul.f32 %v8321, %v8449
    %v8503 = vmul.f32 %v8323, %v8453
    %v8504 = vmul.f32 %v8422, %v8457
    %v8505 = vmul.f32 %v8424, %v8461
    %v8506 = vmul.f32 %v8327, %v8449
    %v8507 = vmul.f32 %v8329, %v8453
    %v8508 = vmul.f32 %v8428, %v8457
    %v8509 = vmul.f32 %v8430, %v8461
    %v8510 = vmul.f32 %v8331, %v8449
    %v8511 = vmul.f32 %v8333, %v8453
    %v8512 = vmul.f32 %v8432, %v8457
    %v8513 = vmul.f32 %v8434, %v8461
    %v8514 = vmul.f32 %v8337, %v8449
    %v8515 = vmul.f32 %v8339, %v8453
    %v8516 = vmul.f32 %v8438, %v8457
    %v8517 = vmul.f32 %v8440, %v8461
    %v8518 = vld [vmem:[%s27] sm:$0xf]
    %v8520 = vlaneseq
    %v8521 = vshrl.u32 %v8520, 7
    %v8522 = vsub.s32 0, %v8521
    %v8523 = vrot.slane %v8518, %v8522
    %v8524 = vlaneseq
    %v8525 = vshrl.u32 %v8524, 7
    %v8526 = vsub.s32 1, %v8525
    %v8527 = vrot.slane %v8518, %v8526
    %v8528 = vlaneseq
    %v8529 = vshrl.u32 %v8528, 7
    %v8530 = vsub.s32 2, %v8529
    %v8531 = vrot.slane %v8518, %v8530
    %v8532 = vlaneseq
    %v8533 = vshrl.u32 %v8532, 7
    %v8534 = vsub.s32 3, %v8533
    %v8535 = vrot.slane %v8518, %v8534
    %v8540 = vadd.f32 %v8466, %v8523
    %v8541 = vadd.f32 %v8467, %v8527
    %v8542 = vadd.f32 %v8468, %v8531
    %v8543 = vadd.f32 %v8469, %v8535
    %v8544 = vadd.f32 %v8470, %v8523
    %v8545 = vadd.f32 %v8471, %v8527
    %v8546 = vadd.f32 %v8472, %v8531
    %v8547 = vadd.f32 %v8473, %v8535
    %v8548 = vadd.f32 %v8474, %v8523
    %v8549 = vadd.f32 %v8475, %v8527
    %v8550 = vadd.f32 %v8476, %v8531
    %v8551 = vadd.f32 %v8477, %v8535
    %v8552 = vadd.f32 %v8478, %v8523
    %v8553 = vadd.f32 %v8479, %v8527
    %v8554 = vadd.f32 %v8480, %v8531
    %v8555 = vadd.f32 %v8481, %v8535
    %v8556 = vadd.f32 %v8482, %v8523
    %v8557 = vadd.f32 %v8483, %v8527
    %v8558 = vadd.f32 %v8484, %v8531
    %v8559 = vadd.f32 %v8485, %v8535
    %v8560 = vadd.f32 %v8486, %v8523
    %v8561 = vadd.f32 %v8487, %v8527
    %v8562 = vadd.f32 %v8488, %v8531
    %v8563 = vadd.f32 %v8489, %v8535
    %v8564 = vadd.f32 %v8490, %v8523
    %v8565 = vadd.f32 %v8491, %v8527
    %v8566 = vadd.f32 %v8492, %v8531
    %v8567 = vadd.f32 %v8493, %v8535
    %v8568 = vadd.f32 %v8494, %v8523
    %v8569 = vadd.f32 %v8495, %v8527
    %v8570 = vadd.f32 %v8496, %v8531
    %v8571 = vadd.f32 %v8497, %v8535
    %v8572 = vadd.f32 %v8498, %v8523
    %v8573 = vadd.f32 %v8499, %v8527
    %v8574 = vadd.f32 %v8500, %v8531
    %v8575 = vadd.f32 %v8501, %v8535
    %v8576 = vadd.f32 %v8502, %v8523
    %v8577 = vadd.f32 %v8503, %v8527
    %v8578 = vadd.f32 %v8504, %v8531
    %v8579 = vadd.f32 %v8505, %v8535
    %v8580 = vadd.f32 %v8506, %v8523
    %v8581 = vadd.f32 %v8507, %v8527
    %v8582 = vadd.f32 %v8508, %v8531
    %v8583 = vadd.f32 %v8509, %v8535
    %v8584 = vadd.f32 %v8510, %v8523
    %v8585 = vadd.f32 %v8511, %v8527
    %v8586 = vadd.f32 %v8512, %v8531
    %v8587 = vadd.f32 %v8513, %v8535
    %v8588 = vadd.f32 %v8514, %v8523
    %v8589 = vadd.f32 %v8515, %v8527
    %v8590 = vadd.f32 %v8516, %v8531
    %v8591 = vadd.f32 %v8517, %v8535
    %v8592 = vadd.f32 %v8540, %v4866
    %v8593 = vadd.f32 %v8541, %v4867
    %v8594 = vadd.f32 %v8544, %v4868
    %v8595 = vadd.f32 %v8545, %v4869
    %v8596 = vadd.f32 %v8548, %v4870
    %v8597 = vadd.f32 %v8549, %v4871
    %v8598 = vadd.f32 %v8552, %v4872
    %v8599 = vadd.f32 %v8553, %v4873
    %v8600 = vadd.f32 %v8556, %v4874
    %v8601 = vadd.f32 %v8557, %v4875
    %v8602 = vadd.f32 %v8560, %v4876
    %v8603 = vadd.f32 %v8561, %v4877
    %v8604 = vadd.f32 %v8564, %v4878
    %v8605 = vadd.f32 %v8565, %v4879
    %v8606 = vadd.f32 %v8568, %v4880
    %v8607 = vadd.f32 %v8569, %v4881
    %v8608 = vadd.f32 %v8572, %v4882
    %v8609 = vadd.f32 %v8573, %v4883
    %v8610 = vadd.f32 %v8576, %v4884
    %v8611 = vadd.f32 %v8577, %v4885
    %v8612 = vadd.f32 %v8580, %v4886
    %v8613 = vadd.f32 %v8581, %v4887
    %v8614 = vadd.f32 %v8584, %v4888
    %v8615 = vadd.f32 %v8585, %v4889
    %v8616 = vadd.f32 %v8588, %v4890
    %v8617 = vadd.f32 %v8589, %v4891
    %v8618 = vpack.c.bf16 %v8594, %v8592
    %v8619 = vpack.c.bf16 %v8595, %v8593
    %v8620 = vpack.c.bf16 %v8598, %v8596
    %v8621 = vpack.c.bf16 %v8599, %v8597
    %v8622 = vpack.c.bf16 %v8602, %v8600
    %v8623 = vpack.c.bf16 %v8603, %v8601
    %v8624 = vpack.c.bf16 %v8606, %v8604
    %v8625 = vpack.c.bf16 %v8607, %v8605
    %v8626 = vpack.c.bf16 %v8610, %v8608
    %v8627 = vpack.c.bf16 %v8611, %v8609
    %v8628 = vpack.c.bf16 %v8614, %v8612
    %v8629 = vpack.c.bf16 %v8615, %v8613
    %v8630 = vpack.c.bf16 %v8616, %v8616
    %v8631 = vpack.c.bf16 %v8617, %v8617
    %v8646 = vunpack.c.l.b16 %v8618
    %v8647 = vunpack.c.l.b16 %v8619
    %v8648 = vunpack.c.h.b16 %v8618
    %v8649 = vunpack.c.h.b16 %v8619
    %v8650 = vunpack.c.l.b16 %v8620
    %v8651 = vunpack.c.l.b16 %v8621
    %v8652 = vunpack.c.h.b16 %v8620
    %v8653 = vunpack.c.h.b16 %v8621
    %v8654 = vunpack.c.l.b16 %v8622
    %v8655 = vunpack.c.l.b16 %v8623
    %v8656 = vunpack.c.h.b16 %v8622
    %v8657 = vunpack.c.h.b16 %v8623
    %v8658 = vunpack.c.l.b16 %v8624
    %v8659 = vunpack.c.l.b16 %v8625
    %v8660 = vunpack.c.h.b16 %v8624
    %v8661 = vunpack.c.h.b16 %v8625
    %v8662 = vunpack.c.l.b16 %v8626
    %v8663 = vunpack.c.l.b16 %v8627
    %v8664 = vunpack.c.h.b16 %v8626
    %v8665 = vunpack.c.h.b16 %v8627
    %v8666 = vunpack.c.l.b16 %v8628
    %v8667 = vunpack.c.l.b16 %v8629
    %v8668 = vunpack.c.h.b16 %v8628
    %v8669 = vunpack.c.h.b16 %v8629
    %v8670 = vunpack.c.l.b16 %v8630
    %v8671 = vunpack.c.l.b16 %v8631
    %v8672 = vpack.c.b16 %v8647, %v8646
    %v8673 = vpack.c.b16 %v8649, %v8648
    %v8674 = vpack.c.b16 %v8651, %v8650
    %v8675 = vpack.c.b16 %v8653, %v8652
    %v8676 = vpack.c.b16 %v8655, %v8654
    %v8677 = vpack.c.b16 %v8657, %v8656
    %v8678 = vpack.c.b16 %v8659, %v8658
    %v8679 = vpack.c.b16 %v8661, %v8660
    %v8680 = vpack.c.b16 %v8663, %v8662
    %v8681 = vpack.c.b16 %v8665, %v8664
    %v8682 = vpack.c.b16 %v8667, %v8666
    %v8683 = vpack.c.b16 %v8669, %v8668
    %v8684 = vpack.c.b16 %v8671, %v8670
    %8698 = vst [vmem:[#allocation37] sm:$0xff] %v8672
    %8699 = vst [vmem:[#allocation37 + $0x10] sm:$0xff] %v8673
    %8700 = vst [vmem:[#allocation37 + $0x20] sm:$0xff] %v8674
    %8701 = vst [vmem:[#allocation37 + $0x30] sm:$0xff] %v8675
    %8702 = vst [vmem:[#allocation37 + $0x40] sm:$0xff] %v8676
    %8703 = vst [vmem:[#allocation37 + $0x50] sm:$0xff] %v8677
    %8704 = vst [vmem:[#allocation37 + $0x60] sm:$0xff] %v8678
    %8705 = vst [vmem:[#allocation37 + $0x70] sm:$0xff] %v8679
    %8706 = vst [vmem:[#allocation37 + $0x80] sm:$0xff] %v8680
    %8707 = vst [vmem:[#allocation37 + $0x90] sm:$0xff] %v8681
    %8708 = vst [vmem:[#allocation37 + $0xa0] sm:$0xff] %v8682
    %8709 = vst [vmem:[#allocation37 + $0xb0] sm:$0xff] %v8683
    %8710 = vst [vmem:[#allocation37 + $0xc0] sm:$0x11] %v8684
    %v8711 = vadd.f32 %v8542, %v463
    %v8712 = vadd.f32 %v8543, %v464
    %v8713 = vadd.f32 %v8546, %v465
    %v8714 = vadd.f32 %v8547, %v466
    %v8715 = vadd.f32 %v8550, %v467
    %v8716 = vadd.f32 %v8551, %v468
    %v8717 = vadd.f32 %v8554, %v469
    %v8718 = vadd.f32 %v8555, %v470
    %v8719 = vadd.f32 %v8558, %v471
    %v8720 = vadd.f32 %v8559, %v472
    %v8721 = vadd.f32 %v8562, %v473
    %v8722 = vadd.f32 %v8563, %v474
    %v8723 = vadd.f32 %v8566, %v475
    %v8724 = vadd.f32 %v8567, %v476
    %v8725 = vadd.f32 %v8570, %v477
    %v8726 = vadd.f32 %v8571, %v478
    %v8727 = vadd.f32 %v8574, %v479
    %v8728 = vadd.f32 %v8575, %v480
    %v8729 = vadd.f32 %v8578, %v481
    %v8730 = vadd.f32 %v8579, %v482
    %v8731 = vadd.f32 %v8582, %v483
    %v8732 = vadd.f32 %v8583, %v484
    %v8733 = vadd.f32 %v8586, %v485
    %v8734 = vadd.f32 %v8587, %v486
    %v8735 = vadd.f32 %v8590, %v487
    %v8736 = vadd.f32 %v8591, %v488
    %v8737 = vpack.c.bf16 %v8713, %v8711
    %v8738 = vpack.c.bf16 %v8714, %v8712
    %v8739 = vpack.c.bf16 %v8717, %v8715
    %v8740 = vpack.c.bf16 %v8718, %v8716
    %v8741 = vpack.c.bf16 %v8721, %v8719
    %v8742 = vpack.c.bf16 %v8722, %v8720
    %v8743 = vpack.c.bf16 %v8725, %v8723
    %v8744 = vpack.c.bf16 %v8726, %v8724
    %v8745 = vpack.c.bf16 %v8729, %v8727
    %v8746 = vpack.c.bf16 %v8730, %v8728
    %v8747 = vpack.c.bf16 %v8733, %v8731
    %v8748 = vpack.c.bf16 %v8734, %v8732
    %v8749 = vpack.c.bf16 %v8735, %v8735
    %v8750 = vpack.c.bf16 %v8736, %v8736
    %v8765 = vunpack.c.l.b16 %v8737
    %v8766 = vunpack.c.l.b16 %v8738
    %v8767 = vunpack.c.h.b16 %v8737
    %v8768 = vunpack.c.h.b16 %v8738
    %v8769 = vunpack.c.l.b16 %v8739
    %v8770 = vunpack.c.l.b16 %v8740
    %v8771 = vunpack.c.h.b16 %v8739
    %v8772 = vunpack.c.h.b16 %v8740
    %v8773 = vunpack.c.l.b16 %v8741
    %v8774 = vunpack.c.l.b16 %v8742
    %v8775 = vunpack.c.h.b16 %v8741
    %v8776 = vunpack.c.h.b16 %v8742
    %v8777 = vunpack.c.l.b16 %v8743
    %v8778 = vunpack.c.l.b16 %v8744
    %v8779 = vunpack.c.h.b16 %v8743
    %v8780 = vunpack.c.h.b16 %v8744
    %v8781 = vunpack.c.l.b16 %v8745
    %v8782 = vunpack.c.l.b16 %v8746
    %v8783 = vunpack.c.h.b16 %v8745
    %v8784 = vunpack.c.h.b16 %v8746
    %v8785 = vunpack.c.l.b16 %v8747
    %v8786 = vunpack.c.l.b16 %v8748
    %v8787 = vunpack.c.h.b16 %v8747
    %v8788 = vunpack.c.h.b16 %v8748
    %v8789 = vunpack.c.l.b16 %v8749
    %v8790 = vunpack.c.l.b16 %v8750
    %v8791 = vpack.c.b16 %v8766, %v8765
    %v8792 = vpack.c.b16 %v8768, %v8767
    %v8793 = vpack.c.b16 %v8770, %v8769
    %v8794 = vpack.c.b16 %v8772, %v8771
    %v8795 = vpack.c.b16 %v8774, %v8773
    %v8796 = vpack.c.b16 %v8776, %v8775
    %v8797 = vpack.c.b16 %v8778, %v8777
    %v8798 = vpack.c.b16 %v8780, %v8779
    %v8799 = vpack.c.b16 %v8782, %v8781
    %v8800 = vpack.c.b16 %v8784, %v8783
    %v8801 = vpack.c.b16 %v8786, %v8785
    %v8802 = vpack.c.b16 %v8788, %v8787
    %v8803 = vpack.c.b16 %v8790, %v8789
    %8817 = vst [vmem:[#allocation37 + $0x8] sm:$0xff] %v8791
    %8818 = vst [vmem:[#allocation37 + $0x18] sm:$0xff] %v8792
    %8819 = vst [vmem:[#allocation37 + $0x28] sm:$0xff] %v8793
    %8820 = vst [vmem:[#allocation37 + $0x38] sm:$0xff] %v8794
    %8821 = vst [vmem:[#allocation37 + $0x48] sm:$0xff] %v8795
    %8822 = vst [vmem:[#allocation37 + $0x58] sm:$0xff] %v8796
    %8823 = vst [vmem:[#allocation37 + $0x68] sm:$0xff] %v8797
    %8824 = vst [vmem:[#allocation37 + $0x78] sm:$0xff] %v8798
    %8825 = vst [vmem:[#allocation37 + $0x88] sm:$0xff] %v8799
    %8826 = vst [vmem:[#allocation37 + $0x98] sm:$0xff] %v8800
    %8827 = vst [vmem:[#allocation37 + $0xa8] sm:$0xff] %v8801
    %8828 = vst [vmem:[#allocation37 + $0xb8] sm:$0xff] %v8802
    %8829 = vst [vmem:[#allocation37 + $0xc8] sm:$0x11] %v8803
    // Predicated region
    $region202: #{tpu_custom_call.1} parent=1 // pred_check
      _
    $region203: #{tpu_custom_call.1} parent=1 // pred_check_branch
      %8831 = sbr.rel (0) target = $region205
    $region204: #{tpu_custom_call.1} parent=1 // pred_region
      %s8833 = ssub.s32 3328, 3328
      %8834 = vsyncadd [#allocation4], %s8833
      %s8835 = sshll.u32 [#allocation37], 4
      %s8836 = int_to_ptr.vmem [resolvable:$true] %s8835
      %8841 = dma.vmem_to_hbm [thread:$0]  %s8836, 3328, %s28, [#allocation4], 256, 256, 16
    $region205: #{tpu_custom_call.1} parent=1 // pred_fallthru
      _
    // Predicated region
    $region206: #{tpu_custom_call.1} parent=1 // pred_check
      _
    $region207: #{tpu_custom_call.1} parent=1 // pred_check_branch
      %8843 = sbr.rel (0) target = $region209
    $region208: #{tpu_custom_call.1} parent=1 // pred_region
      %8844 = dma.done [#allocation4], 3328
    $region209: #{tpu_custom_call.1} parent=1 // pred_fallthru
      _
    %8845 = vsyncpa [#allocation3], 1
    %8846 = vsyncpa [#allocation6], 1
    %8847 = vsyncpa [#allocation9], 1
    %8848 = vsyncpa [#allocation12], 1
    %8849 = vsyncpa [#allocation15], 1
    %8850 = vsyncpa [#allocation18], 1
    %8851 = vsyncpa [#allocation21], 1
    %8852 = vsyncpa [#allocation24], 1
    %8853 = vsyncpa [#allocation27], 1
    %8854 = vsyncpa [#allocation30], 1
    %8855 = vsyncpa [#allocation33], 1
    %8856 = vsyncpa [#allocation36], 1
    %8857 = vsyncpa [#allocation4], 1

</llo_original>
